<compile_context>
chip_gen: v6e
topology: v6e:2x2x1
jax: 0.10.0
libtpu: 0.0.40
codegen_flags: <defaults>
</compile_context>

<pallas_src>
import functools

import jax
import jax.numpy as jnp
import numpy as np
from jax import lax
from jax.experimental import pallas as pl
from jax.experimental.pallas import tpu as pltpu

_OUT_SUB = 8     # sublanes in the per-tile partial-sum slab
_OUT_LANE = 128  # lanes in the per-tile partial-sum slab


def _pad8(n):
    return -(-n // 8) * 8


def _pad128(n):
    return -(-n // 128) * 128


def _log_sigmoid(x):
    # Stable, divide-free log(sigmoid(x)) = min(x, 0) - log(1 + exp(-|x|)).
    return jnp.minimum(x, 0.0) - jnp.log(1.0 + jnp.exp(-jnp.abs(x)))


# --------------------------------------------------------------------------
# Fused kernel: in-kernel one-hot (MXU) embedding gather, tables VMEM-resident
# --------------------------------------------------------------------------
def fused_sgns_kernel(iitem_ref, ctx_idx_ref, sign_ref, i_tab_ref, o_tab_ref,
                      out_ref, *, rows_per_item):
    """One batch tile.  rows_per_item = C + C*n_negs context rows per centre item."""
    item_num = i_tab_ref.shape[0]
    tb = iitem_ref.shape[0]          # batch rows in this tile
    rk = ctx_idx_ref.shape[0]        # tb * rows_per_item

    i_tab = i_tab_ref[...]           # (item_num, F) f32, VMEM resident
    o_tab = o_tab_ref[...]

    # Centre ("input") embeddings: one-hot(tb, item_num) @ i_table on the MXU.
    lanes_b = lax.broadcasted_iota(jnp.int32, (tb, item_num), 1)
    onehot_i = jnp.where(lanes_b == iitem_ref[...], 1.0, 0.0)
    iv = jnp.dot(onehot_i, i_tab, preferred_element_type=jnp.float32)       # (tb, F)

    # Replicate iv along the context axis with a block-selector matrix (MXU):
    # rep[r, b] = 1  iff  context row r belongs to batch element b.
    row_i = lax.broadcasted_iota(jnp.int32, (rk, tb), 0)
    blk_start = lax.broadcasted_iota(jnp.int32, (rk, tb), 1) * rows_per_item
    rep = jnp.where((row_i >= blk_start) & (row_i < blk_start + rows_per_item),
                    1.0, 0.0)
    iv_rep = jnp.dot(rep, iv, preferred_element_type=jnp.float32)           # (rk, F)

    # Context / negative embeddings: SIGNED one-hot @ o_table (MXU).  The -1
    # sign on negative-sample rows implements the reference's .neg() exactly.
    lanes_r = lax.broadcasted_iota(jnp.int32, (rk, item_num), 1)
    onehot_ctx = jnp.where(lanes_r == ctx_idx_ref[...], sign_ref[...], 0.0)
    ctx = jnp.dot(onehot_ctx, o_tab, preferred_element_type=jnp.float32)    # (rk, F)

    scores = jnp.sum(ctx * iv_rep, axis=-1, keepdims=True)                  # (rk, 1)
    partial = jnp.sum(_log_sigmoid(scores))                                 # scalar f32

    # Lane-dense, unmasked store of the per-tile partial sum.
    out_ref[...] = jnp.broadcast_to(partial, out_ref.shape).astype(jnp.float32)


# --------------------------------------------------------------------------
# Fallback kernel: gathers in XLA, batched dot / log-sigmoid / reduce in Pallas
# --------------------------------------------------------------------------
def gather_sgns_kernel(iv_ref, ctx_ref, out_ref):
    iv = iv_ref[...].astype(jnp.float32)        # (tb, F)
    ctx = ctx_ref[...].astype(jnp.float32)      # (tb, K, F), negatives pre-negated
    scores = jnp.sum(ctx * iv[:, None, :], axis=-1)                         # (tb, K)
    partial = jnp.sum(_log_sigmoid(scores))
    out_ref[...] = jnp.broadcast_to(partial, out_ref.shape).astype(jnp.float32)


# --------------------------------------------------------------------------
# Tile selection (accounts for in-kernel f32 temporaries, per review)
# --------------------------------------------------------------------------
def _candidate_tiles(batch):
    return [t for t in range(1, batch + 1)
            if batch % t == 0 and (t % 8 == 0 or t == batch)]


def _pick_tile(batch, tile_bytes_fn, budget_bytes, want_tiles=2):
    cands = _candidate_tiles(batch)
    feasible = [t for t in cands if tile_bytes_fn(t) <= budget_bytes]
    if not feasible:
        feasible = [min(cands)]
    # Prefer >= 2 grid steps so ("parallel",) can shard across v7x's two
    # TensorCores; the extra ~0.35us step is negligible on single-TC chips.
    multi = [t for t in feasible if batch // t >= want_tiles]
    return max(multi) if multi else max(feasible)


def _fused_fixed_bytes(item_num, F):
    # Both tables, double-buffered, lane/sublane padded, f32.
    return 2 * 2 * _pad8(item_num) * _pad128(F) * 4


def _fused_tile_bytes(tb, K, item_num, F):
    rk = tb * K
    by = rk * _pad128(item_num) * 4            # signed one-hot of context ids
    by += tb * _pad128(item_num) * 4           # one-hot of centre ids
    by += rk * _pad128(tb) * 4                 # replication selector
    by += 3 * rk * _pad128(F) * 4              # ctx, iv_rep, product temporaries
    by += 2 * 2 * rk * 128 * 4                 # ctx_idx + sign blocks (double-buffered)
    by += 2 * tb * 128 * 4                     # iitem block
    return by


def _gather_tile_bytes(tb, K, F, itemsize):
    row_in = (_pad128(F) + _pad8(K) * _pad128(F)) * itemsize * 2   # double-buffered inputs
    row_tmp = (_pad128(F) + 2 * _pad8(K) * _pad128(F)) * 4         # f32 widen + product temps
    return tb * (row_in + row_tmp)


# --------------------------------------------------------------------------
# Forward wrappers
# --------------------------------------------------------------------------
def _fused_forward(i_table, o_table, iitem, oitems, nitems, *,
                   tile_b, vmem_budget_bytes, vmem_limit_bytes):
    item_num, F = i_table.shape
    B = iitem.shape[0]
    C = oitems.shape[1]
    K = C + nitems.shape[1]

    if tile_b is None:
        tile_b = _pick_tile(
            B,
            lambda t: _fused_fixed_bytes(item_num, F) + _fused_tile_bytes(t, K, item_num, F),
            vmem_budget_bytes)
    assert B % tile_b == 0, "batch must be divisible by the batch tile"
    num_tiles = B // tile_b

    # Index plumbing only -- no embedding-sized tensor leaves XLA.
    ctx_idx = jnp.concatenate([oitems, nitems], axis=1).astype(jnp.int32)
    ctx_idx = ctx_idx.reshape(B * K, 1)
    sign = jnp.where(jnp.arange(K) < C, 1.0, -1.0).astype(jnp.float32)
    sign = jnp.broadcast_to(sign[None, :], (B, K)).reshape(B * K, 1)
    iitem_col = iitem.astype(jnp.int32).reshape(B, 1)

    kernel = functools.partial(fused_sgns_kernel, rows_per_item=K)

    cost = pl.CostEstimate(
        flops=2 * B * K * item_num * F + 2 * B * item_num * F + 2 * B * K * (tile_b + F),
        transcendentals=2 * B * K,
        bytes_accessed=2 * item_num * F * 4 + B * (K + 1) * 4 * 2
        + num_tiles * _OUT_SUB * _OUT_LANE * 4,
    )

    partial_slabs = pl.pallas_call(
        kernel,
        out_shape=jax.ShapeDtypeStruct((num_tiles, _OUT_SUB, _OUT_LANE), jnp.float32),
        grid=(num_tiles,),
        in_specs=[
            pl.BlockSpec((tile_b, 1), lambda i: (i, 0)),           # iitem ids
            pl.BlockSpec((tile_b * K, 1), lambda i: (i, 0)),       # ctx/neg ids
            pl.BlockSpec((tile_b * K, 1), lambda i: (i, 0)),       # +-1 sign per row
            pl.BlockSpec((item_num, F), lambda i: (0, 0)),         # i_table (resident)
            pl.BlockSpec((item_num, F), lambda i: (0, 0)),         # o_table (resident)
        ],
        out_specs=pl.BlockSpec((1, _OUT_SUB, _OUT_LANE), lambda i: (i, 0, 0)),
        compiler_params=pltpu.CompilerParams(
            dimension_semantics=("parallel",),
            vmem_limit_bytes=vmem_limit_bytes,
        ),
        cost_estimate=cost,
    )(iitem_col, ctx_idx, sign,
      i_table.astype(jnp.float32), o_table.astype(jnp.float32))

    partials = partial_slabs[:, 0, 0]
    # oloss.mean(1) averages over C; nloss.sum(2).mean(1) == (total sum)/C;
    # -(oloss + nloss).mean() over B gives the 1/(B*C) scale.
    return -jnp.sum(partials) / (B * C)


def _gather_forward(i_table, o_table, iitem, oitems, nitems, *,
                    tile_b, vmem_budget_bytes, vmem_limit_bytes):
    item_num, F = i_table.shape
    B = iitem.shape[0]
    C = oitems.shape[1]
    K = C + nitems.shape[1]

    # Size-conditional transfer dtype (review): f32 unless the packed context
    # tensor is big enough for HBM bandwidth to be the real bottleneck.
    transfer_dtype = jnp.bfloat16 if B * K * F * 4 > (8 << 20) else jnp.float32
    itemsize = jnp.dtype(transfer_dtype).itemsize

    iv = jnp.take(i_table, iitem, axis=0).astype(transfer_dtype)            # (B, F)
    # Pre-negate the negative-sample rows (exact sign-bit flip) so the kernel
    # needs no iota/where sign selection.
    ctx = jnp.concatenate(
        [jnp.take(o_table, oitems, axis=0), -jnp.take(o_table, nitems, axis=0)],
        axis=1).astype(transfer_dtype)                                      # (B, K, F)

    if tile_b is None:
        tile_b = _pick_tile(B, lambda t: _gather_tile_bytes(t, K, F, itemsize),
                            vmem_budget_bytes)
    assert B % tile_b == 0
    num_tiles = B // tile_b

    cost = pl.CostEstimate(
        flops=2 * B * K * F + 8 * B * K,
        transcendentals=2 * B * K,
        bytes_accessed=(B * F + B * K * F) * itemsize
        + num_tiles * _OUT_SUB * _OUT_LANE * 4,
    )

    partial_slabs = pl.pallas_call(
        gather_sgns_kernel,
        out_shape=jax.ShapeDtypeStruct((num_tiles, _OUT_SUB, _OUT_LANE), jnp.float32),
        grid=(num_tiles,),
        in_specs=[
            pl.BlockSpec((tile_b, F), lambda i: (i, 0)),
            pl.BlockSpec((tile_b, K, F), lambda i: (i, 0, 0)),
        ],
        out_specs=pl.BlockSpec((1, _OUT_SUB, _OUT_LANE), lambda i: (i, 0, 0)),
        compiler_params=pltpu.CompilerParams(
            dimension_semantics=("parallel",),
            vmem_limit_bytes=vmem_limit_bytes,
        ),
        cost_estimate=cost,
    )(iv, ctx)

    return -jnp.sum(partial_slabs[:, 0, 0]) / (B * C)


def item2vec_forward(i_table, o_table, iitem, oitems, nitems, *,
                     use_fused=None, tile_b=None,
                     vmem_budget_bytes=16 * 1024 * 1024,
                     vmem_limit_bytes=32 * 1024 * 1024):
    """SGNS forward loss.  Fused path keeps both embedding tables VMEM-resident
    and gathers rows in-kernel (one dispatch, no HBM ctx round trip); the
    fallback path (huge vocab) gathers in XLA and reduces in Pallas."""
    item_num, F = i_table.shape
    B = iitem.shape[0]
    C = oitems.shape[1]
    K = C + nitems.shape[1]
    if use_fused is None:
        smallest = min(_candidate_tiles(B))
        need = _fused_fixed_bytes(item_num, F) + _fused_tile_bytes(smallest, K, item_num, F)
        use_fused = need <= vmem_budget_bytes
    if use_fused:
        return _fused_forward(i_table, o_table, iitem, oitems, nitems,
                              tile_b=tile_b, vmem_budget_bytes=vmem_budget_bytes,
                              vmem_limit_bytes=vmem_limit_bytes)
    return _gather_forward(i_table, o_table, iitem, oitems, nitems,
                           tile_b=tile_b, vmem_budget_bytes=vmem_budget_bytes,
                           vmem_limit_bytes=vmem_limit_bytes)


# --------------------------------------------------------------------------
# Init + reference
# --------------------------------------------------------------------------
def make_embedding_table(key, item_num, factors):
    # Matches ItemEmb init: row 0 (padding_idx) zeros, remaining rows
    # uniform(-0.5/factors, 0.5/factors).
    body = jax.random.uniform(
        key, (item_num - 1, factors), dtype=jnp.float32,
        minval=-0.5 / factors, maxval=0.5 / factors)
    return jnp.concatenate([jnp.zeros((1, factors), jnp.float32), body], axis=0)


def reference_loss(i_table, o_table, iitem, oitems, nitems, context_size, n_negs):
    # Pure-JAX f32 mirror of the PyTorch forward.
    iv = jnp.take(i_table, iitem, axis=0)                        # (B, F)
    ov = jnp.take(o_table, oitems, axis=0)                       # (B, C, F)
    nv = -jnp.take(o_table, nitems, axis=0)                      # (B, C*n, F)
    sig = lambda x: 1.0 / (1.0 + jnp.exp(-x))
    oloss = jnp.log(sig(jnp.einsum("bcf,bf->bc", ov, iv))).mean(axis=1)
    nloss = jnp.log(sig(jnp.einsum("bcf,bf->bc", nv, iv)))
    nloss = nloss.reshape(-1, context_size, n_negs).sum(axis=2).mean(axis=1)
    return -(oloss + nloss).mean()


if __name__ == "__main__":
    item_num = 1000          # vocab size
    # TODO(synk): with factors=32 only 32/128 lanes of the gathered-row vregs
    # carry data; choosing factors as a multiple of 128 fills the lane axis and
    # is the remaining compute-side lever for this kernel.
    factors = 32             # embedding dim
    n_negs = 5
    B = 64                   # batch size
    C = 4                    # context size

    key = jax.random.PRNGKey(0)
    k_i, k_o, k_ii, k_oo, k_neg = jax.random.split(key, 5)

    i_table = make_embedding_table(k_i, item_num, factors)
    o_table = make_embedding_table(k_o, item_num, factors)

    iitem = jax.random.randint(k_ii, (B,), 0, item_num, dtype=jnp.int32)
    oitems = jax.random.randint(k_oo, (B, C), 0, item_num, dtype=jnp.int32)
    # TODO(synk): torch draws negatives with FloatTensor.uniform_(0, item_num-1).long()
    # inside forward; here negatives are sampled deterministically in glue and fed in.
    nitems = jax.random.randint(k_neg, (B, C * n_negs), 0, item_num, dtype=jnp.int32)

    ref = reference_loss(i_table, o_table, iitem, oitems, nitems, C, n_negs)

    # Fused path: tables VMEM-resident, in-kernel one-hot (MXU) gathers, f32
    # end-to-end, single dispatch, 2 grid steps (one per v7x TensorCore).
    loss_fused = jax.block_until_ready(
        item2vec_forward(i_table, o_table, iitem, oitems, nitems, use_fused=True))
    np.testing.assert_allclose(np.asarray(loss_fused), np.asarray(ref),
                               rtol=1e-3, atol=1e-5)

    # Fallback path (used when the tables do not fit VMEM): XLA gathers feed a
    # Pallas batched-dot / log-sigmoid / reduction kernel.
    loss_gather = jax.block_until_ready(
        item2vec_forward(i_table, o_table, iitem, oitems, nitems, use_fused=False))
    np.testing.assert_allclose(np.asarray(loss_gather), np.asarray(ref),
                               rtol=1e-3, atol=1e-5)

    print("KERNEL_OK")
</pallas_src>

<mosaic_0001>
module attributes {stable_mosaic.version = 11 : i64} {
  func.func @fused_sgns_kernel(%arg0: i32, %arg1: memref<32x1xi32, #tpu.memory_space<vmem>>, %arg2: memref<768x1xi32, #tpu.memory_space<vmem>>, %arg3: memref<768x1xf32, #tpu.memory_space<vmem>>, %arg4: memref<1000x32xf32, #tpu.memory_space<vmem>>, %arg5: memref<1000x32xf32, #tpu.memory_space<vmem>>, %arg6: memref<1x8x128xf32, #tpu.memory_space<vmem>>) attributes {dimension_semantics = [#tpu.dimension_semantics<parallel>], iteration_bounds = array<i64: 2>, scalar_prefetch = 0 : i64, scratch_operands = 0 : i64, tpu.core_type = #tpu.core_type<tc>, window_params = [{transform_indices = @transform_0, window_bounds = array<i64: 32, 1>}, {transform_indices = @transform_1, window_bounds = array<i64: 768, 1>}, {transform_indices = @transform_2, window_bounds = array<i64: 768, 1>}, {pipeline_mode = #tpu.pipeline_mode<synchronous>, transform_indices = @transform_3, window_bounds = array<i64: 1000, 32>}, {pipeline_mode = #tpu.pipeline_mode<synchronous>, transform_indices = @transform_4, window_bounds = array<i64: 1000, 32>}, {transform_indices = @transform_5, window_bounds = array<i64: 1, 8, 128>}]} {
    %c0 = arith.constant 0 : index
    %c0_0 = arith.constant 0 : index
    %0 = vector.load %arg4[%c0, %c0_0] : memref<1000x32xf32, #tpu.memory_space<vmem>>, vector<1000x32xf32>
    %c0_1 = arith.constant 0 : index
    %c0_2 = arith.constant 0 : index
    %1 = vector.load %arg5[%c0_1, %c0_2] : memref<1000x32xf32, #tpu.memory_space<vmem>>, vector<1000x32xf32>
    %2 = tpu.iota {dimensions = array<i32: 1>} : vector<32x1000xi32>
    %c0_3 = arith.constant 0 : index
    %c0_4 = arith.constant 0 : index
    %3 = vector.load %arg1[%c0_3, %c0_4] : memref<32x1xi32, #tpu.memory_space<vmem>>, vector<32x1xi32>
    %4 = vector.broadcast %3 : vector<32x1xi32> to vector<32x1000xi32>
    %5 = arith.cmpi eq, %2, %4 : vector<32x1000xi32>
    %cst = arith.constant 1.000000e+00 : f32
    %cst_5 = arith.constant 0.000000e+00 : f32
    %6 = vector.broadcast %cst : f32 to vector<32x1000xf32>
    %7 = vector.broadcast %cst_5 : f32 to vector<32x1000xf32>
    %8 = arith.select %5, %6, %7 : vector<32x1000xi1>, vector<32x1000xf32>
    %cst_6 = arith.constant dense<0.000000e+00> : vector<32x32xf32>
    %9 = tpu.matmul %8, %0, %cst_6 {dimension_numbers = #tpu.dot_dimension_numbers<[1], [0], [0], [1], [0, 0, 1, 1], [], []>} : vector<32x1000xf32>, vector<1000x32xf32>, vector<32x32xf32> -> vector<32x32xf32>
    %10 = tpu.iota {dimensions = array<i32: 0>} : vector<768x32xi32>
    %11 = tpu.iota {dimensions = array<i32: 1>} : vector<768x32xi32>
    %c24_i32 = arith.constant 24 : i32
    %12 = vector.broadcast %c24_i32 : i32 to vector<768x32xi32>
    %13 = arith.muli %11, %12 : vector<768x32xi32>
    %14 = arith.cmpi sge, %10, %13 : vector<768x32xi32>
    %c24_i32_7 = arith.constant 24 : i32
    %15 = vector.broadcast %c24_i32_7 : i32 to vector<768x32xi32>
    %16 = arith.addi %13, %15 : vector<768x32xi32>
    %17 = arith.cmpi slt, %10, %16 : vector<768x32xi32>
    %18 = arith.andi %14, %17 : vector<768x32xi1>
    %cst_8 = arith.constant 1.000000e+00 : f32
    %cst_9 = arith.constant 0.000000e+00 : f32
    %19 = vector.broadcast %cst_8 : f32 to vector<768x32xf32>
    %20 = vector.broadcast %cst_9 : f32 to vector<768x32xf32>
    %21 = arith.select %18, %19, %20 : vector<768x32xi1>, vector<768x32xf32>
    %cst_10 = arith.constant dense<0.000000e+00> : vector<768x32xf32>
    %22 = tpu.matmul %21, %9, %cst_10 {dimension_numbers = #tpu.dot_dimension_numbers<[1], [0], [0], [1], [0, 0, 1, 1], [], []>} : vector<768x32xf32>, vector<32x32xf32>, vector<768x32xf32> -> vector<768x32xf32>
    %23 = tpu.iota {dimensions = array<i32: 1>} : vector<768x1000xi32>
    %c0_11 = arith.constant 0 : index
    %c0_12 = arith.constant 0 : index
    %24 = vector.load %arg2[%c0_11, %c0_12] : memref<768x1xi32, #tpu.memory_space<vmem>>, vector<768x1xi32>
    %25 = vector.broadcast %24 : vector<768x1xi32> to vector<768x1000xi32>
    %26 = arith.cmpi eq, %23, %25 : vector<768x1000xi32>
    %c0_13 = arith.constant 0 : index
    %c0_14 = arith.constant 0 : index
    %27 = vector.load %arg3[%c0_13, %c0_14] : memref<768x1xf32, #tpu.memory_space<vmem>>, vector<768x1xf32>
    %cst_15 = arith.constant 0.000000e+00 : f32
    %28 = vector.shape_cast %27 : vector<768x1xf32> to vector<768x1xf32>
    %29 = vector.broadcast %28 : vector<768x1xf32> to vector<768x1000xf32>
    %30 = vector.broadcast %cst_15 : f32 to vector<768x1000xf32>
    %31 = arith.select %26, %29, %30 : vector<768x1000xi1>, vector<768x1000xf32>
    %cst_16 = arith.constant dense<0.000000e+00> : vector<768x32xf32>
    %32 = tpu.matmul %31, %1, %cst_16 {dimension_numbers = #tpu.dot_dimension_numbers<[1], [0], [0], [1], [0, 0, 1, 1], [], []>} : vector<768x1000xf32>, vector<1000x32xf32>, vector<768x32xf32> -> vector<768x32xf32>
    %33 = arith.mulf %32, %22 : vector<768x32xf32>
    %cst_17 = arith.constant dense<0.000000e+00> : vector<768xf32>
    %34 = vector.multi_reduction <add>, %33, %cst_17 [1] : vector<768x32xf32> to vector<768xf32>
    %35 = vector.shape_cast %34 : vector<768xf32> to vector<768x1xf32>
    %cst_18 = arith.constant 0.000000e+00 : f32
    %36 = vector.broadcast %cst_18 : f32 to vector<768x1xf32>
    %37 = arith.minimumf %35, %36 : vector<768x1xf32>
    %38 = math.absf %35 : vector<768x1xf32>
    %cst_19 = arith.constant 0.000000e+00 : f32
    %39 = vector.broadcast %cst_19 : f32 to vector<768x1xf32>
    %40 = arith.subf %39, %38 : vector<768x1xf32>
    %41 = math.exp %40 : vector<768x1xf32>
    %cst_20 = arith.constant 1.000000e+00 : f32
    %42 = vector.broadcast %cst_20 : f32 to vector<768x1xf32>
    %43 = arith.addf %42, %41 : vector<768x1xf32>
    %44 = math.log %43 : vector<768x1xf32>
    %45 = arith.subf %37, %44 : vector<768x1xf32>
    %46 = vector.shape_cast %45 : vector<768x1xf32> to vector<1x768x1xf32>
    %cst_21 = arith.constant dense<0.000000e+00> : vector<1xf32>
    %47 = vector.multi_reduction <add>, %46, %cst_21 [1, 2] : vector<1x768x1xf32> to vector<1xf32>
    %48 = vector.shape_cast %47 : vector<1xf32> to vector<1x1x1xf32>
    %49 = vector.extract %48[0, 0, 0] : f32 from vector<1x1x1xf32>
    %50 = vector.broadcast %49 : f32 to vector<1x8x128xf32>
    %c0_22 = arith.constant 0 : index
    %c0_23 = arith.constant 0 : index
    %c0_24 = arith.constant 0 : index
    %51 = vector.load %arg6[%c0_22, %c0_23, %c0_24] : memref<1x8x128xf32, #tpu.memory_space<vmem>>, vector<1x8x128xf32>
    tpu.vector_store %arg6[%c0_22, %c0_23, %c0_24], %50 {strides = array<i32>} : memref<1x8x128xf32, #tpu.memory_space<vmem>>, vector<1x8x128xf32>,
    return
  }
  func.func @transform_0(%arg0: i32) -> (i32, i32) {
    %c0_i32 = arith.constant 0 : i32
    %c0_i32_0 = arith.constant 0 : i32
    return %arg0, %c0_i32 : i32, i32
  }
  func.func @transform_1(%arg0: i32) -> (i32, i32) {
    %c0_i32 = arith.constant 0 : i32
    %c0_i32_0 = arith.constant 0 : i32
    return %arg0, %c0_i32 : i32, i32
  }
  func.func @transform_2(%arg0: i32) -> (i32, i32) {
    %c0_i32 = arith.constant 0 : i32
    %c0_i32_0 = arith.constant 0 : i32
    return %arg0, %c0_i32 : i32, i32
  }
  func.func @transform_3(%arg0: i32) -> (i32, i32) {
    %c0_i32 = arith.constant 0 : i32
    %c0_i32_0 = arith.constant 0 : i32
    %c0_i32_1 = arith.constant 0 : i32
    return %c0_i32, %c0_i32_0 : i32, i32
  }
  func.func @transform_4(%arg0: i32) -> (i32, i32) {
    %c0_i32 = arith.constant 0 : i32
    %c0_i32_0 = arith.constant 0 : i32
    %c0_i32_1 = arith.constant 0 : i32
    return %c0_i32, %c0_i32_0 : i32, i32
  }
  func.func @transform_5(%arg0: i32) -> (i32, i32, i32) {
    %c0_i32 = arith.constant 0 : i32
    %c0_i32_0 = arith.constant 0 : i32
    %c0_i32_1 = arith.constant 0 : i32
    return %arg0, %c0_i32, %c0_i32_0 : i32, i32, i32
  }
}

</mosaic_0001>

<llo_original>
// kernel: tpu_custom_call.1
$region0: #{tpu_custom_call.1}
  #allocation0 [shape = 'u32[]', space=smem, size = 0x4, offset = 0x4, fixed_abs, tag = 'smem constant byte address 0x4 - core index']
  #allocation1 [shape = 'u32[144,128]{1,0:T(1,128)}', space=vmem, size = 0x12000, scoped, tag = 'internal scratch']
  %s0 = inlined_call_operand.vmem [shape: s32[64,1], index: 0, kind: input, shape index: {}]
  %s1 = inlined_call_operand.vmem [shape: s32[1536,1], index: 1, kind: input, shape index: {}]
  %s2 = inlined_call_operand.vmem [shape: f32[1536,1], index: 2, kind: input, shape index: {}]
  %s3 = inlined_call_operand.vmem [shape: f32[1000,32], index: 3, kind: input, shape index: {}]
  %s4 = inlined_call_operand.vmem [shape: f32[1000,32], index: 4, kind: input, shape index: {}]
  %s5 = inlined_call_operand.hbm [shape: f32[2,8,128], index: 5, kind: output, shape index: {}]
  %s6 = sld [smem:[#allocation0]]
  $region53: #{tpu_custom_call.1} parent=0
    _
  %s8 = ssub.s32 1, %s6
  %s9 = scalar_select 0, %s8, %s6
  $region1: #{tpu_custom_call.1} parent=0
    #allocation2 [shape = 'u8[8192]{0}', space=vmem, size = 0x2000, scoped, tag = 'output window, operand 0']
    #allocation3 [shape = 's32[2]{0}', space=sflag, size = 0x8, scoped, tag = 'scoped memory for tpu_custom_call.1']
    %10 = vsyncpa [#allocation3], 0
    %s11 = scalar_lea.sflag [#allocation3], 1
    %12 = vsyncpa %s11, 0
    loop: start=0, step=1, limit=4
    $region2: #{tpu_custom_call.1} parent=1 // loop_pre_header
      _
    $region3: #{tpu_custom_call.1} parent=1 // loop_header
      %s14 = sphi 0, %s18
      %p15 = scmp.ge.s32.totalorder %s14, 4
      %s24 = sphi 0, %s26
      %s27 = sphi 0, %s24
      %s28 = sphi 0, %s27
      %s44 = sphi 0, %s28
      %s50 = sphi 0, %s52
      %s53 = sphi 0, %s50
      %s54 = sphi 0, %s53
      %s70 = sphi 0, %s54
      %s76 = sphi 0, %s78
      %s79 = sphi 0, %s76
      %s80 = sphi 0, %s79
      %s96 = sphi 0, %s80
      %s100 = sphi 0, %s100
      %s102 = sphi 0, %s100
      %s103 = sphi 0, %s102
      %s117 = sphi 0, %s103
      %s121 = sphi 0, %s121
      %s123 = sphi 0, %s121
      %s124 = sphi 0, %s123
      %s138 = sphi 0, %s124
      %s144 = sphi 0, %s146
      %s147 = sphi 0, %s144
      %s148 = sphi 0, %s147
      %s164 = sphi 0, %s148
    $region4: #{tpu_custom_call.1} parent=1 // loop_header_branch
      %17 = sbr.rel (%p15) target = $region8
    $region5: #{tpu_custom_call.1} parent=1 // loop_body
      %s19 = ssub.s32 %s14, 1
      %s20 = ssub.s32 %s14, 2
      %s21 = sadd.s32 %s14, 1
      %s22 = ssub.s32 %s14, %s21
      %p23 = scmp.eq.s32.totalorder %s22, 0
      %s25 = sadd.s32 %s24, 1
      %s26 = scalar_select %p23, %s24, %s25
      %p29 = pneg %p23
      %p30 = scmp.eq.s32.totalorder %s14, 1
      %p31 = por %p29, %p30
      %p32 = scmp.ne.s32.totalorder %s24, %s27
      %p33 = scmp.eq.s32.totalorder %s14, 0
      %p34 = por %p32, %p33
      %p35 = scmp.ne.s32.totalorder %s24, %s27
      %p36 = scmp.eq.s32.totalorder %s19, 1
      %p37 = por %p35, %p36
      %p38 = scmp.ne.s32.totalorder %s27, %s28
      %p39 = scmp.eq.s32.totalorder %s19, 0
      %p40 = por %p38, %p39
      %p41 = scmp.ne.s32.totalorder %s27, %s28
      %p42 = scmp.eq.s32.totalorder %s20, 1
      %p43 = por %p41, %p42
      %p45 = scmp.ne.s32.totalorder %s28, %s44
      %p46 = scmp.eq.s32.totalorder %s20, 0
      %p47 = por %p45, %p46
      %s48 = ssub.s32 %s14, %s21
      %p49 = scmp.eq.s32.totalorder %s48, 0
      %s51 = sadd.s32 %s50, 1
      %s52 = scalar_select %p49, %s50, %s51
      %p55 = pneg %p49
      %p56 = scmp.eq.s32.totalorder %s14, 1
      %p57 = por %p55, %p56
      %p58 = scmp.ne.s32.totalorder %s50, %s53
      %p59 = scmp.eq.s32.totalorder %s14, 0
      %p60 = por %p58, %p59
      %p61 = scmp.ne.s32.totalorder %s50, %s53
      %p62 = scmp.eq.s32.totalorder %s19, 1
      %p63 = por %p61, %p62
      %p64 = scmp.ne.s32.totalorder %s53, %s54
      %p65 = scmp.eq.s32.totalorder %s19, 0
      %p66 = por %p64, %p65
      %p67 = scmp.ne.s32.totalorder %s53, %s54
      %p68 = scmp.eq.s32.totalorder %s20, 1
      %p69 = por %p67, %p68
      %p71 = scmp.ne.s32.totalorder %s54, %s70
      %p72 = scmp.eq.s32.totalorder %s20, 0
      %p73 = por %p71, %p72
      %s74 = ssub.s32 %s14, %s21
      %p75 = scmp.eq.s32.totalorder %s74, 0
      %s77 = sadd.s32 %s76, 1
      %s78 = scalar_select %p75, %s76, %s77
      %p81 = pneg %p75
      %p82 = scmp.eq.s32.totalorder %s14, 1
      %p83 = por %p81, %p82
      %p84 = scmp.ne.s32.totalorder %s76, %s79
      %p85 = scmp.eq.s32.totalorder %s14, 0
      %p86 = por %p84, %p85
      %p87 = scmp.ne.s32.totalorder %s76, %s79
      %p88 = scmp.eq.s32.totalorder %s19, 1
      %p89 = por %p87, %p88
      %p90 = scmp.ne.s32.totalorder %s79, %s80
      %p91 = scmp.eq.s32.totalorder %s19, 0
      %p92 = por %p90, %p91
      %p93 = scmp.ne.s32.totalorder %s79, %s80
      %p94 = scmp.eq.s32.totalorder %s20, 1
      %p95 = por %p93, %p94
      %p97 = scmp.ne.s32.totalorder %s80, %s96
      %p98 = scmp.eq.s32.totalorder %s20, 0
      %p99 = por %p97, %p98
      %s101 = sadd.s32 %s100, 1
      %p104 = scmp.eq.s32.totalorder %s14, 1
      %p105 = scmp.ne.s32.totalorder %s100, %s102
      %p106 = scmp.eq.s32.totalorder %s14, 0
      %p107 = por %p105, %p106
      %p108 = scmp.ne.s32.totalorder %s100, %s102
      %p109 = scmp.eq.s32.totalorder %s19, 1
      %p110 = por %p108, %p109
      %p111 = scmp.ne.s32.totalorder %s102, %s103
      %p112 = scmp.eq.s32.totalorder %s19, 0
      %p113 = por %p111, %p112
      %p114 = scmp.ne.s32.totalorder %s102, %s103
      %p115 = scmp.eq.s32.totalorder %s20, 1
      %p116 = por %p114, %p115
      %p118 = scmp.ne.s32.totalorder %s103, %s117
      %p119 = scmp.eq.s32.totalorder %s20, 0
      %p120 = por %p118, %p119
      %s122 = sadd.s32 %s121, 1
      %p125 = scmp.eq.s32.totalorder %s14, 1
      %p126 = scmp.ne.s32.totalorder %s121, %s123
      %p127 = scmp.eq.s32.totalorder %s14, 0
      %p128 = por %p126, %p127
      %p129 = scmp.ne.s32.totalorder %s121, %s123
      %p130 = scmp.eq.s32.totalorder %s19, 1
      %p131 = por %p129, %p130
      %p132 = scmp.ne.s32.totalorder %s123, %s124
      %p133 = scmp.eq.s32.totalorder %s19, 0
      %p134 = por %p132, %p133
      %p135 = scmp.ne.s32.totalorder %s123, %s124
      %p136 = scmp.eq.s32.totalorder %s20, 1
      %p137 = por %p135, %p136
      %p139 = scmp.ne.s32.totalorder %s124, %s138
      %p140 = scmp.eq.s32.totalorder %s20, 0
      %p141 = por %p139, %p140
      %s142 = ssub.s32 %s14, %s21
      %p143 = scmp.eq.s32.totalorder %s142, 0
      %s145 = sadd.s32 %s144, 1
      %s146 = scalar_select %p143, %s144, %s145
      %p149 = pneg %p143
      %p150 = scmp.eq.s32.totalorder %s14, 1
      %p151 = por %p149, %p150
      %p152 = scmp.ne.s32.totalorder %s144, %s147
      %p153 = scmp.eq.s32.totalorder %s14, 0
      %p154 = por %p152, %p153
      %p155 = scmp.ne.s32.totalorder %s144, %s147
      %p156 = scmp.eq.s32.totalorder %s19, 1
      %p157 = por %p155, %p156
      %p158 = scmp.ne.s32.totalorder %s147, %s148
      %p159 = scmp.eq.s32.totalorder %s19, 0
      %p160 = por %p158, %p159
      %p161 = scmp.ne.s32.totalorder %s147, %s148
      %p162 = scmp.eq.s32.totalorder %s20, 1
      %p163 = por %p161, %p162
      %p165 = scmp.ne.s32.totalorder %s148, %s164
      %p166 = scmp.eq.s32.totalorder %s20, 0
      %p167 = por %p165, %p166
      %p168 = scmp.le.s32.totalorder 1, %s14
      %p169 = scmp.lt.s32.totalorder %s14, 3
      %p170 = pnand %p168, %p169
      %p171 = pneg %p170
      // Predicated region
      $region9: #{tpu_custom_call.1} parent=5 // pred_check
        _
      $region10: #{tpu_custom_call.1} parent=5 // pred_check_branch
        %173 = sbr.rel (%p170) target = $region12
      $region11: #{tpu_custom_call.1} parent=5 // pred_region
        %s174 = ssub.s32 %s14, 1
        // Predicated region
        $region13: #{tpu_custom_call.1} parent=11 // pred_check
          %p175 = pneg %p113
        $region14: #{tpu_custom_call.1} parent=11 // pred_check_branch
          %177 = sbr.rel (%p175) target = $region16
        $region15: #{tpu_custom_call.1} parent=11 // pred_region
          _
        $region16: #{tpu_custom_call.1} parent=11 // pred_fallthru
          _
        // Predicated region
        $region17: #{tpu_custom_call.1} parent=11 // pred_check
          %p178 = pneg %p134
        $region18: #{tpu_custom_call.1} parent=11 // pred_check_branch
          %180 = sbr.rel (%p178) target = $region20
        $region19: #{tpu_custom_call.1} parent=11 // pred_region
          _
        $region20: #{tpu_custom_call.1} parent=11 // pred_fallthru
          _
      $region12: #{tpu_custom_call.1} parent=5 // pred_fallthru
        _
      %p181 = scmp.lt.s32.totalorder %s14, 2
      // Predicated region
      $region21: #{tpu_custom_call.1} parent=5 // pred_check
        %p182 = pneg %p181
      $region22: #{tpu_custom_call.1} parent=5 // pred_check_branch
        %184 = sbr.rel (%p182) target = $region24
      $region23: #{tpu_custom_call.1} parent=5 // pred_region
        // Predicated region
        $region25: #{tpu_custom_call.1} parent=23 // pred_check
          %p185 = pneg %p34
        $region26: #{tpu_custom_call.1} parent=23 // pred_check_branch
          %187 = sbr.rel (%p185) target = $region28
        $region27: #{tpu_custom_call.1} parent=23 // pred_region
          %s188 = smul.u32 4, %s14
          %p189 = scmp.lt.s32.totalorder %s188, 7
          %s190 = scalar_select %p189, %s188, 7
          %s191 = smul.addr %s190, 8
          %s192 = scalar_lea.vmem %s0, %s191
          %s193 = smul.u32 4, %s14
        $region28: #{tpu_custom_call.1} parent=23 // pred_fallthru
          _
        // Predicated region
        $region29: #{tpu_custom_call.1} parent=23 // pred_check
          %p194 = pneg %p60
        $region30: #{tpu_custom_call.1} parent=23 // pred_check_branch
          %196 = sbr.rel (%p194) target = $region32
        $region31: #{tpu_custom_call.1} parent=23 // pred_region
          %s197 = smul.u32 96, %s14
          %p198 = scmp.lt.s32.totalorder %s197, 191
          %s199 = scalar_select %p198, %s197, 191
          %s200 = smul.addr %s199, 8
          %s201 = scalar_lea.vmem %s1, %s200
          %s202 = smul.u32 96, %s14
        $region32: #{tpu_custom_call.1} parent=23 // pred_fallthru
          _
        // Predicated region
        $region33: #{tpu_custom_call.1} parent=23 // pred_check
          %p203 = pneg %p86
        $region34: #{tpu_custom_call.1} parent=23 // pred_check_branch
          %205 = sbr.rel (%p203) target = $region36
        $region35: #{tpu_custom_call.1} parent=23 // pred_region
          %s206 = smul.u32 96, %s14
          %p207 = scmp.lt.s32.totalorder %s206, 191
          %s208 = scalar_select %p207, %s206, 191
          %s209 = smul.addr %s208, 8
          %s210 = scalar_lea.vmem %s2, %s209
          %s211 = smul.u32 96, %s14
        $region36: #{tpu_custom_call.1} parent=23 // pred_fallthru
          _
      $region24: #{tpu_custom_call.1} parent=5 // pred_fallthru
        _
      %p212 = scmp.le.s32.totalorder 1, %s14
      %p213 = scmp.lt.s32.totalorder %s14, 3
      %p214 = pnand %p212, %p213
      %p215 = pneg %p214
      // Predicated region
      $region37: #{tpu_custom_call.1} parent=5 // pred_check
        _
      $region38: #{tpu_custom_call.1} parent=5 // pred_check_branch
        %217 = sbr.rel (%p214) target = $region40
      $region39: #{tpu_custom_call.1} parent=5 // pred_region
        %s218 = ssub.s32 %s14, 1
        %s219 = smul.u32 4, %s19
        %p220 = scmp.lt.s32.totalorder %s219, 7
        %s221 = scalar_select %p220, %s219, 7
        %s222 = smul.addr %s221, 8
        %s223 = scalar_lea.vmem %s0, %s222
        %p224 = pneg %p40
        %p225 = pneg %p37
        %s226 = smul.u32 96, %s19
        %p227 = scmp.lt.s32.totalorder %s226, 191
        %s228 = scalar_select %p227, %s226, 191
        %s229 = smul.addr %s228, 8
        %s230 = scalar_lea.vmem %s1, %s229
        %p231 = pneg %p66
        %p232 = pneg %p63
        %s233 = smul.u32 96, %s19
        %p234 = scmp.lt.s32.totalorder %s233, 191
        %s235 = scalar_select %p234, %s233, 191
        %s236 = smul.addr %s235, 8
        %s237 = scalar_lea.vmem %s2, %s236
        %p238 = pneg %p92
        %p239 = pneg %p89
        %p240 = pneg %p113
        %p241 = pneg %p110
        %p242 = pneg %p134
        %p243 = pneg %p131
        %p244 = pneg %p160
        %p245 = pneg %p157
        %s246 = sand.u32 %s147, 1
        %s247 = scalar_lea.sflag [#allocation3], %s246
        %s248 = sand.u32 %s147, 1
        %s249 = smul.addr %s248, 8
        %s250 = scalar_lea.vmem [#allocation2], %s249
        %s251 = smul.u32 4, %s19
        %p252 = scmp.lt.s32.totalorder %s251, 7
        %s253 = scalar_select %p252, %s251, 7
        %s254 = smul.addr %s253, 8
        %s255 = scalar_lea.vmem %s0, %s254
        %s256 = smul.u32 4, %s19
        %s257 = smul.u32 96, %s19
        %p258 = scmp.lt.s32.totalorder %s257, 191
        %s259 = scalar_select %p258, %s257, 191
        %s260 = smul.addr %s259, 8
        %s261 = scalar_lea.vmem %s1, %s260
        %s262 = smul.u32 96, %s19
        %s263 = smul.u32 96, %s19
        %p264 = scmp.lt.s32.totalorder %s263, 191
        %s265 = scalar_select %p264, %s263, 191
        %s266 = smul.addr %s265, 8
        %s267 = scalar_lea.vmem %s2, %s266
        %s268 = smul.u32 96, %s19
        %v269 = vld [vmem:[%s3] sm:$0xff]
        %v270 = vld [vmem:[%s3 + $0x8] sm:$0xff]
        %v271 = vld [vmem:[%s3 + $0x10] sm:$0xff]
        %v272 = vld [vmem:[%s3 + $0x18] sm:$0xff]
        %v273 = vld [vmem:[%s3 + $0x20] sm:$0xff]
        %v274 = vld [vmem:[%s3 + $0x28] sm:$0xff]
        %v275 = vld [vmem:[%s3 + $0x30] sm:$0xff]
        %v276 = vld [vmem:[%s3 + $0x38] sm:$0xff]
        %v277 = vld [vmem:[%s3 + $0x40] sm:$0xff]
        %v278 = vld [vmem:[%s3 + $0x48] sm:$0xff]
        %v279 = vld [vmem:[%s3 + $0x50] sm:$0xff]
        %v280 = vld [vmem:[%s3 + $0x58] sm:$0xff]
        %v281 = vld [vmem:[%s3 + $0x60] sm:$0xff]
        %v282 = vld [vmem:[%s3 + $0x68] sm:$0xff]
        %v283 = vld [vmem:[%s3 + $0x70] sm:$0xff]
        %v284 = vld [vmem:[%s3 + $0x78] sm:$0xff]
        %v285 = vld [vmem:[%s3 + $0x80] sm:$0xff]
        %v286 = vld [vmem:[%s3 + $0x88] sm:$0xff]
        %v287 = vld [vmem:[%s3 + $0x90] sm:$0xff]
        %v288 = vld [vmem:[%s3 + $0x98] sm:$0xff]
        %v289 = vld [vmem:[%s3 + $0xa0] sm:$0xff]
        %v290 = vld [vmem:[%s3 + $0xa8] sm:$0xff]
        %v291 = vld [vmem:[%s3 + $0xb0] sm:$0xff]
        %v292 = vld [vmem:[%s3 + $0xb8] sm:$0xff]
        %v293 = vld [vmem:[%s3 + $0xc0] sm:$0xff]
        %v294 = vld [vmem:[%s3 + $0xc8] sm:$0xff]
        %v295 = vld [vmem:[%s3 + $0xd0] sm:$0xff]
        %v296 = vld [vmem:[%s3 + $0xd8] sm:$0xff]
        %v297 = vld [vmem:[%s3 + $0xe0] sm:$0xff]
        %v298 = vld [vmem:[%s3 + $0xe8] sm:$0xff]
        %v299 = vld [vmem:[%s3 + $0xf0] sm:$0xff]
        %v300 = vld [vmem:[%s3 + $0xf8] sm:$0xff]
        %v301 = vld [vmem:[%s3 + $0x100] sm:$0xff]
        %v302 = vld [vmem:[%s3 + $0x108] sm:$0xff]
        %v303 = vld [vmem:[%s3 + $0x110] sm:$0xff]
        %v304 = vld [vmem:[%s3 + $0x118] sm:$0xff]
        %v305 = vld [vmem:[%s3 + $0x120] sm:$0xff]
        %v306 = vld [vmem:[%s3 + $0x128] sm:$0xff]
        %v307 = vld [vmem:[%s3 + $0x130] sm:$0xff]
        %v308 = vld [vmem:[%s3 + $0x138] sm:$0xff]
        %v309 = vld [vmem:[%s3 + $0x140] sm:$0xff]
        %v310 = vld [vmem:[%s3 + $0x148] sm:$0xff]
        %v311 = vld [vmem:[%s3 + $0x150] sm:$0xff]
        %v312 = vld [vmem:[%s3 + $0x158] sm:$0xff]
        %v313 = vld [vmem:[%s3 + $0x160] sm:$0xff]
        %v314 = vld [vmem:[%s3 + $0x168] sm:$0xff]
        %v315 = vld [vmem:[%s3 + $0x170] sm:$0xff]
        %v316 = vld [vmem:[%s3 + $0x178] sm:$0xff]
        %v317 = vld [vmem:[%s3 + $0x180] sm:$0xff]
        %v318 = vld [vmem:[%s3 + $0x188] sm:$0xff]
        %v319 = vld [vmem:[%s3 + $0x190] sm:$0xff]
        %v320 = vld [vmem:[%s3 + $0x198] sm:$0xff]
        %v321 = vld [vmem:[%s3 + $0x1a0] sm:$0xff]
        %v322 = vld [vmem:[%s3 + $0x1a8] sm:$0xff]
        %v323 = vld [vmem:[%s3 + $0x1b0] sm:$0xff]
        %v324 = vld [vmem:[%s3 + $0x1b8] sm:$0xff]
        %v325 = vld [vmem:[%s3 + $0x1c0] sm:$0xff]
        %v326 = vld [vmem:[%s3 + $0x1c8] sm:$0xff]
        %v327 = vld [vmem:[%s3 + $0x1d0] sm:$0xff]
        %v328 = vld [vmem:[%s3 + $0x1d8] sm:$0xff]
        %v329 = vld [vmem:[%s3 + $0x1e0] sm:$0xff]
        %v330 = vld [vmem:[%s3 + $0x1e8] sm:$0xff]
        %v331 = vld [vmem:[%s3 + $0x1f0] sm:$0xff]
        %v332 = vld [vmem:[%s3 + $0x1f8] sm:$0xff]
        %v333 = vld [vmem:[%s3 + $0x200] sm:$0xff]
        %v334 = vld [vmem:[%s3 + $0x208] sm:$0xff]
        %v335 = vld [vmem:[%s3 + $0x210] sm:$0xff]
        %v336 = vld [vmem:[%s3 + $0x218] sm:$0xff]
        %v337 = vld [vmem:[%s3 + $0x220] sm:$0xff]
        %v338 = vld [vmem:[%s3 + $0x228] sm:$0xff]
        %v339 = vld [vmem:[%s3 + $0x230] sm:$0xff]
        %v340 = vld [vmem:[%s3 + $0x238] sm:$0xff]
        %v341 = vld [vmem:[%s3 + $0x240] sm:$0xff]
        %v342 = vld [vmem:[%s3 + $0x248] sm:$0xff]
        %v343 = vld [vmem:[%s3 + $0x250] sm:$0xff]
        %v344 = vld [vmem:[%s3 + $0x258] sm:$0xff]
        %v345 = vld [vmem:[%s3 + $0x260] sm:$0xff]
        %v346 = vld [vmem:[%s3 + $0x268] sm:$0xff]
        %v347 = vld [vmem:[%s3 + $0x270] sm:$0xff]
        %v348 = vld [vmem:[%s3 + $0x278] sm:$0xff]
        %v349 = vld [vmem:[%s3 + $0x280] sm:$0xff]
        %v350 = vld [vmem:[%s3 + $0x288] sm:$0xff]
        %v351 = vld [vmem:[%s3 + $0x290] sm:$0xff]
        %v352 = vld [vmem:[%s3 + $0x298] sm:$0xff]
        %v353 = vld [vmem:[%s3 + $0x2a0] sm:$0xff]
        %v354 = vld [vmem:[%s3 + $0x2a8] sm:$0xff]
        %v355 = vld [vmem:[%s3 + $0x2b0] sm:$0xff]
        %v356 = vld [vmem:[%s3 + $0x2b8] sm:$0xff]
        %v357 = vld [vmem:[%s3 + $0x2c0] sm:$0xff]
        %v358 = vld [vmem:[%s3 + $0x2c8] sm:$0xff]
        %v359 = vld [vmem:[%s3 + $0x2d0] sm:$0xff]
        %v360 = vld [vmem:[%s3 + $0x2d8] sm:$0xff]
        %v361 = vld [vmem:[%s3 + $0x2e0] sm:$0xff]
        %v362 = vld [vmem:[%s3 + $0x2e8] sm:$0xff]
        %v363 = vld [vmem:[%s3 + $0x2f0] sm:$0xff]
        %v364 = vld [vmem:[%s3 + $0x2f8] sm:$0xff]
        %v365 = vld [vmem:[%s3 + $0x300] sm:$0xff]
        %v366 = vld [vmem:[%s3 + $0x308] sm:$0xff]
        %v367 = vld [vmem:[%s3 + $0x310] sm:$0xff]
        %v368 = vld [vmem:[%s3 + $0x318] sm:$0xff]
        %v369 = vld [vmem:[%s3 + $0x320] sm:$0xff]
        %v370 = vld [vmem:[%s3 + $0x328] sm:$0xff]
        %v371 = vld [vmem:[%s3 + $0x330] sm:$0xff]
        %v372 = vld [vmem:[%s3 + $0x338] sm:$0xff]
        %v373 = vld [vmem:[%s3 + $0x340] sm:$0xff]
        %v374 = vld [vmem:[%s3 + $0x348] sm:$0xff]
        %v375 = vld [vmem:[%s3 + $0x350] sm:$0xff]
        %v376 = vld [vmem:[%s3 + $0x358] sm:$0xff]
        %v377 = vld [vmem:[%s3 + $0x360] sm:$0xff]
        %v378 = vld [vmem:[%s3 + $0x368] sm:$0xff]
        %v379 = vld [vmem:[%s3 + $0x370] sm:$0xff]
        %v380 = vld [vmem:[%s3 + $0x378] sm:$0xff]
        %v381 = vld [vmem:[%s3 + $0x380] sm:$0xff]
        %v382 = vld [vmem:[%s3 + $0x388] sm:$0xff]
        %v383 = vld [vmem:[%s3 + $0x390] sm:$0xff]
        %v384 = vld [vmem:[%s3 + $0x398] sm:$0xff]
        %v385 = vld [vmem:[%s3 + $0x3a0] sm:$0xff]
        %v386 = vld [vmem:[%s3 + $0x3a8] sm:$0xff]
        %v387 = vld [vmem:[%s3 + $0x3b0] sm:$0xff]
        %v388 = vld [vmem:[%s3 + $0x3b8] sm:$0xff]
        %v389 = vld [vmem:[%s3 + $0x3c0] sm:$0xff]
        %v390 = vld [vmem:[%s3 + $0x3c8] sm:$0xff]
        %v391 = vld [vmem:[%s3 + $0x3d0] sm:$0xff]
        %v392 = vld [vmem:[%s3 + $0x3d8] sm:$0xff]
        %v393 = vld [vmem:[%s3 + $0x3e0] sm:$0xff]
        %v394 = vld [vmem:[%s4] sm:$0xff]
        %v395 = vld [vmem:[%s4 + $0x8] sm:$0xff]
        %v396 = vld [vmem:[%s4 + $0x10] sm:$0xff]
        %v397 = vld [vmem:[%s4 + $0x18] sm:$0xff]
        %v398 = vld [vmem:[%s4 + $0x20] sm:$0xff]
        %v399 = vld [vmem:[%s4 + $0x28] sm:$0xff]
        %v400 = vld [vmem:[%s4 + $0x30] sm:$0xff]
        %v401 = vld [vmem:[%s4 + $0x38] sm:$0xff]
        %v402 = vld [vmem:[%s4 + $0x40] sm:$0xff]
        %v403 = vld [vmem:[%s4 + $0x48] sm:$0xff]
        %v404 = vld [vmem:[%s4 + $0x50] sm:$0xff]
        %v405 = vld [vmem:[%s4 + $0x58] sm:$0xff]
        %v406 = vld [vmem:[%s4 + $0x60] sm:$0xff]
        %v407 = vld [vmem:[%s4 + $0x68] sm:$0xff]
        %v408 = vld [vmem:[%s4 + $0x70] sm:$0xff]
        %v409 = vld [vmem:[%s4 + $0x78] sm:$0xff]
        %v410 = vld [vmem:[%s4 + $0x80] sm:$0xff]
        %v411 = vld [vmem:[%s4 + $0x88] sm:$0xff]
        %v412 = vld [vmem:[%s4 + $0x90] sm:$0xff]
        %v413 = vld [vmem:[%s4 + $0x98] sm:$0xff]
        %v414 = vld [vmem:[%s4 + $0xa0] sm:$0xff]
        %v415 = vld [vmem:[%s4 + $0xa8] sm:$0xff]
        %v416 = vld [vmem:[%s4 + $0xb0] sm:$0xff]
        %v417 = vld [vmem:[%s4 + $0xb8] sm:$0xff]
        %v418 = vld [vmem:[%s4 + $0xc0] sm:$0xff]
        %v419 = vld [vmem:[%s4 + $0xc8] sm:$0xff]
        %v420 = vld [vmem:[%s4 + $0xd0] sm:$0xff]
        %v421 = vld [vmem:[%s4 + $0xd8] sm:$0xff]
        %v422 = vld [vmem:[%s4 + $0xe0] sm:$0xff]
        %v423 = vld [vmem:[%s4 + $0xe8] sm:$0xff]
        %v424 = vld [vmem:[%s4 + $0xf0] sm:$0xff]
        %v425 = vld [vmem:[%s4 + $0xf8] sm:$0xff]
        %v426 = vld [vmem:[%s4 + $0x100] sm:$0xff]
        %v427 = vld [vmem:[%s4 + $0x108] sm:$0xff]
        %v428 = vld [vmem:[%s4 + $0x110] sm:$0xff]
        %v429 = vld [vmem:[%s4 + $0x118] sm:$0xff]
        %v430 = vld [vmem:[%s4 + $0x120] sm:$0xff]
        %v431 = vld [vmem:[%s4 + $0x128] sm:$0xff]
        %v432 = vld [vmem:[%s4 + $0x130] sm:$0xff]
        %v433 = vld [vmem:[%s4 + $0x138] sm:$0xff]
        %v434 = vld [vmem:[%s4 + $0x140] sm:$0xff]
        %v435 = vld [vmem:[%s4 + $0x148] sm:$0xff]
        %v436 = vld [vmem:[%s4 + $0x150] sm:$0xff]
        %v437 = vld [vmem:[%s4 + $0x158] sm:$0xff]
        %v438 = vld [vmem:[%s4 + $0x160] sm:$0xff]
        %v439 = vld [vmem:[%s4 + $0x168] sm:$0xff]
        %v440 = vld [vmem:[%s4 + $0x170] sm:$0xff]
        %v441 = vld [vmem:[%s4 + $0x178] sm:$0xff]
        %v442 = vld [vmem:[%s4 + $0x180] sm:$0xff]
        %v443 = vld [vmem:[%s4 + $0x188] sm:$0xff]
        %v444 = vld [vmem:[%s4 + $0x190] sm:$0xff]
        %v445 = vld [vmem:[%s4 + $0x198] sm:$0xff]
        %v446 = vld [vmem:[%s4 + $0x1a0] sm:$0xff]
        %v447 = vld [vmem:[%s4 + $0x1a8] sm:$0xff]
        %v448 = vld [vmem:[%s4 + $0x1b0] sm:$0xff]
        %v449 = vld [vmem:[%s4 + $0x1b8] sm:$0xff]
        %v450 = vld [vmem:[%s4 + $0x1c0] sm:$0xff]
        %v451 = vld [vmem:[%s4 + $0x1c8] sm:$0xff]
        %v452 = vld [vmem:[%s4 + $0x1d0] sm:$0xff]
        %v453 = vld [vmem:[%s4 + $0x1d8] sm:$0xff]
        %v454 = vld [vmem:[%s4 + $0x1e0] sm:$0xff]
        %v455 = vld [vmem:[%s4 + $0x1e8] sm:$0xff]
        %v456 = vld [vmem:[%s4 + $0x1f0] sm:$0xff]
        %v457 = vld [vmem:[%s4 + $0x1f8] sm:$0xff]
        %v458 = vld [vmem:[%s4 + $0x200] sm:$0xff]
        %v459 = vld [vmem:[%s4 + $0x208] sm:$0xff]
        %v460 = vld [vmem:[%s4 + $0x210] sm:$0xff]
        %v461 = vld [vmem:[%s4 + $0x218] sm:$0xff]
        %v462 = vld [vmem:[%s4 + $0x220] sm:$0xff]
        %v463 = vld [vmem:[%s4 + $0x228] sm:$0xff]
        %v464 = vld [vmem:[%s4 + $0x230] sm:$0xff]
        %v465 = vld [vmem:[%s4 + $0x238] sm:$0xff]
        %v466 = vld [vmem:[%s4 + $0x240] sm:$0xff]
        %v467 = vld [vmem:[%s4 + $0x248] sm:$0xff]
        %v468 = vld [vmem:[%s4 + $0x250] sm:$0xff]
        %v469 = vld [vmem:[%s4 + $0x258] sm:$0xff]
        %v470 = vld [vmem:[%s4 + $0x260] sm:$0xff]
        %v471 = vld [vmem:[%s4 + $0x268] sm:$0xff]
        %v472 = vld [vmem:[%s4 + $0x270] sm:$0xff]
        %v473 = vld [vmem:[%s4 + $0x278] sm:$0xff]
        %v474 = vld [vmem:[%s4 + $0x280] sm:$0xff]
        %v475 = vld [vmem:[%s4 + $0x288] sm:$0xff]
        %v476 = vld [vmem:[%s4 + $0x290] sm:$0xff]
        %v477 = vld [vmem:[%s4 + $0x298] sm:$0xff]
        %v478 = vld [vmem:[%s4 + $0x2a0] sm:$0xff]
        %v479 = vld [vmem:[%s4 + $0x2a8] sm:$0xff]
        %v480 = vld [vmem:[%s4 + $0x2b0] sm:$0xff]
        %v481 = vld [vmem:[%s4 + $0x2b8] sm:$0xff]
        %v482 = vld [vmem:[%s4 + $0x2c0] sm:$0xff]
        %v483 = vld [vmem:[%s4 + $0x2c8] sm:$0xff]
        %v484 = vld [vmem:[%s4 + $0x2d0] sm:$0xff]
        %v485 = vld [vmem:[%s4 + $0x2d8] sm:$0xff]
        %v486 = vld [vmem:[%s4 + $0x2e0] sm:$0xff]
        %v487 = vld [vmem:[%s4 + $0x2e8] sm:$0xff]
        %v488 = vld [vmem:[%s4 + $0x2f0] sm:$0xff]
        %v489 = vld [vmem:[%s4 + $0x2f8] sm:$0xff]
        %v490 = vld [vmem:[%s4 + $0x300] sm:$0xff]
        %v491 = vld [vmem:[%s4 + $0x308] sm:$0xff]
        %v492 = vld [vmem:[%s4 + $0x310] sm:$0xff]
        %v493 = vld [vmem:[%s4 + $0x318] sm:$0xff]
        %v494 = vld [vmem:[%s4 + $0x320] sm:$0xff]
        %v495 = vld [vmem:[%s4 + $0x328] sm:$0xff]
        %v496 = vld [vmem:[%s4 + $0x330] sm:$0xff]
        %v497 = vld [vmem:[%s4 + $0x338] sm:$0xff]
        %v498 = vld [vmem:[%s4 + $0x340] sm:$0xff]
        %v499 = vld [vmem:[%s4 + $0x348] sm:$0xff]
        %v500 = vld [vmem:[%s4 + $0x350] sm:$0xff]
        %v501 = vld [vmem:[%s4 + $0x358] sm:$0xff]
        %v502 = vld [vmem:[%s4 + $0x360] sm:$0xff]
        %v503 = vld [vmem:[%s4 + $0x368] sm:$0xff]
        %v504 = vld [vmem:[%s4 + $0x370] sm:$0xff]
        %v505 = vld [vmem:[%s4 + $0x378] sm:$0xff]
        %v506 = vld [vmem:[%s4 + $0x380] sm:$0xff]
        %v507 = vld [vmem:[%s4 + $0x388] sm:$0xff]
        %v508 = vld [vmem:[%s4 + $0x390] sm:$0xff]
        %v509 = vld [vmem:[%s4 + $0x398] sm:$0xff]
        %v510 = vld [vmem:[%s4 + $0x3a0] sm:$0xff]
        %v511 = vld [vmem:[%s4 + $0x3a8] sm:$0xff]
        %v512 = vld [vmem:[%s4 + $0x3b0] sm:$0xff]
        %v513 = vld [vmem:[%s4 + $0x3b8] sm:$0xff]
        %v514 = vld [vmem:[%s4 + $0x3c0] sm:$0xff]
        %v515 = vld [vmem:[%s4 + $0x3c8] sm:$0xff]
        %v516 = vld [vmem:[%s4 + $0x3d0] sm:$0xff]
        %v517 = vld [vmem:[%s4 + $0x3d8] sm:$0xff]
        %v518 = vld [vmem:[%s4 + $0x3e0] sm:$0xff]
        %v519 = vlaneseq
        %v520 = vand.u32 %v519, 127
        %v521 = vadd.s32 %v520, 128
        %v522 = vadd.s32 %v520, 256
        %v523 = vadd.s32 %v520, 384
        %v524 = vadd.s32 %v520, 512
        %v525 = vadd.s32 %v520, 640
        %v526 = vadd.s32 %v520, 768
        %v527 = vadd.s32 %v520, 896
        %v528 = vld [vmem:[%s255] sm:$0xff]
        %v529 = vld [vmem:[%s255 + $0x8] sm:$0xff]
        %v530 = vld [vmem:[%s255 + $0x10] sm:$0xff]
        %v531 = vld [vmem:[%s255 + $0x18] sm:$0xff]
        %532 = vset.pattern.permute.xlu0 0
        %533 = vperm.xlu0 %532, %v528
        %v534 = vpop.permute.xlu0 %533
        %535 = vset.pattern.permute.xlu0 0
        %536 = vperm.xlu0 %535, %v529
        %v537 = vpop.permute.xlu0 %536
        %538 = vset.pattern.permute.xlu0 0
        %539 = vperm.xlu0 %538, %v530
        %v540 = vpop.permute.xlu0 %539
        %541 = vset.pattern.permute.xlu0 0
        %542 = vperm.xlu0 %541, %v531
        %v543 = vpop.permute.xlu0 %542
        %vm544 = vcmp.eq.s32.totalorder %v520, %v534
        %vm545 = vcmp.eq.s32.totalorder %v521, %v534
        %vm546 = vcmp.eq.s32.totalorder %v522, %v534
        %vm547 = vcmp.eq.s32.totalorder %v523, %v534
        %vm548 = vcmp.eq.s32.totalorder %v524, %v534
        %vm549 = vcmp.eq.s32.totalorder %v525, %v534
        %vm550 = vcmp.eq.s32.totalorder %v526, %v534
        %vm551 = vcmp.eq.s32.totalorder %v527, %v534
        %vm552 = vcmp.eq.s32.totalorder %v520, %v537
        %vm553 = vcmp.eq.s32.totalorder %v521, %v537
        %vm554 = vcmp.eq.s32.totalorder %v522, %v537
        %vm555 = vcmp.eq.s32.totalorder %v523, %v537
        %vm556 = vcmp.eq.s32.totalorder %v524, %v537
        %vm557 = vcmp.eq.s32.totalorder %v525, %v537
        %vm558 = vcmp.eq.s32.totalorder %v526, %v537
        %vm559 = vcmp.eq.s32.totalorder %v527, %v537
        %vm560 = vcmp.eq.s32.totalorder %v520, %v540
        %vm561 = vcmp.eq.s32.totalorder %v521, %v540
        %vm562 = vcmp.eq.s32.totalorder %v522, %v540
        %vm563 = vcmp.eq.s32.totalorder %v523, %v540
        %vm564 = vcmp.eq.s32.totalorder %v524, %v540
        %vm565 = vcmp.eq.s32.totalorder %v525, %v540
        %vm566 = vcmp.eq.s32.totalorder %v526, %v540
        %vm567 = vcmp.eq.s32.totalorder %v527, %v540
        %vm568 = vcmp.eq.s32.totalorder %v520, %v543
        %vm569 = vcmp.eq.s32.totalorder %v521, %v543
        %vm570 = vcmp.eq.s32.totalorder %v522, %v543
        %vm571 = vcmp.eq.s32.totalorder %v523, %v543
        %vm572 = vcmp.eq.s32.totalorder %v524, %v543
        %vm573 = vcmp.eq.s32.totalorder %v525, %v543
        %vm574 = vcmp.eq.s32.totalorder %v526, %v543
        %vm575 = vcmp.eq.s32.totalorder %v527, %v543
        %v576 = vsel %vm544, 1.0, 0.0
        %v577 = vsel %vm545, 1.0, 0.0
        %v578 = vsel %vm546, 1.0, 0.0
        %v579 = vsel %vm547, 1.0, 0.0
        %v580 = vsel %vm548, 1.0, 0.0
        %v581 = vsel %vm549, 1.0, 0.0
        %v582 = vsel %vm550, 1.0, 0.0
        %v583 = vsel %vm551, 1.0, 0.0
        %v584 = vsel %vm552, 1.0, 0.0
        %v585 = vsel %vm553, 1.0, 0.0
        %v586 = vsel %vm554, 1.0, 0.0
        %v587 = vsel %vm555, 1.0, 0.0
        %v588 = vsel %vm556, 1.0, 0.0
        %v589 = vsel %vm557, 1.0, 0.0
        %v590 = vsel %vm558, 1.0, 0.0
        %v591 = vsel %vm559, 1.0, 0.0
        %v592 = vsel %vm560, 1.0, 0.0
        %v593 = vsel %vm561, 1.0, 0.0
        %v594 = vsel %vm562, 1.0, 0.0
        %v595 = vsel %vm563, 1.0, 0.0
        %v596 = vsel %vm564, 1.0, 0.0
        %v597 = vsel %vm565, 1.0, 0.0
        %v598 = vsel %vm566, 1.0, 0.0
        %v599 = vsel %vm567, 1.0, 0.0
        %v600 = vsel %vm568, 1.0, 0.0
        %v601 = vsel %vm569, 1.0, 0.0
        %v602 = vsel %vm570, 1.0, 0.0
        %v603 = vsel %vm571, 1.0, 0.0
        %v604 = vsel %vm572, 1.0, 0.0
        %v605 = vsel %vm573, 1.0, 0.0
        %v606 = vsel %vm574, 1.0, 0.0
        %v607 = vsel %vm575, 1.0, 0.0
        %vm608 = vcmask 850944
        %v610 = vsel %vm608, %v583, 0
        %v613 = vsel %vm608, %v591, 0
        %v616 = vsel %vm608, %v599, 0
        %v619 = vsel %vm608, %v607, 0
        %621 = vmatprep.subr.mxu0 0.0
        %622 = vmatpush1.msra.mxu0 %v284
        %623 = vmatprep.subr.mxu0 0.0
        %624 = vmatpush1.msra.mxu0 %v283
        %625 = vmatprep.subr.mxu0 0.0
        %626 = vmatpush1.msra.mxu0 %v282
        %627 = vmatprep.subr.mxu0 0.0
        %628 = vmatpush1.msra.mxu0 %v281
        %629 = vmatprep.subr.mxu0 0.0
        %630 = vmatpush1.msra.mxu0 %v280
        %631 = vmatprep.subr.mxu0 0.0
        %632 = vmatpush1.msra.mxu0 %v279
        %633 = vmatprep.subr.mxu0 0.0
        %634 = vmatpush1.msra.mxu0 %v278
        %635 = vmatprep.subr.mxu0 0.0
        %636 = vmatpush1.msra.mxu0 %v277
        %637 = vmatprep.subr.mxu0 0.0
        %638 = vmatpush1.msra.mxu0 %v276
        %639 = vmatprep.subr.mxu0 0.0
        %640 = vmatpush1.msra.mxu0 %v275
        %641 = vmatprep.subr.mxu0 0.0
        %642 = vmatpush1.msra.mxu0 %v274
        %643 = vmatprep.subr.mxu0 0.0
        %644 = vmatpush1.msra.mxu0 %v273
        %645 = vmatprep.subr.mxu0 0.0
        %646 = vmatpush1.msra.mxu0 %v272
        %647 = vmatprep.subr.mxu0 0.0
        %648 = vmatpush1.msra.mxu0 %v271
        %649 = vmatprep.subr.mxu0 0.0
        %650 = vmatpush1.msra.mxu0 %v270
        %651 = vmatprep.subr.mxu0 0.0
        %652 = vmatpush1.msra.mxu0 %v269
        %653 = vmatprep.subr.mxu0 0.0
        %654 = vmatpush2.msra.mxu0 %v300
        %655 = vmatprep.subr.mxu0 0.0
        %656 = vmatpush2.msra.mxu0 %v299
        %657 = vmatprep.subr.mxu0 0.0
        %658 = vmatpush2.msra.mxu0 %v298
        %659 = vmatprep.subr.mxu0 0.0
        %660 = vmatpush2.msra.mxu0 %v297
        %661 = vmatprep.subr.mxu0 0.0
        %662 = vmatpush2.msra.mxu0 %v296
        %663 = vmatprep.subr.mxu0 0.0
        %664 = vmatpush2.msra.mxu0 %v295
        %665 = vmatprep.subr.mxu0 0.0
        %666 = vmatpush2.msra.mxu0 %v294
        %667 = vmatprep.subr.mxu0 0.0
        %668 = vmatpush2.msra.mxu0 %v293
        %669 = vmatprep.subr.mxu0 0.0
        %670 = vmatpush2.msra.mxu0 %v292
        %671 = vmatprep.subr.mxu0 0.0
        %672 = vmatpush2.msra.mxu0 %v291
        %673 = vmatprep.subr.mxu0 0.0
        %674 = vmatpush2.msra.mxu0 %v290
        %675 = vmatprep.subr.mxu0 0.0
        %676 = vmatpush2.msra.mxu0 %v289
        %677 = vmatprep.subr.mxu0 0.0
        %678 = vmatpush2.msra.mxu0 %v288
        %679 = vmatprep.subr.mxu0 0.0
        %680 = vmatpush2.msra.mxu0 %v287
        %681 = vmatprep.subr.mxu0 0.0
        %682 = vmatpush2.msra.mxu0 %v286
        %683 = vmatprep.subr.mxu0 0.0
        %684 = vmatpush2.msra.mxu0 %v285
        %685 = vmatprep.mubr.f32.mxu0 %v577
        %686 = vmatmul.mubr.f32.gmra.mxu0 %v576
        %v687 = vpop.f32.mrf.mxu0
        %v688 = vadd.f32 0.0, %v687
        %v689 = vpop.f32.mrf.mxu0
        %690 = vmatprep.mubr.f32.mxu0 %v585
        %691 = vmatmul.mubr.f32.gmra.mxu0 %v584
        %v692 = vpop.f32.mrf.mxu0
        %v693 = vadd.f32 0.0, %v692
        %v694 = vpop.f32.mrf.mxu0
        %695 = vmatprep.mubr.f32.mxu0 %v593
        %696 = vmatmul.mubr.f32.gmra.mxu0 %v592
        %v697 = vpop.f32.mrf.mxu0
        %v698 = vadd.f32 0.0, %v697
        %v699 = vpop.f32.mrf.mxu0
        %700 = vmatprep.mubr.f32.mxu0 %v601
        %701 = vmatmul.mubr.f32.gmra.mxu0 %v600
        %v702 = vpop.f32.mrf.mxu0
        %v703 = vadd.f32 0.0, %v702
        %v704 = vpop.f32.mrf.mxu0
        %705 = vdwg.mxu0
        %706 = vmatprep.subr.mxu0 0.0
        %707 = vmatpush1.msra.mxu0 %v316
        %708 = vmatprep.subr.mxu0 0.0
        %709 = vmatpush1.msra.mxu0 %v315
        %710 = vmatprep.subr.mxu0 0.0
        %711 = vmatpush1.msra.mxu0 %v314
        %712 = vmatprep.subr.mxu0 0.0
        %713 = vmatpush1.msra.mxu0 %v313
        %714 = vmatprep.subr.mxu0 0.0
        %715 = vmatpush1.msra.mxu0 %v312
        %716 = vmatprep.subr.mxu0 0.0
        %717 = vmatpush1.msra.mxu0 %v311
        %718 = vmatprep.subr.mxu0 0.0
        %719 = vmatpush1.msra.mxu0 %v310
        %720 = vmatprep.subr.mxu0 0.0
        %721 = vmatpush1.msra.mxu0 %v309
        %722 = vmatprep.subr.mxu0 0.0
        %723 = vmatpush1.msra.mxu0 %v308
        %724 = vmatprep.subr.mxu0 0.0
        %725 = vmatpush1.msra.mxu0 %v307
        %726 = vmatprep.subr.mxu0 0.0
        %727 = vmatpush1.msra.mxu0 %v306
        %728 = vmatprep.subr.mxu0 0.0
        %729 = vmatpush1.msra.mxu0 %v305
        %730 = vmatprep.subr.mxu0 0.0
        %731 = vmatpush1.msra.mxu0 %v304
        %732 = vmatprep.subr.mxu0 0.0
        %733 = vmatpush1.msra.mxu0 %v303
        %734 = vmatprep.subr.mxu0 0.0
        %735 = vmatpush1.msra.mxu0 %v302
        %736 = vmatprep.subr.mxu0 0.0
        %737 = vmatpush1.msra.mxu0 %v301
        %738 = vmatprep.subr.mxu0 0.0
        %739 = vmatpush2.msra.mxu0 %v332
        %740 = vmatprep.subr.mxu0 0.0
        %741 = vmatpush2.msra.mxu0 %v331
        %742 = vmatprep.subr.mxu0 0.0
        %743 = vmatpush2.msra.mxu0 %v330
        %744 = vmatprep.subr.mxu0 0.0
        %745 = vmatpush2.msra.mxu0 %v329
        %746 = vmatprep.subr.mxu0 0.0
        %747 = vmatpush2.msra.mxu0 %v328
        %748 = vmatprep.subr.mxu0 0.0
        %749 = vmatpush2.msra.mxu0 %v327
        %750 = vmatprep.subr.mxu0 0.0
        %751 = vmatpush2.msra.mxu0 %v326
        %752 = vmatprep.subr.mxu0 0.0
        %753 = vmatpush2.msra.mxu0 %v325
        %754 = vmatprep.subr.mxu0 0.0
        %755 = vmatpush2.msra.mxu0 %v324
        %756 = vmatprep.subr.mxu0 0.0
        %757 = vmatpush2.msra.mxu0 %v323
        %758 = vmatprep.subr.mxu0 0.0
        %759 = vmatpush2.msra.mxu0 %v322
        %760 = vmatprep.subr.mxu0 0.0
        %761 = vmatpush2.msra.mxu0 %v321
        %762 = vmatprep.subr.mxu0 0.0
        %763 = vmatpush2.msra.mxu0 %v320
        %764 = vmatprep.subr.mxu0 0.0
        %765 = vmatpush2.msra.mxu0 %v319
        %766 = vmatprep.subr.mxu0 0.0
        %767 = vmatpush2.msra.mxu0 %v318
        %768 = vmatprep.subr.mxu0 0.0
        %769 = vmatpush2.msra.mxu0 %v317
        %770 = vmatprep.mubr.f32.mxu0 %v579
        %771 = vmatmul.mubr.f32.gmra.mxu0 %v578
        %v772 = vpop.f32.mrf.mxu0
        %v773 = vadd.f32 %v688, %v772
        %v774 = vpop.f32.mrf.mxu0
        %775 = vmatprep.mubr.f32.mxu0 %v587
        %776 = vmatmul.mubr.f32.gmra.mxu0 %v586
        %v777 = vpop.f32.mrf.mxu0
        %v778 = vadd.f32 %v693, %v777
        %v779 = vpop.f32.mrf.mxu0
        %780 = vmatprep.mubr.f32.mxu0 %v595
        %781 = vmatmul.mubr.f32.gmra.mxu0 %v594
        %v782 = vpop.f32.mrf.mxu0
        %v783 = vadd.f32 %v698, %v782
        %v784 = vpop.f32.mrf.mxu0
        %785 = vmatprep.mubr.f32.mxu0 %v603
        %786 = vmatmul.mubr.f32.gmra.mxu0 %v602
        %v787 = vpop.f32.mrf.mxu0
        %v788 = vadd.f32 %v703, %v787
        %v789 = vpop.f32.mrf.mxu0
        %790 = vdwg.mxu0
        %791 = vmatprep.subr.mxu0 0.0
        %792 = vmatpush1.msra.mxu0 %v348
        %793 = vmatprep.subr.mxu0 0.0
        %794 = vmatpush1.msra.mxu0 %v347
        %795 = vmatprep.subr.mxu0 0.0
        %796 = vmatpush1.msra.mxu0 %v346
        %797 = vmatprep.subr.mxu0 0.0
        %798 = vmatpush1.msra.mxu0 %v345
        %799 = vmatprep.subr.mxu0 0.0
        %800 = vmatpush1.msra.mxu0 %v344
        %801 = vmatprep.subr.mxu0 0.0
        %802 = vmatpush1.msra.mxu0 %v343
        %803 = vmatprep.subr.mxu0 0.0
        %804 = vmatpush1.msra.mxu0 %v342
        %805 = vmatprep.subr.mxu0 0.0
        %806 = vmatpush1.msra.mxu0 %v341
        %807 = vmatprep.subr.mxu0 0.0
        %808 = vmatpush1.msra.mxu0 %v340
        %809 = vmatprep.subr.mxu0 0.0
        %810 = vmatpush1.msra.mxu0 %v339
        %811 = vmatprep.subr.mxu0 0.0
        %812 = vmatpush1.msra.mxu0 %v338
        %813 = vmatprep.subr.mxu0 0.0
        %814 = vmatpush1.msra.mxu0 %v337
        %815 = vmatprep.subr.mxu0 0.0
        %816 = vmatpush1.msra.mxu0 %v336
        %817 = vmatprep.subr.mxu0 0.0
        %818 = vmatpush1.msra.mxu0 %v335
        %819 = vmatprep.subr.mxu0 0.0
        %820 = vmatpush1.msra.mxu0 %v334
        %821 = vmatprep.subr.mxu0 0.0
        %822 = vmatpush1.msra.mxu0 %v333
        %823 = vmatprep.subr.mxu0 0.0
        %824 = vmatpush2.msra.mxu0 %v364
        %825 = vmatprep.subr.mxu0 0.0
        %826 = vmatpush2.msra.mxu0 %v363
        %827 = vmatprep.subr.mxu0 0.0
        %828 = vmatpush2.msra.mxu0 %v362
        %829 = vmatprep.subr.mxu0 0.0
        %830 = vmatpush2.msra.mxu0 %v361
        %831 = vmatprep.subr.mxu0 0.0
        %832 = vmatpush2.msra.mxu0 %v360
        %833 = vmatprep.subr.mxu0 0.0
        %834 = vmatpush2.msra.mxu0 %v359
        %835 = vmatprep.subr.mxu0 0.0
        %836 = vmatpush2.msra.mxu0 %v358
        %837 = vmatprep.subr.mxu0 0.0
        %838 = vmatpush2.msra.mxu0 %v357
        %839 = vmatprep.subr.mxu0 0.0
        %840 = vmatpush2.msra.mxu0 %v356
        %841 = vmatprep.subr.mxu0 0.0
        %842 = vmatpush2.msra.mxu0 %v355
        %843 = vmatprep.subr.mxu0 0.0
        %844 = vmatpush2.msra.mxu0 %v354
        %845 = vmatprep.subr.mxu0 0.0
        %846 = vmatpush2.msra.mxu0 %v353
        %847 = vmatprep.subr.mxu0 0.0
        %848 = vmatpush2.msra.mxu0 %v352
        %849 = vmatprep.subr.mxu0 0.0
        %850 = vmatpush2.msra.mxu0 %v351
        %851 = vmatprep.subr.mxu0 0.0
        %852 = vmatpush2.msra.mxu0 %v350
        %853 = vmatprep.subr.mxu0 0.0
        %854 = vmatpush2.msra.mxu0 %v349
        %855 = vmatprep.mubr.f32.mxu0 %v581
        %856 = vmatmul.mubr.f32.gmra.mxu0 %v580
        %v857 = vpop.f32.mrf.mxu0
        %v858 = vadd.f32 %v773, %v857
        %v859 = vpop.f32.mrf.mxu0
        %860 = vmatprep.mubr.f32.mxu0 %v589
        %861 = vmatmul.mubr.f32.gmra.mxu0 %v588
        %v862 = vpop.f32.mrf.mxu0
        %v863 = vadd.f32 %v778, %v862
        %v864 = vpop.f32.mrf.mxu0
        %865 = vmatprep.mubr.f32.mxu0 %v597
        %866 = vmatmul.mubr.f32.gmra.mxu0 %v596
        %v867 = vpop.f32.mrf.mxu0
        %v868 = vadd.f32 %v783, %v867
        %v869 = vpop.f32.mrf.mxu0
        %870 = vmatprep.mubr.f32.mxu0 %v605
        %871 = vmatmul.mubr.f32.gmra.mxu0 %v604
        %v872 = vpop.f32.mrf.mxu0
        %v873 = vadd.f32 %v788, %v872
        %v874 = vpop.f32.mrf.mxu0
        %875 = vdwg.mxu0
        %876 = vmatprep.subr.mxu0 0.0
        %877 = vmatpush1.msra.mxu0 %v380
        %878 = vmatprep.subr.mxu0 0.0
        %879 = vmatpush1.msra.mxu0 %v379
        %880 = vmatprep.subr.mxu0 0.0
        %881 = vmatpush1.msra.mxu0 %v378
        %882 = vmatprep.subr.mxu0 0.0
        %883 = vmatpush1.msra.mxu0 %v377
        %884 = vmatprep.subr.mxu0 0.0
        %885 = vmatpush1.msra.mxu0 %v376
        %886 = vmatprep.subr.mxu0 0.0
        %887 = vmatpush1.msra.mxu0 %v375
        %888 = vmatprep.subr.mxu0 0.0
        %889 = vmatpush1.msra.mxu0 %v374
        %890 = vmatprep.subr.mxu0 0.0
        %891 = vmatpush1.msra.mxu0 %v373
        %892 = vmatprep.subr.mxu0 0.0
        %893 = vmatpush1.msra.mxu0 %v372
        %894 = vmatprep.subr.mxu0 0.0
        %895 = vmatpush1.msra.mxu0 %v371
        %896 = vmatprep.subr.mxu0 0.0
        %897 = vmatpush1.msra.mxu0 %v370
        %898 = vmatprep.subr.mxu0 0.0
        %899 = vmatpush1.msra.mxu0 %v369
        %900 = vmatprep.subr.mxu0 0.0
        %901 = vmatpush1.msra.mxu0 %v368
        %902 = vmatprep.subr.mxu0 0.0
        %903 = vmatpush1.msra.mxu0 %v367
        %904 = vmatprep.subr.mxu0 0.0
        %905 = vmatpush1.msra.mxu0 %v366
        %906 = vmatprep.subr.mxu0 0.0
        %907 = vmatpush1.msra.mxu0 %v365
        %908 = vmatprep.subr.mxu0 0.0
        %909 = vmatpush2.msra.mxu0 0.0
        %910 = vmatprep.subr.mxu0 0.0
        %911 = vmatpush2.msra.mxu0 0.0
        %912 = vmatprep.subr.mxu0 0.0
        %913 = vmatpush2.msra.mxu0 0.0
        %914 = vmatprep.subr.mxu0 0.0
        %915 = vmatpush2.msra.mxu0 %v393
        %916 = vmatprep.subr.mxu0 0.0
        %917 = vmatpush2.msra.mxu0 %v392
        %918 = vmatprep.subr.mxu0 0.0
        %919 = vmatpush2.msra.mxu0 %v391
        %920 = vmatprep.subr.mxu0 0.0
        %921 = vmatpush2.msra.mxu0 %v390
        %922 = vmatprep.subr.mxu0 0.0
        %923 = vmatpush2.msra.mxu0 %v389
        %924 = vmatprep.subr.mxu0 0.0
        %925 = vmatpush2.msra.mxu0 %v388
        %926 = vmatprep.subr.mxu0 0.0
        %927 = vmatpush2.msra.mxu0 %v387
        %928 = vmatprep.subr.mxu0 0.0
        %929 = vmatpush2.msra.mxu0 %v386
        %930 = vmatprep.subr.mxu0 0.0
        %931 = vmatpush2.msra.mxu0 %v385
        %932 = vmatprep.subr.mxu0 0.0
        %933 = vmatpush2.msra.mxu0 %v384
        %934 = vmatprep.subr.mxu0 0.0
        %935 = vmatpush2.msra.mxu0 %v383
        %936 = vmatprep.subr.mxu0 0.0
        %937 = vmatpush2.msra.mxu0 %v382
        %938 = vmatprep.subr.mxu0 0.0
        %939 = vmatpush2.msra.mxu0 %v381
        %940 = vmatprep.mubr.f32.mxu0 %v610
        %941 = vmatmul.mubr.f32.gmra.mxu0 %v582
        %v942 = vpop.f32.mrf.mxu0
        %v943 = vadd.f32 %v858, %v942
        %v944 = vpop.f32.mrf.mxu0
        %945 = vmatprep.mubr.f32.mxu0 %v613
        %946 = vmatmul.mubr.f32.gmra.mxu0 %v590
        %v947 = vpop.f32.mrf.mxu0
        %v948 = vadd.f32 %v863, %v947
        %v949 = vpop.f32.mrf.mxu0
        %950 = vmatprep.mubr.f32.mxu0 %v616
        %951 = vmatmul.mubr.f32.gmra.mxu0 %v598
        %v952 = vpop.f32.mrf.mxu0
        %v953 = vadd.f32 %v868, %v952
        %v954 = vpop.f32.mrf.mxu0
        %955 = vmatprep.mubr.f32.mxu0 %v619
        %956 = vmatmul.mubr.f32.gmra.mxu0 %v606
        %v957 = vpop.f32.mrf.mxu0
        %v958 = vadd.f32 %v873, %v957
        %v959 = vpop.f32.mrf.mxu0
        %960 = vdwg.mxu0
        %v961 = vlaneseq
        %v962 = vshrl.u32 %v961, 7
        %v963 = vadd.s32 %v962, 8
        %v964 = vadd.s32 %v962, 16
        %v965 = vadd.s32 %v962, 24
        %v966 = vadd.s32 %v962, 32
        %v967 = vadd.s32 %v962, 40
        %v968 = vadd.s32 %v962, 48
        %v969 = vadd.s32 %v962, 56
        %v970 = vadd.s32 %v962, 64
        %v971 = vadd.s32 %v962, 72
        %v972 = vadd.s32 %v962, 80
        %v973 = vadd.s32 %v962, 88
        %v974 = vadd.s32 %v962, 96
        %v975 = vadd.s32 %v962, 104
        %v976 = vadd.s32 %v962, 112
        %v977 = vadd.s32 %v962, 120
        %v978 = vadd.s32 %v962, 128
        %v979 = vadd.s32 %v962, 136
        %v980 = vadd.s32 %v962, 144
        %v981 = vadd.s32 %v962, 152
        %v982 = vadd.s32 %v962, 160
        %v983 = vadd.s32 %v962, 168
        %v984 = vadd.s32 %v962, 176
        %v985 = vadd.s32 %v962, 184
        %v986 = vadd.s32 %v962, 192
        %v987 = vadd.s32 %v962, 200
        %v988 = vadd.s32 %v962, 208
        %v989 = vadd.s32 %v962, 216
        %v990 = vadd.s32 %v962, 224
        %v991 = vadd.s32 %v962, 232
        %v992 = vadd.s32 %v962, 240
        %v993 = vadd.s32 %v962, 248
        %v994 = vadd.s32 %v962, 256
        %v995 = vadd.s32 %v962, 264
        %v996 = vadd.s32 %v962, 272
        %v997 = vadd.s32 %v962, 280
        %v998 = vadd.s32 %v962, 288
        %v999 = vadd.s32 %v962, 296
        %v1000 = vadd.s32 %v962, 304
        %v1001 = vadd.s32 %v962, 312
        %v1002 = vadd.s32 %v962, 320
        %v1003 = vadd.s32 %v962, 328
        %v1004 = vadd.s32 %v962, 336
        %v1005 = vadd.s32 %v962, 344
        %v1006 = vadd.s32 %v962, 352
        %v1007 = vadd.s32 %v962, 360
        %v1008 = vadd.s32 %v962, 368
        %v1009 = vadd.s32 %v962, 376
        %v1010 = vadd.s32 %v962, 384
        %v1011 = vadd.s32 %v962, 392
        %v1012 = vadd.s32 %v962, 400
        %v1013 = vadd.s32 %v962, 408
        %v1014 = vadd.s32 %v962, 416
        %v1015 = vadd.s32 %v962, 424
        %v1016 = vadd.s32 %v962, 432
        %v1017 = vadd.s32 %v962, 440
        %v1018 = vadd.s32 %v962, 448
        %v1019 = vadd.s32 %v962, 456
        %v1020 = vadd.s32 %v962, 464
        %v1021 = vadd.s32 %v962, 472
        %v1022 = vadd.s32 %v962, 480
        %v1023 = vadd.s32 %v962, 488
        %v1024 = vadd.s32 %v962, 496
        %v1025 = vadd.s32 %v962, 504
        %v1026 = vadd.s32 %v962, 512
        %v1027 = vadd.s32 %v962, 520
        %v1028 = vadd.s32 %v962, 528
        %v1029 = vadd.s32 %v962, 536
        %v1030 = vadd.s32 %v962, 544
        %v1031 = vadd.s32 %v962, 552
        %v1032 = vadd.s32 %v962, 560
        %v1033 = vadd.s32 %v962, 568
        %v1034 = vadd.s32 %v962, 576
        %v1035 = vadd.s32 %v962, 584
        %v1036 = vadd.s32 %v962, 592
        %v1037 = vadd.s32 %v962, 600
        %v1038 = vadd.s32 %v962, 608
        %v1039 = vadd.s32 %v962, 616
        %v1040 = vadd.s32 %v962, 624
        %v1041 = vadd.s32 %v962, 632
        %v1042 = vadd.s32 %v962, 640
        %v1043 = vadd.s32 %v962, 648
        %v1044 = vadd.s32 %v962, 656
        %v1045 = vadd.s32 %v962, 664
        %v1046 = vadd.s32 %v962, 672
        %v1047 = vadd.s32 %v962, 680
        %v1048 = vadd.s32 %v962, 688
        %v1049 = vadd.s32 %v962, 696
        %v1050 = vadd.s32 %v962, 704
        %v1051 = vadd.s32 %v962, 712
        %v1052 = vadd.s32 %v962, 720
        %v1053 = vadd.s32 %v962, 728
        %v1054 = vadd.s32 %v962, 736
        %v1055 = vadd.s32 %v962, 744
        %v1056 = vadd.s32 %v962, 752
        %v1057 = vadd.s32 %v962, 760
        %v1058 = vmul.u32 %v520, 24
        %vm1059 = vcmp.ge.s32.totalorder %v962, %v1058
        %vm1060 = vcmp.ge.s32.totalorder %v963, %v1058
        %vm1061 = vcmp.ge.s32.totalorder %v964, %v1058
        %vm1062 = vcmp.ge.s32.totalorder %v965, %v1058
        %vm1063 = vcmp.ge.s32.totalorder %v966, %v1058
        %vm1064 = vcmp.ge.s32.totalorder %v967, %v1058
        %vm1065 = vcmp.ge.s32.totalorder %v968, %v1058
        %vm1066 = vcmp.ge.s32.totalorder %v969, %v1058
        %vm1067 = vcmp.ge.s32.totalorder %v970, %v1058
        %vm1068 = vcmp.ge.s32.totalorder %v971, %v1058
        %vm1069 = vcmp.ge.s32.totalorder %v972, %v1058
        %vm1070 = vcmp.ge.s32.totalorder %v973, %v1058
        %vm1071 = vcmp.ge.s32.totalorder %v974, %v1058
        %vm1072 = vcmp.ge.s32.totalorder %v975, %v1058
        %vm1073 = vcmp.ge.s32.totalorder %v976, %v1058
        %vm1074 = vcmp.ge.s32.totalorder %v977, %v1058
        %vm1075 = vcmp.ge.s32.totalorder %v978, %v1058
        %vm1076 = vcmp.ge.s32.totalorder %v979, %v1058
        %vm1077 = vcmp.ge.s32.totalorder %v980, %v1058
        %vm1078 = vcmp.ge.s32.totalorder %v981, %v1058
        %vm1079 = vcmp.ge.s32.totalorder %v982, %v1058
        %vm1080 = vcmp.ge.s32.totalorder %v983, %v1058
        %vm1081 = vcmp.ge.s32.totalorder %v984, %v1058
        %vm1082 = vcmp.ge.s32.totalorder %v985, %v1058
        %vm1083 = vcmp.ge.s32.totalorder %v986, %v1058
        %vm1084 = vcmp.ge.s32.totalorder %v987, %v1058
        %vm1085 = vcmp.ge.s32.totalorder %v988, %v1058
        %vm1086 = vcmp.ge.s32.totalorder %v989, %v1058
        %vm1087 = vcmp.ge.s32.totalorder %v990, %v1058
        %vm1088 = vcmp.ge.s32.totalorder %v991, %v1058
        %vm1089 = vcmp.ge.s32.totalorder %v992, %v1058
        %vm1090 = vcmp.ge.s32.totalorder %v993, %v1058
        %vm1091 = vcmp.ge.s32.totalorder %v994, %v1058
        %vm1092 = vcmp.ge.s32.totalorder %v995, %v1058
        %vm1093 = vcmp.ge.s32.totalorder %v996, %v1058
        %vm1094 = vcmp.ge.s32.totalorder %v997, %v1058
        %vm1095 = vcmp.ge.s32.totalorder %v998, %v1058
        %vm1096 = vcmp.ge.s32.totalorder %v999, %v1058
        %vm1097 = vcmp.ge.s32.totalorder %v1000, %v1058
        %vm1098 = vcmp.ge.s32.totalorder %v1001, %v1058
        %vm1099 = vcmp.ge.s32.totalorder %v1002, %v1058
        %vm1100 = vcmp.ge.s32.totalorder %v1003, %v1058
        %vm1101 = vcmp.ge.s32.totalorder %v1004, %v1058
        %vm1102 = vcmp.ge.s32.totalorder %v1005, %v1058
        %vm1103 = vcmp.ge.s32.totalorder %v1006, %v1058
        %vm1104 = vcmp.ge.s32.totalorder %v1007, %v1058
        %vm1105 = vcmp.ge.s32.totalorder %v1008, %v1058
        %vm1106 = vcmp.ge.s32.totalorder %v1009, %v1058
        %vm1107 = vcmp.ge.s32.totalorder %v1010, %v1058
        %vm1108 = vcmp.ge.s32.totalorder %v1011, %v1058
        %vm1109 = vcmp.ge.s32.totalorder %v1012, %v1058
        %vm1110 = vcmp.ge.s32.totalorder %v1013, %v1058
        %vm1111 = vcmp.ge.s32.totalorder %v1014, %v1058
        %vm1112 = vcmp.ge.s32.totalorder %v1015, %v1058
        %vm1113 = vcmp.ge.s32.totalorder %v1016, %v1058
        %vm1114 = vcmp.ge.s32.totalorder %v1017, %v1058
        %vm1115 = vcmp.ge.s32.totalorder %v1018, %v1058
        %vm1116 = vcmp.ge.s32.totalorder %v1019, %v1058
        %vm1117 = vcmp.ge.s32.totalorder %v1020, %v1058
        %vm1118 = vcmp.ge.s32.totalorder %v1021, %v1058
        %vm1119 = vcmp.ge.s32.totalorder %v1022, %v1058
        %vm1120 = vcmp.ge.s32.totalorder %v1023, %v1058
        %vm1121 = vcmp.ge.s32.totalorder %v1024, %v1058
        %vm1122 = vcmp.ge.s32.totalorder %v1025, %v1058
        %vm1123 = vcmp.ge.s32.totalorder %v1026, %v1058
        %vm1124 = vcmp.ge.s32.totalorder %v1027, %v1058
        %vm1125 = vcmp.ge.s32.totalorder %v1028, %v1058
        %vm1126 = vcmp.ge.s32.totalorder %v1029, %v1058
        %vm1127 = vcmp.ge.s32.totalorder %v1030, %v1058
        %vm1128 = vcmp.ge.s32.totalorder %v1031, %v1058
        %vm1129 = vcmp.ge.s32.totalorder %v1032, %v1058
        %vm1130 = vcmp.ge.s32.totalorder %v1033, %v1058
        %vm1131 = vcmp.ge.s32.totalorder %v1034, %v1058
        %vm1132 = vcmp.ge.s32.totalorder %v1035, %v1058
        %vm1133 = vcmp.ge.s32.totalorder %v1036, %v1058
        %vm1134 = vcmp.ge.s32.totalorder %v1037, %v1058
        %vm1135 = vcmp.ge.s32.totalorder %v1038, %v1058
        %vm1136 = vcmp.ge.s32.totalorder %v1039, %v1058
        %vm1137 = vcmp.ge.s32.totalorder %v1040, %v1058
        %vm1138 = vcmp.ge.s32.totalorder %v1041, %v1058
        %vm1139 = vcmp.ge.s32.totalorder %v1042, %v1058
        %vm1140 = vcmp.ge.s32.totalorder %v1043, %v1058
        %vm1141 = vcmp.ge.s32.totalorder %v1044, %v1058
        %vm1142 = vcmp.ge.s32.totalorder %v1045, %v1058
        %vm1143 = vcmp.ge.s32.totalorder %v1046, %v1058
        %vm1144 = vcmp.ge.s32.totalorder %v1047, %v1058
        %vm1145 = vcmp.ge.s32.totalorder %v1048, %v1058
        %vm1146 = vcmp.ge.s32.totalorder %v1049, %v1058
        %vm1147 = vcmp.ge.s32.totalorder %v1050, %v1058
        %vm1148 = vcmp.ge.s32.totalorder %v1051, %v1058
        %vm1149 = vcmp.ge.s32.totalorder %v1052, %v1058
        %vm1150 = vcmp.ge.s32.totalorder %v1053, %v1058
        %vm1151 = vcmp.ge.s32.totalorder %v1054, %v1058
        %vm1152 = vcmp.ge.s32.totalorder %v1055, %v1058
        %vm1153 = vcmp.ge.s32.totalorder %v1056, %v1058
        %vm1154 = vcmp.ge.s32.totalorder %v1057, %v1058
        %v1155 = vadd.s32 %v1058, 24
        %vm1156 = vcmp.lt.s32.totalorder %v962, %v1155
        %vm1157 = vcmp.lt.s32.totalorder %v963, %v1155
        %vm1158 = vcmp.lt.s32.totalorder %v964, %v1155
        %vm1159 = vcmp.lt.s32.totalorder %v965, %v1155
        %vm1160 = vcmp.lt.s32.totalorder %v966, %v1155
        %vm1161 = vcmp.lt.s32.totalorder %v967, %v1155
        %vm1162 = vcmp.lt.s32.totalorder %v968, %v1155
        %vm1163 = vcmp.lt.s32.totalorder %v969, %v1155
        %vm1164 = vcmp.lt.s32.totalorder %v970, %v1155
        %vm1165 = vcmp.lt.s32.totalorder %v971, %v1155
        %vm1166 = vcmp.lt.s32.totalorder %v972, %v1155
        %vm1167 = vcmp.lt.s32.totalorder %v973, %v1155
        %vm1168 = vcmp.lt.s32.totalorder %v974, %v1155
        %vm1169 = vcmp.lt.s32.totalorder %v975, %v1155
        %vm1170 = vcmp.lt.s32.totalorder %v976, %v1155
        %vm1171 = vcmp.lt.s32.totalorder %v977, %v1155
        %vm1172 = vcmp.lt.s32.totalorder %v978, %v1155
        %vm1173 = vcmp.lt.s32.totalorder %v979, %v1155
        %vm1174 = vcmp.lt.s32.totalorder %v980, %v1155
        %vm1175 = vcmp.lt.s32.totalorder %v981, %v1155
        %vm1176 = vcmp.lt.s32.totalorder %v982, %v1155
        %vm1177 = vcmp.lt.s32.totalorder %v983, %v1155
        %vm1178 = vcmp.lt.s32.totalorder %v984, %v1155
        %vm1179 = vcmp.lt.s32.totalorder %v985, %v1155
        %vm1180 = vcmp.lt.s32.totalorder %v986, %v1155
        %vm1181 = vcmp.lt.s32.totalorder %v987, %v1155
        %vm1182 = vcmp.lt.s32.totalorder %v988, %v1155
        %vm1183 = vcmp.lt.s32.totalorder %v989, %v1155
        %vm1184 = vcmp.lt.s32.totalorder %v990, %v1155
        %vm1185 = vcmp.lt.s32.totalorder %v991, %v1155
        %vm1186 = vcmp.lt.s32.totalorder %v992, %v1155
        %vm1187 = vcmp.lt.s32.totalorder %v993, %v1155
        %vm1188 = vcmp.lt.s32.totalorder %v994, %v1155
        %vm1189 = vcmp.lt.s32.totalorder %v995, %v1155
        %vm1190 = vcmp.lt.s32.totalorder %v996, %v1155
        %vm1191 = vcmp.lt.s32.totalorder %v997, %v1155
        %vm1192 = vcmp.lt.s32.totalorder %v998, %v1155
        %vm1193 = vcmp.lt.s32.totalorder %v999, %v1155
        %vm1194 = vcmp.lt.s32.totalorder %v1000, %v1155
        %vm1195 = vcmp.lt.s32.totalorder %v1001, %v1155
        %vm1196 = vcmp.lt.s32.totalorder %v1002, %v1155
        %vm1197 = vcmp.lt.s32.totalorder %v1003, %v1155
        %vm1198 = vcmp.lt.s32.totalorder %v1004, %v1155
        %vm1199 = vcmp.lt.s32.totalorder %v1005, %v1155
        %vm1200 = vcmp.lt.s32.totalorder %v1006, %v1155
        %vm1201 = vcmp.lt.s32.totalorder %v1007, %v1155
        %vm1202 = vcmp.lt.s32.totalorder %v1008, %v1155
        %vm1203 = vcmp.lt.s32.totalorder %v1009, %v1155
        %vm1204 = vcmp.lt.s32.totalorder %v1010, %v1155
        %vm1205 = vcmp.lt.s32.totalorder %v1011, %v1155
        %vm1206 = vcmp.lt.s32.totalorder %v1012, %v1155
        %vm1207 = vcmp.lt.s32.totalorder %v1013, %v1155
        %vm1208 = vcmp.lt.s32.totalorder %v1014, %v1155
        %vm1209 = vcmp.lt.s32.totalorder %v1015, %v1155
        %vm1210 = vcmp.lt.s32.totalorder %v1016, %v1155
        %vm1211 = vcmp.lt.s32.totalorder %v1017, %v1155
        %vm1212 = vcmp.lt.s32.totalorder %v1018, %v1155
        %vm1213 = vcmp.lt.s32.totalorder %v1019, %v1155
        %vm1214 = vcmp.lt.s32.totalorder %v1020, %v1155
        %vm1215 = vcmp.lt.s32.totalorder %v1021, %v1155
        %vm1216 = vcmp.lt.s32.totalorder %v1022, %v1155
        %vm1217 = vcmp.lt.s32.totalorder %v1023, %v1155
        %vm1218 = vcmp.lt.s32.totalorder %v1024, %v1155
        %vm1219 = vcmp.lt.s32.totalorder %v1025, %v1155
        %vm1220 = vcmp.lt.s32.totalorder %v1026, %v1155
        %vm1221 = vcmp.lt.s32.totalorder %v1027, %v1155
        %vm1222 = vcmp.lt.s32.totalorder %v1028, %v1155
        %vm1223 = vcmp.lt.s32.totalorder %v1029, %v1155
        %vm1224 = vcmp.lt.s32.totalorder %v1030, %v1155
        %vm1225 = vcmp.lt.s32.totalorder %v1031, %v1155
        %vm1226 = vcmp.lt.s32.totalorder %v1032, %v1155
        %vm1227 = vcmp.lt.s32.totalorder %v1033, %v1155
        %vm1228 = vcmp.lt.s32.totalorder %v1034, %v1155
        %vm1229 = vcmp.lt.s32.totalorder %v1035, %v1155
        %vm1230 = vcmp.lt.s32.totalorder %v1036, %v1155
        %vm1231 = vcmp.lt.s32.totalorder %v1037, %v1155
        %vm1232 = vcmp.lt.s32.totalorder %v1038, %v1155
        %vm1233 = vcmp.lt.s32.totalorder %v1039, %v1155
        %vm1234 = vcmp.lt.s32.totalorder %v1040, %v1155
        %vm1235 = vcmp.lt.s32.totalorder %v1041, %v1155
        %vm1236 = vcmp.lt.s32.totalorder %v1042, %v1155
        %vm1237 = vcmp.lt.s32.totalorder %v1043, %v1155
        %vm1238 = vcmp.lt.s32.totalorder %v1044, %v1155
        %vm1239 = vcmp.lt.s32.totalorder %v1045, %v1155
        %vm1240 = vcmp.lt.s32.totalorder %v1046, %v1155
        %vm1241 = vcmp.lt.s32.totalorder %v1047, %v1155
        %vm1242 = vcmp.lt.s32.totalorder %v1048, %v1155
        %vm1243 = vcmp.lt.s32.totalorder %v1049, %v1155
        %vm1244 = vcmp.lt.s32.totalorder %v1050, %v1155
        %vm1245 = vcmp.lt.s32.totalorder %v1051, %v1155
        %vm1246 = vcmp.lt.s32.totalorder %v1052, %v1155
        %vm1247 = vcmp.lt.s32.totalorder %v1053, %v1155
        %vm1248 = vcmp.lt.s32.totalorder %v1054, %v1155
        %vm1249 = vcmp.lt.s32.totalorder %v1055, %v1155
        %vm1250 = vcmp.lt.s32.totalorder %v1056, %v1155
        %vm1251 = vcmp.lt.s32.totalorder %v1057, %v1155
        %vm1252 = vmand %vm1059, %vm1156
        %vm1253 = vmand %vm1060, %vm1157
        %vm1254 = vmand %vm1061, %vm1158
        %vm1255 = vmand %vm1062, %vm1159
        %vm1256 = vmand %vm1063, %vm1160
        %vm1257 = vmand %vm1064, %vm1161
        %vm1258 = vmand %vm1065, %vm1162
        %vm1259 = vmand %vm1066, %vm1163
        %vm1260 = vmand %vm1067, %vm1164
        %vm1261 = vmand %vm1068, %vm1165
        %vm1262 = vmand %vm1069, %vm1166
        %vm1263 = vmand %vm1070, %vm1167
        %vm1264 = vmand %vm1071, %vm1168
        %vm1265 = vmand %vm1072, %vm1169
        %vm1266 = vmand %vm1073, %vm1170
        %vm1267 = vmand %vm1074, %vm1171
        %vm1268 = vmand %vm1075, %vm1172
        %vm1269 = vmand %vm1076, %vm1173
        %vm1270 = vmand %vm1077, %vm1174
        %vm1271 = vmand %vm1078, %vm1175
        %vm1272 = vmand %vm1079, %vm1176
        %vm1273 = vmand %vm1080, %vm1177
        %vm1274 = vmand %vm1081, %vm1178
        %vm1275 = vmand %vm1082, %vm1179
        %vm1276 = vmand %vm1083, %vm1180
        %vm1277 = vmand %vm1084, %vm1181
        %vm1278 = vmand %vm1085, %vm1182
        %vm1279 = vmand %vm1086, %vm1183
        %vm1280 = vmand %vm1087, %vm1184
        %vm1281 = vmand %vm1088, %vm1185
        %vm1282 = vmand %vm1089, %vm1186
        %vm1283 = vmand %vm1090, %vm1187
        %vm1284 = vmand %vm1091, %vm1188
        %vm1285 = vmand %vm1092, %vm1189
        %vm1286 = vmand %vm1093, %vm1190
        %vm1287 = vmand %vm1094, %vm1191
        %vm1288 = vmand %vm1095, %vm1192
        %vm1289 = vmand %vm1096, %vm1193
        %vm1290 = vmand %vm1097, %vm1194
        %vm1291 = vmand %vm1098, %vm1195
        %vm1292 = vmand %vm1099, %vm1196
        %vm1293 = vmand %vm1100, %vm1197
        %vm1294 = vmand %vm1101, %vm1198
        %vm1295 = vmand %vm1102, %vm1199
        %vm1296 = vmand %vm1103, %vm1200
        %vm1297 = vmand %vm1104, %vm1201
        %vm1298 = vmand %vm1105, %vm1202
        %vm1299 = vmand %vm1106, %vm1203
        %vm1300 = vmand %vm1107, %vm1204
        %vm1301 = vmand %vm1108, %vm1205
        %vm1302 = vmand %vm1109, %vm1206
        %vm1303 = vmand %vm1110, %vm1207
        %vm1304 = vmand %vm1111, %vm1208
        %vm1305 = vmand %vm1112, %vm1209
        %vm1306 = vmand %vm1113, %vm1210
        %vm1307 = vmand %vm1114, %vm1211
        %vm1308 = vmand %vm1115, %vm1212
        %vm1309 = vmand %vm1116, %vm1213
        %vm1310 = vmand %vm1117, %vm1214
        %vm1311 = vmand %vm1118, %vm1215
        %vm1312 = vmand %vm1119, %vm1216
        %vm1313 = vmand %vm1120, %vm1217
        %vm1314 = vmand %vm1121, %vm1218
        %vm1315 = vmand %vm1122, %vm1219
        %vm1316 = vmand %vm1123, %vm1220
        %vm1317 = vmand %vm1124, %vm1221
        %vm1318 = vmand %vm1125, %vm1222
        %vm1319 = vmand %vm1126, %vm1223
        %vm1320 = vmand %vm1127, %vm1224
        %vm1321 = vmand %vm1128, %vm1225
        %vm1322 = vmand %vm1129, %vm1226
        %vm1323 = vmand %vm1130, %vm1227
        %vm1324 = vmand %vm1131, %vm1228
        %vm1325 = vmand %vm1132, %vm1229
        %vm1326 = vmand %vm1133, %vm1230
        %vm1327 = vmand %vm1134, %vm1231
        %vm1328 = vmand %vm1135, %vm1232
        %vm1329 = vmand %vm1136, %vm1233
        %vm1330 = vmand %vm1137, %vm1234
        %vm1331 = vmand %vm1138, %vm1235
        %vm1332 = vmand %vm1139, %vm1236
        %vm1333 = vmand %vm1140, %vm1237
        %vm1334 = vmand %vm1141, %vm1238
        %vm1335 = vmand %vm1142, %vm1239
        %vm1336 = vmand %vm1143, %vm1240
        %vm1337 = vmand %vm1144, %vm1241
        %vm1338 = vmand %vm1145, %vm1242
        %vm1339 = vmand %vm1146, %vm1243
        %vm1340 = vmand %vm1147, %vm1244
        %vm1341 = vmand %vm1148, %vm1245
        %vm1342 = vmand %vm1149, %vm1246
        %vm1343 = vmand %vm1150, %vm1247
        %vm1344 = vmand %vm1151, %vm1248
        %vm1345 = vmand %vm1152, %vm1249
        %vm1346 = vmand %vm1153, %vm1250
        %vm1347 = vmand %vm1154, %vm1251
        %v1348 = vsel %vm1252, 1.0, 0.0
        %v1349 = vsel %vm1253, 1.0, 0.0
        %v1350 = vsel %vm1254, 1.0, 0.0
        %v1351 = vsel %vm1255, 1.0, 0.0
        %v1352 = vsel %vm1256, 1.0, 0.0
        %v1353 = vsel %vm1257, 1.0, 0.0
        %v1354 = vsel %vm1258, 1.0, 0.0
        %v1355 = vsel %vm1259, 1.0, 0.0
        %v1356 = vsel %vm1260, 1.0, 0.0
        %v1357 = vsel %vm1261, 1.0, 0.0
        %v1358 = vsel %vm1262, 1.0, 0.0
        %v1359 = vsel %vm1263, 1.0, 0.0
        %v1360 = vsel %vm1264, 1.0, 0.0
        %v1361 = vsel %vm1265, 1.0, 0.0
        %v1362 = vsel %vm1266, 1.0, 0.0
        %v1363 = vsel %vm1267, 1.0, 0.0
        %v1364 = vsel %vm1268, 1.0, 0.0
        %v1365 = vsel %vm1269, 1.0, 0.0
        %v1366 = vsel %vm1270, 1.0, 0.0
        %v1367 = vsel %vm1271, 1.0, 0.0
        %v1368 = vsel %vm1272, 1.0, 0.0
        %v1369 = vsel %vm1273, 1.0, 0.0
        %v1370 = vsel %vm1274, 1.0, 0.0
        %v1371 = vsel %vm1275, 1.0, 0.0
        %v1372 = vsel %vm1276, 1.0, 0.0
        %v1373 = vsel %vm1277, 1.0, 0.0
        %v1374 = vsel %vm1278, 1.0, 0.0
        %v1375 = vsel %vm1279, 1.0, 0.0
        %v1376 = vsel %vm1280, 1.0, 0.0
        %v1377 = vsel %vm1281, 1.0, 0.0
        %v1378 = vsel %vm1282, 1.0, 0.0
        %v1379 = vsel %vm1283, 1.0, 0.0
        %v1380 = vsel %vm1284, 1.0, 0.0
        %v1381 = vsel %vm1285, 1.0, 0.0
        %v1382 = vsel %vm1286, 1.0, 0.0
        %v1383 = vsel %vm1287, 1.0, 0.0
        %v1384 = vsel %vm1288, 1.0, 0.0
        %v1385 = vsel %vm1289, 1.0, 0.0
        %v1386 = vsel %vm1290, 1.0, 0.0
        %v1387 = vsel %vm1291, 1.0, 0.0
        %v1388 = vsel %vm1292, 1.0, 0.0
        %v1389 = vsel %vm1293, 1.0, 0.0
        %v1390 = vsel %vm1294, 1.0, 0.0
        %v1391 = vsel %vm1295, 1.0, 0.0
        %v1392 = vsel %vm1296, 1.0, 0.0
        %v1393 = vsel %vm1297, 1.0, 0.0
        %v1394 = vsel %vm1298, 1.0, 0.0
        %v1395 = vsel %vm1299, 1.0, 0.0
        %v1396 = vsel %vm1300, 1.0, 0.0
        %v1397 = vsel %vm1301, 1.0, 0.0
        %v1398 = vsel %vm1302, 1.0, 0.0
        %v1399 = vsel %vm1303, 1.0, 0.0
        %v1400 = vsel %vm1304, 1.0, 0.0
        %v1401 = vsel %vm1305, 1.0, 0.0
        %v1402 = vsel %vm1306, 1.0, 0.0
        %v1403 = vsel %vm1307, 1.0, 0.0
        %v1404 = vsel %vm1308, 1.0, 0.0
        %v1405 = vsel %vm1309, 1.0, 0.0
        %v1406 = vsel %vm1310, 1.0, 0.0
        %v1407 = vsel %vm1311, 1.0, 0.0
        %v1408 = vsel %vm1312, 1.0, 0.0
        %v1409 = vsel %vm1313, 1.0, 0.0
        %v1410 = vsel %vm1314, 1.0, 0.0
        %v1411 = vsel %vm1315, 1.0, 0.0
        %v1412 = vsel %vm1316, 1.0, 0.0
        %v1413 = vsel %vm1317, 1.0, 0.0
        %v1414 = vsel %vm1318, 1.0, 0.0
        %v1415 = vsel %vm1319, 1.0, 0.0
        %v1416 = vsel %vm1320, 1.0, 0.0
        %v1417 = vsel %vm1321, 1.0, 0.0
        %v1418 = vsel %vm1322, 1.0, 0.0
        %v1419 = vsel %vm1323, 1.0, 0.0
        %v1420 = vsel %vm1324, 1.0, 0.0
        %v1421 = vsel %vm1325, 1.0, 0.0
        %v1422 = vsel %vm1326, 1.0, 0.0
        %v1423 = vsel %vm1327, 1.0, 0.0
        %v1424 = vsel %vm1328, 1.0, 0.0
        %v1425 = vsel %vm1329, 1.0, 0.0
        %v1426 = vsel %vm1330, 1.0, 0.0
        %v1427 = vsel %vm1331, 1.0, 0.0
        %v1428 = vsel %vm1332, 1.0, 0.0
        %v1429 = vsel %vm1333, 1.0, 0.0
        %v1430 = vsel %vm1334, 1.0, 0.0
        %v1431 = vsel %vm1335, 1.0, 0.0
        %v1432 = vsel %vm1336, 1.0, 0.0
        %v1433 = vsel %vm1337, 1.0, 0.0
        %v1434 = vsel %vm1338, 1.0, 0.0
        %v1435 = vsel %vm1339, 1.0, 0.0
        %v1436 = vsel %vm1340, 1.0, 0.0
        %v1437 = vsel %vm1341, 1.0, 0.0
        %v1438 = vsel %vm1342, 1.0, 0.0
        %v1439 = vsel %vm1343, 1.0, 0.0
        %v1440 = vsel %vm1344, 1.0, 0.0
        %v1441 = vsel %vm1345, 1.0, 0.0
        %v1442 = vsel %vm1346, 1.0, 0.0
        %v1443 = vsel %vm1347, 1.0, 0.0
        %vm1444 = vcmask 261120
        %v1446 = vsel %vm1444, %v1348, 0
        %v1449 = vsel %vm1444, %v1349, 0
        %v1452 = vsel %vm1444, %v1350, 0
        %v1455 = vsel %vm1444, %v1351, 0
        %v1458 = vsel %vm1444, %v1352, 0
        %v1461 = vsel %vm1444, %v1353, 0
        %v1464 = vsel %vm1444, %v1354, 0
        %v1467 = vsel %vm1444, %v1355, 0
        %v1470 = vsel %vm1444, %v1356, 0
        %v1473 = vsel %vm1444, %v1357, 0
        %v1476 = vsel %vm1444, %v1358, 0
        %v1479 = vsel %vm1444, %v1359, 0
        %v1482 = vsel %vm1444, %v1360, 0
        %v1485 = vsel %vm1444, %v1361, 0
        %v1488 = vsel %vm1444, %v1362, 0
        %v1491 = vsel %vm1444, %v1363, 0
        %v1494 = vsel %vm1444, %v1364, 0
        %v1497 = vsel %vm1444, %v1365, 0
        %v1500 = vsel %vm1444, %v1366, 0
        %v1503 = vsel %vm1444, %v1367, 0
        %v1506 = vsel %vm1444, %v1368, 0
        %v1509 = vsel %vm1444, %v1369, 0
        %v1512 = vsel %vm1444, %v1370, 0
        %v1515 = vsel %vm1444, %v1371, 0
        %v1518 = vsel %vm1444, %v1372, 0
        %v1521 = vsel %vm1444, %v1373, 0
        %v1524 = vsel %vm1444, %v1374, 0
        %v1527 = vsel %vm1444, %v1375, 0
        %v1530 = vsel %vm1444, %v1376, 0
        %v1533 = vsel %vm1444, %v1377, 0
        %v1536 = vsel %vm1444, %v1378, 0
        %v1539 = vsel %vm1444, %v1379, 0
        %v1542 = vsel %vm1444, %v1380, 0
        %v1545 = vsel %vm1444, %v1381, 0
        %v1548 = vsel %vm1444, %v1382, 0
        %v1551 = vsel %vm1444, %v1383, 0
        %v1554 = vsel %vm1444, %v1384, 0
        %v1557 = vsel %vm1444, %v1385, 0
        %v1560 = vsel %vm1444, %v1386, 0
        %v1563 = vsel %vm1444, %v1387, 0
        %v1566 = vsel %vm1444, %v1388, 0
        %v1569 = vsel %vm1444, %v1389, 0
        %v1572 = vsel %vm1444, %v1390, 0
        %v1575 = vsel %vm1444, %v1391, 0
        %v1578 = vsel %vm1444, %v1392, 0
        %v1581 = vsel %vm1444, %v1393, 0
        %v1584 = vsel %vm1444, %v1394, 0
        %v1587 = vsel %vm1444, %v1395, 0
        %v1590 = vsel %vm1444, %v1396, 0
        %v1593 = vsel %vm1444, %v1397, 0
        %v1596 = vsel %vm1444, %v1398, 0
        %v1599 = vsel %vm1444, %v1399, 0
        %v1602 = vsel %vm1444, %v1400, 0
        %v1605 = vsel %vm1444, %v1401, 0
        %v1608 = vsel %vm1444, %v1402, 0
        %v1611 = vsel %vm1444, %v1403, 0
        %v1614 = vsel %vm1444, %v1404, 0
        %v1617 = vsel %vm1444, %v1405, 0
        %v1620 = vsel %vm1444, %v1406, 0
        %v1623 = vsel %vm1444, %v1407, 0
        %v1626 = vsel %vm1444, %v1408, 0
        %v1629 = vsel %vm1444, %v1409, 0
        %v1632 = vsel %vm1444, %v1410, 0
        %v1635 = vsel %vm1444, %v1411, 0
        %v1638 = vsel %vm1444, %v1412, 0
        %v1641 = vsel %vm1444, %v1413, 0
        %v1644 = vsel %vm1444, %v1414, 0
        %v1647 = vsel %vm1444, %v1415, 0
        %v1650 = vsel %vm1444, %v1416, 0
        %v1653 = vsel %vm1444, %v1417, 0
        %v1656 = vsel %vm1444, %v1418, 0
        %v1659 = vsel %vm1444, %v1419, 0
        %v1662 = vsel %vm1444, %v1420, 0
        %v1665 = vsel %vm1444, %v1421, 0
        %v1668 = vsel %vm1444, %v1422, 0
        %v1671 = vsel %vm1444, %v1423, 0
        %v1674 = vsel %vm1444, %v1424, 0
        %v1677 = vsel %vm1444, %v1425, 0
        %v1680 = vsel %vm1444, %v1426, 0
        %v1683 = vsel %vm1444, %v1427, 0
        %v1686 = vsel %vm1444, %v1428, 0
        %v1689 = vsel %vm1444, %v1429, 0
        %v1692 = vsel %vm1444, %v1430, 0
        %v1695 = vsel %vm1444, %v1431, 0
        %v1698 = vsel %vm1444, %v1432, 0
        %v1701 = vsel %vm1444, %v1433, 0
        %v1704 = vsel %vm1444, %v1434, 0
        %v1707 = vsel %vm1444, %v1435, 0
        %v1710 = vsel %vm1444, %v1436, 0
        %v1713 = vsel %vm1444, %v1437, 0
        %v1716 = vsel %vm1444, %v1438, 0
        %v1719 = vsel %vm1444, %v1439, 0
        %v1722 = vsel %vm1444, %v1440, 0
        %v1725 = vsel %vm1444, %v1441, 0
        %v1728 = vsel %vm1444, %v1442, 0
        %v1731 = vsel %vm1444, %v1443, 0
        %1733 = vmatprep.subr.mxu0 0.0
        %1734 = vmatpush1.msra.mxu0 0.0
        %1735 = vmatprep.subr.mxu0 0.0
        %1736 = vmatpush1.msra.mxu0 0.0
        %1737 = vmatprep.subr.mxu0 0.0
        %1738 = vmatpush1.msra.mxu0 0.0
        %1739 = vmatprep.subr.mxu0 0.0
        %1740 = vmatpush1.msra.mxu0 0.0
        %1741 = vmatprep.subr.mxu0 0.0
        %1742 = vmatpush1.msra.mxu0 0.0
        %1743 = vmatprep.subr.mxu0 0.0
        %1744 = vmatpush1.msra.mxu0 0.0
        %1745 = vmatprep.subr.mxu0 0.0
        %1746 = vmatpush1.msra.mxu0 0.0
        %1747 = vmatprep.subr.mxu0 0.0
        %1748 = vmatpush1.msra.mxu0 0.0
        %1749 = vmatprep.subr.mxu0 0.0
        %1750 = vmatpush1.msra.mxu0 0.0
        %1751 = vmatprep.subr.mxu0 0.0
        %1752 = vmatpush1.msra.mxu0 0.0
        %1753 = vmatprep.subr.mxu0 0.0
        %1754 = vmatpush1.msra.mxu0 0.0
        %1755 = vmatprep.subr.mxu0 0.0
        %1756 = vmatpush1.msra.mxu0 0.0
        %1757 = vmatprep.subr.mxu0 0.0
        %1758 = vmatpush1.msra.mxu0 %v958
        %1759 = vmatprep.subr.mxu0 0.0
        %1760 = vmatpush1.msra.mxu0 %v953
        %1761 = vmatprep.subr.mxu0 0.0
        %1762 = vmatpush1.msra.mxu0 %v948
        %1763 = vmatprep.subr.mxu0 0.0
        %1764 = vmatpush1.msra.mxu0 %v943
        %1765 = vmatprep.subr.mxu0 0.0
        %1766 = vmatpush2.msra.mxu0 0.0
        %1767 = vmatprep.subr.mxu0 0.0
        %1768 = vmatpush2.msra.mxu0 0.0
        %1769 = vmatprep.subr.mxu0 0.0
        %1770 = vmatpush2.msra.mxu0 0.0
        %1771 = vmatprep.subr.mxu0 0.0
        %1772 = vmatpush2.msra.mxu0 0.0
        %1773 = vmatprep.subr.mxu0 0.0
        %1774 = vmatpush2.msra.mxu0 0.0
        %1775 = vmatprep.subr.mxu0 0.0
        %1776 = vmatpush2.msra.mxu0 0.0
        %1777 = vmatprep.subr.mxu0 0.0
        %1778 = vmatpush2.msra.mxu0 0.0
        %1779 = vmatprep.subr.mxu0 0.0
        %1780 = vmatpush2.msra.mxu0 0.0
        %1781 = vmatprep.subr.mxu0 0.0
        %1782 = vmatpush2.msra.mxu0 0.0
        %1783 = vmatprep.subr.mxu0 0.0
        %1784 = vmatpush2.msra.mxu0 0.0
        %1785 = vmatprep.subr.mxu0 0.0
        %1786 = vmatpush2.msra.mxu0 0.0
        %1787 = vmatprep.subr.mxu0 0.0
        %1788 = vmatpush2.msra.mxu0 0.0
        %1789 = vmatprep.subr.mxu0 0.0
        %1790 = vmatpush2.msra.mxu0 0.0
        %1791 = vmatprep.subr.mxu0 0.0
        %1792 = vmatpush2.msra.mxu0 0.0
        %1793 = vmatprep.subr.mxu0 0.0
        %1794 = vmatpush2.msra.mxu0 0.0
        %1795 = vmatprep.subr.mxu0 0.0
        %1796 = vmatpush2.msra.mxu0 0.0
        %1797 = vmatprep.mubr.f32.mxu0 0.0
        %1798 = vmatmul.mubr.f32.gmra.mxu0 %v1446
        %v1799 = vpop.f32.mrf.mxu0
        %v1800 = vadd.f32 0.0, %v1799
        %v1801 = vpop.f32.mrf.mxu0
        %1802 = vmatprep.mubr.f32.mxu0 0.0
        %1803 = vmatmul.mubr.f32.gmra.mxu0 %v1449
        %v1804 = vpop.f32.mrf.mxu0
        %v1805 = vadd.f32 0.0, %v1804
        %v1806 = vpop.f32.mrf.mxu0
        %1807 = vmatprep.mubr.f32.mxu0 0.0
        %1808 = vmatmul.mubr.f32.gmra.mxu0 %v1452
        %v1809 = vpop.f32.mrf.mxu0
        %v1810 = vadd.f32 0.0, %v1809
        %v1811 = vpop.f32.mrf.mxu0
        %1812 = vmatprep.mubr.f32.mxu0 0.0
        %1813 = vmatmul.mubr.f32.gmra.mxu0 %v1455
        %v1814 = vpop.f32.mrf.mxu0
        %v1815 = vadd.f32 0.0, %v1814
        %v1816 = vpop.f32.mrf.mxu0
        %1817 = vmatprep.mubr.f32.mxu0 0.0
        %1818 = vmatmul.mubr.f32.gmra.mxu0 %v1458
        %v1819 = vpop.f32.mrf.mxu0
        %v1820 = vadd.f32 0.0, %v1819
        %v1821 = vpop.f32.mrf.mxu0
        %1822 = vmatprep.mubr.f32.mxu0 0.0
        %1823 = vmatmul.mubr.f32.gmra.mxu0 %v1461
        %v1824 = vpop.f32.mrf.mxu0
        %v1825 = vadd.f32 0.0, %v1824
        %v1826 = vpop.f32.mrf.mxu0
        %1827 = vmatprep.mubr.f32.mxu0 0.0
        %1828 = vmatmul.mubr.f32.gmra.mxu0 %v1464
        %v1829 = vpop.f32.mrf.mxu0
        %v1830 = vadd.f32 0.0, %v1829
        %v1831 = vpop.f32.mrf.mxu0
        %1832 = vmatprep.mubr.f32.mxu0 0.0
        %1833 = vmatmul.mubr.f32.gmra.mxu0 %v1467
        %v1834 = vpop.f32.mrf.mxu0
        %v1835 = vadd.f32 0.0, %v1834
        %v1836 = vpop.f32.mrf.mxu0
        %1837 = vmatprep.mubr.f32.mxu0 0.0
        %1838 = vmatmul.mubr.f32.gmra.mxu0 %v1470
        %v1839 = vpop.f32.mrf.mxu0
        %v1840 = vadd.f32 0.0, %v1839
        %v1841 = vpop.f32.mrf.mxu0
        %1842 = vmatprep.mubr.f32.mxu0 0.0
        %1843 = vmatmul.mubr.f32.gmra.mxu0 %v1473
        %v1844 = vpop.f32.mrf.mxu0
        %v1845 = vadd.f32 0.0, %v1844
        %v1846 = vpop.f32.mrf.mxu0
        %1847 = vmatprep.mubr.f32.mxu0 0.0
        %1848 = vmatmul.mubr.f32.gmra.mxu0 %v1476
        %v1849 = vpop.f32.mrf.mxu0
        %v1850 = vadd.f32 0.0, %v1849
        %v1851 = vpop.f32.mrf.mxu0
        %1852 = vmatprep.mubr.f32.mxu0 0.0
        %1853 = vmatmul.mubr.f32.gmra.mxu0 %v1479
        %v1854 = vpop.f32.mrf.mxu0
        %v1855 = vadd.f32 0.0, %v1854
        %v1856 = vpop.f32.mrf.mxu0
        %1857 = vmatprep.mubr.f32.mxu0 0.0
        %1858 = vmatmul.mubr.f32.gmra.mxu0 %v1482
        %v1859 = vpop.f32.mrf.mxu0
        %v1860 = vadd.f32 0.0, %v1859
        %v1861 = vpop.f32.mrf.mxu0
        %1862 = vmatprep.mubr.f32.mxu0 0.0
        %1863 = vmatmul.mubr.f32.gmra.mxu0 %v1485
        %v1864 = vpop.f32.mrf.mxu0
        %v1865 = vadd.f32 0.0, %v1864
        %v1866 = vpop.f32.mrf.mxu0
        %1867 = vmatprep.mubr.f32.mxu0 0.0
        %1868 = vmatmul.mubr.f32.gmra.mxu0 %v1488
        %v1869 = vpop.f32.mrf.mxu0
        %v1870 = vadd.f32 0.0, %v1869
        %v1871 = vpop.f32.mrf.mxu0
        %1872 = vmatprep.mubr.f32.mxu0 0.0
        %1873 = vmatmul.mubr.f32.gmra.mxu0 %v1491
        %v1874 = vpop.f32.mrf.mxu0
        %v1875 = vadd.f32 0.0, %v1874
        %v1876 = vpop.f32.mrf.mxu0
        %1877 = vmatprep.mubr.f32.mxu0 0.0
        %1878 = vmatmul.mubr.f32.gmra.mxu0 %v1494
        %v1879 = vpop.f32.mrf.mxu0
        %v1880 = vadd.f32 0.0, %v1879
        %v1881 = vpop.f32.mrf.mxu0
        %1882 = vmatprep.mubr.f32.mxu0 0.0
        %1883 = vmatmul.mubr.f32.gmra.mxu0 %v1497
        %v1884 = vpop.f32.mrf.mxu0
        %v1885 = vadd.f32 0.0, %v1884
        %v1886 = vpop.f32.mrf.mxu0
        %1887 = vmatprep.mubr.f32.mxu0 0.0
        %1888 = vmatmul.mubr.f32.gmra.mxu0 %v1500
        %v1889 = vpop.f32.mrf.mxu0
        %v1890 = vadd.f32 0.0, %v1889
        %v1891 = vpop.f32.mrf.mxu0
        %1892 = vmatprep.mubr.f32.mxu0 0.0
        %1893 = vmatmul.mubr.f32.gmra.mxu0 %v1503
        %v1894 = vpop.f32.mrf.mxu0
        %v1895 = vadd.f32 0.0, %v1894
        %v1896 = vpop.f32.mrf.mxu0
        %1897 = vmatprep.mubr.f32.mxu0 0.0
        %1898 = vmatmul.mubr.f32.gmra.mxu0 %v1506
        %v1899 = vpop.f32.mrf.mxu0
        %v1900 = vadd.f32 0.0, %v1899
        %v1901 = vpop.f32.mrf.mxu0
        %1902 = vmatprep.mubr.f32.mxu0 0.0
        %1903 = vmatmul.mubr.f32.gmra.mxu0 %v1509
        %v1904 = vpop.f32.mrf.mxu0
        %v1905 = vadd.f32 0.0, %v1904
        %v1906 = vpop.f32.mrf.mxu0
        %1907 = vmatprep.mubr.f32.mxu0 0.0
        %1908 = vmatmul.mubr.f32.gmra.mxu0 %v1512
        %v1909 = vpop.f32.mrf.mxu0
        %v1910 = vadd.f32 0.0, %v1909
        %v1911 = vpop.f32.mrf.mxu0
        %1912 = vmatprep.mubr.f32.mxu0 0.0
        %1913 = vmatmul.mubr.f32.gmra.mxu0 %v1515
        %v1914 = vpop.f32.mrf.mxu0
        %v1915 = vadd.f32 0.0, %v1914
        %v1916 = vpop.f32.mrf.mxu0
        %1917 = vmatprep.mubr.f32.mxu0 0.0
        %1918 = vmatmul.mubr.f32.gmra.mxu0 %v1518
        %v1919 = vpop.f32.mrf.mxu0
        %v1920 = vadd.f32 0.0, %v1919
        %v1921 = vpop.f32.mrf.mxu0
        %1922 = vmatprep.mubr.f32.mxu0 0.0
        %1923 = vmatmul.mubr.f32.gmra.mxu0 %v1521
        %v1924 = vpop.f32.mrf.mxu0
        %v1925 = vadd.f32 0.0, %v1924
        %v1926 = vpop.f32.mrf.mxu0
        %1927 = vmatprep.mubr.f32.mxu0 0.0
        %1928 = vmatmul.mubr.f32.gmra.mxu0 %v1524
        %v1929 = vpop.f32.mrf.mxu0
        %v1930 = vadd.f32 0.0, %v1929
        %v1931 = vpop.f32.mrf.mxu0
        %1932 = vmatprep.mubr.f32.mxu0 0.0
        %1933 = vmatmul.mubr.f32.gmra.mxu0 %v1527
        %v1934 = vpop.f32.mrf.mxu0
        %v1935 = vadd.f32 0.0, %v1934
        %v1936 = vpop.f32.mrf.mxu0
        %1937 = vmatprep.mubr.f32.mxu0 0.0
        %1938 = vmatmul.mubr.f32.gmra.mxu0 %v1530
        %v1939 = vpop.f32.mrf.mxu0
        %v1940 = vadd.f32 0.0, %v1939
        %v1941 = vpop.f32.mrf.mxu0
        %1942 = vmatprep.mubr.f32.mxu0 0.0
        %1943 = vmatmul.mubr.f32.gmra.mxu0 %v1533
        %v1944 = vpop.f32.mrf.mxu0
        %v1945 = vadd.f32 0.0, %v1944
        %v1946 = vpop.f32.mrf.mxu0
        %1947 = vmatprep.mubr.f32.mxu0 0.0
        %1948 = vmatmul.mubr.f32.gmra.mxu0 %v1536
        %v1949 = vpop.f32.mrf.mxu0
        %v1950 = vadd.f32 0.0, %v1949
        %v1951 = vpop.f32.mrf.mxu0
        %1952 = vmatprep.mubr.f32.mxu0 0.0
        %1953 = vmatmul.mubr.f32.gmra.mxu0 %v1539
        %v1954 = vpop.f32.mrf.mxu0
        %v1955 = vadd.f32 0.0, %v1954
        %v1956 = vpop.f32.mrf.mxu0
        %1957 = vmatprep.mubr.f32.mxu0 0.0
        %1958 = vmatmul.mubr.f32.gmra.mxu0 %v1542
        %v1959 = vpop.f32.mrf.mxu0
        %v1960 = vadd.f32 0.0, %v1959
        %v1961 = vpop.f32.mrf.mxu0
        %1962 = vmatprep.mubr.f32.mxu0 0.0
        %1963 = vmatmul.mubr.f32.gmra.mxu0 %v1545
        %v1964 = vpop.f32.mrf.mxu0
        %v1965 = vadd.f32 0.0, %v1964
        %v1966 = vpop.f32.mrf.mxu0
        %1967 = vmatprep.mubr.f32.mxu0 0.0
        %1968 = vmatmul.mubr.f32.gmra.mxu0 %v1548
        %v1969 = vpop.f32.mrf.mxu0
        %v1970 = vadd.f32 0.0, %v1969
        %v1971 = vpop.f32.mrf.mxu0
        %1972 = vmatprep.mubr.f32.mxu0 0.0
        %1973 = vmatmul.mubr.f32.gmra.mxu0 %v1551
        %v1974 = vpop.f32.mrf.mxu0
        %v1975 = vadd.f32 0.0, %v1974
        %v1976 = vpop.f32.mrf.mxu0
        %1977 = vmatprep.mubr.f32.mxu0 0.0
        %1978 = vmatmul.mubr.f32.gmra.mxu0 %v1554
        %v1979 = vpop.f32.mrf.mxu0
        %v1980 = vadd.f32 0.0, %v1979
        %v1981 = vpop.f32.mrf.mxu0
        %1982 = vmatprep.mubr.f32.mxu0 0.0
        %1983 = vmatmul.mubr.f32.gmra.mxu0 %v1557
        %v1984 = vpop.f32.mrf.mxu0
        %v1985 = vadd.f32 0.0, %v1984
        %v1986 = vpop.f32.mrf.mxu0
        %1987 = vmatprep.mubr.f32.mxu0 0.0
        %1988 = vmatmul.mubr.f32.gmra.mxu0 %v1560
        %v1989 = vpop.f32.mrf.mxu0
        %v1990 = vadd.f32 0.0, %v1989
        %v1991 = vpop.f32.mrf.mxu0
        %1992 = vmatprep.mubr.f32.mxu0 0.0
        %1993 = vmatmul.mubr.f32.gmra.mxu0 %v1563
        %v1994 = vpop.f32.mrf.mxu0
        %v1995 = vadd.f32 0.0, %v1994
        %v1996 = vpop.f32.mrf.mxu0
        %1997 = vmatprep.mubr.f32.mxu0 0.0
        %1998 = vmatmul.mubr.f32.gmra.mxu0 %v1566
        %v1999 = vpop.f32.mrf.mxu0
        %v2000 = vadd.f32 0.0, %v1999
        %v2001 = vpop.f32.mrf.mxu0
        %2002 = vmatprep.mubr.f32.mxu0 0.0
        %2003 = vmatmul.mubr.f32.gmra.mxu0 %v1569
        %v2004 = vpop.f32.mrf.mxu0
        %v2005 = vadd.f32 0.0, %v2004
        %v2006 = vpop.f32.mrf.mxu0
        %2007 = vmatprep.mubr.f32.mxu0 0.0
        %2008 = vmatmul.mubr.f32.gmra.mxu0 %v1572
        %v2009 = vpop.f32.mrf.mxu0
        %v2010 = vadd.f32 0.0, %v2009
        %v2011 = vpop.f32.mrf.mxu0
        %2012 = vmatprep.mubr.f32.mxu0 0.0
        %2013 = vmatmul.mubr.f32.gmra.mxu0 %v1575
        %v2014 = vpop.f32.mrf.mxu0
        %v2015 = vadd.f32 0.0, %v2014
        %v2016 = vpop.f32.mrf.mxu0
        %2017 = vmatprep.mubr.f32.mxu0 0.0
        %2018 = vmatmul.mubr.f32.gmra.mxu0 %v1578
        %v2019 = vpop.f32.mrf.mxu0
        %v2020 = vadd.f32 0.0, %v2019
        %v2021 = vpop.f32.mrf.mxu0
        %2022 = vmatprep.mubr.f32.mxu0 0.0
        %2023 = vmatmul.mubr.f32.gmra.mxu0 %v1581
        %v2024 = vpop.f32.mrf.mxu0
        %v2025 = vadd.f32 0.0, %v2024
        %v2026 = vpop.f32.mrf.mxu0
        %2027 = vmatprep.mubr.f32.mxu0 0.0
        %2028 = vmatmul.mubr.f32.gmra.mxu0 %v1584
        %v2029 = vpop.f32.mrf.mxu0
        %v2030 = vadd.f32 0.0, %v2029
        %v2031 = vpop.f32.mrf.mxu0
        %2032 = vmatprep.mubr.f32.mxu0 0.0
        %2033 = vmatmul.mubr.f32.gmra.mxu0 %v1587
        %v2034 = vpop.f32.mrf.mxu0
        %v2035 = vadd.f32 0.0, %v2034
        %v2036 = vpop.f32.mrf.mxu0
        %2037 = vmatprep.mubr.f32.mxu0 0.0
        %2038 = vmatmul.mubr.f32.gmra.mxu0 %v1590
        %v2039 = vpop.f32.mrf.mxu0
        %v2040 = vadd.f32 0.0, %v2039
        %v2041 = vpop.f32.mrf.mxu0
        %2042 = vmatprep.mubr.f32.mxu0 0.0
        %2043 = vmatmul.mubr.f32.gmra.mxu0 %v1593
        %v2044 = vpop.f32.mrf.mxu0
        %v2045 = vadd.f32 0.0, %v2044
        %v2046 = vpop.f32.mrf.mxu0
        %2047 = vmatprep.mubr.f32.mxu0 0.0
        %2048 = vmatmul.mubr.f32.gmra.mxu0 %v1596
        %v2049 = vpop.f32.mrf.mxu0
        %v2050 = vadd.f32 0.0, %v2049
        %v2051 = vpop.f32.mrf.mxu0
        %2052 = vmatprep.mubr.f32.mxu0 0.0
        %2053 = vmatmul.mubr.f32.gmra.mxu0 %v1599
        %v2054 = vpop.f32.mrf.mxu0
        %v2055 = vadd.f32 0.0, %v2054
        %v2056 = vpop.f32.mrf.mxu0
        %2057 = vmatprep.mubr.f32.mxu0 0.0
        %2058 = vmatmul.mubr.f32.gmra.mxu0 %v1602
        %v2059 = vpop.f32.mrf.mxu0
        %v2060 = vadd.f32 0.0, %v2059
        %v2061 = vpop.f32.mrf.mxu0
        %2062 = vmatprep.mubr.f32.mxu0 0.0
        %2063 = vmatmul.mubr.f32.gmra.mxu0 %v1605
        %v2064 = vpop.f32.mrf.mxu0
        %v2065 = vadd.f32 0.0, %v2064
        %v2066 = vpop.f32.mrf.mxu0
        %2067 = vmatprep.mubr.f32.mxu0 0.0
        %2068 = vmatmul.mubr.f32.gmra.mxu0 %v1608
        %v2069 = vpop.f32.mrf.mxu0
        %v2070 = vadd.f32 0.0, %v2069
        %v2071 = vpop.f32.mrf.mxu0
        %2072 = vmatprep.mubr.f32.mxu0 0.0
        %2073 = vmatmul.mubr.f32.gmra.mxu0 %v1611
        %v2074 = vpop.f32.mrf.mxu0
        %v2075 = vadd.f32 0.0, %v2074
        %v2076 = vpop.f32.mrf.mxu0
        %2077 = vmatprep.mubr.f32.mxu0 0.0
        %2078 = vmatmul.mubr.f32.gmra.mxu0 %v1614
        %v2079 = vpop.f32.mrf.mxu0
        %v2080 = vadd.f32 0.0, %v2079
        %v2081 = vpop.f32.mrf.mxu0
        %2082 = vmatprep.mubr.f32.mxu0 0.0
        %2083 = vmatmul.mubr.f32.gmra.mxu0 %v1617
        %v2084 = vpop.f32.mrf.mxu0
        %v2085 = vadd.f32 0.0, %v2084
        %v2086 = vpop.f32.mrf.mxu0
        %2087 = vmatprep.mubr.f32.mxu0 0.0
        %2088 = vmatmul.mubr.f32.gmra.mxu0 %v1620
        %v2089 = vpop.f32.mrf.mxu0
        %v2090 = vadd.f32 0.0, %v2089
        %v2091 = vpop.f32.mrf.mxu0
        %2092 = vmatprep.mubr.f32.mxu0 0.0
        %2093 = vmatmul.mubr.f32.gmra.mxu0 %v1623
        %v2094 = vpop.f32.mrf.mxu0
        %v2095 = vadd.f32 0.0, %v2094
        %v2096 = vpop.f32.mrf.mxu0
        %2097 = vmatprep.mubr.f32.mxu0 0.0
        %2098 = vmatmul.mubr.f32.gmra.mxu0 %v1626
        %v2099 = vpop.f32.mrf.mxu0
        %v2100 = vadd.f32 0.0, %v2099
        %v2101 = vpop.f32.mrf.mxu0
        %2102 = vmatprep.mubr.f32.mxu0 0.0
        %2103 = vmatmul.mubr.f32.gmra.mxu0 %v1629
        %v2104 = vpop.f32.mrf.mxu0
        %v2105 = vadd.f32 0.0, %v2104
        %v2106 = vpop.f32.mrf.mxu0
        %2107 = vmatprep.mubr.f32.mxu0 0.0
        %2108 = vmatmul.mubr.f32.gmra.mxu0 %v1632
        %v2109 = vpop.f32.mrf.mxu0
        %v2110 = vadd.f32 0.0, %v2109
        %v2111 = vpop.f32.mrf.mxu0
        %2112 = vmatprep.mubr.f32.mxu0 0.0
        %2113 = vmatmul.mubr.f32.gmra.mxu0 %v1635
        %v2114 = vpop.f32.mrf.mxu0
        %v2115 = vadd.f32 0.0, %v2114
        %v2116 = vpop.f32.mrf.mxu0
        %2117 = vmatprep.mubr.f32.mxu0 0.0
        %2118 = vmatmul.mubr.f32.gmra.mxu0 %v1638
        %v2119 = vpop.f32.mrf.mxu0
        %v2120 = vadd.f32 0.0, %v2119
        %v2121 = vpop.f32.mrf.mxu0
        %2122 = vmatprep.mubr.f32.mxu0 0.0
        %2123 = vmatmul.mubr.f32.gmra.mxu0 %v1641
        %v2124 = vpop.f32.mrf.mxu0
        %v2125 = vadd.f32 0.0, %v2124
        %v2126 = vpop.f32.mrf.mxu0
        %2127 = vmatprep.mubr.f32.mxu0 0.0
        %2128 = vmatmul.mubr.f32.gmra.mxu0 %v1644
        %v2129 = vpop.f32.mrf.mxu0
        %v2130 = vadd.f32 0.0, %v2129
        %v2131 = vpop.f32.mrf.mxu0
        %2132 = vmatprep.mubr.f32.mxu0 0.0
        %2133 = vmatmul.mubr.f32.gmra.mxu0 %v1647
        %v2134 = vpop.f32.mrf.mxu0
        %v2135 = vadd.f32 0.0, %v2134
        %v2136 = vpop.f32.mrf.mxu0
        %2137 = vmatprep.mubr.f32.mxu0 0.0
        %2138 = vmatmul.mubr.f32.gmra.mxu0 %v1650
        %v2139 = vpop.f32.mrf.mxu0
        %v2140 = vadd.f32 0.0, %v2139
        %v2141 = vpop.f32.mrf.mxu0
        %2142 = vmatprep.mubr.f32.mxu0 0.0
        %2143 = vmatmul.mubr.f32.gmra.mxu0 %v1653
        %v2144 = vpop.f32.mrf.mxu0
        %v2145 = vadd.f32 0.0, %v2144
        %v2146 = vpop.f32.mrf.mxu0
        %2147 = vmatprep.mubr.f32.mxu0 0.0
        %2148 = vmatmul.mubr.f32.gmra.mxu0 %v1656
        %v2149 = vpop.f32.mrf.mxu0
        %v2150 = vadd.f32 0.0, %v2149
        %v2151 = vpop.f32.mrf.mxu0
        %2152 = vmatprep.mubr.f32.mxu0 0.0
        %2153 = vmatmul.mubr.f32.gmra.mxu0 %v1659
        %v2154 = vpop.f32.mrf.mxu0
        %v2155 = vadd.f32 0.0, %v2154
        %v2156 = vpop.f32.mrf.mxu0
        %2157 = vmatprep.mubr.f32.mxu0 0.0
        %2158 = vmatmul.mubr.f32.gmra.mxu0 %v1662
        %v2159 = vpop.f32.mrf.mxu0
        %v2160 = vadd.f32 0.0, %v2159
        %v2161 = vpop.f32.mrf.mxu0
        %2162 = vmatprep.mubr.f32.mxu0 0.0
        %2163 = vmatmul.mubr.f32.gmra.mxu0 %v1665
        %v2164 = vpop.f32.mrf.mxu0
        %v2165 = vadd.f32 0.0, %v2164
        %v2166 = vpop.f32.mrf.mxu0
        %2167 = vmatprep.mubr.f32.mxu0 0.0
        %2168 = vmatmul.mubr.f32.gmra.mxu0 %v1668
        %v2169 = vpop.f32.mrf.mxu0
        %v2170 = vadd.f32 0.0, %v2169
        %v2171 = vpop.f32.mrf.mxu0
        %2172 = vmatprep.mubr.f32.mxu0 0.0
        %2173 = vmatmul.mubr.f32.gmra.mxu0 %v1671
        %v2174 = vpop.f32.mrf.mxu0
        %v2175 = vadd.f32 0.0, %v2174
        %v2176 = vpop.f32.mrf.mxu0
        %2177 = vmatprep.mubr.f32.mxu0 0.0
        %2178 = vmatmul.mubr.f32.gmra.mxu0 %v1674
        %v2179 = vpop.f32.mrf.mxu0
        %v2180 = vadd.f32 0.0, %v2179
        %v2181 = vpop.f32.mrf.mxu0
        %2182 = vmatprep.mubr.f32.mxu0 0.0
        %2183 = vmatmul.mubr.f32.gmra.mxu0 %v1677
        %v2184 = vpop.f32.mrf.mxu0
        %v2185 = vadd.f32 0.0, %v2184
        %v2186 = vpop.f32.mrf.mxu0
        %2187 = vmatprep.mubr.f32.mxu0 0.0
        %2188 = vmatmul.mubr.f32.gmra.mxu0 %v1680
        %v2189 = vpop.f32.mrf.mxu0
        %v2190 = vadd.f32 0.0, %v2189
        %v2191 = vpop.f32.mrf.mxu0
        %2192 = vmatprep.mubr.f32.mxu0 0.0
        %2193 = vmatmul.mubr.f32.gmra.mxu0 %v1683
        %v2194 = vpop.f32.mrf.mxu0
        %v2195 = vadd.f32 0.0, %v2194
        %v2196 = vpop.f32.mrf.mxu0
        %2197 = vmatprep.mubr.f32.mxu0 0.0
        %2198 = vmatmul.mubr.f32.gmra.mxu0 %v1686
        %v2199 = vpop.f32.mrf.mxu0
        %v2200 = vadd.f32 0.0, %v2199
        %v2201 = vpop.f32.mrf.mxu0
        %2202 = vmatprep.mubr.f32.mxu0 0.0
        %2203 = vmatmul.mubr.f32.gmra.mxu0 %v1689
        %v2204 = vpop.f32.mrf.mxu0
        %v2205 = vadd.f32 0.0, %v2204
        %v2206 = vpop.f32.mrf.mxu0
        %2207 = vmatprep.mubr.f32.mxu0 0.0
        %2208 = vmatmul.mubr.f32.gmra.mxu0 %v1692
        %v2209 = vpop.f32.mrf.mxu0
        %v2210 = vadd.f32 0.0, %v2209
        %v2211 = vpop.f32.mrf.mxu0
        %2212 = vmatprep.mubr.f32.mxu0 0.0
        %2213 = vmatmul.mubr.f32.gmra.mxu0 %v1695
        %v2214 = vpop.f32.mrf.mxu0
        %v2215 = vadd.f32 0.0, %v2214
        %v2216 = vpop.f32.mrf.mxu0
        %2217 = vmatprep.mubr.f32.mxu0 0.0
        %2218 = vmatmul.mubr.f32.gmra.mxu0 %v1698
        %v2219 = vpop.f32.mrf.mxu0
        %v2220 = vadd.f32 0.0, %v2219
        %v2221 = vpop.f32.mrf.mxu0
        %2222 = vmatprep.mubr.f32.mxu0 0.0
        %2223 = vmatmul.mubr.f32.gmra.mxu0 %v1701
        %v2224 = vpop.f32.mrf.mxu0
        %v2225 = vadd.f32 0.0, %v2224
        %v2226 = vpop.f32.mrf.mxu0
        %2227 = vmatprep.mubr.f32.mxu0 0.0
        %2228 = vmatmul.mubr.f32.gmra.mxu0 %v1704
        %v2229 = vpop.f32.mrf.mxu0
        %v2230 = vadd.f32 0.0, %v2229
        %v2231 = vpop.f32.mrf.mxu0
        %2232 = vmatprep.mubr.f32.mxu0 0.0
        %2233 = vmatmul.mubr.f32.gmra.mxu0 %v1707
        %v2234 = vpop.f32.mrf.mxu0
        %v2235 = vadd.f32 0.0, %v2234
        %v2236 = vpop.f32.mrf.mxu0
        %2237 = vmatprep.mubr.f32.mxu0 0.0
        %2238 = vmatmul.mubr.f32.gmra.mxu0 %v1710
        %v2239 = vpop.f32.mrf.mxu0
        %v2240 = vadd.f32 0.0, %v2239
        %v2241 = vpop.f32.mrf.mxu0
        %2242 = vmatprep.mubr.f32.mxu0 0.0
        %2243 = vmatmul.mubr.f32.gmra.mxu0 %v1713
        %v2244 = vpop.f32.mrf.mxu0
        %v2245 = vadd.f32 0.0, %v2244
        %v2246 = vpop.f32.mrf.mxu0
        %2247 = vmatprep.mubr.f32.mxu0 0.0
        %2248 = vmatmul.mubr.f32.gmra.mxu0 %v1716
        %v2249 = vpop.f32.mrf.mxu0
        %v2250 = vadd.f32 0.0, %v2249
        %v2251 = vpop.f32.mrf.mxu0
        %2252 = vmatprep.mubr.f32.mxu0 0.0
        %2253 = vmatmul.mubr.f32.gmra.mxu0 %v1719
        %v2254 = vpop.f32.mrf.mxu0
        %v2255 = vadd.f32 0.0, %v2254
        %v2256 = vpop.f32.mrf.mxu0
        %2257 = vmatprep.mubr.f32.mxu0 0.0
        %2258 = vmatmul.mubr.f32.gmra.mxu0 %v1722
        %v2259 = vpop.f32.mrf.mxu0
        %v2260 = vadd.f32 0.0, %v2259
        %v2261 = vpop.f32.mrf.mxu0
        %2262 = vmatprep.mubr.f32.mxu0 0.0
        %2263 = vmatmul.mubr.f32.gmra.mxu0 %v1725
        %v2264 = vpop.f32.mrf.mxu0
        %v2265 = vadd.f32 0.0, %v2264
        %v2266 = vpop.f32.mrf.mxu0
        %2267 = vmatprep.mubr.f32.mxu0 0.0
        %2268 = vmatmul.mubr.f32.gmra.mxu0 %v1728
        %v2269 = vpop.f32.mrf.mxu0
        %v2270 = vadd.f32 0.0, %v2269
        %v2271 = vpop.f32.mrf.mxu0
        %2272 = vmatprep.mubr.f32.mxu0 0.0
        %2273 = vmatmul.mubr.f32.gmra.mxu0 %v1731
        %v2274 = vpop.f32.mrf.mxu0
        %v2275 = vadd.f32 0.0, %v2274
        %v2276 = vpop.f32.mrf.mxu0
        %2277 = vdwg.mxu0
        %v2278 = vld [vmem:[%s261] sm:$0xff]
        %v2279 = vld [vmem:[%s261 + $0x8] sm:$0xff]
        %v2280 = vld [vmem:[%s261 + $0x10] sm:$0xff]
        %v2281 = vld [vmem:[%s261 + $0x18] sm:$0xff]
        %v2282 = vld [vmem:[%s261 + $0x20] sm:$0xff]
        %v2283 = vld [vmem:[%s261 + $0x28] sm:$0xff]
        %v2284 = vld [vmem:[%s261 + $0x30] sm:$0xff]
        %v2285 = vld [vmem:[%s261 + $0x38] sm:$0xff]
        %v2286 = vld [vmem:[%s261 + $0x40] sm:$0xff]
        %v2287 = vld [vmem:[%s261 + $0x48] sm:$0xff]
        %v2288 = vld [vmem:[%s261 + $0x50] sm:$0xff]
        %v2289 = vld [vmem:[%s261 + $0x58] sm:$0xff]
        %v2290 = vld [vmem:[%s261 + $0x60] sm:$0xff]
        %v2291 = vld [vmem:[%s261 + $0x68] sm:$0xff]
        %v2292 = vld [vmem:[%s261 + $0x70] sm:$0xff]
        %v2293 = vld [vmem:[%s261 + $0x78] sm:$0xff]
        %v2294 = vld [vmem:[%s261 + $0x80] sm:$0xff]
        %v2295 = vld [vmem:[%s261 + $0x88] sm:$0xff]
        %v2296 = vld [vmem:[%s261 + $0x90] sm:$0xff]
        %v2297 = vld [vmem:[%s261 + $0x98] sm:$0xff]
        %v2298 = vld [vmem:[%s261 + $0xa0] sm:$0xff]
        %v2299 = vld [vmem:[%s261 + $0xa8] sm:$0xff]
        %v2300 = vld [vmem:[%s261 + $0xb0] sm:$0xff]
        %v2301 = vld [vmem:[%s261 + $0xb8] sm:$0xff]
        %v2302 = vld [vmem:[%s261 + $0xc0] sm:$0xff]
        %v2303 = vld [vmem:[%s261 + $0xc8] sm:$0xff]
        %v2304 = vld [vmem:[%s261 + $0xd0] sm:$0xff]
        %v2305 = vld [vmem:[%s261 + $0xd8] sm:$0xff]
        %v2306 = vld [vmem:[%s261 + $0xe0] sm:$0xff]
        %v2307 = vld [vmem:[%s261 + $0xe8] sm:$0xff]
        %v2308 = vld [vmem:[%s261 + $0xf0] sm:$0xff]
        %v2309 = vld [vmem:[%s261 + $0xf8] sm:$0xff]
        %v2310 = vld [vmem:[%s261 + $0x100] sm:$0xff]
        %v2311 = vld [vmem:[%s261 + $0x108] sm:$0xff]
        %v2312 = vld [vmem:[%s261 + $0x110] sm:$0xff]
        %v2313 = vld [vmem:[%s261 + $0x118] sm:$0xff]
        %v2314 = vld [vmem:[%s261 + $0x120] sm:$0xff]
        %v2315 = vld [vmem:[%s261 + $0x128] sm:$0xff]
        %v2316 = vld [vmem:[%s261 + $0x130] sm:$0xff]
        %v2317 = vld [vmem:[%s261 + $0x138] sm:$0xff]
        %v2318 = vld [vmem:[%s261 + $0x140] sm:$0xff]
        %v2319 = vld [vmem:[%s261 + $0x148] sm:$0xff]
        %v2320 = vld [vmem:[%s261 + $0x150] sm:$0xff]
        %v2321 = vld [vmem:[%s261 + $0x158] sm:$0xff]
        %v2322 = vld [vmem:[%s261 + $0x160] sm:$0xff]
        %v2323 = vld [vmem:[%s261 + $0x168] sm:$0xff]
        %v2324 = vld [vmem:[%s261 + $0x170] sm:$0xff]
        %v2325 = vld [vmem:[%s261 + $0x178] sm:$0xff]
        %v2326 = vld [vmem:[%s261 + $0x180] sm:$0xff]
        %v2327 = vld [vmem:[%s261 + $0x188] sm:$0xff]
        %v2328 = vld [vmem:[%s261 + $0x190] sm:$0xff]
        %v2329 = vld [vmem:[%s261 + $0x198] sm:$0xff]
        %v2330 = vld [vmem:[%s261 + $0x1a0] sm:$0xff]
        %v2331 = vld [vmem:[%s261 + $0x1a8] sm:$0xff]
        %v2332 = vld [vmem:[%s261 + $0x1b0] sm:$0xff]
        %v2333 = vld [vmem:[%s261 + $0x1b8] sm:$0xff]
        %v2334 = vld [vmem:[%s261 + $0x1c0] sm:$0xff]
        %v2335 = vld [vmem:[%s261 + $0x1c8] sm:$0xff]
        %v2336 = vld [vmem:[%s261 + $0x1d0] sm:$0xff]
        %v2337 = vld [vmem:[%s261 + $0x1d8] sm:$0xff]
        %v2338 = vld [vmem:[%s261 + $0x1e0] sm:$0xff]
        %v2339 = vld [vmem:[%s261 + $0x1e8] sm:$0xff]
        %v2340 = vld [vmem:[%s261 + $0x1f0] sm:$0xff]
        %v2341 = vld [vmem:[%s261 + $0x1f8] sm:$0xff]
        %v2342 = vld [vmem:[%s261 + $0x200] sm:$0xff]
        %v2343 = vld [vmem:[%s261 + $0x208] sm:$0xff]
        %v2344 = vld [vmem:[%s261 + $0x210] sm:$0xff]
        %v2345 = vld [vmem:[%s261 + $0x218] sm:$0xff]
        %v2346 = vld [vmem:[%s261 + $0x220] sm:$0xff]
        %v2347 = vld [vmem:[%s261 + $0x228] sm:$0xff]
        %v2348 = vld [vmem:[%s261 + $0x230] sm:$0xff]
        %v2349 = vld [vmem:[%s261 + $0x238] sm:$0xff]
        %v2350 = vld [vmem:[%s261 + $0x240] sm:$0xff]
        %v2351 = vld [vmem:[%s261 + $0x248] sm:$0xff]
        %v2352 = vld [vmem:[%s261 + $0x250] sm:$0xff]
        %v2353 = vld [vmem:[%s261 + $0x258] sm:$0xff]
        %v2354 = vld [vmem:[%s261 + $0x260] sm:$0xff]
        %v2355 = vld [vmem:[%s261 + $0x268] sm:$0xff]
        %v2356 = vld [vmem:[%s261 + $0x270] sm:$0xff]
        %v2357 = vld [vmem:[%s261 + $0x278] sm:$0xff]
        %v2358 = vld [vmem:[%s261 + $0x280] sm:$0xff]
        %v2359 = vld [vmem:[%s261 + $0x288] sm:$0xff]
        %v2360 = vld [vmem:[%s261 + $0x290] sm:$0xff]
        %v2361 = vld [vmem:[%s261 + $0x298] sm:$0xff]
        %v2362 = vld [vmem:[%s261 + $0x2a0] sm:$0xff]
        %v2363 = vld [vmem:[%s261 + $0x2a8] sm:$0xff]
        %v2364 = vld [vmem:[%s261 + $0x2b0] sm:$0xff]
        %v2365 = vld [vmem:[%s261 + $0x2b8] sm:$0xff]
        %v2366 = vld [vmem:[%s261 + $0x2c0] sm:$0xff]
        %v2367 = vld [vmem:[%s261 + $0x2c8] sm:$0xff]
        %v2368 = vld [vmem:[%s261 + $0x2d0] sm:$0xff]
        %v2369 = vld [vmem:[%s261 + $0x2d8] sm:$0xff]
        %v2370 = vld [vmem:[%s261 + $0x2e0] sm:$0xff]
        %v2371 = vld [vmem:[%s261 + $0x2e8] sm:$0xff]
        %v2372 = vld [vmem:[%s261 + $0x2f0] sm:$0xff]
        %v2373 = vld [vmem:[%s261 + $0x2f8] sm:$0xff]
        %2374 = vset.pattern.permute.xlu0 0
        %2375 = vperm.xlu0 %2374, %v2278
        %v2376 = vpop.permute.xlu0 %2375
        %2377 = vset.pattern.permute.xlu0 0
        %2378 = vperm.xlu0 %2377, %v2279
        %v2379 = vpop.permute.xlu0 %2378
        %2380 = vset.pattern.permute.xlu0 0
        %2381 = vperm.xlu0 %2380, %v2280
        %v2382 = vpop.permute.xlu0 %2381
        %2383 = vset.pattern.permute.xlu0 0
        %2384 = vperm.xlu0 %2383, %v2281
        %v2385 = vpop.permute.xlu0 %2384
        %2386 = vset.pattern.permute.xlu0 0
        %2387 = vperm.xlu0 %2386, %v2282
        %v2388 = vpop.permute.xlu0 %2387
        %2389 = vset.pattern.permute.xlu0 0
        %2390 = vperm.xlu0 %2389, %v2283
        %v2391 = vpop.permute.xlu0 %2390
        %2392 = vset.pattern.permute.xlu0 0
        %2393 = vperm.xlu0 %2392, %v2284
        %v2394 = vpop.permute.xlu0 %2393
        %2395 = vset.pattern.permute.xlu0 0
        %2396 = vperm.xlu0 %2395, %v2285
        %v2397 = vpop.permute.xlu0 %2396
        %2398 = vset.pattern.permute.xlu0 0
        %2399 = vperm.xlu0 %2398, %v2286
        %v2400 = vpop.permute.xlu0 %2399
        %2401 = vset.pattern.permute.xlu0 0
        %2402 = vperm.xlu0 %2401, %v2287
        %v2403 = vpop.permute.xlu0 %2402
        %2404 = vset.pattern.permute.xlu0 0
        %2405 = vperm.xlu0 %2404, %v2288
        %v2406 = vpop.permute.xlu0 %2405
        %2407 = vset.pattern.permute.xlu0 0
        %2408 = vperm.xlu0 %2407, %v2289
        %v2409 = vpop.permute.xlu0 %2408
        %2410 = vset.pattern.permute.xlu0 0
        %2411 = vperm.xlu0 %2410, %v2290
        %v2412 = vpop.permute.xlu0 %2411
        %2413 = vset.pattern.permute.xlu0 0
        %2414 = vperm.xlu0 %2413, %v2291
        %v2415 = vpop.permute.xlu0 %2414
        %2416 = vset.pattern.permute.xlu0 0
        %2417 = vperm.xlu0 %2416, %v2292
        %v2418 = vpop.permute.xlu0 %2417
        %2419 = vset.pattern.permute.xlu0 0
        %2420 = vperm.xlu0 %2419, %v2293
        %v2421 = vpop.permute.xlu0 %2420
        %2422 = vset.pattern.permute.xlu0 0
        %2423 = vperm.xlu0 %2422, %v2294
        %v2424 = vpop.permute.xlu0 %2423
        %2425 = vset.pattern.permute.xlu0 0
        %2426 = vperm.xlu0 %2425, %v2295
        %v2427 = vpop.permute.xlu0 %2426
        %2428 = vset.pattern.permute.xlu0 0
        %2429 = vperm.xlu0 %2428, %v2296
        %v2430 = vpop.permute.xlu0 %2429
        %2431 = vset.pattern.permute.xlu0 0
        %2432 = vperm.xlu0 %2431, %v2297
        %v2433 = vpop.permute.xlu0 %2432
        %2434 = vset.pattern.permute.xlu0 0
        %2435 = vperm.xlu0 %2434, %v2298
        %v2436 = vpop.permute.xlu0 %2435
        %2437 = vset.pattern.permute.xlu0 0
        %2438 = vperm.xlu0 %2437, %v2299
        %v2439 = vpop.permute.xlu0 %2438
        %2440 = vset.pattern.permute.xlu0 0
        %2441 = vperm.xlu0 %2440, %v2300
        %v2442 = vpop.permute.xlu0 %2441
        %2443 = vset.pattern.permute.xlu0 0
        %2444 = vperm.xlu0 %2443, %v2301
        %v2445 = vpop.permute.xlu0 %2444
        %2446 = vset.pattern.permute.xlu0 0
        %2447 = vperm.xlu0 %2446, %v2302
        %v2448 = vpop.permute.xlu0 %2447
        %2449 = vset.pattern.permute.xlu0 0
        %2450 = vperm.xlu0 %2449, %v2303
        %v2451 = vpop.permute.xlu0 %2450
        %2452 = vset.pattern.permute.xlu0 0
        %2453 = vperm.xlu0 %2452, %v2304
        %v2454 = vpop.permute.xlu0 %2453
        %2455 = vset.pattern.permute.xlu0 0
        %2456 = vperm.xlu0 %2455, %v2305
        %v2457 = vpop.permute.xlu0 %2456
        %2458 = vset.pattern.permute.xlu0 0
        %2459 = vperm.xlu0 %2458, %v2306
        %v2460 = vpop.permute.xlu0 %2459
        %2461 = vset.pattern.permute.xlu0 0
        %2462 = vperm.xlu0 %2461, %v2307
        %v2463 = vpop.permute.xlu0 %2462
        %2464 = vset.pattern.permute.xlu0 0
        %2465 = vperm.xlu0 %2464, %v2308
        %v2466 = vpop.permute.xlu0 %2465
        %2467 = vset.pattern.permute.xlu0 0
        %2468 = vperm.xlu0 %2467, %v2309
        %v2469 = vpop.permute.xlu0 %2468
        %2470 = vset.pattern.permute.xlu0 0
        %2471 = vperm.xlu0 %2470, %v2310
        %v2472 = vpop.permute.xlu0 %2471
        %2473 = vset.pattern.permute.xlu0 0
        %2474 = vperm.xlu0 %2473, %v2311
        %v2475 = vpop.permute.xlu0 %2474
        %2476 = vset.pattern.permute.xlu0 0
        %2477 = vperm.xlu0 %2476, %v2312
        %v2478 = vpop.permute.xlu0 %2477
        %2479 = vset.pattern.permute.xlu0 0
        %2480 = vperm.xlu0 %2479, %v2313
        %v2481 = vpop.permute.xlu0 %2480
        %2482 = vset.pattern.permute.xlu0 0
        %2483 = vperm.xlu0 %2482, %v2314
        %v2484 = vpop.permute.xlu0 %2483
        %2485 = vset.pattern.permute.xlu0 0
        %2486 = vperm.xlu0 %2485, %v2315
        %v2487 = vpop.permute.xlu0 %2486
        %2488 = vset.pattern.permute.xlu0 0
        %2489 = vperm.xlu0 %2488, %v2316
        %v2490 = vpop.permute.xlu0 %2489
        %2491 = vset.pattern.permute.xlu0 0
        %2492 = vperm.xlu0 %2491, %v2317
        %v2493 = vpop.permute.xlu0 %2492
        %2494 = vset.pattern.permute.xlu0 0
        %2495 = vperm.xlu0 %2494, %v2318
        %v2496 = vpop.permute.xlu0 %2495
        %2497 = vset.pattern.permute.xlu0 0
        %2498 = vperm.xlu0 %2497, %v2319
        %v2499 = vpop.permute.xlu0 %2498
        %2500 = vset.pattern.permute.xlu0 0
        %2501 = vperm.xlu0 %2500, %v2320
        %v2502 = vpop.permute.xlu0 %2501
        %2503 = vset.pattern.permute.xlu0 0
        %2504 = vperm.xlu0 %2503, %v2321
        %v2505 = vpop.permute.xlu0 %2504
        %2506 = vset.pattern.permute.xlu0 0
        %2507 = vperm.xlu0 %2506, %v2322
        %v2508 = vpop.permute.xlu0 %2507
        %2509 = vset.pattern.permute.xlu0 0
        %2510 = vperm.xlu0 %2509, %v2323
        %v2511 = vpop.permute.xlu0 %2510
        %2512 = vset.pattern.permute.xlu0 0
        %2513 = vperm.xlu0 %2512, %v2324
        %v2514 = vpop.permute.xlu0 %2513
        %2515 = vset.pattern.permute.xlu0 0
        %2516 = vperm.xlu0 %2515, %v2325
        %v2517 = vpop.permute.xlu0 %2516
        %2518 = vset.pattern.permute.xlu0 0
        %2519 = vperm.xlu0 %2518, %v2326
        %v2520 = vpop.permute.xlu0 %2519
        %2521 = vset.pattern.permute.xlu0 0
        %2522 = vperm.xlu0 %2521, %v2327
        %v2523 = vpop.permute.xlu0 %2522
        %2524 = vset.pattern.permute.xlu0 0
        %2525 = vperm.xlu0 %2524, %v2328
        %v2526 = vpop.permute.xlu0 %2525
        %2527 = vset.pattern.permute.xlu0 0
        %2528 = vperm.xlu0 %2527, %v2329
        %v2529 = vpop.permute.xlu0 %2528
        %2530 = vset.pattern.permute.xlu0 0
        %2531 = vperm.xlu0 %2530, %v2330
        %v2532 = vpop.permute.xlu0 %2531
        %2533 = vset.pattern.permute.xlu0 0
        %2534 = vperm.xlu0 %2533, %v2331
        %v2535 = vpop.permute.xlu0 %2534
        %2536 = vset.pattern.permute.xlu0 0
        %2537 = vperm.xlu0 %2536, %v2332
        %v2538 = vpop.permute.xlu0 %2537
        %2539 = vset.pattern.permute.xlu0 0
        %2540 = vperm.xlu0 %2539, %v2333
        %v2541 = vpop.permute.xlu0 %2540
        %2542 = vset.pattern.permute.xlu0 0
        %2543 = vperm.xlu0 %2542, %v2334
        %v2544 = vpop.permute.xlu0 %2543
        %2545 = vset.pattern.permute.xlu0 0
        %2546 = vperm.xlu0 %2545, %v2335
        %v2547 = vpop.permute.xlu0 %2546
        %2548 = vset.pattern.permute.xlu0 0
        %2549 = vperm.xlu0 %2548, %v2336
        %v2550 = vpop.permute.xlu0 %2549
        %2551 = vset.pattern.permute.xlu0 0
        %2552 = vperm.xlu0 %2551, %v2337
        %v2553 = vpop.permute.xlu0 %2552
        %2554 = vset.pattern.permute.xlu0 0
        %2555 = vperm.xlu0 %2554, %v2338
        %v2556 = vpop.permute.xlu0 %2555
        %2557 = vset.pattern.permute.xlu0 0
        %2558 = vperm.xlu0 %2557, %v2339
        %v2559 = vpop.permute.xlu0 %2558
        %2560 = vset.pattern.permute.xlu0 0
        %2561 = vperm.xlu0 %2560, %v2340
        %v2562 = vpop.permute.xlu0 %2561
        %2563 = vset.pattern.permute.xlu0 0
        %2564 = vperm.xlu0 %2563, %v2341
        %v2565 = vpop.permute.xlu0 %2564
        %2566 = vset.pattern.permute.xlu0 0
        %2567 = vperm.xlu0 %2566, %v2342
        %v2568 = vpop.permute.xlu0 %2567
        %2569 = vset.pattern.permute.xlu0 0
        %2570 = vperm.xlu0 %2569, %v2343
        %v2571 = vpop.permute.xlu0 %2570
        %2572 = vset.pattern.permute.xlu0 0
        %2573 = vperm.xlu0 %2572, %v2344
        %v2574 = vpop.permute.xlu0 %2573
        %2575 = vset.pattern.permute.xlu0 0
        %2576 = vperm.xlu0 %2575, %v2345
        %v2577 = vpop.permute.xlu0 %2576
        %2578 = vset.pattern.permute.xlu0 0
        %2579 = vperm.xlu0 %2578, %v2346
        %v2580 = vpop.permute.xlu0 %2579
        %2581 = vset.pattern.permute.xlu0 0
        %2582 = vperm.xlu0 %2581, %v2347
        %v2583 = vpop.permute.xlu0 %2582
        %2584 = vset.pattern.permute.xlu0 0
        %2585 = vperm.xlu0 %2584, %v2348
        %v2586 = vpop.permute.xlu0 %2585
        %2587 = vset.pattern.permute.xlu0 0
        %2588 = vperm.xlu0 %2587, %v2349
        %v2589 = vpop.permute.xlu0 %2588
        %2590 = vset.pattern.permute.xlu0 0
        %2591 = vperm.xlu0 %2590, %v2350
        %v2592 = vpop.permute.xlu0 %2591
        %2593 = vset.pattern.permute.xlu0 0
        %2594 = vperm.xlu0 %2593, %v2351
        %v2595 = vpop.permute.xlu0 %2594
        %2596 = vset.pattern.permute.xlu0 0
        %2597 = vperm.xlu0 %2596, %v2352
        %v2598 = vpop.permute.xlu0 %2597
        %2599 = vset.pattern.permute.xlu0 0
        %2600 = vperm.xlu0 %2599, %v2353
        %v2601 = vpop.permute.xlu0 %2600
        %2602 = vset.pattern.permute.xlu0 0
        %2603 = vperm.xlu0 %2602, %v2354
        %v2604 = vpop.permute.xlu0 %2603
        %2605 = vset.pattern.permute.xlu0 0
        %2606 = vperm.xlu0 %2605, %v2355
        %v2607 = vpop.permute.xlu0 %2606
        %2608 = vset.pattern.permute.xlu0 0
        %2609 = vperm.xlu0 %2608, %v2356
        %v2610 = vpop.permute.xlu0 %2609
        %2611 = vset.pattern.permute.xlu0 0
        %2612 = vperm.xlu0 %2611, %v2357
        %v2613 = vpop.permute.xlu0 %2612
        %2614 = vset.pattern.permute.xlu0 0
        %2615 = vperm.xlu0 %2614, %v2358
        %v2616 = vpop.permute.xlu0 %2615
        %2617 = vset.pattern.permute.xlu0 0
        %2618 = vperm.xlu0 %2617, %v2359
        %v2619 = vpop.permute.xlu0 %2618
        %2620 = vset.pattern.permute.xlu0 0
        %2621 = vperm.xlu0 %2620, %v2360
        %v2622 = vpop.permute.xlu0 %2621
        %2623 = vset.pattern.permute.xlu0 0
        %2624 = vperm.xlu0 %2623, %v2361
        %v2625 = vpop.permute.xlu0 %2624
        %2626 = vset.pattern.permute.xlu0 0
        %2627 = vperm.xlu0 %2626, %v2362
        %v2628 = vpop.permute.xlu0 %2627
        %2629 = vset.pattern.permute.xlu0 0
        %2630 = vperm.xlu0 %2629, %v2363
        %v2631 = vpop.permute.xlu0 %2630
        %2632 = vset.pattern.permute.xlu0 0
        %2633 = vperm.xlu0 %2632, %v2364
        %v2634 = vpop.permute.xlu0 %2633
        %2635 = vset.pattern.permute.xlu0 0
        %2636 = vperm.xlu0 %2635, %v2365
        %v2637 = vpop.permute.xlu0 %2636
        %2638 = vset.pattern.permute.xlu0 0
        %2639 = vperm.xlu0 %2638, %v2366
        %v2640 = vpop.permute.xlu0 %2639
        %2641 = vset.pattern.permute.xlu0 0
        %2642 = vperm.xlu0 %2641, %v2367
        %v2643 = vpop.permute.xlu0 %2642
        %2644 = vset.pattern.permute.xlu0 0
        %2645 = vperm.xlu0 %2644, %v2368
        %v2646 = vpop.permute.xlu0 %2645
        %2647 = vset.pattern.permute.xlu0 0
        %2648 = vperm.xlu0 %2647, %v2369
        %v2649 = vpop.permute.xlu0 %2648
        %2650 = vset.pattern.permute.xlu0 0
        %2651 = vperm.xlu0 %2650, %v2370
        %v2652 = vpop.permute.xlu0 %2651
        %2653 = vset.pattern.permute.xlu0 0
        %2654 = vperm.xlu0 %2653, %v2371
        %v2655 = vpop.permute.xlu0 %2654
        %2656 = vset.pattern.permute.xlu0 0
        %2657 = vperm.xlu0 %2656, %v2372
        %v2658 = vpop.permute.xlu0 %2657
        %2659 = vset.pattern.permute.xlu0 0
        %2660 = vperm.xlu0 %2659, %v2373
        %v2661 = vpop.permute.xlu0 %2660
        %vm2662 = vcmp.eq.s32.totalorder %v520, %v2376
        %vm2663 = vcmp.eq.s32.totalorder %v521, %v2376
        %vm2664 = vcmp.eq.s32.totalorder %v522, %v2376
        %vm2665 = vcmp.eq.s32.totalorder %v523, %v2376
        %vm2666 = vcmp.eq.s32.totalorder %v524, %v2376
        %vm2667 = vcmp.eq.s32.totalorder %v525, %v2376
        %vm2668 = vcmp.eq.s32.totalorder %v526, %v2376
        %vm2669 = vcmp.eq.s32.totalorder %v527, %v2376
        %vm2670 = vcmp.eq.s32.totalorder %v520, %v2379
        %vm2671 = vcmp.eq.s32.totalorder %v521, %v2379
        %vm2672 = vcmp.eq.s32.totalorder %v522, %v2379
        %vm2673 = vcmp.eq.s32.totalorder %v523, %v2379
        %vm2674 = vcmp.eq.s32.totalorder %v524, %v2379
        %vm2675 = vcmp.eq.s32.totalorder %v525, %v2379
        %vm2676 = vcmp.eq.s32.totalorder %v526, %v2379
        %vm2677 = vcmp.eq.s32.totalorder %v527, %v2379
        %vm2678 = vcmp.eq.s32.totalorder %v520, %v2382
        %vm2679 = vcmp.eq.s32.totalorder %v521, %v2382
        %vm2680 = vcmp.eq.s32.totalorder %v522, %v2382
        %vm2681 = vcmp.eq.s32.totalorder %v523, %v2382
        %vm2682 = vcmp.eq.s32.totalorder %v524, %v2382
        %vm2683 = vcmp.eq.s32.totalorder %v525, %v2382
        %vm2684 = vcmp.eq.s32.totalorder %v526, %v2382
        %vm2685 = vcmp.eq.s32.totalorder %v527, %v2382
        %vm2686 = vcmp.eq.s32.totalorder %v520, %v2385
        %vm2687 = vcmp.eq.s32.totalorder %v521, %v2385
        %vm2688 = vcmp.eq.s32.totalorder %v522, %v2385
        %vm2689 = vcmp.eq.s32.totalorder %v523, %v2385
        %vm2690 = vcmp.eq.s32.totalorder %v524, %v2385
        %vm2691 = vcmp.eq.s32.totalorder %v525, %v2385
        %vm2692 = vcmp.eq.s32.totalorder %v526, %v2385
        %vm2693 = vcmp.eq.s32.totalorder %v527, %v2385
        %vm2694 = vcmp.eq.s32.totalorder %v520, %v2388
        %vm2695 = vcmp.eq.s32.totalorder %v521, %v2388
        %vm2696 = vcmp.eq.s32.totalorder %v522, %v2388
        %vm2697 = vcmp.eq.s32.totalorder %v523, %v2388
        %vm2698 = vcmp.eq.s32.totalorder %v524, %v2388
        %vm2699 = vcmp.eq.s32.totalorder %v525, %v2388
        %vm2700 = vcmp.eq.s32.totalorder %v526, %v2388
        %vm2701 = vcmp.eq.s32.totalorder %v527, %v2388
        %vm2702 = vcmp.eq.s32.totalorder %v520, %v2391
        %vm2703 = vcmp.eq.s32.totalorder %v521, %v2391
        %vm2704 = vcmp.eq.s32.totalorder %v522, %v2391
        %vm2705 = vcmp.eq.s32.totalorder %v523, %v2391
        %vm2706 = vcmp.eq.s32.totalorder %v524, %v2391
        %vm2707 = vcmp.eq.s32.totalorder %v525, %v2391
        %vm2708 = vcmp.eq.s32.totalorder %v526, %v2391
        %vm2709 = vcmp.eq.s32.totalorder %v527, %v2391
        %vm2710 = vcmp.eq.s32.totalorder %v520, %v2394
        %vm2711 = vcmp.eq.s32.totalorder %v521, %v2394
        %vm2712 = vcmp.eq.s32.totalorder %v522, %v2394
        %vm2713 = vcmp.eq.s32.totalorder %v523, %v2394
        %vm2714 = vcmp.eq.s32.totalorder %v524, %v2394
        %vm2715 = vcmp.eq.s32.totalorder %v525, %v2394
        %vm2716 = vcmp.eq.s32.totalorder %v526, %v2394
        %vm2717 = vcmp.eq.s32.totalorder %v527, %v2394
        %vm2718 = vcmp.eq.s32.totalorder %v520, %v2397
        %vm2719 = vcmp.eq.s32.totalorder %v521, %v2397
        %vm2720 = vcmp.eq.s32.totalorder %v522, %v2397
        %vm2721 = vcmp.eq.s32.totalorder %v523, %v2397
        %vm2722 = vcmp.eq.s32.totalorder %v524, %v2397
        %vm2723 = vcmp.eq.s32.totalorder %v525, %v2397
        %vm2724 = vcmp.eq.s32.totalorder %v526, %v2397
        %vm2725 = vcmp.eq.s32.totalorder %v527, %v2397
        %vm2726 = vcmp.eq.s32.totalorder %v520, %v2400
        %vm2727 = vcmp.eq.s32.totalorder %v521, %v2400
        %vm2728 = vcmp.eq.s32.totalorder %v522, %v2400
        %vm2729 = vcmp.eq.s32.totalorder %v523, %v2400
        %vm2730 = vcmp.eq.s32.totalorder %v524, %v2400
        %vm2731 = vcmp.eq.s32.totalorder %v525, %v2400
        %vm2732 = vcmp.eq.s32.totalorder %v526, %v2400
        %vm2733 = vcmp.eq.s32.totalorder %v527, %v2400
        %vm2734 = vcmp.eq.s32.totalorder %v520, %v2403
        %vm2735 = vcmp.eq.s32.totalorder %v521, %v2403
        %vm2736 = vcmp.eq.s32.totalorder %v522, %v2403
        %vm2737 = vcmp.eq.s32.totalorder %v523, %v2403
        %vm2738 = vcmp.eq.s32.totalorder %v524, %v2403
        %vm2739 = vcmp.eq.s32.totalorder %v525, %v2403
        %vm2740 = vcmp.eq.s32.totalorder %v526, %v2403
        %vm2741 = vcmp.eq.s32.totalorder %v527, %v2403
        %vm2742 = vcmp.eq.s32.totalorder %v520, %v2406
        %vm2743 = vcmp.eq.s32.totalorder %v521, %v2406
        %vm2744 = vcmp.eq.s32.totalorder %v522, %v2406
        %vm2745 = vcmp.eq.s32.totalorder %v523, %v2406
        %vm2746 = vcmp.eq.s32.totalorder %v524, %v2406
        %vm2747 = vcmp.eq.s32.totalorder %v525, %v2406
        %vm2748 = vcmp.eq.s32.totalorder %v526, %v2406
        %vm2749 = vcmp.eq.s32.totalorder %v527, %v2406
        %vm2750 = vcmp.eq.s32.totalorder %v520, %v2409
        %vm2751 = vcmp.eq.s32.totalorder %v521, %v2409
        %vm2752 = vcmp.eq.s32.totalorder %v522, %v2409
        %vm2753 = vcmp.eq.s32.totalorder %v523, %v2409
        %vm2754 = vcmp.eq.s32.totalorder %v524, %v2409
        %vm2755 = vcmp.eq.s32.totalorder %v525, %v2409
        %vm2756 = vcmp.eq.s32.totalorder %v526, %v2409
        %vm2757 = vcmp.eq.s32.totalorder %v527, %v2409
        %vm2758 = vcmp.eq.s32.totalorder %v520, %v2412
        %vm2759 = vcmp.eq.s32.totalorder %v521, %v2412
        %vm2760 = vcmp.eq.s32.totalorder %v522, %v2412
        %vm2761 = vcmp.eq.s32.totalorder %v523, %v2412
        %vm2762 = vcmp.eq.s32.totalorder %v524, %v2412
        %vm2763 = vcmp.eq.s32.totalorder %v525, %v2412
        %vm2764 = vcmp.eq.s32.totalorder %v526, %v2412
        %vm2765 = vcmp.eq.s32.totalorder %v527, %v2412
        %vm2766 = vcmp.eq.s32.totalorder %v520, %v2415
        %vm2767 = vcmp.eq.s32.totalorder %v521, %v2415
        %vm2768 = vcmp.eq.s32.totalorder %v522, %v2415
        %vm2769 = vcmp.eq.s32.totalorder %v523, %v2415
        %vm2770 = vcmp.eq.s32.totalorder %v524, %v2415
        %vm2771 = vcmp.eq.s32.totalorder %v525, %v2415
        %vm2772 = vcmp.eq.s32.totalorder %v526, %v2415
        %vm2773 = vcmp.eq.s32.totalorder %v527, %v2415
        %vm2774 = vcmp.eq.s32.totalorder %v520, %v2418
        %vm2775 = vcmp.eq.s32.totalorder %v521, %v2418
        %vm2776 = vcmp.eq.s32.totalorder %v522, %v2418
        %vm2777 = vcmp.eq.s32.totalorder %v523, %v2418
        %vm2778 = vcmp.eq.s32.totalorder %v524, %v2418
        %vm2779 = vcmp.eq.s32.totalorder %v525, %v2418
        %vm2780 = vcmp.eq.s32.totalorder %v526, %v2418
        %vm2781 = vcmp.eq.s32.totalorder %v527, %v2418
        %vm2782 = vcmp.eq.s32.totalorder %v520, %v2421
        %vm2783 = vcmp.eq.s32.totalorder %v521, %v2421
        %vm2784 = vcmp.eq.s32.totalorder %v522, %v2421
        %vm2785 = vcmp.eq.s32.totalorder %v523, %v2421
        %vm2786 = vcmp.eq.s32.totalorder %v524, %v2421
        %vm2787 = vcmp.eq.s32.totalorder %v525, %v2421
        %vm2788 = vcmp.eq.s32.totalorder %v526, %v2421
        %vm2789 = vcmp.eq.s32.totalorder %v527, %v2421
        %vm2790 = vcmp.eq.s32.totalorder %v520, %v2424
        %vm2791 = vcmp.eq.s32.totalorder %v521, %v2424
        %vm2792 = vcmp.eq.s32.totalorder %v522, %v2424
        %vm2793 = vcmp.eq.s32.totalorder %v523, %v2424
        %vm2794 = vcmp.eq.s32.totalorder %v524, %v2424
        %vm2795 = vcmp.eq.s32.totalorder %v525, %v2424
        %vm2796 = vcmp.eq.s32.totalorder %v526, %v2424
        %vm2797 = vcmp.eq.s32.totalorder %v527, %v2424
        %vm2798 = vcmp.eq.s32.totalorder %v520, %v2427
        %vm2799 = vcmp.eq.s32.totalorder %v521, %v2427
        %vm2800 = vcmp.eq.s32.totalorder %v522, %v2427
        %vm2801 = vcmp.eq.s32.totalorder %v523, %v2427
        %vm2802 = vcmp.eq.s32.totalorder %v524, %v2427
        %vm2803 = vcmp.eq.s32.totalorder %v525, %v2427
        %vm2804 = vcmp.eq.s32.totalorder %v526, %v2427
        %vm2805 = vcmp.eq.s32.totalorder %v527, %v2427
        %vm2806 = vcmp.eq.s32.totalorder %v520, %v2430
        %vm2807 = vcmp.eq.s32.totalorder %v521, %v2430
        %vm2808 = vcmp.eq.s32.totalorder %v522, %v2430
        %vm2809 = vcmp.eq.s32.totalorder %v523, %v2430
        %vm2810 = vcmp.eq.s32.totalorder %v524, %v2430
        %vm2811 = vcmp.eq.s32.totalorder %v525, %v2430
        %vm2812 = vcmp.eq.s32.totalorder %v526, %v2430
        %vm2813 = vcmp.eq.s32.totalorder %v527, %v2430
        %vm2814 = vcmp.eq.s32.totalorder %v520, %v2433
        %vm2815 = vcmp.eq.s32.totalorder %v521, %v2433
        %vm2816 = vcmp.eq.s32.totalorder %v522, %v2433
        %vm2817 = vcmp.eq.s32.totalorder %v523, %v2433
        %vm2818 = vcmp.eq.s32.totalorder %v524, %v2433
        %vm2819 = vcmp.eq.s32.totalorder %v525, %v2433
        %vm2820 = vcmp.eq.s32.totalorder %v526, %v2433
        %vm2821 = vcmp.eq.s32.totalorder %v527, %v2433
        %vm2822 = vcmp.eq.s32.totalorder %v520, %v2436
        %vm2823 = vcmp.eq.s32.totalorder %v521, %v2436
        %vm2824 = vcmp.eq.s32.totalorder %v522, %v2436
        %vm2825 = vcmp.eq.s32.totalorder %v523, %v2436
        %vm2826 = vcmp.eq.s32.totalorder %v524, %v2436
        %vm2827 = vcmp.eq.s32.totalorder %v525, %v2436
        %vm2828 = vcmp.eq.s32.totalorder %v526, %v2436
        %vm2829 = vcmp.eq.s32.totalorder %v527, %v2436
        %vm2830 = vcmp.eq.s32.totalorder %v520, %v2439
        %vm2831 = vcmp.eq.s32.totalorder %v521, %v2439
        %vm2832 = vcmp.eq.s32.totalorder %v522, %v2439
        %vm2833 = vcmp.eq.s32.totalorder %v523, %v2439
        %vm2834 = vcmp.eq.s32.totalorder %v524, %v2439
        %vm2835 = vcmp.eq.s32.totalorder %v525, %v2439
        %vm2836 = vcmp.eq.s32.totalorder %v526, %v2439
        %vm2837 = vcmp.eq.s32.totalorder %v527, %v2439
        %vm2838 = vcmp.eq.s32.totalorder %v520, %v2442
        %vm2839 = vcmp.eq.s32.totalorder %v521, %v2442
        %vm2840 = vcmp.eq.s32.totalorder %v522, %v2442
        %vm2841 = vcmp.eq.s32.totalorder %v523, %v2442
        %vm2842 = vcmp.eq.s32.totalorder %v524, %v2442
        %vm2843 = vcmp.eq.s32.totalorder %v525, %v2442
        %vm2844 = vcmp.eq.s32.totalorder %v526, %v2442
        %vm2845 = vcmp.eq.s32.totalorder %v527, %v2442
        %vm2846 = vcmp.eq.s32.totalorder %v520, %v2445
        %vm2847 = vcmp.eq.s32.totalorder %v521, %v2445
        %vm2848 = vcmp.eq.s32.totalorder %v522, %v2445
        %vm2849 = vcmp.eq.s32.totalorder %v523, %v2445
        %vm2850 = vcmp.eq.s32.totalorder %v524, %v2445
        %vm2851 = vcmp.eq.s32.totalorder %v525, %v2445
        %vm2852 = vcmp.eq.s32.totalorder %v526, %v2445
        %vm2853 = vcmp.eq.s32.totalorder %v527, %v2445
        %vm2854 = vcmp.eq.s32.totalorder %v520, %v2448
        %vm2855 = vcmp.eq.s32.totalorder %v521, %v2448
        %vm2856 = vcmp.eq.s32.totalorder %v522, %v2448
        %vm2857 = vcmp.eq.s32.totalorder %v523, %v2448
        %vm2858 = vcmp.eq.s32.totalorder %v524, %v2448
        %vm2859 = vcmp.eq.s32.totalorder %v525, %v2448
        %vm2860 = vcmp.eq.s32.totalorder %v526, %v2448
        %vm2861 = vcmp.eq.s32.totalorder %v527, %v2448
        %vm2862 = vcmp.eq.s32.totalorder %v520, %v2451
        %vm2863 = vcmp.eq.s32.totalorder %v521, %v2451
        %vm2864 = vcmp.eq.s32.totalorder %v522, %v2451
        %vm2865 = vcmp.eq.s32.totalorder %v523, %v2451
        %vm2866 = vcmp.eq.s32.totalorder %v524, %v2451
        %vm2867 = vcmp.eq.s32.totalorder %v525, %v2451
        %vm2868 = vcmp.eq.s32.totalorder %v526, %v2451
        %vm2869 = vcmp.eq.s32.totalorder %v527, %v2451
        %vm2870 = vcmp.eq.s32.totalorder %v520, %v2454
        %vm2871 = vcmp.eq.s32.totalorder %v521, %v2454
        %vm2872 = vcmp.eq.s32.totalorder %v522, %v2454
        %vm2873 = vcmp.eq.s32.totalorder %v523, %v2454
        %vm2874 = vcmp.eq.s32.totalorder %v524, %v2454
        %vm2875 = vcmp.eq.s32.totalorder %v525, %v2454
        %vm2876 = vcmp.eq.s32.totalorder %v526, %v2454
        %vm2877 = vcmp.eq.s32.totalorder %v527, %v2454
        %vm2878 = vcmp.eq.s32.totalorder %v520, %v2457
        %vm2879 = vcmp.eq.s32.totalorder %v521, %v2457
        %vm2880 = vcmp.eq.s32.totalorder %v522, %v2457
        %vm2881 = vcmp.eq.s32.totalorder %v523, %v2457
        %vm2882 = vcmp.eq.s32.totalorder %v524, %v2457
        %vm2883 = vcmp.eq.s32.totalorder %v525, %v2457
        %vm2884 = vcmp.eq.s32.totalorder %v526, %v2457
        %vm2885 = vcmp.eq.s32.totalorder %v527, %v2457
        %vm2886 = vcmp.eq.s32.totalorder %v520, %v2460
        %vm2887 = vcmp.eq.s32.totalorder %v521, %v2460
        %vm2888 = vcmp.eq.s32.totalorder %v522, %v2460
        %vm2889 = vcmp.eq.s32.totalorder %v523, %v2460
        %vm2890 = vcmp.eq.s32.totalorder %v524, %v2460
        %vm2891 = vcmp.eq.s32.totalorder %v525, %v2460
        %vm2892 = vcmp.eq.s32.totalorder %v526, %v2460
        %vm2893 = vcmp.eq.s32.totalorder %v527, %v2460
        %vm2894 = vcmp.eq.s32.totalorder %v520, %v2463
        %vm2895 = vcmp.eq.s32.totalorder %v521, %v2463
        %vm2896 = vcmp.eq.s32.totalorder %v522, %v2463
        %vm2897 = vcmp.eq.s32.totalorder %v523, %v2463
        %vm2898 = vcmp.eq.s32.totalorder %v524, %v2463
        %vm2899 = vcmp.eq.s32.totalorder %v525, %v2463
        %vm2900 = vcmp.eq.s32.totalorder %v526, %v2463
        %vm2901 = vcmp.eq.s32.totalorder %v527, %v2463
        %vm2902 = vcmp.eq.s32.totalorder %v520, %v2466
        %vm2903 = vcmp.eq.s32.totalorder %v521, %v2466
        %vm2904 = vcmp.eq.s32.totalorder %v522, %v2466
        %vm2905 = vcmp.eq.s32.totalorder %v523, %v2466
        %vm2906 = vcmp.eq.s32.totalorder %v524, %v2466
        %vm2907 = vcmp.eq.s32.totalorder %v525, %v2466
        %vm2908 = vcmp.eq.s32.totalorder %v526, %v2466
        %vm2909 = vcmp.eq.s32.totalorder %v527, %v2466
        %vm2910 = vcmp.eq.s32.totalorder %v520, %v2469
        %vm2911 = vcmp.eq.s32.totalorder %v521, %v2469
        %vm2912 = vcmp.eq.s32.totalorder %v522, %v2469
        %vm2913 = vcmp.eq.s32.totalorder %v523, %v2469
        %vm2914 = vcmp.eq.s32.totalorder %v524, %v2469
        %vm2915 = vcmp.eq.s32.totalorder %v525, %v2469
        %vm2916 = vcmp.eq.s32.totalorder %v526, %v2469
        %vm2917 = vcmp.eq.s32.totalorder %v527, %v2469
        %vm2918 = vcmp.eq.s32.totalorder %v520, %v2472
        %vm2919 = vcmp.eq.s32.totalorder %v521, %v2472
        %vm2920 = vcmp.eq.s32.totalorder %v522, %v2472
        %vm2921 = vcmp.eq.s32.totalorder %v523, %v2472
        %vm2922 = vcmp.eq.s32.totalorder %v524, %v2472
        %vm2923 = vcmp.eq.s32.totalorder %v525, %v2472
        %vm2924 = vcmp.eq.s32.totalorder %v526, %v2472
        %vm2925 = vcmp.eq.s32.totalorder %v527, %v2472
        %vm2926 = vcmp.eq.s32.totalorder %v520, %v2475
        %vm2927 = vcmp.eq.s32.totalorder %v521, %v2475
        %vm2928 = vcmp.eq.s32.totalorder %v522, %v2475
        %vm2929 = vcmp.eq.s32.totalorder %v523, %v2475
        %vm2930 = vcmp.eq.s32.totalorder %v524, %v2475
        %vm2931 = vcmp.eq.s32.totalorder %v525, %v2475
        %vm2932 = vcmp.eq.s32.totalorder %v526, %v2475
        %vm2933 = vcmp.eq.s32.totalorder %v527, %v2475
        %vm2934 = vcmp.eq.s32.totalorder %v520, %v2478
        %vm2935 = vcmp.eq.s32.totalorder %v521, %v2478
        %vm2936 = vcmp.eq.s32.totalorder %v522, %v2478
        %vm2937 = vcmp.eq.s32.totalorder %v523, %v2478
        %vm2938 = vcmp.eq.s32.totalorder %v524, %v2478
        %vm2939 = vcmp.eq.s32.totalorder %v525, %v2478
        %vm2940 = vcmp.eq.s32.totalorder %v526, %v2478
        %vm2941 = vcmp.eq.s32.totalorder %v527, %v2478
        %vm2942 = vcmp.eq.s32.totalorder %v520, %v2481
        %vm2943 = vcmp.eq.s32.totalorder %v521, %v2481
        %vm2944 = vcmp.eq.s32.totalorder %v522, %v2481
        %vm2945 = vcmp.eq.s32.totalorder %v523, %v2481
        %vm2946 = vcmp.eq.s32.totalorder %v524, %v2481
        %vm2947 = vcmp.eq.s32.totalorder %v525, %v2481
        %vm2948 = vcmp.eq.s32.totalorder %v526, %v2481
        %vm2949 = vcmp.eq.s32.totalorder %v527, %v2481
        %vm2950 = vcmp.eq.s32.totalorder %v520, %v2484
        %vm2951 = vcmp.eq.s32.totalorder %v521, %v2484
        %vm2952 = vcmp.eq.s32.totalorder %v522, %v2484
        %vm2953 = vcmp.eq.s32.totalorder %v523, %v2484
        %vm2954 = vcmp.eq.s32.totalorder %v524, %v2484
        %vm2955 = vcmp.eq.s32.totalorder %v525, %v2484
        %vm2956 = vcmp.eq.s32.totalorder %v526, %v2484
        %vm2957 = vcmp.eq.s32.totalorder %v527, %v2484
        %vm2958 = vcmp.eq.s32.totalorder %v520, %v2487
        %vm2959 = vcmp.eq.s32.totalorder %v521, %v2487
        %vm2960 = vcmp.eq.s32.totalorder %v522, %v2487
        %vm2961 = vcmp.eq.s32.totalorder %v523, %v2487
        %vm2962 = vcmp.eq.s32.totalorder %v524, %v2487
        %vm2963 = vcmp.eq.s32.totalorder %v525, %v2487
        %vm2964 = vcmp.eq.s32.totalorder %v526, %v2487
        %vm2965 = vcmp.eq.s32.totalorder %v527, %v2487
        %vm2966 = vcmp.eq.s32.totalorder %v520, %v2490
        %vm2967 = vcmp.eq.s32.totalorder %v521, %v2490
        %vm2968 = vcmp.eq.s32.totalorder %v522, %v2490
        %vm2969 = vcmp.eq.s32.totalorder %v523, %v2490
        %vm2970 = vcmp.eq.s32.totalorder %v524, %v2490
        %vm2971 = vcmp.eq.s32.totalorder %v525, %v2490
        %vm2972 = vcmp.eq.s32.totalorder %v526, %v2490
        %vm2973 = vcmp.eq.s32.totalorder %v527, %v2490
        %vm2974 = vcmp.eq.s32.totalorder %v520, %v2493
        %vm2975 = vcmp.eq.s32.totalorder %v521, %v2493
        %vm2976 = vcmp.eq.s32.totalorder %v522, %v2493
        %vm2977 = vcmp.eq.s32.totalorder %v523, %v2493
        %vm2978 = vcmp.eq.s32.totalorder %v524, %v2493
        %vm2979 = vcmp.eq.s32.totalorder %v525, %v2493
        %vm2980 = vcmp.eq.s32.totalorder %v526, %v2493
        %vm2981 = vcmp.eq.s32.totalorder %v527, %v2493
        %vm2982 = vcmp.eq.s32.totalorder %v520, %v2496
        %vm2983 = vcmp.eq.s32.totalorder %v521, %v2496
        %vm2984 = vcmp.eq.s32.totalorder %v522, %v2496
        %vm2985 = vcmp.eq.s32.totalorder %v523, %v2496
        %vm2986 = vcmp.eq.s32.totalorder %v524, %v2496
        %vm2987 = vcmp.eq.s32.totalorder %v525, %v2496
        %vm2988 = vcmp.eq.s32.totalorder %v526, %v2496
        %vm2989 = vcmp.eq.s32.totalorder %v527, %v2496
        %vm2990 = vcmp.eq.s32.totalorder %v520, %v2499
        %vm2991 = vcmp.eq.s32.totalorder %v521, %v2499
        %vm2992 = vcmp.eq.s32.totalorder %v522, %v2499
        %vm2993 = vcmp.eq.s32.totalorder %v523, %v2499
        %vm2994 = vcmp.eq.s32.totalorder %v524, %v2499
        %vm2995 = vcmp.eq.s32.totalorder %v525, %v2499
        %vm2996 = vcmp.eq.s32.totalorder %v526, %v2499
        %vm2997 = vcmp.eq.s32.totalorder %v527, %v2499
        %vm2998 = vcmp.eq.s32.totalorder %v520, %v2502
        %vm2999 = vcmp.eq.s32.totalorder %v521, %v2502
        %vm3000 = vcmp.eq.s32.totalorder %v522, %v2502
        %vm3001 = vcmp.eq.s32.totalorder %v523, %v2502
        %vm3002 = vcmp.eq.s32.totalorder %v524, %v2502
        %vm3003 = vcmp.eq.s32.totalorder %v525, %v2502
        %vm3004 = vcmp.eq.s32.totalorder %v526, %v2502
        %vm3005 = vcmp.eq.s32.totalorder %v527, %v2502
        %vm3006 = vcmp.eq.s32.totalorder %v520, %v2505
        %vm3007 = vcmp.eq.s32.totalorder %v521, %v2505
        %vm3008 = vcmp.eq.s32.totalorder %v522, %v2505
        %vm3009 = vcmp.eq.s32.totalorder %v523, %v2505
        %vm3010 = vcmp.eq.s32.totalorder %v524, %v2505
        %vm3011 = vcmp.eq.s32.totalorder %v525, %v2505
        %vm3012 = vcmp.eq.s32.totalorder %v526, %v2505
        %vm3013 = vcmp.eq.s32.totalorder %v527, %v2505
        %vm3014 = vcmp.eq.s32.totalorder %v520, %v2508
        %vm3015 = vcmp.eq.s32.totalorder %v521, %v2508
        %vm3016 = vcmp.eq.s32.totalorder %v522, %v2508
        %vm3017 = vcmp.eq.s32.totalorder %v523, %v2508
        %vm3018 = vcmp.eq.s32.totalorder %v524, %v2508
        %vm3019 = vcmp.eq.s32.totalorder %v525, %v2508
        %vm3020 = vcmp.eq.s32.totalorder %v526, %v2508
        %vm3021 = vcmp.eq.s32.totalorder %v527, %v2508
        %vm3022 = vcmp.eq.s32.totalorder %v520, %v2511
        %vm3023 = vcmp.eq.s32.totalorder %v521, %v2511
        %vm3024 = vcmp.eq.s32.totalorder %v522, %v2511
        %vm3025 = vcmp.eq.s32.totalorder %v523, %v2511
        %vm3026 = vcmp.eq.s32.totalorder %v524, %v2511
        %vm3027 = vcmp.eq.s32.totalorder %v525, %v2511
        %vm3028 = vcmp.eq.s32.totalorder %v526, %v2511
        %vm3029 = vcmp.eq.s32.totalorder %v527, %v2511
        %vm3030 = vcmp.eq.s32.totalorder %v520, %v2514
        %vm3031 = vcmp.eq.s32.totalorder %v521, %v2514
        %vm3032 = vcmp.eq.s32.totalorder %v522, %v2514
        %vm3033 = vcmp.eq.s32.totalorder %v523, %v2514
        %vm3034 = vcmp.eq.s32.totalorder %v524, %v2514
        %vm3035 = vcmp.eq.s32.totalorder %v525, %v2514
        %vm3036 = vcmp.eq.s32.totalorder %v526, %v2514
        %vm3037 = vcmp.eq.s32.totalorder %v527, %v2514
        %vm3038 = vcmp.eq.s32.totalorder %v520, %v2517
        %vm3039 = vcmp.eq.s32.totalorder %v521, %v2517
        %vm3040 = vcmp.eq.s32.totalorder %v522, %v2517
        %vm3041 = vcmp.eq.s32.totalorder %v523, %v2517
        %vm3042 = vcmp.eq.s32.totalorder %v524, %v2517
        %vm3043 = vcmp.eq.s32.totalorder %v525, %v2517
        %vm3044 = vcmp.eq.s32.totalorder %v526, %v2517
        %vm3045 = vcmp.eq.s32.totalorder %v527, %v2517
        %vm3046 = vcmp.eq.s32.totalorder %v520, %v2520
        %vm3047 = vcmp.eq.s32.totalorder %v521, %v2520
        %vm3048 = vcmp.eq.s32.totalorder %v522, %v2520
        %vm3049 = vcmp.eq.s32.totalorder %v523, %v2520
        %vm3050 = vcmp.eq.s32.totalorder %v524, %v2520
        %vm3051 = vcmp.eq.s32.totalorder %v525, %v2520
        %vm3052 = vcmp.eq.s32.totalorder %v526, %v2520
        %vm3053 = vcmp.eq.s32.totalorder %v527, %v2520
        %vm3054 = vcmp.eq.s32.totalorder %v520, %v2523
        %vm3055 = vcmp.eq.s32.totalorder %v521, %v2523
        %vm3056 = vcmp.eq.s32.totalorder %v522, %v2523
        %vm3057 = vcmp.eq.s32.totalorder %v523, %v2523
        %vm3058 = vcmp.eq.s32.totalorder %v524, %v2523
        %vm3059 = vcmp.eq.s32.totalorder %v525, %v2523
        %vm3060 = vcmp.eq.s32.totalorder %v526, %v2523
        %vm3061 = vcmp.eq.s32.totalorder %v527, %v2523
        %vm3062 = vcmp.eq.s32.totalorder %v520, %v2526
        %vm3063 = vcmp.eq.s32.totalorder %v521, %v2526
        %vm3064 = vcmp.eq.s32.totalorder %v522, %v2526
        %vm3065 = vcmp.eq.s32.totalorder %v523, %v2526
        %vm3066 = vcmp.eq.s32.totalorder %v524, %v2526
        %vm3067 = vcmp.eq.s32.totalorder %v525, %v2526
        %vm3068 = vcmp.eq.s32.totalorder %v526, %v2526
        %vm3069 = vcmp.eq.s32.totalorder %v527, %v2526
        %vm3070 = vcmp.eq.s32.totalorder %v520, %v2529
        %vm3071 = vcmp.eq.s32.totalorder %v521, %v2529
        %vm3072 = vcmp.eq.s32.totalorder %v522, %v2529
        %vm3073 = vcmp.eq.s32.totalorder %v523, %v2529
        %vm3074 = vcmp.eq.s32.totalorder %v524, %v2529
        %vm3075 = vcmp.eq.s32.totalorder %v525, %v2529
        %vm3076 = vcmp.eq.s32.totalorder %v526, %v2529
        %vm3077 = vcmp.eq.s32.totalorder %v527, %v2529
        %vm3078 = vcmp.eq.s32.totalorder %v520, %v2532
        %vm3079 = vcmp.eq.s32.totalorder %v521, %v2532
        %vm3080 = vcmp.eq.s32.totalorder %v522, %v2532
        %vm3081 = vcmp.eq.s32.totalorder %v523, %v2532
        %vm3082 = vcmp.eq.s32.totalorder %v524, %v2532
        %vm3083 = vcmp.eq.s32.totalorder %v525, %v2532
        %vm3084 = vcmp.eq.s32.totalorder %v526, %v2532
        %vm3085 = vcmp.eq.s32.totalorder %v527, %v2532
        %vm3086 = vcmp.eq.s32.totalorder %v520, %v2535
        %vm3087 = vcmp.eq.s32.totalorder %v521, %v2535
        %vm3088 = vcmp.eq.s32.totalorder %v522, %v2535
        %vm3089 = vcmp.eq.s32.totalorder %v523, %v2535
        %vm3090 = vcmp.eq.s32.totalorder %v524, %v2535
        %vm3091 = vcmp.eq.s32.totalorder %v525, %v2535
        %vm3092 = vcmp.eq.s32.totalorder %v526, %v2535
        %vm3093 = vcmp.eq.s32.totalorder %v527, %v2535
        %vm3094 = vcmp.eq.s32.totalorder %v520, %v2538
        %vm3095 = vcmp.eq.s32.totalorder %v521, %v2538
        %vm3096 = vcmp.eq.s32.totalorder %v522, %v2538
        %vm3097 = vcmp.eq.s32.totalorder %v523, %v2538
        %vm3098 = vcmp.eq.s32.totalorder %v524, %v2538
        %vm3099 = vcmp.eq.s32.totalorder %v525, %v2538
        %vm3100 = vcmp.eq.s32.totalorder %v526, %v2538
        %vm3101 = vcmp.eq.s32.totalorder %v527, %v2538
        %vm3102 = vcmp.eq.s32.totalorder %v520, %v2541
        %vm3103 = vcmp.eq.s32.totalorder %v521, %v2541
        %vm3104 = vcmp.eq.s32.totalorder %v522, %v2541
        %vm3105 = vcmp.eq.s32.totalorder %v523, %v2541
        %vm3106 = vcmp.eq.s32.totalorder %v524, %v2541
        %vm3107 = vcmp.eq.s32.totalorder %v525, %v2541
        %vm3108 = vcmp.eq.s32.totalorder %v526, %v2541
        %vm3109 = vcmp.eq.s32.totalorder %v527, %v2541
        %vm3110 = vcmp.eq.s32.totalorder %v520, %v2544
        %vm3111 = vcmp.eq.s32.totalorder %v521, %v2544
        %vm3112 = vcmp.eq.s32.totalorder %v522, %v2544
        %vm3113 = vcmp.eq.s32.totalorder %v523, %v2544
        %vm3114 = vcmp.eq.s32.totalorder %v524, %v2544
        %vm3115 = vcmp.eq.s32.totalorder %v525, %v2544
        %vm3116 = vcmp.eq.s32.totalorder %v526, %v2544
        %vm3117 = vcmp.eq.s32.totalorder %v527, %v2544
        %vm3118 = vcmp.eq.s32.totalorder %v520, %v2547
        %vm3119 = vcmp.eq.s32.totalorder %v521, %v2547
        %vm3120 = vcmp.eq.s32.totalorder %v522, %v2547
        %vm3121 = vcmp.eq.s32.totalorder %v523, %v2547
        %vm3122 = vcmp.eq.s32.totalorder %v524, %v2547
        %vm3123 = vcmp.eq.s32.totalorder %v525, %v2547
        %vm3124 = vcmp.eq.s32.totalorder %v526, %v2547
        %vm3125 = vcmp.eq.s32.totalorder %v527, %v2547
        %vm3126 = vcmp.eq.s32.totalorder %v520, %v2550
        %vm3127 = vcmp.eq.s32.totalorder %v521, %v2550
        %vm3128 = vcmp.eq.s32.totalorder %v522, %v2550
        %vm3129 = vcmp.eq.s32.totalorder %v523, %v2550
        %vm3130 = vcmp.eq.s32.totalorder %v524, %v2550
        %vm3131 = vcmp.eq.s32.totalorder %v525, %v2550
        %vm3132 = vcmp.eq.s32.totalorder %v526, %v2550
        %vm3133 = vcmp.eq.s32.totalorder %v527, %v2550
        %vm3134 = vcmp.eq.s32.totalorder %v520, %v2553
        %vm3135 = vcmp.eq.s32.totalorder %v521, %v2553
        %vm3136 = vcmp.eq.s32.totalorder %v522, %v2553
        %vm3137 = vcmp.eq.s32.totalorder %v523, %v2553
        %vm3138 = vcmp.eq.s32.totalorder %v524, %v2553
        %vm3139 = vcmp.eq.s32.totalorder %v525, %v2553
        %vm3140 = vcmp.eq.s32.totalorder %v526, %v2553
        %vm3141 = vcmp.eq.s32.totalorder %v527, %v2553
        %vm3142 = vcmp.eq.s32.totalorder %v520, %v2556
        %vm3143 = vcmp.eq.s32.totalorder %v521, %v2556
        %vm3144 = vcmp.eq.s32.totalorder %v522, %v2556
        %vm3145 = vcmp.eq.s32.totalorder %v523, %v2556
        %vm3146 = vcmp.eq.s32.totalorder %v524, %v2556
        %vm3147 = vcmp.eq.s32.totalorder %v525, %v2556
        %vm3148 = vcmp.eq.s32.totalorder %v526, %v2556
        %vm3149 = vcmp.eq.s32.totalorder %v527, %v2556
        %vm3150 = vcmp.eq.s32.totalorder %v520, %v2559
        %vm3151 = vcmp.eq.s32.totalorder %v521, %v2559
        %vm3152 = vcmp.eq.s32.totalorder %v522, %v2559
        %vm3153 = vcmp.eq.s32.totalorder %v523, %v2559
        %vm3154 = vcmp.eq.s32.totalorder %v524, %v2559
        %vm3155 = vcmp.eq.s32.totalorder %v525, %v2559
        %vm3156 = vcmp.eq.s32.totalorder %v526, %v2559
        %vm3157 = vcmp.eq.s32.totalorder %v527, %v2559
        %vm3158 = vcmp.eq.s32.totalorder %v520, %v2562
        %vm3159 = vcmp.eq.s32.totalorder %v521, %v2562
        %vm3160 = vcmp.eq.s32.totalorder %v522, %v2562
        %vm3161 = vcmp.eq.s32.totalorder %v523, %v2562
        %vm3162 = vcmp.eq.s32.totalorder %v524, %v2562
        %vm3163 = vcmp.eq.s32.totalorder %v525, %v2562
        %vm3164 = vcmp.eq.s32.totalorder %v526, %v2562
        %vm3165 = vcmp.eq.s32.totalorder %v527, %v2562
        %vm3166 = vcmp.eq.s32.totalorder %v520, %v2565
        %vm3167 = vcmp.eq.s32.totalorder %v521, %v2565
        %vm3168 = vcmp.eq.s32.totalorder %v522, %v2565
        %vm3169 = vcmp.eq.s32.totalorder %v523, %v2565
        %vm3170 = vcmp.eq.s32.totalorder %v524, %v2565
        %vm3171 = vcmp.eq.s32.totalorder %v525, %v2565
        %vm3172 = vcmp.eq.s32.totalorder %v526, %v2565
        %vm3173 = vcmp.eq.s32.totalorder %v527, %v2565
        %vm3174 = vcmp.eq.s32.totalorder %v520, %v2568
        %vm3175 = vcmp.eq.s32.totalorder %v521, %v2568
        %vm3176 = vcmp.eq.s32.totalorder %v522, %v2568
        %vm3177 = vcmp.eq.s32.totalorder %v523, %v2568
        %vm3178 = vcmp.eq.s32.totalorder %v524, %v2568
        %vm3179 = vcmp.eq.s32.totalorder %v525, %v2568
        %vm3180 = vcmp.eq.s32.totalorder %v526, %v2568
        %vm3181 = vcmp.eq.s32.totalorder %v527, %v2568
        %vm3182 = vcmp.eq.s32.totalorder %v520, %v2571
        %vm3183 = vcmp.eq.s32.totalorder %v521, %v2571
        %vm3184 = vcmp.eq.s32.totalorder %v522, %v2571
        %vm3185 = vcmp.eq.s32.totalorder %v523, %v2571
        %vm3186 = vcmp.eq.s32.totalorder %v524, %v2571
        %vm3187 = vcmp.eq.s32.totalorder %v525, %v2571
        %vm3188 = vcmp.eq.s32.totalorder %v526, %v2571
        %vm3189 = vcmp.eq.s32.totalorder %v527, %v2571
        %vm3190 = vcmp.eq.s32.totalorder %v520, %v2574
        %vm3191 = vcmp.eq.s32.totalorder %v521, %v2574
        %vm3192 = vcmp.eq.s32.totalorder %v522, %v2574
        %vm3193 = vcmp.eq.s32.totalorder %v523, %v2574
        %vm3194 = vcmp.eq.s32.totalorder %v524, %v2574
        %vm3195 = vcmp.eq.s32.totalorder %v525, %v2574
        %vm3196 = vcmp.eq.s32.totalorder %v526, %v2574
        %vm3197 = vcmp.eq.s32.totalorder %v527, %v2574
        %vm3198 = vcmp.eq.s32.totalorder %v520, %v2577
        %vm3199 = vcmp.eq.s32.totalorder %v521, %v2577
        %vm3200 = vcmp.eq.s32.totalorder %v522, %v2577
        %vm3201 = vcmp.eq.s32.totalorder %v523, %v2577
        %vm3202 = vcmp.eq.s32.totalorder %v524, %v2577
        %vm3203 = vcmp.eq.s32.totalorder %v525, %v2577
        %vm3204 = vcmp.eq.s32.totalorder %v526, %v2577
        %vm3205 = vcmp.eq.s32.totalorder %v527, %v2577
        %vm3206 = vcmp.eq.s32.totalorder %v520, %v2580
        %vm3207 = vcmp.eq.s32.totalorder %v521, %v2580
        %vm3208 = vcmp.eq.s32.totalorder %v522, %v2580
        %vm3209 = vcmp.eq.s32.totalorder %v523, %v2580
        %vm3210 = vcmp.eq.s32.totalorder %v524, %v2580
        %vm3211 = vcmp.eq.s32.totalorder %v525, %v2580
        %vm3212 = vcmp.eq.s32.totalorder %v526, %v2580
        %vm3213 = vcmp.eq.s32.totalorder %v527, %v2580
        %vm3214 = vcmp.eq.s32.totalorder %v520, %v2583
        %vm3215 = vcmp.eq.s32.totalorder %v521, %v2583
        %vm3216 = vcmp.eq.s32.totalorder %v522, %v2583
        %vm3217 = vcmp.eq.s32.totalorder %v523, %v2583
        %vm3218 = vcmp.eq.s32.totalorder %v524, %v2583
        %vm3219 = vcmp.eq.s32.totalorder %v525, %v2583
        %vm3220 = vcmp.eq.s32.totalorder %v526, %v2583
        %vm3221 = vcmp.eq.s32.totalorder %v527, %v2583
        %vm3222 = vcmp.eq.s32.totalorder %v520, %v2586
        %vm3223 = vcmp.eq.s32.totalorder %v521, %v2586
        %vm3224 = vcmp.eq.s32.totalorder %v522, %v2586
        %vm3225 = vcmp.eq.s32.totalorder %v523, %v2586
        %vm3226 = vcmp.eq.s32.totalorder %v524, %v2586
        %vm3227 = vcmp.eq.s32.totalorder %v525, %v2586
        %vm3228 = vcmp.eq.s32.totalorder %v526, %v2586
        %vm3229 = vcmp.eq.s32.totalorder %v527, %v2586
        %vm3230 = vcmp.eq.s32.totalorder %v520, %v2589
        %vm3231 = vcmp.eq.s32.totalorder %v521, %v2589
        %vm3232 = vcmp.eq.s32.totalorder %v522, %v2589
        %vm3233 = vcmp.eq.s32.totalorder %v523, %v2589
        %vm3234 = vcmp.eq.s32.totalorder %v524, %v2589
        %vm3235 = vcmp.eq.s32.totalorder %v525, %v2589
        %vm3236 = vcmp.eq.s32.totalorder %v526, %v2589
        %vm3237 = vcmp.eq.s32.totalorder %v527, %v2589
        %vm3238 = vcmp.eq.s32.totalorder %v520, %v2592
        %vm3239 = vcmp.eq.s32.totalorder %v521, %v2592
        %vm3240 = vcmp.eq.s32.totalorder %v522, %v2592
        %vm3241 = vcmp.eq.s32.totalorder %v523, %v2592
        %vm3242 = vcmp.eq.s32.totalorder %v524, %v2592
        %vm3243 = vcmp.eq.s32.totalorder %v525, %v2592
        %vm3244 = vcmp.eq.s32.totalorder %v526, %v2592
        %vm3245 = vcmp.eq.s32.totalorder %v527, %v2592
        %vm3246 = vcmp.eq.s32.totalorder %v520, %v2595
        %vm3247 = vcmp.eq.s32.totalorder %v521, %v2595
        %vm3248 = vcmp.eq.s32.totalorder %v522, %v2595
        %vm3249 = vcmp.eq.s32.totalorder %v523, %v2595
        %vm3250 = vcmp.eq.s32.totalorder %v524, %v2595
        %vm3251 = vcmp.eq.s32.totalorder %v525, %v2595
        %vm3252 = vcmp.eq.s32.totalorder %v526, %v2595
        %vm3253 = vcmp.eq.s32.totalorder %v527, %v2595
        %vm3254 = vcmp.eq.s32.totalorder %v520, %v2598
        %vm3255 = vcmp.eq.s32.totalorder %v521, %v2598
        %vm3256 = vcmp.eq.s32.totalorder %v522, %v2598
        %vm3257 = vcmp.eq.s32.totalorder %v523, %v2598
        %vm3258 = vcmp.eq.s32.totalorder %v524, %v2598
        %vm3259 = vcmp.eq.s32.totalorder %v525, %v2598
        %vm3260 = vcmp.eq.s32.totalorder %v526, %v2598
        %vm3261 = vcmp.eq.s32.totalorder %v527, %v2598
        %vm3262 = vcmp.eq.s32.totalorder %v520, %v2601
        %vm3263 = vcmp.eq.s32.totalorder %v521, %v2601
        %vm3264 = vcmp.eq.s32.totalorder %v522, %v2601
        %vm3265 = vcmp.eq.s32.totalorder %v523, %v2601
        %vm3266 = vcmp.eq.s32.totalorder %v524, %v2601
        %vm3267 = vcmp.eq.s32.totalorder %v525, %v2601
        %vm3268 = vcmp.eq.s32.totalorder %v526, %v2601
        %vm3269 = vcmp.eq.s32.totalorder %v527, %v2601
        %vm3270 = vcmp.eq.s32.totalorder %v520, %v2604
        %vm3271 = vcmp.eq.s32.totalorder %v521, %v2604
        %vm3272 = vcmp.eq.s32.totalorder %v522, %v2604
        %vm3273 = vcmp.eq.s32.totalorder %v523, %v2604
        %vm3274 = vcmp.eq.s32.totalorder %v524, %v2604
        %vm3275 = vcmp.eq.s32.totalorder %v525, %v2604
        %vm3276 = vcmp.eq.s32.totalorder %v526, %v2604
        %vm3277 = vcmp.eq.s32.totalorder %v527, %v2604
        %vm3278 = vcmp.eq.s32.totalorder %v520, %v2607
        %vm3279 = vcmp.eq.s32.totalorder %v521, %v2607
        %vm3280 = vcmp.eq.s32.totalorder %v522, %v2607
        %vm3281 = vcmp.eq.s32.totalorder %v523, %v2607
        %vm3282 = vcmp.eq.s32.totalorder %v524, %v2607
        %vm3283 = vcmp.eq.s32.totalorder %v525, %v2607
        %vm3284 = vcmp.eq.s32.totalorder %v526, %v2607
        %vm3285 = vcmp.eq.s32.totalorder %v527, %v2607
        %vm3286 = vcmp.eq.s32.totalorder %v520, %v2610
        %vm3287 = vcmp.eq.s32.totalorder %v521, %v2610
        %vm3288 = vcmp.eq.s32.totalorder %v522, %v2610
        %vm3289 = vcmp.eq.s32.totalorder %v523, %v2610
        %vm3290 = vcmp.eq.s32.totalorder %v524, %v2610
        %vm3291 = vcmp.eq.s32.totalorder %v525, %v2610
        %vm3292 = vcmp.eq.s32.totalorder %v526, %v2610
        %vm3293 = vcmp.eq.s32.totalorder %v527, %v2610
        %vm3294 = vcmp.eq.s32.totalorder %v520, %v2613
        %vm3295 = vcmp.eq.s32.totalorder %v521, %v2613
        %vm3296 = vcmp.eq.s32.totalorder %v522, %v2613
        %vm3297 = vcmp.eq.s32.totalorder %v523, %v2613
        %vm3298 = vcmp.eq.s32.totalorder %v524, %v2613
        %vm3299 = vcmp.eq.s32.totalorder %v525, %v2613
        %vm3300 = vcmp.eq.s32.totalorder %v526, %v2613
        %vm3301 = vcmp.eq.s32.totalorder %v527, %v2613
        %vm3302 = vcmp.eq.s32.totalorder %v520, %v2616
        %vm3303 = vcmp.eq.s32.totalorder %v521, %v2616
        %vm3304 = vcmp.eq.s32.totalorder %v522, %v2616
        %vm3305 = vcmp.eq.s32.totalorder %v523, %v2616
        %vm3306 = vcmp.eq.s32.totalorder %v524, %v2616
        %vm3307 = vcmp.eq.s32.totalorder %v525, %v2616
        %vm3308 = vcmp.eq.s32.totalorder %v526, %v2616
        %vm3309 = vcmp.eq.s32.totalorder %v527, %v2616
        %vm3310 = vcmp.eq.s32.totalorder %v520, %v2619
        %vm3311 = vcmp.eq.s32.totalorder %v521, %v2619
        %vm3312 = vcmp.eq.s32.totalorder %v522, %v2619
        %vm3313 = vcmp.eq.s32.totalorder %v523, %v2619
        %vm3314 = vcmp.eq.s32.totalorder %v524, %v2619
        %vm3315 = vcmp.eq.s32.totalorder %v525, %v2619
        %vm3316 = vcmp.eq.s32.totalorder %v526, %v2619
        %vm3317 = vcmp.eq.s32.totalorder %v527, %v2619
        %vm3318 = vcmp.eq.s32.totalorder %v520, %v2622
        %vm3319 = vcmp.eq.s32.totalorder %v521, %v2622
        %vm3320 = vcmp.eq.s32.totalorder %v522, %v2622
        %vm3321 = vcmp.eq.s32.totalorder %v523, %v2622
        %vm3322 = vcmp.eq.s32.totalorder %v524, %v2622
        %vm3323 = vcmp.eq.s32.totalorder %v525, %v2622
        %vm3324 = vcmp.eq.s32.totalorder %v526, %v2622
        %vm3325 = vcmp.eq.s32.totalorder %v527, %v2622
        %vm3326 = vcmp.eq.s32.totalorder %v520, %v2625
        %vm3327 = vcmp.eq.s32.totalorder %v521, %v2625
        %vm3328 = vcmp.eq.s32.totalorder %v522, %v2625
        %vm3329 = vcmp.eq.s32.totalorder %v523, %v2625
        %vm3330 = vcmp.eq.s32.totalorder %v524, %v2625
        %vm3331 = vcmp.eq.s32.totalorder %v525, %v2625
        %vm3332 = vcmp.eq.s32.totalorder %v526, %v2625
        %vm3333 = vcmp.eq.s32.totalorder %v527, %v2625
        %vm3334 = vcmp.eq.s32.totalorder %v520, %v2628
        %vm3335 = vcmp.eq.s32.totalorder %v521, %v2628
        %vm3336 = vcmp.eq.s32.totalorder %v522, %v2628
        %vm3337 = vcmp.eq.s32.totalorder %v523, %v2628
        %vm3338 = vcmp.eq.s32.totalorder %v524, %v2628
        %vm3339 = vcmp.eq.s32.totalorder %v525, %v2628
        %vm3340 = vcmp.eq.s32.totalorder %v526, %v2628
        %vm3341 = vcmp.eq.s32.totalorder %v527, %v2628
        %vm3342 = vcmp.eq.s32.totalorder %v520, %v2631
        %vm3343 = vcmp.eq.s32.totalorder %v521, %v2631
        %vm3344 = vcmp.eq.s32.totalorder %v522, %v2631
        %vm3345 = vcmp.eq.s32.totalorder %v523, %v2631
        %vm3346 = vcmp.eq.s32.totalorder %v524, %v2631
        %vm3347 = vcmp.eq.s32.totalorder %v525, %v2631
        %vm3348 = vcmp.eq.s32.totalorder %v526, %v2631
        %vm3349 = vcmp.eq.s32.totalorder %v527, %v2631
        %vm3350 = vcmp.eq.s32.totalorder %v520, %v2634
        %vm3351 = vcmp.eq.s32.totalorder %v521, %v2634
        %vm3352 = vcmp.eq.s32.totalorder %v522, %v2634
        %vm3353 = vcmp.eq.s32.totalorder %v523, %v2634
        %vm3354 = vcmp.eq.s32.totalorder %v524, %v2634
        %vm3355 = vcmp.eq.s32.totalorder %v525, %v2634
        %vm3356 = vcmp.eq.s32.totalorder %v526, %v2634
        %vm3357 = vcmp.eq.s32.totalorder %v527, %v2634
        %vm3358 = vcmp.eq.s32.totalorder %v520, %v2637
        %vm3359 = vcmp.eq.s32.totalorder %v521, %v2637
        %vm3360 = vcmp.eq.s32.totalorder %v522, %v2637
        %vm3361 = vcmp.eq.s32.totalorder %v523, %v2637
        %vm3362 = vcmp.eq.s32.totalorder %v524, %v2637
        %vm3363 = vcmp.eq.s32.totalorder %v525, %v2637
        %vm3364 = vcmp.eq.s32.totalorder %v526, %v2637
        %vm3365 = vcmp.eq.s32.totalorder %v527, %v2637
        %vm3366 = vcmp.eq.s32.totalorder %v520, %v2640
        %vm3367 = vcmp.eq.s32.totalorder %v521, %v2640
        %vm3368 = vcmp.eq.s32.totalorder %v522, %v2640
        %vm3369 = vcmp.eq.s32.totalorder %v523, %v2640
        %vm3370 = vcmp.eq.s32.totalorder %v524, %v2640
        %vm3371 = vcmp.eq.s32.totalorder %v525, %v2640
        %vm3372 = vcmp.eq.s32.totalorder %v526, %v2640
        %vm3373 = vcmp.eq.s32.totalorder %v527, %v2640
        %vm3374 = vcmp.eq.s32.totalorder %v520, %v2643
        %vm3375 = vcmp.eq.s32.totalorder %v521, %v2643
        %vm3376 = vcmp.eq.s32.totalorder %v522, %v2643
        %vm3377 = vcmp.eq.s32.totalorder %v523, %v2643
        %vm3378 = vcmp.eq.s32.totalorder %v524, %v2643
        %vm3379 = vcmp.eq.s32.totalorder %v525, %v2643
        %vm3380 = vcmp.eq.s32.totalorder %v526, %v2643
        %vm3381 = vcmp.eq.s32.totalorder %v527, %v2643
        %vm3382 = vcmp.eq.s32.totalorder %v520, %v2646
        %vm3383 = vcmp.eq.s32.totalorder %v521, %v2646
        %vm3384 = vcmp.eq.s32.totalorder %v522, %v2646
        %vm3385 = vcmp.eq.s32.totalorder %v523, %v2646
        %vm3386 = vcmp.eq.s32.totalorder %v524, %v2646
        %vm3387 = vcmp.eq.s32.totalorder %v525, %v2646
        %vm3388 = vcmp.eq.s32.totalorder %v526, %v2646
        %vm3389 = vcmp.eq.s32.totalorder %v527, %v2646
        %vm3390 = vcmp.eq.s32.totalorder %v520, %v2649
        %vm3391 = vcmp.eq.s32.totalorder %v521, %v2649
        %vm3392 = vcmp.eq.s32.totalorder %v522, %v2649
        %vm3393 = vcmp.eq.s32.totalorder %v523, %v2649
        %vm3394 = vcmp.eq.s32.totalorder %v524, %v2649
        %vm3395 = vcmp.eq.s32.totalorder %v525, %v2649
        %vm3396 = vcmp.eq.s32.totalorder %v526, %v2649
        %vm3397 = vcmp.eq.s32.totalorder %v527, %v2649
        %vm3398 = vcmp.eq.s32.totalorder %v520, %v2652
        %vm3399 = vcmp.eq.s32.totalorder %v521, %v2652
        %vm3400 = vcmp.eq.s32.totalorder %v522, %v2652
        %vm3401 = vcmp.eq.s32.totalorder %v523, %v2652
        %vm3402 = vcmp.eq.s32.totalorder %v524, %v2652
        %vm3403 = vcmp.eq.s32.totalorder %v525, %v2652
        %vm3404 = vcmp.eq.s32.totalorder %v526, %v2652
        %vm3405 = vcmp.eq.s32.totalorder %v527, %v2652
        %vm3406 = vcmp.eq.s32.totalorder %v520, %v2655
        %vm3407 = vcmp.eq.s32.totalorder %v521, %v2655
        %vm3408 = vcmp.eq.s32.totalorder %v522, %v2655
        %vm3409 = vcmp.eq.s32.totalorder %v523, %v2655
        %vm3410 = vcmp.eq.s32.totalorder %v524, %v2655
        %vm3411 = vcmp.eq.s32.totalorder %v525, %v2655
        %vm3412 = vcmp.eq.s32.totalorder %v526, %v2655
        %vm3413 = vcmp.eq.s32.totalorder %v527, %v2655
        %vm3414 = vcmp.eq.s32.totalorder %v520, %v2658
        %vm3415 = vcmp.eq.s32.totalorder %v521, %v2658
        %vm3416 = vcmp.eq.s32.totalorder %v522, %v2658
        %vm3417 = vcmp.eq.s32.totalorder %v523, %v2658
        %vm3418 = vcmp.eq.s32.totalorder %v524, %v2658
        %vm3419 = vcmp.eq.s32.totalorder %v525, %v2658
        %vm3420 = vcmp.eq.s32.totalorder %v526, %v2658
        %vm3421 = vcmp.eq.s32.totalorder %v527, %v2658
        %vm3422 = vcmp.eq.s32.totalorder %v520, %v2661
        %vm3423 = vcmp.eq.s32.totalorder %v521, %v2661
        %vm3424 = vcmp.eq.s32.totalorder %v522, %v2661
        %vm3425 = vcmp.eq.s32.totalorder %v523, %v2661
        %vm3426 = vcmp.eq.s32.totalorder %v524, %v2661
        %vm3427 = vcmp.eq.s32.totalorder %v525, %v2661
        %vm3428 = vcmp.eq.s32.totalorder %v526, %v2661
        %vm3429 = vcmp.eq.s32.totalorder %v527, %v2661
        %v3430 = vld [vmem:[%s267] sm:$0xff]
        %v3431 = vld [vmem:[%s267 + $0x8] sm:$0xff]
        %v3432 = vld [vmem:[%s267 + $0x10] sm:$0xff]
        %v3433 = vld [vmem:[%s267 + $0x18] sm:$0xff]
        %v3434 = vld [vmem:[%s267 + $0x20] sm:$0xff]
        %v3435 = vld [vmem:[%s267 + $0x28] sm:$0xff]
        %v3436 = vld [vmem:[%s267 + $0x30] sm:$0xff]
        %v3437 = vld [vmem:[%s267 + $0x38] sm:$0xff]
        %v3438 = vld [vmem:[%s267 + $0x40] sm:$0xff]
        %v3439 = vld [vmem:[%s267 + $0x48] sm:$0xff]
        %v3440 = vld [vmem:[%s267 + $0x50] sm:$0xff]
        %v3441 = vld [vmem:[%s267 + $0x58] sm:$0xff]
        %v3442 = vld [vmem:[%s267 + $0x60] sm:$0xff]
        %v3443 = vld [vmem:[%s267 + $0x68] sm:$0xff]
        %v3444 = vld [vmem:[%s267 + $0x70] sm:$0xff]
        %v3445 = vld [vmem:[%s267 + $0x78] sm:$0xff]
        %v3446 = vld [vmem:[%s267 + $0x80] sm:$0xff]
        %v3447 = vld [vmem:[%s267 + $0x88] sm:$0xff]
        %v3448 = vld [vmem:[%s267 + $0x90] sm:$0xff]
        %v3449 = vld [vmem:[%s267 + $0x98] sm:$0xff]
        %v3450 = vld [vmem:[%s267 + $0xa0] sm:$0xff]
        %v3451 = vld [vmem:[%s267 + $0xa8] sm:$0xff]
        %v3452 = vld [vmem:[%s267 + $0xb0] sm:$0xff]
        %v3453 = vld [vmem:[%s267 + $0xb8] sm:$0xff]
        %v3454 = vld [vmem:[%s267 + $0xc0] sm:$0xff]
        %v3455 = vld [vmem:[%s267 + $0xc8] sm:$0xff]
        %v3456 = vld [vmem:[%s267 + $0xd0] sm:$0xff]
        %v3457 = vld [vmem:[%s267 + $0xd8] sm:$0xff]
        %v3458 = vld [vmem:[%s267 + $0xe0] sm:$0xff]
        %v3459 = vld [vmem:[%s267 + $0xe8] sm:$0xff]
        %v3460 = vld [vmem:[%s267 + $0xf0] sm:$0xff]
        %v3461 = vld [vmem:[%s267 + $0xf8] sm:$0xff]
        %v3462 = vld [vmem:[%s267 + $0x100] sm:$0xff]
        %v3463 = vld [vmem:[%s267 + $0x108] sm:$0xff]
        %v3464 = vld [vmem:[%s267 + $0x110] sm:$0xff]
        %v3465 = vld [vmem:[%s267 + $0x118] sm:$0xff]
        %v3466 = vld [vmem:[%s267 + $0x120] sm:$0xff]
        %v3467 = vld [vmem:[%s267 + $0x128] sm:$0xff]
        %v3468 = vld [vmem:[%s267 + $0x130] sm:$0xff]
        %v3469 = vld [vmem:[%s267 + $0x138] sm:$0xff]
        %v3470 = vld [vmem:[%s267 + $0x140] sm:$0xff]
        %v3471 = vld [vmem:[%s267 + $0x148] sm:$0xff]
        %v3472 = vld [vmem:[%s267 + $0x150] sm:$0xff]
        %v3473 = vld [vmem:[%s267 + $0x158] sm:$0xff]
        %v3474 = vld [vmem:[%s267 + $0x160] sm:$0xff]
        %v3475 = vld [vmem:[%s267 + $0x168] sm:$0xff]
        %v3476 = vld [vmem:[%s267 + $0x170] sm:$0xff]
        %v3477 = vld [vmem:[%s267 + $0x178] sm:$0xff]
        %v3478 = vld [vmem:[%s267 + $0x180] sm:$0xff]
        %v3479 = vld [vmem:[%s267 + $0x188] sm:$0xff]
        %v3480 = vld [vmem:[%s267 + $0x190] sm:$0xff]
        %v3481 = vld [vmem:[%s267 + $0x198] sm:$0xff]
        %v3482 = vld [vmem:[%s267 + $0x1a0] sm:$0xff]
        %v3483 = vld [vmem:[%s267 + $0x1a8] sm:$0xff]
        %v3484 = vld [vmem:[%s267 + $0x1b0] sm:$0xff]
        %v3485 = vld [vmem:[%s267 + $0x1b8] sm:$0xff]
        %v3486 = vld [vmem:[%s267 + $0x1c0] sm:$0xff]
        %v3487 = vld [vmem:[%s267 + $0x1c8] sm:$0xff]
        %v3488 = vld [vmem:[%s267 + $0x1d0] sm:$0xff]
        %v3489 = vld [vmem:[%s267 + $0x1d8] sm:$0xff]
        %v3490 = vld [vmem:[%s267 + $0x1e0] sm:$0xff]
        %v3491 = vld [vmem:[%s267 + $0x1e8] sm:$0xff]
        %v3492 = vld [vmem:[%s267 + $0x1f0] sm:$0xff]
        %v3493 = vld [vmem:[%s267 + $0x1f8] sm:$0xff]
        %v3494 = vld [vmem:[%s267 + $0x200] sm:$0xff]
        %v3495 = vld [vmem:[%s267 + $0x208] sm:$0xff]
        %v3496 = vld [vmem:[%s267 + $0x210] sm:$0xff]
        %v3497 = vld [vmem:[%s267 + $0x218] sm:$0xff]
        %v3498 = vld [vmem:[%s267 + $0x220] sm:$0xff]
        %v3499 = vld [vmem:[%s267 + $0x228] sm:$0xff]
        %v3500 = vld [vmem:[%s267 + $0x230] sm:$0xff]
        %v3501 = vld [vmem:[%s267 + $0x238] sm:$0xff]
        %v3502 = vld [vmem:[%s267 + $0x240] sm:$0xff]
        %v3503 = vld [vmem:[%s267 + $0x248] sm:$0xff]
        %v3504 = vld [vmem:[%s267 + $0x250] sm:$0xff]
        %v3505 = vld [vmem:[%s267 + $0x258] sm:$0xff]
        %v3506 = vld [vmem:[%s267 + $0x260] sm:$0xff]
        %v3507 = vld [vmem:[%s267 + $0x268] sm:$0xff]
        %v3508 = vld [vmem:[%s267 + $0x270] sm:$0xff]
        %v3509 = vld [vmem:[%s267 + $0x278] sm:$0xff]
        %v3510 = vld [vmem:[%s267 + $0x280] sm:$0xff]
        %v3511 = vld [vmem:[%s267 + $0x288] sm:$0xff]
        %v3512 = vld [vmem:[%s267 + $0x290] sm:$0xff]
        %v3513 = vld [vmem:[%s267 + $0x298] sm:$0xff]
        %v3514 = vld [vmem:[%s267 + $0x2a0] sm:$0xff]
        %v3515 = vld [vmem:[%s267 + $0x2a8] sm:$0xff]
        %v3516 = vld [vmem:[%s267 + $0x2b0] sm:$0xff]
        %v3517 = vld [vmem:[%s267 + $0x2b8] sm:$0xff]
        %v3518 = vld [vmem:[%s267 + $0x2c0] sm:$0xff]
        %v3519 = vld [vmem:[%s267 + $0x2c8] sm:$0xff]
        %v3520 = vld [vmem:[%s267 + $0x2d0] sm:$0xff]
        %v3521 = vld [vmem:[%s267 + $0x2d8] sm:$0xff]
        %v3522 = vld [vmem:[%s267 + $0x2e0] sm:$0xff]
        %v3523 = vld [vmem:[%s267 + $0x2e8] sm:$0xff]
        %v3524 = vld [vmem:[%s267 + $0x2f0] sm:$0xff]
        %v3525 = vld [vmem:[%s267 + $0x2f8] sm:$0xff]
        %3527 = vset.pattern.permute.xlu0 0
        %3528 = vperm.xlu0 %3527, %v3430
        %v3529 = vpop.permute.xlu0 %3528
        %3532 = vset.pattern.permute.xlu0 0
        %3533 = vperm.xlu0 %3532, %v3431
        %v3534 = vpop.permute.xlu0 %3533
        %3537 = vset.pattern.permute.xlu0 0
        %3538 = vperm.xlu0 %3537, %v3432
        %v3539 = vpop.permute.xlu0 %3538
        %3542 = vset.pattern.permute.xlu0 0
        %3543 = vperm.xlu0 %3542, %v3433
        %v3544 = vpop.permute.xlu0 %3543
        %3547 = vset.pattern.permute.xlu0 0
        %3548 = vperm.xlu0 %3547, %v3434
        %v3549 = vpop.permute.xlu0 %3548
        %3552 = vset.pattern.permute.xlu0 0
        %3553 = vperm.xlu0 %3552, %v3435
        %v3554 = vpop.permute.xlu0 %3553
        %3557 = vset.pattern.permute.xlu0 0
        %3558 = vperm.xlu0 %3557, %v3436
        %v3559 = vpop.permute.xlu0 %3558
        %3562 = vset.pattern.permute.xlu0 0
        %3563 = vperm.xlu0 %3562, %v3437
        %v3564 = vpop.permute.xlu0 %3563
        %3567 = vset.pattern.permute.xlu0 0
        %3568 = vperm.xlu0 %3567, %v3438
        %v3569 = vpop.permute.xlu0 %3568
        %3572 = vset.pattern.permute.xlu0 0
        %3573 = vperm.xlu0 %3572, %v3439
        %v3574 = vpop.permute.xlu0 %3573
        %3577 = vset.pattern.permute.xlu0 0
        %3578 = vperm.xlu0 %3577, %v3440
        %v3579 = vpop.permute.xlu0 %3578
        %3582 = vset.pattern.permute.xlu0 0
        %3583 = vperm.xlu0 %3582, %v3441
        %v3584 = vpop.permute.xlu0 %3583
        %3587 = vset.pattern.permute.xlu0 0
        %3588 = vperm.xlu0 %3587, %v3442
        %v3589 = vpop.permute.xlu0 %3588
        %3592 = vset.pattern.permute.xlu0 0
        %3593 = vperm.xlu0 %3592, %v3443
        %v3594 = vpop.permute.xlu0 %3593
        %3597 = vset.pattern.permute.xlu0 0
        %3598 = vperm.xlu0 %3597, %v3444
        %v3599 = vpop.permute.xlu0 %3598
        %3602 = vset.pattern.permute.xlu0 0
        %3603 = vperm.xlu0 %3602, %v3445
        %v3604 = vpop.permute.xlu0 %3603
        %3607 = vset.pattern.permute.xlu0 0
        %3608 = vperm.xlu0 %3607, %v3446
        %v3609 = vpop.permute.xlu0 %3608
        %3612 = vset.pattern.permute.xlu0 0
        %3613 = vperm.xlu0 %3612, %v3447
        %v3614 = vpop.permute.xlu0 %3613
        %3617 = vset.pattern.permute.xlu0 0
        %3618 = vperm.xlu0 %3617, %v3448
        %v3619 = vpop.permute.xlu0 %3618
        %3622 = vset.pattern.permute.xlu0 0
        %3623 = vperm.xlu0 %3622, %v3449
        %v3624 = vpop.permute.xlu0 %3623
        %3627 = vset.pattern.permute.xlu0 0
        %3628 = vperm.xlu0 %3627, %v3450
        %v3629 = vpop.permute.xlu0 %3628
        %3632 = vset.pattern.permute.xlu0 0
        %3633 = vperm.xlu0 %3632, %v3451
        %v3634 = vpop.permute.xlu0 %3633
        %3637 = vset.pattern.permute.xlu0 0
        %3638 = vperm.xlu0 %3637, %v3452
        %v3639 = vpop.permute.xlu0 %3638
        %3642 = vset.pattern.permute.xlu0 0
        %3643 = vperm.xlu0 %3642, %v3453
        %v3644 = vpop.permute.xlu0 %3643
        %3647 = vset.pattern.permute.xlu0 0
        %3648 = vperm.xlu0 %3647, %v3454
        %v3649 = vpop.permute.xlu0 %3648
        %3652 = vset.pattern.permute.xlu0 0
        %3653 = vperm.xlu0 %3652, %v3455
        %v3654 = vpop.permute.xlu0 %3653
        %3657 = vset.pattern.permute.xlu0 0
        %3658 = vperm.xlu0 %3657, %v3456
        %v3659 = vpop.permute.xlu0 %3658
        %3662 = vset.pattern.permute.xlu0 0
        %3663 = vperm.xlu0 %3662, %v3457
        %v3664 = vpop.permute.xlu0 %3663
        %3667 = vset.pattern.permute.xlu0 0
        %3668 = vperm.xlu0 %3667, %v3458
        %v3669 = vpop.permute.xlu0 %3668
        %3672 = vset.pattern.permute.xlu0 0
        %3673 = vperm.xlu0 %3672, %v3459
        %v3674 = vpop.permute.xlu0 %3673
        %3677 = vset.pattern.permute.xlu0 0
        %3678 = vperm.xlu0 %3677, %v3460
        %v3679 = vpop.permute.xlu0 %3678
        %3682 = vset.pattern.permute.xlu0 0
        %3683 = vperm.xlu0 %3682, %v3461
        %v3684 = vpop.permute.xlu0 %3683
        %3687 = vset.pattern.permute.xlu0 0
        %3688 = vperm.xlu0 %3687, %v3462
        %v3689 = vpop.permute.xlu0 %3688
        %3692 = vset.pattern.permute.xlu0 0
        %3693 = vperm.xlu0 %3692, %v3463
        %v3694 = vpop.permute.xlu0 %3693
        %3697 = vset.pattern.permute.xlu0 0
        %3698 = vperm.xlu0 %3697, %v3464
        %v3699 = vpop.permute.xlu0 %3698
        %3702 = vset.pattern.permute.xlu0 0
        %3703 = vperm.xlu0 %3702, %v3465
        %v3704 = vpop.permute.xlu0 %3703
        %3707 = vset.pattern.permute.xlu0 0
        %3708 = vperm.xlu0 %3707, %v3466
        %v3709 = vpop.permute.xlu0 %3708
        %3712 = vset.pattern.permute.xlu0 0
        %3713 = vperm.xlu0 %3712, %v3467
        %v3714 = vpop.permute.xlu0 %3713
        %3717 = vset.pattern.permute.xlu0 0
        %3718 = vperm.xlu0 %3717, %v3468
        %v3719 = vpop.permute.xlu0 %3718
        %3722 = vset.pattern.permute.xlu0 0
        %3723 = vperm.xlu0 %3722, %v3469
        %v3724 = vpop.permute.xlu0 %3723
        %3727 = vset.pattern.permute.xlu0 0
        %3728 = vperm.xlu0 %3727, %v3470
        %v3729 = vpop.permute.xlu0 %3728
        %3732 = vset.pattern.permute.xlu0 0
        %3733 = vperm.xlu0 %3732, %v3471
        %v3734 = vpop.permute.xlu0 %3733
        %3737 = vset.pattern.permute.xlu0 0
        %3738 = vperm.xlu0 %3737, %v3472
        %v3739 = vpop.permute.xlu0 %3738
        %3742 = vset.pattern.permute.xlu0 0
        %3743 = vperm.xlu0 %3742, %v3473
        %v3744 = vpop.permute.xlu0 %3743
        %3747 = vset.pattern.permute.xlu0 0
        %3748 = vperm.xlu0 %3747, %v3474
        %v3749 = vpop.permute.xlu0 %3748
        %3752 = vset.pattern.permute.xlu0 0
        %3753 = vperm.xlu0 %3752, %v3475
        %v3754 = vpop.permute.xlu0 %3753
        %3757 = vset.pattern.permute.xlu0 0
        %3758 = vperm.xlu0 %3757, %v3476
        %v3759 = vpop.permute.xlu0 %3758
        %3762 = vset.pattern.permute.xlu0 0
        %3763 = vperm.xlu0 %3762, %v3477
        %v3764 = vpop.permute.xlu0 %3763
        %3767 = vset.pattern.permute.xlu0 0
        %3768 = vperm.xlu0 %3767, %v3478
        %v3769 = vpop.permute.xlu0 %3768
        %3772 = vset.pattern.permute.xlu0 0
        %3773 = vperm.xlu0 %3772, %v3479
        %v3774 = vpop.permute.xlu0 %3773
        %3777 = vset.pattern.permute.xlu0 0
        %3778 = vperm.xlu0 %3777, %v3480
        %v3779 = vpop.permute.xlu0 %3778
        %3782 = vset.pattern.permute.xlu0 0
        %3783 = vperm.xlu0 %3782, %v3481
        %v3784 = vpop.permute.xlu0 %3783
        %3787 = vset.pattern.permute.xlu0 0
        %3788 = vperm.xlu0 %3787, %v3482
        %v3789 = vpop.permute.xlu0 %3788
        %3792 = vset.pattern.permute.xlu0 0
        %3793 = vperm.xlu0 %3792, %v3483
        %v3794 = vpop.permute.xlu0 %3793
        %3797 = vset.pattern.permute.xlu0 0
        %3798 = vperm.xlu0 %3797, %v3484
        %v3799 = vpop.permute.xlu0 %3798
        %3802 = vset.pattern.permute.xlu0 0
        %3803 = vperm.xlu0 %3802, %v3485
        %v3804 = vpop.permute.xlu0 %3803
        %3807 = vset.pattern.permute.xlu0 0
        %3808 = vperm.xlu0 %3807, %v3486
        %v3809 = vpop.permute.xlu0 %3808
        %3812 = vset.pattern.permute.xlu0 0
        %3813 = vperm.xlu0 %3812, %v3487
        %v3814 = vpop.permute.xlu0 %3813
        %3817 = vset.pattern.permute.xlu0 0
        %3818 = vperm.xlu0 %3817, %v3488
        %v3819 = vpop.permute.xlu0 %3818
        %3822 = vset.pattern.permute.xlu0 0
        %3823 = vperm.xlu0 %3822, %v3489
        %v3824 = vpop.permute.xlu0 %3823
        %3827 = vset.pattern.permute.xlu0 0
        %3828 = vperm.xlu0 %3827, %v3490
        %v3829 = vpop.permute.xlu0 %3828
        %3832 = vset.pattern.permute.xlu0 0
        %3833 = vperm.xlu0 %3832, %v3491
        %v3834 = vpop.permute.xlu0 %3833
        %3837 = vset.pattern.permute.xlu0 0
        %3838 = vperm.xlu0 %3837, %v3492
        %v3839 = vpop.permute.xlu0 %3838
        %3842 = vset.pattern.permute.xlu0 0
        %3843 = vperm.xlu0 %3842, %v3493
        %v3844 = vpop.permute.xlu0 %3843
        %3847 = vset.pattern.permute.xlu0 0
        %3848 = vperm.xlu0 %3847, %v3494
        %v3849 = vpop.permute.xlu0 %3848
        %3852 = vset.pattern.permute.xlu0 0
        %3853 = vperm.xlu0 %3852, %v3495
        %v3854 = vpop.permute.xlu0 %3853
        %3857 = vset.pattern.permute.xlu0 0
        %3858 = vperm.xlu0 %3857, %v3496
        %v3859 = vpop.permute.xlu0 %3858
        %3862 = vset.pattern.permute.xlu0 0
        %3863 = vperm.xlu0 %3862, %v3497
        %v3864 = vpop.permute.xlu0 %3863
        %3867 = vset.pattern.permute.xlu0 0
        %3868 = vperm.xlu0 %3867, %v3498
        %v3869 = vpop.permute.xlu0 %3868
        %3872 = vset.pattern.permute.xlu0 0
        %3873 = vperm.xlu0 %3872, %v3499
        %v3874 = vpop.permute.xlu0 %3873
        %3877 = vset.pattern.permute.xlu0 0
        %3878 = vperm.xlu0 %3877, %v3500
        %v3879 = vpop.permute.xlu0 %3878
        %3882 = vset.pattern.permute.xlu0 0
        %3883 = vperm.xlu0 %3882, %v3501
        %v3884 = vpop.permute.xlu0 %3883
        %3887 = vset.pattern.permute.xlu0 0
        %3888 = vperm.xlu0 %3887, %v3502
        %v3889 = vpop.permute.xlu0 %3888
        %3892 = vset.pattern.permute.xlu0 0
        %3893 = vperm.xlu0 %3892, %v3503
        %v3894 = vpop.permute.xlu0 %3893
        %3897 = vset.pattern.permute.xlu0 0
        %3898 = vperm.xlu0 %3897, %v3504
        %v3899 = vpop.permute.xlu0 %3898
        %3902 = vset.pattern.permute.xlu0 0
        %3903 = vperm.xlu0 %3902, %v3505
        %v3904 = vpop.permute.xlu0 %3903
        %3907 = vset.pattern.permute.xlu0 0
        %3908 = vperm.xlu0 %3907, %v3506
        %v3909 = vpop.permute.xlu0 %3908
        %3912 = vset.pattern.permute.xlu0 0
        %3913 = vperm.xlu0 %3912, %v3507
        %v3914 = vpop.permute.xlu0 %3913
        %3917 = vset.pattern.permute.xlu0 0
        %3918 = vperm.xlu0 %3917, %v3508
        %v3919 = vpop.permute.xlu0 %3918
        %3922 = vset.pattern.permute.xlu0 0
        %3923 = vperm.xlu0 %3922, %v3509
        %v3924 = vpop.permute.xlu0 %3923
        %3927 = vset.pattern.permute.xlu0 0
        %3928 = vperm.xlu0 %3927, %v3510
        %v3929 = vpop.permute.xlu0 %3928
        %3932 = vset.pattern.permute.xlu0 0
        %3933 = vperm.xlu0 %3932, %v3511
        %v3934 = vpop.permute.xlu0 %3933
        %3937 = vset.pattern.permute.xlu0 0
        %3938 = vperm.xlu0 %3937, %v3512
        %v3939 = vpop.permute.xlu0 %3938
        %3942 = vset.pattern.permute.xlu0 0
        %3943 = vperm.xlu0 %3942, %v3513
        %v3944 = vpop.permute.xlu0 %3943
        %3947 = vset.pattern.permute.xlu0 0
        %3948 = vperm.xlu0 %3947, %v3514
        %v3949 = vpop.permute.xlu0 %3948
        %3952 = vset.pattern.permute.xlu0 0
        %3953 = vperm.xlu0 %3952, %v3515
        %v3954 = vpop.permute.xlu0 %3953
        %3957 = vset.pattern.permute.xlu0 0
        %3958 = vperm.xlu0 %3957, %v3516
        %v3959 = vpop.permute.xlu0 %3958
        %3962 = vset.pattern.permute.xlu0 0
        %3963 = vperm.xlu0 %3962, %v3517
        %v3964 = vpop.permute.xlu0 %3963
        %3967 = vset.pattern.permute.xlu0 0
        %3968 = vperm.xlu0 %3967, %v3518
        %v3969 = vpop.permute.xlu0 %3968
        %3972 = vset.pattern.permute.xlu0 0
        %3973 = vperm.xlu0 %3972, %v3519
        %v3974 = vpop.permute.xlu0 %3973
        %3977 = vset.pattern.permute.xlu0 0
        %3978 = vperm.xlu0 %3977, %v3520
        %v3979 = vpop.permute.xlu0 %3978
        %3982 = vset.pattern.permute.xlu0 0
        %3983 = vperm.xlu0 %3982, %v3521
        %v3984 = vpop.permute.xlu0 %3983
        %3987 = vset.pattern.permute.xlu0 0
        %3988 = vperm.xlu0 %3987, %v3522
        %v3989 = vpop.permute.xlu0 %3988
        %3992 = vset.pattern.permute.xlu0 0
        %3993 = vperm.xlu0 %3992, %v3523
        %v3994 = vpop.permute.xlu0 %3993
        %3997 = vset.pattern.permute.xlu0 0
        %3998 = vperm.xlu0 %3997, %v3524
        %v3999 = vpop.permute.xlu0 %3998
        %4002 = vset.pattern.permute.xlu0 0
        %4003 = vperm.xlu0 %4002, %v3525
        %v4004 = vpop.permute.xlu0 %4003
        %v4006 = vsel %vm2662, %v3529, 0.0
        %v4007 = vsel %vm2663, %v3529, 0.0
        %v4008 = vsel %vm2664, %v3529, 0.0
        %v4009 = vsel %vm2665, %v3529, 0.0
        %v4010 = vsel %vm2666, %v3529, 0.0
        %v4011 = vsel %vm2667, %v3529, 0.0
        %v4012 = vsel %vm2668, %v3529, 0.0
        %v4013 = vsel %vm2669, %v3529, 0.0
        %v4014 = vsel %vm2670, %v3534, 0.0
        %v4015 = vsel %vm2671, %v3534, 0.0
        %v4016 = vsel %vm2672, %v3534, 0.0
        %v4017 = vsel %vm2673, %v3534, 0.0
        %v4018 = vsel %vm2674, %v3534, 0.0
        %v4019 = vsel %vm2675, %v3534, 0.0
        %v4020 = vsel %vm2676, %v3534, 0.0
        %v4021 = vsel %vm2677, %v3534, 0.0
        %v4022 = vsel %vm2678, %v3539, 0.0
        %v4023 = vsel %vm2679, %v3539, 0.0
        %v4024 = vsel %vm2680, %v3539, 0.0
        %v4025 = vsel %vm2681, %v3539, 0.0
        %v4026 = vsel %vm2682, %v3539, 0.0
        %v4027 = vsel %vm2683, %v3539, 0.0
        %v4028 = vsel %vm2684, %v3539, 0.0
        %v4029 = vsel %vm2685, %v3539, 0.0
        %v4030 = vsel %vm2686, %v3544, 0.0
        %v4031 = vsel %vm2687, %v3544, 0.0
        %v4032 = vsel %vm2688, %v3544, 0.0
        %v4033 = vsel %vm2689, %v3544, 0.0
        %v4034 = vsel %vm2690, %v3544, 0.0
        %v4035 = vsel %vm2691, %v3544, 0.0
        %v4036 = vsel %vm2692, %v3544, 0.0
        %v4037 = vsel %vm2693, %v3544, 0.0
        %v4038 = vsel %vm2694, %v3549, 0.0
        %v4039 = vsel %vm2695, %v3549, 0.0
        %v4040 = vsel %vm2696, %v3549, 0.0
        %v4041 = vsel %vm2697, %v3549, 0.0
        %v4042 = vsel %vm2698, %v3549, 0.0
        %v4043 = vsel %vm2699, %v3549, 0.0
        %v4044 = vsel %vm2700, %v3549, 0.0
        %v4045 = vsel %vm2701, %v3549, 0.0
        %v4046 = vsel %vm2702, %v3554, 0.0
        %v4047 = vsel %vm2703, %v3554, 0.0
        %v4048 = vsel %vm2704, %v3554, 0.0
        %v4049 = vsel %vm2705, %v3554, 0.0
        %v4050 = vsel %vm2706, %v3554, 0.0
        %v4051 = vsel %vm2707, %v3554, 0.0
        %v4052 = vsel %vm2708, %v3554, 0.0
        %v4053 = vsel %vm2709, %v3554, 0.0
        %v4054 = vsel %vm2710, %v3559, 0.0
        %v4055 = vsel %vm2711, %v3559, 0.0
        %v4056 = vsel %vm2712, %v3559, 0.0
        %v4057 = vsel %vm2713, %v3559, 0.0
        %v4058 = vsel %vm2714, %v3559, 0.0
        %v4059 = vsel %vm2715, %v3559, 0.0
        %v4060 = vsel %vm2716, %v3559, 0.0
        %v4061 = vsel %vm2717, %v3559, 0.0
        %v4062 = vsel %vm2718, %v3564, 0.0
        %v4063 = vsel %vm2719, %v3564, 0.0
        %v4064 = vsel %vm2720, %v3564, 0.0
        %v4065 = vsel %vm2721, %v3564, 0.0
        %v4066 = vsel %vm2722, %v3564, 0.0
        %v4067 = vsel %vm2723, %v3564, 0.0
        %v4068 = vsel %vm2724, %v3564, 0.0
        %v4069 = vsel %vm2725, %v3564, 0.0
        %v4070 = vsel %vm2726, %v3569, 0.0
        %v4071 = vsel %vm2727, %v3569, 0.0
        %v4072 = vsel %vm2728, %v3569, 0.0
        %v4073 = vsel %vm2729, %v3569, 0.0
        %v4074 = vsel %vm2730, %v3569, 0.0
        %v4075 = vsel %vm2731, %v3569, 0.0
        %v4076 = vsel %vm2732, %v3569, 0.0
        %v4077 = vsel %vm2733, %v3569, 0.0
        %v4078 = vsel %vm2734, %v3574, 0.0
        %v4079 = vsel %vm2735, %v3574, 0.0
        %v4080 = vsel %vm2736, %v3574, 0.0
        %v4081 = vsel %vm2737, %v3574, 0.0
        %v4082 = vsel %vm2738, %v3574, 0.0
        %v4083 = vsel %vm2739, %v3574, 0.0
        %v4084 = vsel %vm2740, %v3574, 0.0
        %v4085 = vsel %vm2741, %v3574, 0.0
        %v4086 = vsel %vm2742, %v3579, 0.0
        %v4087 = vsel %vm2743, %v3579, 0.0
        %v4088 = vsel %vm2744, %v3579, 0.0
        %v4089 = vsel %vm2745, %v3579, 0.0
        %v4090 = vsel %vm2746, %v3579, 0.0
        %v4091 = vsel %vm2747, %v3579, 0.0
        %v4092 = vsel %vm2748, %v3579, 0.0
        %v4093 = vsel %vm2749, %v3579, 0.0
        %v4094 = vsel %vm2750, %v3584, 0.0
        %v4095 = vsel %vm2751, %v3584, 0.0
        %v4096 = vsel %vm2752, %v3584, 0.0
        %v4097 = vsel %vm2753, %v3584, 0.0
        %v4098 = vsel %vm2754, %v3584, 0.0
        %v4099 = vsel %vm2755, %v3584, 0.0
        %v4100 = vsel %vm2756, %v3584, 0.0
        %v4101 = vsel %vm2757, %v3584, 0.0
        %v4102 = vsel %vm2758, %v3589, 0.0
        %v4103 = vsel %vm2759, %v3589, 0.0
        %v4104 = vsel %vm2760, %v3589, 0.0
        %v4105 = vsel %vm2761, %v3589, 0.0
        %v4106 = vsel %vm2762, %v3589, 0.0
        %v4107 = vsel %vm2763, %v3589, 0.0
        %v4108 = vsel %vm2764, %v3589, 0.0
        %v4109 = vsel %vm2765, %v3589, 0.0
        %v4110 = vsel %vm2766, %v3594, 0.0
        %v4111 = vsel %vm2767, %v3594, 0.0
        %v4112 = vsel %vm2768, %v3594, 0.0
        %v4113 = vsel %vm2769, %v3594, 0.0
        %v4114 = vsel %vm2770, %v3594, 0.0
        %v4115 = vsel %vm2771, %v3594, 0.0
        %v4116 = vsel %vm2772, %v3594, 0.0
        %v4117 = vsel %vm2773, %v3594, 0.0
        %v4118 = vsel %vm2774, %v3599, 0.0
        %v4119 = vsel %vm2775, %v3599, 0.0
        %v4120 = vsel %vm2776, %v3599, 0.0
        %v4121 = vsel %vm2777, %v3599, 0.0
        %v4122 = vsel %vm2778, %v3599, 0.0
        %v4123 = vsel %vm2779, %v3599, 0.0
        %v4124 = vsel %vm2780, %v3599, 0.0
        %v4125 = vsel %vm2781, %v3599, 0.0
        %v4126 = vsel %vm2782, %v3604, 0.0
        %v4127 = vsel %vm2783, %v3604, 0.0
        %v4128 = vsel %vm2784, %v3604, 0.0
        %v4129 = vsel %vm2785, %v3604, 0.0
        %v4130 = vsel %vm2786, %v3604, 0.0
        %v4131 = vsel %vm2787, %v3604, 0.0
        %v4132 = vsel %vm2788, %v3604, 0.0
        %v4133 = vsel %vm2789, %v3604, 0.0
        %v4134 = vsel %vm2790, %v3609, 0.0
        %v4135 = vsel %vm2791, %v3609, 0.0
        %v4136 = vsel %vm2792, %v3609, 0.0
        %v4137 = vsel %vm2793, %v3609, 0.0
        %v4138 = vsel %vm2794, %v3609, 0.0
        %v4139 = vsel %vm2795, %v3609, 0.0
        %v4140 = vsel %vm2796, %v3609, 0.0
        %v4141 = vsel %vm2797, %v3609, 0.0
        %v4142 = vsel %vm2798, %v3614, 0.0
        %v4143 = vsel %vm2799, %v3614, 0.0
        %v4144 = vsel %vm2800, %v3614, 0.0
        %v4145 = vsel %vm2801, %v3614, 0.0
        %v4146 = vsel %vm2802, %v3614, 0.0
        %v4147 = vsel %vm2803, %v3614, 0.0
        %v4148 = vsel %vm2804, %v3614, 0.0
        %v4149 = vsel %vm2805, %v3614, 0.0
        %v4150 = vsel %vm2806, %v3619, 0.0
        %v4151 = vsel %vm2807, %v3619, 0.0
        %v4152 = vsel %vm2808, %v3619, 0.0
        %v4153 = vsel %vm2809, %v3619, 0.0
        %v4154 = vsel %vm2810, %v3619, 0.0
        %v4155 = vsel %vm2811, %v3619, 0.0
        %v4156 = vsel %vm2812, %v3619, 0.0
        %v4157 = vsel %vm2813, %v3619, 0.0
        %v4158 = vsel %vm2814, %v3624, 0.0
        %v4159 = vsel %vm2815, %v3624, 0.0
        %v4160 = vsel %vm2816, %v3624, 0.0
        %v4161 = vsel %vm2817, %v3624, 0.0
        %v4162 = vsel %vm2818, %v3624, 0.0
        %v4163 = vsel %vm2819, %v3624, 0.0
        %v4164 = vsel %vm2820, %v3624, 0.0
        %v4165 = vsel %vm2821, %v3624, 0.0
        %v4166 = vsel %vm2822, %v3629, 0.0
        %v4167 = vsel %vm2823, %v3629, 0.0
        %v4168 = vsel %vm2824, %v3629, 0.0
        %v4169 = vsel %vm2825, %v3629, 0.0
        %v4170 = vsel %vm2826, %v3629, 0.0
        %v4171 = vsel %vm2827, %v3629, 0.0
        %v4172 = vsel %vm2828, %v3629, 0.0
        %v4173 = vsel %vm2829, %v3629, 0.0
        %v4174 = vsel %vm2830, %v3634, 0.0
        %v4175 = vsel %vm2831, %v3634, 0.0
        %v4176 = vsel %vm2832, %v3634, 0.0
        %v4177 = vsel %vm2833, %v3634, 0.0
        %v4178 = vsel %vm2834, %v3634, 0.0
        %v4179 = vsel %vm2835, %v3634, 0.0
        %v4180 = vsel %vm2836, %v3634, 0.0
        %v4181 = vsel %vm2837, %v3634, 0.0
        %v4182 = vsel %vm2838, %v3639, 0.0
        %v4183 = vsel %vm2839, %v3639, 0.0
        %v4184 = vsel %vm2840, %v3639, 0.0
        %v4185 = vsel %vm2841, %v3639, 0.0
        %v4186 = vsel %vm2842, %v3639, 0.0
        %v4187 = vsel %vm2843, %v3639, 0.0
        %v4188 = vsel %vm2844, %v3639, 0.0
        %v4189 = vsel %vm2845, %v3639, 0.0
        %v4190 = vsel %vm2846, %v3644, 0.0
        %v4191 = vsel %vm2847, %v3644, 0.0
        %v4192 = vsel %vm2848, %v3644, 0.0
        %v4193 = vsel %vm2849, %v3644, 0.0
        %v4194 = vsel %vm2850, %v3644, 0.0
        %v4195 = vsel %vm2851, %v3644, 0.0
        %v4196 = vsel %vm2852, %v3644, 0.0
        %v4197 = vsel %vm2853, %v3644, 0.0
        %v4198 = vsel %vm2854, %v3649, 0.0
        %v4199 = vsel %vm2855, %v3649, 0.0
        %v4200 = vsel %vm2856, %v3649, 0.0
        %v4201 = vsel %vm2857, %v3649, 0.0
        %v4202 = vsel %vm2858, %v3649, 0.0
        %v4203 = vsel %vm2859, %v3649, 0.0
        %v4204 = vsel %vm2860, %v3649, 0.0
        %v4205 = vsel %vm2861, %v3649, 0.0
        %v4206 = vsel %vm2862, %v3654, 0.0
        %v4207 = vsel %vm2863, %v3654, 0.0
        %v4208 = vsel %vm2864, %v3654, 0.0
        %v4209 = vsel %vm2865, %v3654, 0.0
        %v4210 = vsel %vm2866, %v3654, 0.0
        %v4211 = vsel %vm2867, %v3654, 0.0
        %v4212 = vsel %vm2868, %v3654, 0.0
        %v4213 = vsel %vm2869, %v3654, 0.0
        %v4214 = vsel %vm2870, %v3659, 0.0
        %v4215 = vsel %vm2871, %v3659, 0.0
        %v4216 = vsel %vm2872, %v3659, 0.0
        %v4217 = vsel %vm2873, %v3659, 0.0
        %v4218 = vsel %vm2874, %v3659, 0.0
        %v4219 = vsel %vm2875, %v3659, 0.0
        %v4220 = vsel %vm2876, %v3659, 0.0
        %v4221 = vsel %vm2877, %v3659, 0.0
        %v4222 = vsel %vm2878, %v3664, 0.0
        %v4223 = vsel %vm2879, %v3664, 0.0
        %v4224 = vsel %vm2880, %v3664, 0.0
        %v4225 = vsel %vm2881, %v3664, 0.0
        %v4226 = vsel %vm2882, %v3664, 0.0
        %v4227 = vsel %vm2883, %v3664, 0.0
        %v4228 = vsel %vm2884, %v3664, 0.0
        %v4229 = vsel %vm2885, %v3664, 0.0
        %v4230 = vsel %vm2886, %v3669, 0.0
        %v4231 = vsel %vm2887, %v3669, 0.0
        %v4232 = vsel %vm2888, %v3669, 0.0
        %v4233 = vsel %vm2889, %v3669, 0.0
        %v4234 = vsel %vm2890, %v3669, 0.0
        %v4235 = vsel %vm2891, %v3669, 0.0
        %v4236 = vsel %vm2892, %v3669, 0.0
        %v4237 = vsel %vm2893, %v3669, 0.0
        %v4238 = vsel %vm2894, %v3674, 0.0
        %v4239 = vsel %vm2895, %v3674, 0.0
        %v4240 = vsel %vm2896, %v3674, 0.0
        %v4241 = vsel %vm2897, %v3674, 0.0
        %v4242 = vsel %vm2898, %v3674, 0.0
        %v4243 = vsel %vm2899, %v3674, 0.0
        %v4244 = vsel %vm2900, %v3674, 0.0
        %v4245 = vsel %vm2901, %v3674, 0.0
        %v4246 = vsel %vm2902, %v3679, 0.0
        %v4247 = vsel %vm2903, %v3679, 0.0
        %v4248 = vsel %vm2904, %v3679, 0.0
        %v4249 = vsel %vm2905, %v3679, 0.0
        %v4250 = vsel %vm2906, %v3679, 0.0
        %v4251 = vsel %vm2907, %v3679, 0.0
        %v4252 = vsel %vm2908, %v3679, 0.0
        %v4253 = vsel %vm2909, %v3679, 0.0
        %v4254 = vsel %vm2910, %v3684, 0.0
        %v4255 = vsel %vm2911, %v3684, 0.0
        %v4256 = vsel %vm2912, %v3684, 0.0
        %v4257 = vsel %vm2913, %v3684, 0.0
        %v4258 = vsel %vm2914, %v3684, 0.0
        %v4259 = vsel %vm2915, %v3684, 0.0
        %v4260 = vsel %vm2916, %v3684, 0.0
        %v4261 = vsel %vm2917, %v3684, 0.0
        %v4262 = vsel %vm2918, %v3689, 0.0
        %v4263 = vsel %vm2919, %v3689, 0.0
        %v4264 = vsel %vm2920, %v3689, 0.0
        %v4265 = vsel %vm2921, %v3689, 0.0
        %v4266 = vsel %vm2922, %v3689, 0.0
        %v4267 = vsel %vm2923, %v3689, 0.0
        %v4268 = vsel %vm2924, %v3689, 0.0
        %v4269 = vsel %vm2925, %v3689, 0.0
        %v4270 = vsel %vm2926, %v3694, 0.0
        %v4271 = vsel %vm2927, %v3694, 0.0
        %v4272 = vsel %vm2928, %v3694, 0.0
        %v4273 = vsel %vm2929, %v3694, 0.0
        %v4274 = vsel %vm2930, %v3694, 0.0
        %v4275 = vsel %vm2931, %v3694, 0.0
        %v4276 = vsel %vm2932, %v3694, 0.0
        %v4277 = vsel %vm2933, %v3694, 0.0
        %v4278 = vsel %vm2934, %v3699, 0.0
        %v4279 = vsel %vm2935, %v3699, 0.0
        %v4280 = vsel %vm2936, %v3699, 0.0
        %v4281 = vsel %vm2937, %v3699, 0.0
        %v4282 = vsel %vm2938, %v3699, 0.0
        %v4283 = vsel %vm2939, %v3699, 0.0
        %v4284 = vsel %vm2940, %v3699, 0.0
        %v4285 = vsel %vm2941, %v3699, 0.0
        %v4286 = vsel %vm2942, %v3704, 0.0
        %v4287 = vsel %vm2943, %v3704, 0.0
        %v4288 = vsel %vm2944, %v3704, 0.0
        %v4289 = vsel %vm2945, %v3704, 0.0
        %v4290 = vsel %vm2946, %v3704, 0.0
        %v4291 = vsel %vm2947, %v3704, 0.0
        %v4292 = vsel %vm2948, %v3704, 0.0
        %v4293 = vsel %vm2949, %v3704, 0.0
        %v4294 = vsel %vm2950, %v3709, 0.0
        %v4295 = vsel %vm2951, %v3709, 0.0
        %v4296 = vsel %vm2952, %v3709, 0.0
        %v4297 = vsel %vm2953, %v3709, 0.0
        %v4298 = vsel %vm2954, %v3709, 0.0
        %v4299 = vsel %vm2955, %v3709, 0.0
        %v4300 = vsel %vm2956, %v3709, 0.0
        %v4301 = vsel %vm2957, %v3709, 0.0
        %v4302 = vsel %vm2958, %v3714, 0.0
        %v4303 = vsel %vm2959, %v3714, 0.0
        %v4304 = vsel %vm2960, %v3714, 0.0
        %v4305 = vsel %vm2961, %v3714, 0.0
        %v4306 = vsel %vm2962, %v3714, 0.0
        %v4307 = vsel %vm2963, %v3714, 0.0
        %v4308 = vsel %vm2964, %v3714, 0.0
        %v4309 = vsel %vm2965, %v3714, 0.0
        %v4310 = vsel %vm2966, %v3719, 0.0
        %v4311 = vsel %vm2967, %v3719, 0.0
        %v4312 = vsel %vm2968, %v3719, 0.0
        %v4313 = vsel %vm2969, %v3719, 0.0
        %v4314 = vsel %vm2970, %v3719, 0.0
        %v4315 = vsel %vm2971, %v3719, 0.0
        %v4316 = vsel %vm2972, %v3719, 0.0
        %v4317 = vsel %vm2973, %v3719, 0.0
        %v4318 = vsel %vm2974, %v3724, 0.0
        %v4319 = vsel %vm2975, %v3724, 0.0
        %v4320 = vsel %vm2976, %v3724, 0.0
        %v4321 = vsel %vm2977, %v3724, 0.0
        %v4322 = vsel %vm2978, %v3724, 0.0
        %v4323 = vsel %vm2979, %v3724, 0.0
        %v4324 = vsel %vm2980, %v3724, 0.0
        %v4325 = vsel %vm2981, %v3724, 0.0
        %v4326 = vsel %vm2982, %v3729, 0.0
        %v4327 = vsel %vm2983, %v3729, 0.0
        %v4328 = vsel %vm2984, %v3729, 0.0
        %v4329 = vsel %vm2985, %v3729, 0.0
        %v4330 = vsel %vm2986, %v3729, 0.0
        %v4331 = vsel %vm2987, %v3729, 0.0
        %v4332 = vsel %vm2988, %v3729, 0.0
        %v4333 = vsel %vm2989, %v3729, 0.0
        %v4334 = vsel %vm2990, %v3734, 0.0
        %v4335 = vsel %vm2991, %v3734, 0.0
        %v4336 = vsel %vm2992, %v3734, 0.0
        %v4337 = vsel %vm2993, %v3734, 0.0
        %v4338 = vsel %vm2994, %v3734, 0.0
        %v4339 = vsel %vm2995, %v3734, 0.0
        %v4340 = vsel %vm2996, %v3734, 0.0
        %v4341 = vsel %vm2997, %v3734, 0.0
        %v4342 = vsel %vm2998, %v3739, 0.0
        %v4343 = vsel %vm2999, %v3739, 0.0
        %v4344 = vsel %vm3000, %v3739, 0.0
        %v4345 = vsel %vm3001, %v3739, 0.0
        %v4346 = vsel %vm3002, %v3739, 0.0
        %v4347 = vsel %vm3003, %v3739, 0.0
        %v4348 = vsel %vm3004, %v3739, 0.0
        %v4349 = vsel %vm3005, %v3739, 0.0
        %v4350 = vsel %vm3006, %v3744, 0.0
        %v4351 = vsel %vm3007, %v3744, 0.0
        %v4352 = vsel %vm3008, %v3744, 0.0
        %v4353 = vsel %vm3009, %v3744, 0.0
        %v4354 = vsel %vm3010, %v3744, 0.0
        %v4355 = vsel %vm3011, %v3744, 0.0
        %v4356 = vsel %vm3012, %v3744, 0.0
        %v4357 = vsel %vm3013, %v3744, 0.0
        %v4358 = vsel %vm3014, %v3749, 0.0
        %v4359 = vsel %vm3015, %v3749, 0.0
        %v4360 = vsel %vm3016, %v3749, 0.0
        %v4361 = vsel %vm3017, %v3749, 0.0
        %v4362 = vsel %vm3018, %v3749, 0.0
        %v4363 = vsel %vm3019, %v3749, 0.0
        %v4364 = vsel %vm3020, %v3749, 0.0
        %v4365 = vsel %vm3021, %v3749, 0.0
        %v4366 = vsel %vm3022, %v3754, 0.0
        %v4367 = vsel %vm3023, %v3754, 0.0
        %v4368 = vsel %vm3024, %v3754, 0.0
        %v4369 = vsel %vm3025, %v3754, 0.0
        %v4370 = vsel %vm3026, %v3754, 0.0
        %v4371 = vsel %vm3027, %v3754, 0.0
        %v4372 = vsel %vm3028, %v3754, 0.0
        %v4373 = vsel %vm3029, %v3754, 0.0
        %v4374 = vsel %vm3030, %v3759, 0.0
        %v4375 = vsel %vm3031, %v3759, 0.0
        %v4376 = vsel %vm3032, %v3759, 0.0
        %v4377 = vsel %vm3033, %v3759, 0.0
        %v4378 = vsel %vm3034, %v3759, 0.0
        %v4379 = vsel %vm3035, %v3759, 0.0
        %v4380 = vsel %vm3036, %v3759, 0.0
        %v4381 = vsel %vm3037, %v3759, 0.0
        %v4382 = vsel %vm3038, %v3764, 0.0
        %v4383 = vsel %vm3039, %v3764, 0.0
        %v4384 = vsel %vm3040, %v3764, 0.0
        %v4385 = vsel %vm3041, %v3764, 0.0
        %v4386 = vsel %vm3042, %v3764, 0.0
        %v4387 = vsel %vm3043, %v3764, 0.0
        %v4388 = vsel %vm3044, %v3764, 0.0
        %v4389 = vsel %vm3045, %v3764, 0.0
        %v4390 = vsel %vm3046, %v3769, 0.0
        %v4391 = vsel %vm3047, %v3769, 0.0
        %v4392 = vsel %vm3048, %v3769, 0.0
        %v4393 = vsel %vm3049, %v3769, 0.0
        %v4394 = vsel %vm3050, %v3769, 0.0
        %v4395 = vsel %vm3051, %v3769, 0.0
        %v4396 = vsel %vm3052, %v3769, 0.0
        %v4397 = vsel %vm3053, %v3769, 0.0
        %v4398 = vsel %vm3054, %v3774, 0.0
        %v4399 = vsel %vm3055, %v3774, 0.0
        %v4400 = vsel %vm3056, %v3774, 0.0
        %v4401 = vsel %vm3057, %v3774, 0.0
        %v4402 = vsel %vm3058, %v3774, 0.0
        %v4403 = vsel %vm3059, %v3774, 0.0
        %v4404 = vsel %vm3060, %v3774, 0.0
        %v4405 = vsel %vm3061, %v3774, 0.0
        %v4406 = vsel %vm3062, %v3779, 0.0
        %v4407 = vsel %vm3063, %v3779, 0.0
        %v4408 = vsel %vm3064, %v3779, 0.0
        %v4409 = vsel %vm3065, %v3779, 0.0
        %v4410 = vsel %vm3066, %v3779, 0.0
        %v4411 = vsel %vm3067, %v3779, 0.0
        %v4412 = vsel %vm3068, %v3779, 0.0
        %v4413 = vsel %vm3069, %v3779, 0.0
        %v4414 = vsel %vm3070, %v3784, 0.0
        %v4415 = vsel %vm3071, %v3784, 0.0
        %v4416 = vsel %vm3072, %v3784, 0.0
        %v4417 = vsel %vm3073, %v3784, 0.0
        %v4418 = vsel %vm3074, %v3784, 0.0
        %v4419 = vsel %vm3075, %v3784, 0.0
        %v4420 = vsel %vm3076, %v3784, 0.0
        %v4421 = vsel %vm3077, %v3784, 0.0
        %v4422 = vsel %vm3078, %v3789, 0.0
        %v4423 = vsel %vm3079, %v3789, 0.0
        %v4424 = vsel %vm3080, %v3789, 0.0
        %v4425 = vsel %vm3081, %v3789, 0.0
        %v4426 = vsel %vm3082, %v3789, 0.0
        %v4427 = vsel %vm3083, %v3789, 0.0
        %v4428 = vsel %vm3084, %v3789, 0.0
        %v4429 = vsel %vm3085, %v3789, 0.0
        %v4430 = vsel %vm3086, %v3794, 0.0
        %v4431 = vsel %vm3087, %v3794, 0.0
        %v4432 = vsel %vm3088, %v3794, 0.0
        %v4433 = vsel %vm3089, %v3794, 0.0
        %v4434 = vsel %vm3090, %v3794, 0.0
        %v4435 = vsel %vm3091, %v3794, 0.0
        %v4436 = vsel %vm3092, %v3794, 0.0
        %v4437 = vsel %vm3093, %v3794, 0.0
        %v4438 = vsel %vm3094, %v3799, 0.0
        %v4439 = vsel %vm3095, %v3799, 0.0
        %v4440 = vsel %vm3096, %v3799, 0.0
        %v4441 = vsel %vm3097, %v3799, 0.0
        %v4442 = vsel %vm3098, %v3799, 0.0
        %v4443 = vsel %vm3099, %v3799, 0.0
        %v4444 = vsel %vm3100, %v3799, 0.0
        %v4445 = vsel %vm3101, %v3799, 0.0
        %v4446 = vsel %vm3102, %v3804, 0.0
        %v4447 = vsel %vm3103, %v3804, 0.0
        %v4448 = vsel %vm3104, %v3804, 0.0
        %v4449 = vsel %vm3105, %v3804, 0.0
        %v4450 = vsel %vm3106, %v3804, 0.0
        %v4451 = vsel %vm3107, %v3804, 0.0
        %v4452 = vsel %vm3108, %v3804, 0.0
        %v4453 = vsel %vm3109, %v3804, 0.0
        %v4454 = vsel %vm3110, %v3809, 0.0
        %v4455 = vsel %vm3111, %v3809, 0.0
        %v4456 = vsel %vm3112, %v3809, 0.0
        %v4457 = vsel %vm3113, %v3809, 0.0
        %v4458 = vsel %vm3114, %v3809, 0.0
        %v4459 = vsel %vm3115, %v3809, 0.0
        %v4460 = vsel %vm3116, %v3809, 0.0
        %v4461 = vsel %vm3117, %v3809, 0.0
        %v4462 = vsel %vm3118, %v3814, 0.0
        %v4463 = vsel %vm3119, %v3814, 0.0
        %v4464 = vsel %vm3120, %v3814, 0.0
        %v4465 = vsel %vm3121, %v3814, 0.0
        %v4466 = vsel %vm3122, %v3814, 0.0
        %v4467 = vsel %vm3123, %v3814, 0.0
        %v4468 = vsel %vm3124, %v3814, 0.0
        %v4469 = vsel %vm3125, %v3814, 0.0
        %v4470 = vsel %vm3126, %v3819, 0.0
        %v4471 = vsel %vm3127, %v3819, 0.0
        %v4472 = vsel %vm3128, %v3819, 0.0
        %v4473 = vsel %vm3129, %v3819, 0.0
        %v4474 = vsel %vm3130, %v3819, 0.0
        %v4475 = vsel %vm3131, %v3819, 0.0
        %v4476 = vsel %vm3132, %v3819, 0.0
        %v4477 = vsel %vm3133, %v3819, 0.0
        %v4478 = vsel %vm3134, %v3824, 0.0
        %v4479 = vsel %vm3135, %v3824, 0.0
        %v4480 = vsel %vm3136, %v3824, 0.0
        %v4481 = vsel %vm3137, %v3824, 0.0
        %v4482 = vsel %vm3138, %v3824, 0.0
        %v4483 = vsel %vm3139, %v3824, 0.0
        %v4484 = vsel %vm3140, %v3824, 0.0
        %v4485 = vsel %vm3141, %v3824, 0.0
        %v4486 = vsel %vm3142, %v3829, 0.0
        %v4487 = vsel %vm3143, %v3829, 0.0
        %v4488 = vsel %vm3144, %v3829, 0.0
        %v4489 = vsel %vm3145, %v3829, 0.0
        %v4490 = vsel %vm3146, %v3829, 0.0
        %v4491 = vsel %vm3147, %v3829, 0.0
        %v4492 = vsel %vm3148, %v3829, 0.0
        %v4493 = vsel %vm3149, %v3829, 0.0
        %v4494 = vsel %vm3150, %v3834, 0.0
        %v4495 = vsel %vm3151, %v3834, 0.0
        %v4496 = vsel %vm3152, %v3834, 0.0
        %v4497 = vsel %vm3153, %v3834, 0.0
        %v4498 = vsel %vm3154, %v3834, 0.0
        %v4499 = vsel %vm3155, %v3834, 0.0
        %v4500 = vsel %vm3156, %v3834, 0.0
        %v4501 = vsel %vm3157, %v3834, 0.0
        %v4502 = vsel %vm3158, %v3839, 0.0
        %v4503 = vsel %vm3159, %v3839, 0.0
        %v4504 = vsel %vm3160, %v3839, 0.0
        %v4505 = vsel %vm3161, %v3839, 0.0
        %v4506 = vsel %vm3162, %v3839, 0.0
        %v4507 = vsel %vm3163, %v3839, 0.0
        %v4508 = vsel %vm3164, %v3839, 0.0
        %v4509 = vsel %vm3165, %v3839, 0.0
        %v4510 = vsel %vm3166, %v3844, 0.0
        %v4511 = vsel %vm3167, %v3844, 0.0
        %v4512 = vsel %vm3168, %v3844, 0.0
        %v4513 = vsel %vm3169, %v3844, 0.0
        %v4514 = vsel %vm3170, %v3844, 0.0
        %v4515 = vsel %vm3171, %v3844, 0.0
        %v4516 = vsel %vm3172, %v3844, 0.0
        %v4517 = vsel %vm3173, %v3844, 0.0
        %v4518 = vsel %vm3174, %v3849, 0.0
        %v4519 = vsel %vm3175, %v3849, 0.0
        %v4520 = vsel %vm3176, %v3849, 0.0
        %v4521 = vsel %vm3177, %v3849, 0.0
        %v4522 = vsel %vm3178, %v3849, 0.0
        %v4523 = vsel %vm3179, %v3849, 0.0
        %v4524 = vsel %vm3180, %v3849, 0.0
        %v4525 = vsel %vm3181, %v3849, 0.0
        %v4526 = vsel %vm3182, %v3854, 0.0
        %v4527 = vsel %vm3183, %v3854, 0.0
        %v4528 = vsel %vm3184, %v3854, 0.0
        %v4529 = vsel %vm3185, %v3854, 0.0
        %v4530 = vsel %vm3186, %v3854, 0.0
        %v4531 = vsel %vm3187, %v3854, 0.0
        %v4532 = vsel %vm3188, %v3854, 0.0
        %v4533 = vsel %vm3189, %v3854, 0.0
        %v4534 = vsel %vm3190, %v3859, 0.0
        %v4535 = vsel %vm3191, %v3859, 0.0
        %v4536 = vsel %vm3192, %v3859, 0.0
        %v4537 = vsel %vm3193, %v3859, 0.0
        %v4538 = vsel %vm3194, %v3859, 0.0
        %v4539 = vsel %vm3195, %v3859, 0.0
        %v4540 = vsel %vm3196, %v3859, 0.0
        %v4541 = vsel %vm3197, %v3859, 0.0
        %v4542 = vsel %vm3198, %v3864, 0.0
        %v4543 = vsel %vm3199, %v3864, 0.0
        %v4544 = vsel %vm3200, %v3864, 0.0
        %v4545 = vsel %vm3201, %v3864, 0.0
        %v4546 = vsel %vm3202, %v3864, 0.0
        %v4547 = vsel %vm3203, %v3864, 0.0
        %v4548 = vsel %vm3204, %v3864, 0.0
        %v4549 = vsel %vm3205, %v3864, 0.0
        %v4550 = vsel %vm3206, %v3869, 0.0
        %v4551 = vsel %vm3207, %v3869, 0.0
        %v4552 = vsel %vm3208, %v3869, 0.0
        %v4553 = vsel %vm3209, %v3869, 0.0
        %v4554 = vsel %vm3210, %v3869, 0.0
        %v4555 = vsel %vm3211, %v3869, 0.0
        %v4556 = vsel %vm3212, %v3869, 0.0
        %v4557 = vsel %vm3213, %v3869, 0.0
        %v4558 = vsel %vm3214, %v3874, 0.0
        %v4559 = vsel %vm3215, %v3874, 0.0
        %v4560 = vsel %vm3216, %v3874, 0.0
        %v4561 = vsel %vm3217, %v3874, 0.0
        %v4562 = vsel %vm3218, %v3874, 0.0
        %v4563 = vsel %vm3219, %v3874, 0.0
        %v4564 = vsel %vm3220, %v3874, 0.0
        %v4565 = vsel %vm3221, %v3874, 0.0
        %v4566 = vsel %vm3222, %v3879, 0.0
        %v4567 = vsel %vm3223, %v3879, 0.0
        %v4568 = vsel %vm3224, %v3879, 0.0
        %v4569 = vsel %vm3225, %v3879, 0.0
        %v4570 = vsel %vm3226, %v3879, 0.0
        %v4571 = vsel %vm3227, %v3879, 0.0
        %v4572 = vsel %vm3228, %v3879, 0.0
        %v4573 = vsel %vm3229, %v3879, 0.0
        %v4574 = vsel %vm3230, %v3884, 0.0
        %v4575 = vsel %vm3231, %v3884, 0.0
        %v4576 = vsel %vm3232, %v3884, 0.0
        %v4577 = vsel %vm3233, %v3884, 0.0
        %v4578 = vsel %vm3234, %v3884, 0.0
        %v4579 = vsel %vm3235, %v3884, 0.0
        %v4580 = vsel %vm3236, %v3884, 0.0
        %v4581 = vsel %vm3237, %v3884, 0.0
        %v4582 = vsel %vm3238, %v3889, 0.0
        %v4583 = vsel %vm3239, %v3889, 0.0
        %v4584 = vsel %vm3240, %v3889, 0.0
        %v4585 = vsel %vm3241, %v3889, 0.0
        %v4586 = vsel %vm3242, %v3889, 0.0
        %v4587 = vsel %vm3243, %v3889, 0.0
        %v4588 = vsel %vm3244, %v3889, 0.0
        %v4589 = vsel %vm3245, %v3889, 0.0
        %v4590 = vsel %vm3246, %v3894, 0.0
        %v4591 = vsel %vm3247, %v3894, 0.0
        %v4592 = vsel %vm3248, %v3894, 0.0
        %v4593 = vsel %vm3249, %v3894, 0.0
        %v4594 = vsel %vm3250, %v3894, 0.0
        %v4595 = vsel %vm3251, %v3894, 0.0
        %v4596 = vsel %vm3252, %v3894, 0.0
        %v4597 = vsel %vm3253, %v3894, 0.0
        %v4598 = vsel %vm3254, %v3899, 0.0
        %v4599 = vsel %vm3255, %v3899, 0.0
        %v4600 = vsel %vm3256, %v3899, 0.0
        %v4601 = vsel %vm3257, %v3899, 0.0
        %v4602 = vsel %vm3258, %v3899, 0.0
        %v4603 = vsel %vm3259, %v3899, 0.0
        %v4604 = vsel %vm3260, %v3899, 0.0
        %v4605 = vsel %vm3261, %v3899, 0.0
        %v4606 = vsel %vm3262, %v3904, 0.0
        %v4607 = vsel %vm3263, %v3904, 0.0
        %v4608 = vsel %vm3264, %v3904, 0.0
        %v4609 = vsel %vm3265, %v3904, 0.0
        %v4610 = vsel %vm3266, %v3904, 0.0
        %v4611 = vsel %vm3267, %v3904, 0.0
        %v4612 = vsel %vm3268, %v3904, 0.0
        %v4613 = vsel %vm3269, %v3904, 0.0
        %v4614 = vsel %vm3270, %v3909, 0.0
        %v4615 = vsel %vm3271, %v3909, 0.0
        %v4616 = vsel %vm3272, %v3909, 0.0
        %v4617 = vsel %vm3273, %v3909, 0.0
        %v4618 = vsel %vm3274, %v3909, 0.0
        %v4619 = vsel %vm3275, %v3909, 0.0
        %v4620 = vsel %vm3276, %v3909, 0.0
        %v4621 = vsel %vm3277, %v3909, 0.0
        %v4622 = vsel %vm3278, %v3914, 0.0
        %v4623 = vsel %vm3279, %v3914, 0.0
        %v4624 = vsel %vm3280, %v3914, 0.0
        %v4625 = vsel %vm3281, %v3914, 0.0
        %v4626 = vsel %vm3282, %v3914, 0.0
        %v4627 = vsel %vm3283, %v3914, 0.0
        %v4628 = vsel %vm3284, %v3914, 0.0
        %v4629 = vsel %vm3285, %v3914, 0.0
        %v4630 = vsel %vm3286, %v3919, 0.0
        %v4631 = vsel %vm3287, %v3919, 0.0
        %v4632 = vsel %vm3288, %v3919, 0.0
        %v4633 = vsel %vm3289, %v3919, 0.0
        %v4634 = vsel %vm3290, %v3919, 0.0
        %v4635 = vsel %vm3291, %v3919, 0.0
        %v4636 = vsel %vm3292, %v3919, 0.0
        %v4637 = vsel %vm3293, %v3919, 0.0
        %v4638 = vsel %vm3294, %v3924, 0.0
        %v4639 = vsel %vm3295, %v3924, 0.0
        %v4640 = vsel %vm3296, %v3924, 0.0
        %v4641 = vsel %vm3297, %v3924, 0.0
        %v4642 = vsel %vm3298, %v3924, 0.0
        %v4643 = vsel %vm3299, %v3924, 0.0
        %v4644 = vsel %vm3300, %v3924, 0.0
        %v4645 = vsel %vm3301, %v3924, 0.0
        %v4646 = vsel %vm3302, %v3929, 0.0
        %v4647 = vsel %vm3303, %v3929, 0.0
        %v4648 = vsel %vm3304, %v3929, 0.0
        %v4649 = vsel %vm3305, %v3929, 0.0
        %v4650 = vsel %vm3306, %v3929, 0.0
        %v4651 = vsel %vm3307, %v3929, 0.0
        %v4652 = vsel %vm3308, %v3929, 0.0
        %v4653 = vsel %vm3309, %v3929, 0.0
        %v4654 = vsel %vm3310, %v3934, 0.0
        %v4655 = vsel %vm3311, %v3934, 0.0
        %v4656 = vsel %vm3312, %v3934, 0.0
        %v4657 = vsel %vm3313, %v3934, 0.0
        %v4658 = vsel %vm3314, %v3934, 0.0
        %v4659 = vsel %vm3315, %v3934, 0.0
        %v4660 = vsel %vm3316, %v3934, 0.0
        %v4661 = vsel %vm3317, %v3934, 0.0
        %v4662 = vsel %vm3318, %v3939, 0.0
        %v4663 = vsel %vm3319, %v3939, 0.0
        %v4664 = vsel %vm3320, %v3939, 0.0
        %v4665 = vsel %vm3321, %v3939, 0.0
        %v4666 = vsel %vm3322, %v3939, 0.0
        %v4667 = vsel %vm3323, %v3939, 0.0
        %v4668 = vsel %vm3324, %v3939, 0.0
        %v4669 = vsel %vm3325, %v3939, 0.0
        %v4670 = vsel %vm3326, %v3944, 0.0
        %v4671 = vsel %vm3327, %v3944, 0.0
        %v4672 = vsel %vm3328, %v3944, 0.0
        %v4673 = vsel %vm3329, %v3944, 0.0
        %v4674 = vsel %vm3330, %v3944, 0.0
        %v4675 = vsel %vm3331, %v3944, 0.0
        %v4676 = vsel %vm3332, %v3944, 0.0
        %v4677 = vsel %vm3333, %v3944, 0.0
        %v4678 = vsel %vm3334, %v3949, 0.0
        %v4679 = vsel %vm3335, %v3949, 0.0
        %v4680 = vsel %vm3336, %v3949, 0.0
        %v4681 = vsel %vm3337, %v3949, 0.0
        %v4682 = vsel %vm3338, %v3949, 0.0
        %v4683 = vsel %vm3339, %v3949, 0.0
        %v4684 = vsel %vm3340, %v3949, 0.0
        %v4685 = vsel %vm3341, %v3949, 0.0
        %v4686 = vsel %vm3342, %v3954, 0.0
        %v4687 = vsel %vm3343, %v3954, 0.0
        %v4688 = vsel %vm3344, %v3954, 0.0
        %v4689 = vsel %vm3345, %v3954, 0.0
        %v4690 = vsel %vm3346, %v3954, 0.0
        %v4691 = vsel %vm3347, %v3954, 0.0
        %v4692 = vsel %vm3348, %v3954, 0.0
        %v4693 = vsel %vm3349, %v3954, 0.0
        %v4694 = vsel %vm3350, %v3959, 0.0
        %v4695 = vsel %vm3351, %v3959, 0.0
        %v4696 = vsel %vm3352, %v3959, 0.0
        %v4697 = vsel %vm3353, %v3959, 0.0
        %v4698 = vsel %vm3354, %v3959, 0.0
        %v4699 = vsel %vm3355, %v3959, 0.0
        %v4700 = vsel %vm3356, %v3959, 0.0
        %v4701 = vsel %vm3357, %v3959, 0.0
        %v4702 = vsel %vm3358, %v3964, 0.0
        %v4703 = vsel %vm3359, %v3964, 0.0
        %v4704 = vsel %vm3360, %v3964, 0.0
        %v4705 = vsel %vm3361, %v3964, 0.0
        %v4706 = vsel %vm3362, %v3964, 0.0
        %v4707 = vsel %vm3363, %v3964, 0.0
        %v4708 = vsel %vm3364, %v3964, 0.0
        %v4709 = vsel %vm3365, %v3964, 0.0
        %v4710 = vsel %vm3366, %v3969, 0.0
        %v4711 = vsel %vm3367, %v3969, 0.0
        %v4712 = vsel %vm3368, %v3969, 0.0
        %v4713 = vsel %vm3369, %v3969, 0.0
        %v4714 = vsel %vm3370, %v3969, 0.0
        %v4715 = vsel %vm3371, %v3969, 0.0
        %v4716 = vsel %vm3372, %v3969, 0.0
        %v4717 = vsel %vm3373, %v3969, 0.0
        %v4718 = vsel %vm3374, %v3974, 0.0
        %v4719 = vsel %vm3375, %v3974, 0.0
        %v4720 = vsel %vm3376, %v3974, 0.0
        %v4721 = vsel %vm3377, %v3974, 0.0
        %v4722 = vsel %vm3378, %v3974, 0.0
        %v4723 = vsel %vm3379, %v3974, 0.0
        %v4724 = vsel %vm3380, %v3974, 0.0
        %v4725 = vsel %vm3381, %v3974, 0.0
        %v4726 = vsel %vm3382, %v3979, 0.0
        %v4727 = vsel %vm3383, %v3979, 0.0
        %v4728 = vsel %vm3384, %v3979, 0.0
        %v4729 = vsel %vm3385, %v3979, 0.0
        %v4730 = vsel %vm3386, %v3979, 0.0
        %v4731 = vsel %vm3387, %v3979, 0.0
        %v4732 = vsel %vm3388, %v3979, 0.0
        %v4733 = vsel %vm3389, %v3979, 0.0
        %v4734 = vsel %vm3390, %v3984, 0.0
        %v4735 = vsel %vm3391, %v3984, 0.0
        %v4736 = vsel %vm3392, %v3984, 0.0
        %v4737 = vsel %vm3393, %v3984, 0.0
        %v4738 = vsel %vm3394, %v3984, 0.0
        %v4739 = vsel %vm3395, %v3984, 0.0
        %v4740 = vsel %vm3396, %v3984, 0.0
        %v4741 = vsel %vm3397, %v3984, 0.0
        %v4742 = vsel %vm3398, %v3989, 0.0
        %v4743 = vsel %vm3399, %v3989, 0.0
        %v4744 = vsel %vm3400, %v3989, 0.0
        %v4745 = vsel %vm3401, %v3989, 0.0
        %v4746 = vsel %vm3402, %v3989, 0.0
        %v4747 = vsel %vm3403, %v3989, 0.0
        %v4748 = vsel %vm3404, %v3989, 0.0
        %v4749 = vsel %vm3405, %v3989, 0.0
        %v4750 = vsel %vm3406, %v3994, 0.0
        %v4751 = vsel %vm3407, %v3994, 0.0
        %v4752 = vsel %vm3408, %v3994, 0.0
        %v4753 = vsel %vm3409, %v3994, 0.0
        %v4754 = vsel %vm3410, %v3994, 0.0
        %v4755 = vsel %vm3411, %v3994, 0.0
        %v4756 = vsel %vm3412, %v3994, 0.0
        %v4757 = vsel %vm3413, %v3994, 0.0
        %v4758 = vsel %vm3414, %v3999, 0.0
        %v4759 = vsel %vm3415, %v3999, 0.0
        %v4760 = vsel %vm3416, %v3999, 0.0
        %v4761 = vsel %vm3417, %v3999, 0.0
        %v4762 = vsel %vm3418, %v3999, 0.0
        %v4763 = vsel %vm3419, %v3999, 0.0
        %v4764 = vsel %vm3420, %v3999, 0.0
        %v4765 = vsel %vm3421, %v3999, 0.0
        %v4766 = vsel %vm3422, %v4004, 0.0
        %v4767 = vsel %vm3423, %v4004, 0.0
        %v4768 = vsel %vm3424, %v4004, 0.0
        %v4769 = vsel %vm3425, %v4004, 0.0
        %v4770 = vsel %vm3426, %v4004, 0.0
        %v4771 = vsel %vm3427, %v4004, 0.0
        %v4772 = vsel %vm3428, %v4004, 0.0
        %v4773 = vsel %vm3429, %v4004, 0.0
        %v4775 = vsel %vm608, %v4013, 0
        %v4778 = vsel %vm608, %v4021, 0
        %v4781 = vsel %vm608, %v4029, 0
        %v4784 = vsel %vm608, %v4037, 0
        %v4787 = vsel %vm608, %v4045, 0
        %v4790 = vsel %vm608, %v4053, 0
        %v4793 = vsel %vm608, %v4061, 0
        %v4796 = vsel %vm608, %v4069, 0
        %v4799 = vsel %vm608, %v4077, 0
        %v4802 = vsel %vm608, %v4085, 0
        %v4805 = vsel %vm608, %v4093, 0
        %v4808 = vsel %vm608, %v4101, 0
        %v4811 = vsel %vm608, %v4109, 0
        %v4814 = vsel %vm608, %v4117, 0
        %v4817 = vsel %vm608, %v4125, 0
        %v4820 = vsel %vm608, %v4133, 0
        %v4823 = vsel %vm608, %v4141, 0
        %v4826 = vsel %vm608, %v4149, 0
        %v4829 = vsel %vm608, %v4157, 0
        %v4832 = vsel %vm608, %v4165, 0
        %v4835 = vsel %vm608, %v4173, 0
        %v4838 = vsel %vm608, %v4181, 0
        %v4841 = vsel %vm608, %v4189, 0
        %v4844 = vsel %vm608, %v4197, 0
        %v4847 = vsel %vm608, %v4205, 0
        %v4850 = vsel %vm608, %v4213, 0
        %v4853 = vsel %vm608, %v4221, 0
        %v4856 = vsel %vm608, %v4229, 0
        %v4859 = vsel %vm608, %v4237, 0
        %v4862 = vsel %vm608, %v4245, 0
        %v4865 = vsel %vm608, %v4253, 0
        %v4868 = vsel %vm608, %v4261, 0
        %v4871 = vsel %vm608, %v4269, 0
        %v4874 = vsel %vm608, %v4277, 0
        %v4877 = vsel %vm608, %v4285, 0
        %v4880 = vsel %vm608, %v4293, 0
        %v4883 = vsel %vm608, %v4301, 0
        %v4886 = vsel %vm608, %v4309, 0
        %v4889 = vsel %vm608, %v4317, 0
        %v4892 = vsel %vm608, %v4325, 0
        %v4895 = vsel %vm608, %v4333, 0
        %v4898 = vsel %vm608, %v4341, 0
        %v4901 = vsel %vm608, %v4349, 0
        %v4904 = vsel %vm608, %v4357, 0
        %v4907 = vsel %vm608, %v4365, 0
        %v4910 = vsel %vm608, %v4373, 0
        %v4913 = vsel %vm608, %v4381, 0
        %v4916 = vsel %vm608, %v4389, 0
        %v4919 = vsel %vm608, %v4397, 0
        %v4922 = vsel %vm608, %v4405, 0
        %v4925 = vsel %vm608, %v4413, 0
        %v4928 = vsel %vm608, %v4421, 0
        %v4931 = vsel %vm608, %v4429, 0
        %v4934 = vsel %vm608, %v4437, 0
        %v4937 = vsel %vm608, %v4445, 0
        %v4940 = vsel %vm608, %v4453, 0
        %v4943 = vsel %vm608, %v4461, 0
        %v4946 = vsel %vm608, %v4469, 0
        %v4949 = vsel %vm608, %v4477, 0
        %v4952 = vsel %vm608, %v4485, 0
        %v4955 = vsel %vm608, %v4493, 0
        %v4958 = vsel %vm608, %v4501, 0
        %v4961 = vsel %vm608, %v4509, 0
        %v4964 = vsel %vm608, %v4517, 0
        %v4967 = vsel %vm608, %v4525, 0
        %v4970 = vsel %vm608, %v4533, 0
        %v4973 = vsel %vm608, %v4541, 0
        %v4976 = vsel %vm608, %v4549, 0
        %v4979 = vsel %vm608, %v4557, 0
        %v4982 = vsel %vm608, %v4565, 0
        %v4985 = vsel %vm608, %v4573, 0
        %v4988 = vsel %vm608, %v4581, 0
        %v4991 = vsel %vm608, %v4589, 0
        %v4994 = vsel %vm608, %v4597, 0
        %v4997 = vsel %vm608, %v4605, 0
        %v5000 = vsel %vm608, %v4613, 0
        %v5003 = vsel %vm608, %v4621, 0
        %v5006 = vsel %vm608, %v4629, 0
        %v5009 = vsel %vm608, %v4637, 0
        %v5012 = vsel %vm608, %v4645, 0
        %v5015 = vsel %vm608, %v4653, 0
        %v5018 = vsel %vm608, %v4661, 0
        %v5021 = vsel %vm608, %v4669, 0
        %v5024 = vsel %vm608, %v4677, 0
        %v5027 = vsel %vm608, %v4685, 0
        %v5030 = vsel %vm608, %v4693, 0
        %v5033 = vsel %vm608, %v4701, 0
        %v5036 = vsel %vm608, %v4709, 0
        %v5039 = vsel %vm608, %v4717, 0
        %v5042 = vsel %vm608, %v4725, 0
        %v5045 = vsel %vm608, %v4733, 0
        %v5048 = vsel %vm608, %v4741, 0
        %v5051 = vsel %vm608, %v4749, 0
        %v5054 = vsel %vm608, %v4757, 0
        %v5057 = vsel %vm608, %v4765, 0
        %v5060 = vsel %vm608, %v4773, 0
        %5062 = vmatprep.subr.mxu0 0.0
        %5063 = vmatpush1.msra.mxu0 %v409
        %5064 = vmatprep.subr.mxu0 0.0
        %5065 = vmatpush1.msra.mxu0 %v408
        %5066 = vmatprep.subr.mxu0 0.0
        %5067 = vmatpush1.msra.mxu0 %v407
        %5068 = vmatprep.subr.mxu0 0.0
        %5069 = vmatpush1.msra.mxu0 %v406
        %5070 = vmatprep.subr.mxu0 0.0
        %5071 = vmatpush1.msra.mxu0 %v405
        %5072 = vmatprep.subr.mxu0 0.0
        %5073 = vmatpush1.msra.mxu0 %v404
        %5074 = vmatprep.subr.mxu0 0.0
        %5075 = vmatpush1.msra.mxu0 %v403
        %5076 = vmatprep.subr.mxu0 0.0
        %5077 = vmatpush1.msra.mxu0 %v402
        %5078 = vmatprep.subr.mxu0 0.0
        %5079 = vmatpush1.msra.mxu0 %v401
        %5080 = vmatprep.subr.mxu0 0.0
        %5081 = vmatpush1.msra.mxu0 %v400
        %5082 = vmatprep.subr.mxu0 0.0
        %5083 = vmatpush1.msra.mxu0 %v399
        %5084 = vmatprep.subr.mxu0 0.0
        %5085 = vmatpush1.msra.mxu0 %v398
        %5086 = vmatprep.subr.mxu0 0.0
        %5087 = vmatpush1.msra.mxu0 %v397
        %5088 = vmatprep.subr.mxu0 0.0
        %5089 = vmatpush1.msra.mxu0 %v396
        %5090 = vmatprep.subr.mxu0 0.0
        %5091 = vmatpush1.msra.mxu0 %v395
        %5092 = vmatprep.subr.mxu0 0.0
        %5093 = vmatpush1.msra.mxu0 %v394
        %5094 = vmatprep.subr.mxu0 0.0
        %5095 = vmatpush2.msra.mxu0 %v425
        %5096 = vmatprep.subr.mxu0 0.0
        %5097 = vmatpush2.msra.mxu0 %v424
        %5098 = vmatprep.subr.mxu0 0.0
        %5099 = vmatpush2.msra.mxu0 %v423
        %5100 = vmatprep.subr.mxu0 0.0
        %5101 = vmatpush2.msra.mxu0 %v422
        %5102 = vmatprep.subr.mxu0 0.0
        %5103 = vmatpush2.msra.mxu0 %v421
        %5104 = vmatprep.subr.mxu0 0.0
        %5105 = vmatpush2.msra.mxu0 %v420
        %5106 = vmatprep.subr.mxu0 0.0
        %5107 = vmatpush2.msra.mxu0 %v419
        %5108 = vmatprep.subr.mxu0 0.0
        %5109 = vmatpush2.msra.mxu0 %v418
        %5110 = vmatprep.subr.mxu0 0.0
        %5111 = vmatpush2.msra.mxu0 %v417
        %5112 = vmatprep.subr.mxu0 0.0
        %5113 = vmatpush2.msra.mxu0 %v416
        %5114 = vmatprep.subr.mxu0 0.0
        %5115 = vmatpush2.msra.mxu0 %v415
        %5116 = vmatprep.subr.mxu0 0.0
        %5117 = vmatpush2.msra.mxu0 %v414
        %5118 = vmatprep.subr.mxu0 0.0
        %5119 = vmatpush2.msra.mxu0 %v413
        %5120 = vmatprep.subr.mxu0 0.0
        %5121 = vmatpush2.msra.mxu0 %v412
        %5122 = vmatprep.subr.mxu0 0.0
        %5123 = vmatpush2.msra.mxu0 %v411
        %5124 = vmatprep.subr.mxu0 0.0
        %5125 = vmatpush2.msra.mxu0 %v410
        %5126 = vmatprep.mubr.f32.mxu0 %v4007
        %5127 = vmatmul.mubr.f32.gmra.mxu0 %v4006
        %v5128 = vpop.f32.mrf.mxu0
        %v5129 = vadd.f32 0.0, %v5128
        %v5130 = vpop.f32.mrf.mxu0
        %5131 = vmatprep.mubr.f32.mxu0 %v4015
        %5132 = vmatmul.mubr.f32.gmra.mxu0 %v4014
        %v5133 = vpop.f32.mrf.mxu0
        %v5134 = vadd.f32 0.0, %v5133
        %v5135 = vpop.f32.mrf.mxu0
        %5136 = vmatprep.mubr.f32.mxu0 %v4023
        %5137 = vmatmul.mubr.f32.gmra.mxu0 %v4022
        %v5138 = vpop.f32.mrf.mxu0
        %v5139 = vadd.f32 0.0, %v5138
        %v5140 = vpop.f32.mrf.mxu0
        %5141 = vmatprep.mubr.f32.mxu0 %v4031
        %5142 = vmatmul.mubr.f32.gmra.mxu0 %v4030
        %v5143 = vpop.f32.mrf.mxu0
        %v5144 = vadd.f32 0.0, %v5143
        %v5145 = vpop.f32.mrf.mxu0
        %5146 = vmatprep.mubr.f32.mxu0 %v4039
        %5147 = vmatmul.mubr.f32.gmra.mxu0 %v4038
        %v5148 = vpop.f32.mrf.mxu0
        %v5149 = vadd.f32 0.0, %v5148
        %v5150 = vpop.f32.mrf.mxu0
        %5151 = vmatprep.mubr.f32.mxu0 %v4047
        %5152 = vmatmul.mubr.f32.gmra.mxu0 %v4046
        %v5153 = vpop.f32.mrf.mxu0
        %v5154 = vadd.f32 0.0, %v5153
        %v5155 = vpop.f32.mrf.mxu0
        %5156 = vmatprep.mubr.f32.mxu0 %v4055
        %5157 = vmatmul.mubr.f32.gmra.mxu0 %v4054
        %v5158 = vpop.f32.mrf.mxu0
        %v5159 = vadd.f32 0.0, %v5158
        %v5160 = vpop.f32.mrf.mxu0
        %5161 = vmatprep.mubr.f32.mxu0 %v4063
        %5162 = vmatmul.mubr.f32.gmra.mxu0 %v4062
        %v5163 = vpop.f32.mrf.mxu0
        %v5164 = vadd.f32 0.0, %v5163
        %v5165 = vpop.f32.mrf.mxu0
        %5166 = vmatprep.mubr.f32.mxu0 %v4071
        %5167 = vmatmul.mubr.f32.gmra.mxu0 %v4070
        %v5168 = vpop.f32.mrf.mxu0
        %v5169 = vadd.f32 0.0, %v5168
        %v5170 = vpop.f32.mrf.mxu0
        %5171 = vmatprep.mubr.f32.mxu0 %v4079
        %5172 = vmatmul.mubr.f32.gmra.mxu0 %v4078
        %v5173 = vpop.f32.mrf.mxu0
        %v5174 = vadd.f32 0.0, %v5173
        %v5175 = vpop.f32.mrf.mxu0
        %5176 = vmatprep.mubr.f32.mxu0 %v4087
        %5177 = vmatmul.mubr.f32.gmra.mxu0 %v4086
        %v5178 = vpop.f32.mrf.mxu0
        %v5179 = vadd.f32 0.0, %v5178
        %v5180 = vpop.f32.mrf.mxu0
        %5181 = vmatprep.mubr.f32.mxu0 %v4095
        %5182 = vmatmul.mubr.f32.gmra.mxu0 %v4094
        %v5183 = vpop.f32.mrf.mxu0
        %v5184 = vadd.f32 0.0, %v5183
        %v5185 = vpop.f32.mrf.mxu0
        %5186 = vmatprep.mubr.f32.mxu0 %v4103
        %5187 = vmatmul.mubr.f32.gmra.mxu0 %v4102
        %v5188 = vpop.f32.mrf.mxu0
        %v5189 = vadd.f32 0.0, %v5188
        %v5190 = vpop.f32.mrf.mxu0
        %5191 = vmatprep.mubr.f32.mxu0 %v4111
        %5192 = vmatmul.mubr.f32.gmra.mxu0 %v4110
        %v5193 = vpop.f32.mrf.mxu0
        %v5194 = vadd.f32 0.0, %v5193
        %v5195 = vpop.f32.mrf.mxu0
        %5196 = vmatprep.mubr.f32.mxu0 %v4119
        %5197 = vmatmul.mubr.f32.gmra.mxu0 %v4118
        %v5198 = vpop.f32.mrf.mxu0
        %v5199 = vadd.f32 0.0, %v5198
        %v5200 = vpop.f32.mrf.mxu0
        %5201 = vmatprep.mubr.f32.mxu0 %v4127
        %5202 = vmatmul.mubr.f32.gmra.mxu0 %v4126
        %v5203 = vpop.f32.mrf.mxu0
        %v5204 = vadd.f32 0.0, %v5203
        %v5205 = vpop.f32.mrf.mxu0
        %5206 = vmatprep.mubr.f32.mxu0 %v4135
        %5207 = vmatmul.mubr.f32.gmra.mxu0 %v4134
        %v5208 = vpop.f32.mrf.mxu0
        %v5209 = vadd.f32 0.0, %v5208
        %v5210 = vpop.f32.mrf.mxu0
        %5211 = vmatprep.mubr.f32.mxu0 %v4143
        %5212 = vmatmul.mubr.f32.gmra.mxu0 %v4142
        %v5213 = vpop.f32.mrf.mxu0
        %v5214 = vadd.f32 0.0, %v5213
        %v5215 = vpop.f32.mrf.mxu0
        %5216 = vmatprep.mubr.f32.mxu0 %v4151
        %5217 = vmatmul.mubr.f32.gmra.mxu0 %v4150
        %v5218 = vpop.f32.mrf.mxu0
        %v5219 = vadd.f32 0.0, %v5218
        %v5220 = vpop.f32.mrf.mxu0
        %5221 = vmatprep.mubr.f32.mxu0 %v4159
        %5222 = vmatmul.mubr.f32.gmra.mxu0 %v4158
        %v5223 = vpop.f32.mrf.mxu0
        %v5224 = vadd.f32 0.0, %v5223
        %v5225 = vpop.f32.mrf.mxu0
        %5226 = vmatprep.mubr.f32.mxu0 %v4167
        %5227 = vmatmul.mubr.f32.gmra.mxu0 %v4166
        %v5228 = vpop.f32.mrf.mxu0
        %v5229 = vadd.f32 0.0, %v5228
        %v5230 = vpop.f32.mrf.mxu0
        %5231 = vmatprep.mubr.f32.mxu0 %v4175
        %5232 = vmatmul.mubr.f32.gmra.mxu0 %v4174
        %v5233 = vpop.f32.mrf.mxu0
        %v5234 = vadd.f32 0.0, %v5233
        %v5235 = vpop.f32.mrf.mxu0
        %5236 = vmatprep.mubr.f32.mxu0 %v4183
        %5237 = vmatmul.mubr.f32.gmra.mxu0 %v4182
        %v5238 = vpop.f32.mrf.mxu0
        %v5239 = vadd.f32 0.0, %v5238
        %v5240 = vpop.f32.mrf.mxu0
        %5241 = vmatprep.mubr.f32.mxu0 %v4191
        %5242 = vmatmul.mubr.f32.gmra.mxu0 %v4190
        %v5243 = vpop.f32.mrf.mxu0
        %v5244 = vadd.f32 0.0, %v5243
        %v5245 = vpop.f32.mrf.mxu0
        %5246 = vmatprep.mubr.f32.mxu0 %v4199
        %5247 = vmatmul.mubr.f32.gmra.mxu0 %v4198
        %v5248 = vpop.f32.mrf.mxu0
        %v5249 = vadd.f32 0.0, %v5248
        %v5250 = vpop.f32.mrf.mxu0
        %5251 = vmatprep.mubr.f32.mxu0 %v4207
        %5252 = vmatmul.mubr.f32.gmra.mxu0 %v4206
        %v5253 = vpop.f32.mrf.mxu0
        %v5254 = vadd.f32 0.0, %v5253
        %v5255 = vpop.f32.mrf.mxu0
        %5256 = vmatprep.mubr.f32.mxu0 %v4215
        %5257 = vmatmul.mubr.f32.gmra.mxu0 %v4214
        %v5258 = vpop.f32.mrf.mxu0
        %v5259 = vadd.f32 0.0, %v5258
        %v5260 = vpop.f32.mrf.mxu0
        %5261 = vmatprep.mubr.f32.mxu0 %v4223
        %5262 = vmatmul.mubr.f32.gmra.mxu0 %v4222
        %v5263 = vpop.f32.mrf.mxu0
        %v5264 = vadd.f32 0.0, %v5263
        %v5265 = vpop.f32.mrf.mxu0
        %5266 = vmatprep.mubr.f32.mxu0 %v4231
        %5267 = vmatmul.mubr.f32.gmra.mxu0 %v4230
        %v5268 = vpop.f32.mrf.mxu0
        %v5269 = vadd.f32 0.0, %v5268
        %v5270 = vpop.f32.mrf.mxu0
        %5271 = vmatprep.mubr.f32.mxu0 %v4239
        %5272 = vmatmul.mubr.f32.gmra.mxu0 %v4238
        %v5273 = vpop.f32.mrf.mxu0
        %v5274 = vadd.f32 0.0, %v5273
        %v5275 = vpop.f32.mrf.mxu0
        %5276 = vmatprep.mubr.f32.mxu0 %v4247
        %5277 = vmatmul.mubr.f32.gmra.mxu0 %v4246
        %v5278 = vpop.f32.mrf.mxu0
        %v5279 = vadd.f32 0.0, %v5278
        %v5280 = vpop.f32.mrf.mxu0
        %5281 = vmatprep.mubr.f32.mxu0 %v4255
        %5282 = vmatmul.mubr.f32.gmra.mxu0 %v4254
        %v5283 = vpop.f32.mrf.mxu0
        %v5284 = vadd.f32 0.0, %v5283
        %v5285 = vpop.f32.mrf.mxu0
        %5286 = vmatprep.mubr.f32.mxu0 %v4263
        %5287 = vmatmul.mubr.f32.gmra.mxu0 %v4262
        %v5288 = vpop.f32.mrf.mxu0
        %v5289 = vadd.f32 0.0, %v5288
        %v5290 = vpop.f32.mrf.mxu0
        %5291 = vmatprep.mubr.f32.mxu0 %v4271
        %5292 = vmatmul.mubr.f32.gmra.mxu0 %v4270
        %v5293 = vpop.f32.mrf.mxu0
        %v5294 = vadd.f32 0.0, %v5293
        %v5295 = vpop.f32.mrf.mxu0
        %5296 = vmatprep.mubr.f32.mxu0 %v4279
        %5297 = vmatmul.mubr.f32.gmra.mxu0 %v4278
        %v5298 = vpop.f32.mrf.mxu0
        %v5299 = vadd.f32 0.0, %v5298
        %v5300 = vpop.f32.mrf.mxu0
        %5301 = vmatprep.mubr.f32.mxu0 %v4287
        %5302 = vmatmul.mubr.f32.gmra.mxu0 %v4286
        %v5303 = vpop.f32.mrf.mxu0
        %v5304 = vadd.f32 0.0, %v5303
        %v5305 = vpop.f32.mrf.mxu0
        %5306 = vmatprep.mubr.f32.mxu0 %v4295
        %5307 = vmatmul.mubr.f32.gmra.mxu0 %v4294
        %v5308 = vpop.f32.mrf.mxu0
        %v5309 = vadd.f32 0.0, %v5308
        %v5310 = vpop.f32.mrf.mxu0
        %5311 = vmatprep.mubr.f32.mxu0 %v4303
        %5312 = vmatmul.mubr.f32.gmra.mxu0 %v4302
        %v5313 = vpop.f32.mrf.mxu0
        %v5314 = vadd.f32 0.0, %v5313
        %v5315 = vpop.f32.mrf.mxu0
        %5316 = vmatprep.mubr.f32.mxu0 %v4311
        %5317 = vmatmul.mubr.f32.gmra.mxu0 %v4310
        %v5318 = vpop.f32.mrf.mxu0
        %v5319 = vadd.f32 0.0, %v5318
        %v5320 = vpop.f32.mrf.mxu0
        %5321 = vmatprep.mubr.f32.mxu0 %v4319
        %5322 = vmatmul.mubr.f32.gmra.mxu0 %v4318
        %v5323 = vpop.f32.mrf.mxu0
        %v5324 = vadd.f32 0.0, %v5323
        %v5325 = vpop.f32.mrf.mxu0
        %5326 = vmatprep.mubr.f32.mxu0 %v4327
        %5327 = vmatmul.mubr.f32.gmra.mxu0 %v4326
        %v5328 = vpop.f32.mrf.mxu0
        %v5329 = vadd.f32 0.0, %v5328
        %v5330 = vpop.f32.mrf.mxu0
        %5331 = vmatprep.mubr.f32.mxu0 %v4335
        %5332 = vmatmul.mubr.f32.gmra.mxu0 %v4334
        %v5333 = vpop.f32.mrf.mxu0
        %v5334 = vadd.f32 0.0, %v5333
        %v5335 = vpop.f32.mrf.mxu0
        %5336 = vmatprep.mubr.f32.mxu0 %v4343
        %5337 = vmatmul.mubr.f32.gmra.mxu0 %v4342
        %v5338 = vpop.f32.mrf.mxu0
        %v5339 = vadd.f32 0.0, %v5338
        %v5340 = vpop.f32.mrf.mxu0
        %5341 = vmatprep.mubr.f32.mxu0 %v4351
        %5342 = vmatmul.mubr.f32.gmra.mxu0 %v4350
        %v5343 = vpop.f32.mrf.mxu0
        %v5344 = vadd.f32 0.0, %v5343
        %v5345 = vpop.f32.mrf.mxu0
        %5346 = vmatprep.mubr.f32.mxu0 %v4359
        %5347 = vmatmul.mubr.f32.gmra.mxu0 %v4358
        %v5348 = vpop.f32.mrf.mxu0
        %v5349 = vadd.f32 0.0, %v5348
        %v5350 = vpop.f32.mrf.mxu0
        %5351 = vmatprep.mubr.f32.mxu0 %v4367
        %5352 = vmatmul.mubr.f32.gmra.mxu0 %v4366
        %v5353 = vpop.f32.mrf.mxu0
        %v5354 = vadd.f32 0.0, %v5353
        %v5355 = vpop.f32.mrf.mxu0
        %5356 = vmatprep.mubr.f32.mxu0 %v4375
        %5357 = vmatmul.mubr.f32.gmra.mxu0 %v4374
        %v5358 = vpop.f32.mrf.mxu0
        %v5359 = vadd.f32 0.0, %v5358
        %v5360 = vpop.f32.mrf.mxu0
        %5361 = vmatprep.mubr.f32.mxu0 %v4383
        %5362 = vmatmul.mubr.f32.gmra.mxu0 %v4382
        %v5363 = vpop.f32.mrf.mxu0
        %v5364 = vadd.f32 0.0, %v5363
        %v5365 = vpop.f32.mrf.mxu0
        %5366 = vmatprep.mubr.f32.mxu0 %v4391
        %5367 = vmatmul.mubr.f32.gmra.mxu0 %v4390
        %v5368 = vpop.f32.mrf.mxu0
        %v5369 = vadd.f32 0.0, %v5368
        %v5370 = vpop.f32.mrf.mxu0
        %5371 = vmatprep.mubr.f32.mxu0 %v4399
        %5372 = vmatmul.mubr.f32.gmra.mxu0 %v4398
        %v5373 = vpop.f32.mrf.mxu0
        %v5374 = vadd.f32 0.0, %v5373
        %v5375 = vpop.f32.mrf.mxu0
        %5376 = vmatprep.mubr.f32.mxu0 %v4407
        %5377 = vmatmul.mubr.f32.gmra.mxu0 %v4406
        %v5378 = vpop.f32.mrf.mxu0
        %v5379 = vadd.f32 0.0, %v5378
        %v5380 = vpop.f32.mrf.mxu0
        %5381 = vmatprep.mubr.f32.mxu0 %v4415
        %5382 = vmatmul.mubr.f32.gmra.mxu0 %v4414
        %v5383 = vpop.f32.mrf.mxu0
        %v5384 = vadd.f32 0.0, %v5383
        %v5385 = vpop.f32.mrf.mxu0
        %5386 = vmatprep.mubr.f32.mxu0 %v4423
        %5387 = vmatmul.mubr.f32.gmra.mxu0 %v4422
        %v5388 = vpop.f32.mrf.mxu0
        %v5389 = vadd.f32 0.0, %v5388
        %v5390 = vpop.f32.mrf.mxu0
        %5391 = vmatprep.mubr.f32.mxu0 %v4431
        %5392 = vmatmul.mubr.f32.gmra.mxu0 %v4430
        %v5393 = vpop.f32.mrf.mxu0
        %v5394 = vadd.f32 0.0, %v5393
        %v5395 = vpop.f32.mrf.mxu0
        %5396 = vmatprep.mubr.f32.mxu0 %v4439
        %5397 = vmatmul.mubr.f32.gmra.mxu0 %v4438
        %v5398 = vpop.f32.mrf.mxu0
        %v5399 = vadd.f32 0.0, %v5398
        %v5400 = vpop.f32.mrf.mxu0
        %5401 = vmatprep.mubr.f32.mxu0 %v4447
        %5402 = vmatmul.mubr.f32.gmra.mxu0 %v4446
        %v5403 = vpop.f32.mrf.mxu0
        %v5404 = vadd.f32 0.0, %v5403
        %v5405 = vpop.f32.mrf.mxu0
        %5406 = vmatprep.mubr.f32.mxu0 %v4455
        %5407 = vmatmul.mubr.f32.gmra.mxu0 %v4454
        %v5408 = vpop.f32.mrf.mxu0
        %v5409 = vadd.f32 0.0, %v5408
        %v5410 = vpop.f32.mrf.mxu0
        %5411 = vmatprep.mubr.f32.mxu0 %v4463
        %5412 = vmatmul.mubr.f32.gmra.mxu0 %v4462
        %v5413 = vpop.f32.mrf.mxu0
        %v5414 = vadd.f32 0.0, %v5413
        %v5415 = vpop.f32.mrf.mxu0
        %5416 = vmatprep.mubr.f32.mxu0 %v4471
        %5417 = vmatmul.mubr.f32.gmra.mxu0 %v4470
        %v5418 = vpop.f32.mrf.mxu0
        %v5419 = vadd.f32 0.0, %v5418
        %v5420 = vpop.f32.mrf.mxu0
        %5421 = vmatprep.mubr.f32.mxu0 %v4479
        %5422 = vmatmul.mubr.f32.gmra.mxu0 %v4478
        %v5423 = vpop.f32.mrf.mxu0
        %v5424 = vadd.f32 0.0, %v5423
        %v5425 = vpop.f32.mrf.mxu0
        %5426 = vmatprep.mubr.f32.mxu0 %v4487
        %5427 = vmatmul.mubr.f32.gmra.mxu0 %v4486
        %v5428 = vpop.f32.mrf.mxu0
        %v5429 = vadd.f32 0.0, %v5428
        %v5430 = vpop.f32.mrf.mxu0
        %5431 = vmatprep.mubr.f32.mxu0 %v4495
        %5432 = vmatmul.mubr.f32.gmra.mxu0 %v4494
        %v5433 = vpop.f32.mrf.mxu0
        %v5434 = vadd.f32 0.0, %v5433
        %v5435 = vpop.f32.mrf.mxu0
        %5436 = vmatprep.mubr.f32.mxu0 %v4503
        %5437 = vmatmul.mubr.f32.gmra.mxu0 %v4502
        %v5438 = vpop.f32.mrf.mxu0
        %v5439 = vadd.f32 0.0, %v5438
        %v5440 = vpop.f32.mrf.mxu0
        %5441 = vmatprep.mubr.f32.mxu0 %v4511
        %5442 = vmatmul.mubr.f32.gmra.mxu0 %v4510
        %v5443 = vpop.f32.mrf.mxu0
        %v5444 = vadd.f32 0.0, %v5443
        %v5445 = vpop.f32.mrf.mxu0
        %5446 = vmatprep.mubr.f32.mxu0 %v4519
        %5447 = vmatmul.mubr.f32.gmra.mxu0 %v4518
        %v5448 = vpop.f32.mrf.mxu0
        %v5449 = vadd.f32 0.0, %v5448
        %v5450 = vpop.f32.mrf.mxu0
        %5451 = vmatprep.mubr.f32.mxu0 %v4527
        %5452 = vmatmul.mubr.f32.gmra.mxu0 %v4526
        %v5453 = vpop.f32.mrf.mxu0
        %v5454 = vadd.f32 0.0, %v5453
        %v5455 = vpop.f32.mrf.mxu0
        %5456 = vmatprep.mubr.f32.mxu0 %v4535
        %5457 = vmatmul.mubr.f32.gmra.mxu0 %v4534
        %v5458 = vpop.f32.mrf.mxu0
        %v5459 = vadd.f32 0.0, %v5458
        %v5460 = vpop.f32.mrf.mxu0
        %5461 = vmatprep.mubr.f32.mxu0 %v4543
        %5462 = vmatmul.mubr.f32.gmra.mxu0 %v4542
        %v5463 = vpop.f32.mrf.mxu0
        %v5464 = vadd.f32 0.0, %v5463
        %v5465 = vpop.f32.mrf.mxu0
        %5466 = vmatprep.mubr.f32.mxu0 %v4551
        %5467 = vmatmul.mubr.f32.gmra.mxu0 %v4550
        %v5468 = vpop.f32.mrf.mxu0
        %v5469 = vadd.f32 0.0, %v5468
        %v5470 = vpop.f32.mrf.mxu0
        %5471 = vmatprep.mubr.f32.mxu0 %v4559
        %5472 = vmatmul.mubr.f32.gmra.mxu0 %v4558
        %v5473 = vpop.f32.mrf.mxu0
        %v5474 = vadd.f32 0.0, %v5473
        %v5475 = vpop.f32.mrf.mxu0
        %5476 = vmatprep.mubr.f32.mxu0 %v4567
        %5477 = vmatmul.mubr.f32.gmra.mxu0 %v4566
        %v5478 = vpop.f32.mrf.mxu0
        %v5479 = vadd.f32 0.0, %v5478
        %v5480 = vpop.f32.mrf.mxu0
        %5481 = vmatprep.mubr.f32.mxu0 %v4575
        %5482 = vmatmul.mubr.f32.gmra.mxu0 %v4574
        %v5483 = vpop.f32.mrf.mxu0
        %v5484 = vadd.f32 0.0, %v5483
        %v5485 = vpop.f32.mrf.mxu0
        %5486 = vmatprep.mubr.f32.mxu0 %v4583
        %5487 = vmatmul.mubr.f32.gmra.mxu0 %v4582
        %v5488 = vpop.f32.mrf.mxu0
        %v5489 = vadd.f32 0.0, %v5488
        %v5490 = vpop.f32.mrf.mxu0
        %5491 = vmatprep.mubr.f32.mxu0 %v4591
        %5492 = vmatmul.mubr.f32.gmra.mxu0 %v4590
        %v5493 = vpop.f32.mrf.mxu0
        %v5494 = vadd.f32 0.0, %v5493
        %v5495 = vpop.f32.mrf.mxu0
        %5496 = vmatprep.mubr.f32.mxu0 %v4599
        %5497 = vmatmul.mubr.f32.gmra.mxu0 %v4598
        %v5498 = vpop.f32.mrf.mxu0
        %v5499 = vadd.f32 0.0, %v5498
        %v5500 = vpop.f32.mrf.mxu0
        %5501 = vmatprep.mubr.f32.mxu0 %v4607
        %5502 = vmatmul.mubr.f32.gmra.mxu0 %v4606
        %v5503 = vpop.f32.mrf.mxu0
        %v5504 = vadd.f32 0.0, %v5503
        %v5505 = vpop.f32.mrf.mxu0
        %5506 = vmatprep.mubr.f32.mxu0 %v4615
        %5507 = vmatmul.mubr.f32.gmra.mxu0 %v4614
        %v5508 = vpop.f32.mrf.mxu0
        %v5509 = vadd.f32 0.0, %v5508
        %v5510 = vpop.f32.mrf.mxu0
        %5511 = vmatprep.mubr.f32.mxu0 %v4623
        %5512 = vmatmul.mubr.f32.gmra.mxu0 %v4622
        %v5513 = vpop.f32.mrf.mxu0
        %v5514 = vadd.f32 0.0, %v5513
        %v5515 = vpop.f32.mrf.mxu0
        %5516 = vmatprep.mubr.f32.mxu0 %v4631
        %5517 = vmatmul.mubr.f32.gmra.mxu0 %v4630
        %v5518 = vpop.f32.mrf.mxu0
        %v5519 = vadd.f32 0.0, %v5518
        %v5520 = vpop.f32.mrf.mxu0
        %5521 = vmatprep.mubr.f32.mxu0 %v4639
        %5522 = vmatmul.mubr.f32.gmra.mxu0 %v4638
        %v5523 = vpop.f32.mrf.mxu0
        %v5524 = vadd.f32 0.0, %v5523
        %v5525 = vpop.f32.mrf.mxu0
        %5526 = vmatprep.mubr.f32.mxu0 %v4647
        %5527 = vmatmul.mubr.f32.gmra.mxu0 %v4646
        %v5528 = vpop.f32.mrf.mxu0
        %v5529 = vadd.f32 0.0, %v5528
        %v5530 = vpop.f32.mrf.mxu0
        %5531 = vmatprep.mubr.f32.mxu0 %v4655
        %5532 = vmatmul.mubr.f32.gmra.mxu0 %v4654
        %v5533 = vpop.f32.mrf.mxu0
        %v5534 = vadd.f32 0.0, %v5533
        %v5535 = vpop.f32.mrf.mxu0
        %5536 = vmatprep.mubr.f32.mxu0 %v4663
        %5537 = vmatmul.mubr.f32.gmra.mxu0 %v4662
        %v5538 = vpop.f32.mrf.mxu0
        %v5539 = vadd.f32 0.0, %v5538
        %v5540 = vpop.f32.mrf.mxu0
        %5541 = vmatprep.mubr.f32.mxu0 %v4671
        %5542 = vmatmul.mubr.f32.gmra.mxu0 %v4670
        %v5543 = vpop.f32.mrf.mxu0
        %v5544 = vadd.f32 0.0, %v5543
        %v5545 = vpop.f32.mrf.mxu0
        %5546 = vmatprep.mubr.f32.mxu0 %v4679
        %5547 = vmatmul.mubr.f32.gmra.mxu0 %v4678
        %v5548 = vpop.f32.mrf.mxu0
        %v5549 = vadd.f32 0.0, %v5548
        %v5550 = vpop.f32.mrf.mxu0
        %5551 = vmatprep.mubr.f32.mxu0 %v4687
        %5552 = vmatmul.mubr.f32.gmra.mxu0 %v4686
        %v5553 = vpop.f32.mrf.mxu0
        %v5554 = vadd.f32 0.0, %v5553
        %v5555 = vpop.f32.mrf.mxu0
        %5556 = vmatprep.mubr.f32.mxu0 %v4695
        %5557 = vmatmul.mubr.f32.gmra.mxu0 %v4694
        %v5558 = vpop.f32.mrf.mxu0
        %v5559 = vadd.f32 0.0, %v5558
        %v5560 = vpop.f32.mrf.mxu0
        %5561 = vmatprep.mubr.f32.mxu0 %v4703
        %5562 = vmatmul.mubr.f32.gmra.mxu0 %v4702
        %v5563 = vpop.f32.mrf.mxu0
        %v5564 = vadd.f32 0.0, %v5563
        %v5565 = vpop.f32.mrf.mxu0
        %5566 = vmatprep.mubr.f32.mxu0 %v4711
        %5567 = vmatmul.mubr.f32.gmra.mxu0 %v4710
        %v5568 = vpop.f32.mrf.mxu0
        %v5569 = vadd.f32 0.0, %v5568
        %v5570 = vpop.f32.mrf.mxu0
        %5571 = vmatprep.mubr.f32.mxu0 %v4719
        %5572 = vmatmul.mubr.f32.gmra.mxu0 %v4718
        %v5573 = vpop.f32.mrf.mxu0
        %v5574 = vadd.f32 0.0, %v5573
        %v5575 = vpop.f32.mrf.mxu0
        %5576 = vmatprep.mubr.f32.mxu0 %v4727
        %5577 = vmatmul.mubr.f32.gmra.mxu0 %v4726
        %v5578 = vpop.f32.mrf.mxu0
        %v5579 = vadd.f32 0.0, %v5578
        %v5580 = vpop.f32.mrf.mxu0
        %5581 = vmatprep.mubr.f32.mxu0 %v4735
        %5582 = vmatmul.mubr.f32.gmra.mxu0 %v4734
        %v5583 = vpop.f32.mrf.mxu0
        %v5584 = vadd.f32 0.0, %v5583
        %v5585 = vpop.f32.mrf.mxu0
        %5586 = vmatprep.mubr.f32.mxu0 %v4743
        %5587 = vmatmul.mubr.f32.gmra.mxu0 %v4742
        %v5588 = vpop.f32.mrf.mxu0
        %v5589 = vadd.f32 0.0, %v5588
        %v5590 = vpop.f32.mrf.mxu0
        %5591 = vmatprep.mubr.f32.mxu0 %v4751
        %5592 = vmatmul.mubr.f32.gmra.mxu0 %v4750
        %v5593 = vpop.f32.mrf.mxu0
        %v5594 = vadd.f32 0.0, %v5593
        %v5595 = vpop.f32.mrf.mxu0
        %5596 = vmatprep.mubr.f32.mxu0 %v4759
        %5597 = vmatmul.mubr.f32.gmra.mxu0 %v4758
        %v5598 = vpop.f32.mrf.mxu0
        %v5599 = vadd.f32 0.0, %v5598
        %v5600 = vpop.f32.mrf.mxu0
        %5601 = vmatprep.mubr.f32.mxu0 %v4767
        %5602 = vmatmul.mubr.f32.gmra.mxu0 %v4766
        %v5603 = vpop.f32.mrf.mxu0
        %v5604 = vadd.f32 0.0, %v5603
        %v5605 = vpop.f32.mrf.mxu0
        %5606 = vdwg.mxu0
        %5607 = vmatprep.subr.mxu0 0.0
        %5608 = vmatpush1.msra.mxu0 %v441
        %5609 = vmatprep.subr.mxu0 0.0
        %5610 = vmatpush1.msra.mxu0 %v440
        %5611 = vmatprep.subr.mxu0 0.0
        %5612 = vmatpush1.msra.mxu0 %v439
        %5613 = vmatprep.subr.mxu0 0.0
        %5614 = vmatpush1.msra.mxu0 %v438
        %5615 = vmatprep.subr.mxu0 0.0
        %5616 = vmatpush1.msra.mxu0 %v437
        %5617 = vmatprep.subr.mxu0 0.0
        %5618 = vmatpush1.msra.mxu0 %v436
        %5619 = vmatprep.subr.mxu0 0.0
        %5620 = vmatpush1.msra.mxu0 %v435
        %5621 = vmatprep.subr.mxu0 0.0
        %5622 = vmatpush1.msra.mxu0 %v434
        %5623 = vmatprep.subr.mxu0 0.0
        %5624 = vmatpush1.msra.mxu0 %v433
        %5625 = vmatprep.subr.mxu0 0.0
        %5626 = vmatpush1.msra.mxu0 %v432
        %5627 = vmatprep.subr.mxu0 0.0
        %5628 = vmatpush1.msra.mxu0 %v431
        %5629 = vmatprep.subr.mxu0 0.0
        %5630 = vmatpush1.msra.mxu0 %v430
        %5631 = vmatprep.subr.mxu0 0.0
        %5632 = vmatpush1.msra.mxu0 %v429
        %5633 = vmatprep.subr.mxu0 0.0
        %5634 = vmatpush1.msra.mxu0 %v428
        %5635 = vmatprep.subr.mxu0 0.0
        %5636 = vmatpush1.msra.mxu0 %v427
        %5637 = vmatprep.subr.mxu0 0.0
        %5638 = vmatpush1.msra.mxu0 %v426
        %5639 = vmatprep.subr.mxu0 0.0
        %5640 = vmatpush2.msra.mxu0 %v457
        %5641 = vmatprep.subr.mxu0 0.0
        %5642 = vmatpush2.msra.mxu0 %v456
        %5643 = vmatprep.subr.mxu0 0.0
        %5644 = vmatpush2.msra.mxu0 %v455
        %5645 = vmatprep.subr.mxu0 0.0
        %5646 = vmatpush2.msra.mxu0 %v454
        %5647 = vmatprep.subr.mxu0 0.0
        %5648 = vmatpush2.msra.mxu0 %v453
        %5649 = vmatprep.subr.mxu0 0.0
        %5650 = vmatpush2.msra.mxu0 %v452
        %5651 = vmatprep.subr.mxu0 0.0
        %5652 = vmatpush2.msra.mxu0 %v451
        %5653 = vmatprep.subr.mxu0 0.0
        %5654 = vmatpush2.msra.mxu0 %v450
        %5655 = vmatprep.subr.mxu0 0.0
        %5656 = vmatpush2.msra.mxu0 %v449
        %5657 = vmatprep.subr.mxu0 0.0
        %5658 = vmatpush2.msra.mxu0 %v448
        %5659 = vmatprep.subr.mxu0 0.0
        %5660 = vmatpush2.msra.mxu0 %v447
        %5661 = vmatprep.subr.mxu0 0.0
        %5662 = vmatpush2.msra.mxu0 %v446
        %5663 = vmatprep.subr.mxu0 0.0
        %5664 = vmatpush2.msra.mxu0 %v445
        %5665 = vmatprep.subr.mxu0 0.0
        %5666 = vmatpush2.msra.mxu0 %v444
        %5667 = vmatprep.subr.mxu0 0.0
        %5668 = vmatpush2.msra.mxu0 %v443
        %5669 = vmatprep.subr.mxu0 0.0
        %5670 = vmatpush2.msra.mxu0 %v442
        %5671 = vmatprep.mubr.f32.mxu0 %v4009
        %5672 = vmatmul.mubr.f32.gmra.mxu0 %v4008
        %v5673 = vpop.f32.mrf.mxu0
        %v5674 = vadd.f32 %v5129, %v5673
        %v5675 = vpop.f32.mrf.mxu0
        %5676 = vmatprep.mubr.f32.mxu0 %v4017
        %5677 = vmatmul.mubr.f32.gmra.mxu0 %v4016
        %v5678 = vpop.f32.mrf.mxu0
        %v5679 = vadd.f32 %v5134, %v5678
        %v5680 = vpop.f32.mrf.mxu0
        %5681 = vmatprep.mubr.f32.mxu0 %v4025
        %5682 = vmatmul.mubr.f32.gmra.mxu0 %v4024
        %v5683 = vpop.f32.mrf.mxu0
        %v5684 = vadd.f32 %v5139, %v5683
        %v5685 = vpop.f32.mrf.mxu0
        %5686 = vmatprep.mubr.f32.mxu0 %v4033
        %5687 = vmatmul.mubr.f32.gmra.mxu0 %v4032
        %v5688 = vpop.f32.mrf.mxu0
        %v5689 = vadd.f32 %v5144, %v5688
        %v5690 = vpop.f32.mrf.mxu0
        %5691 = vmatprep.mubr.f32.mxu0 %v4041
        %5692 = vmatmul.mubr.f32.gmra.mxu0 %v4040
        %v5693 = vpop.f32.mrf.mxu0
        %v5694 = vadd.f32 %v5149, %v5693
        %v5695 = vpop.f32.mrf.mxu0
        %5696 = vmatprep.mubr.f32.mxu0 %v4049
        %5697 = vmatmul.mubr.f32.gmra.mxu0 %v4048
        %v5698 = vpop.f32.mrf.mxu0
        %v5699 = vadd.f32 %v5154, %v5698
        %v5700 = vpop.f32.mrf.mxu0
        %5701 = vmatprep.mubr.f32.mxu0 %v4057
        %5702 = vmatmul.mubr.f32.gmra.mxu0 %v4056
        %v5703 = vpop.f32.mrf.mxu0
        %v5704 = vadd.f32 %v5159, %v5703
        %v5705 = vpop.f32.mrf.mxu0
        %5706 = vmatprep.mubr.f32.mxu0 %v4065
        %5707 = vmatmul.mubr.f32.gmra.mxu0 %v4064
        %v5708 = vpop.f32.mrf.mxu0
        %v5709 = vadd.f32 %v5164, %v5708
        %v5710 = vpop.f32.mrf.mxu0
        %5711 = vmatprep.mubr.f32.mxu0 %v4073
        %5712 = vmatmul.mubr.f32.gmra.mxu0 %v4072
        %v5713 = vpop.f32.mrf.mxu0
        %v5714 = vadd.f32 %v5169, %v5713
        %v5715 = vpop.f32.mrf.mxu0
        %5716 = vmatprep.mubr.f32.mxu0 %v4081
        %5717 = vmatmul.mubr.f32.gmra.mxu0 %v4080
        %v5718 = vpop.f32.mrf.mxu0
        %v5719 = vadd.f32 %v5174, %v5718
        %v5720 = vpop.f32.mrf.mxu0
        %5721 = vmatprep.mubr.f32.mxu0 %v4089
        %5722 = vmatmul.mubr.f32.gmra.mxu0 %v4088
        %v5723 = vpop.f32.mrf.mxu0
        %v5724 = vadd.f32 %v5179, %v5723
        %v5725 = vpop.f32.mrf.mxu0
        %5726 = vmatprep.mubr.f32.mxu0 %v4097
        %5727 = vmatmul.mubr.f32.gmra.mxu0 %v4096
        %v5728 = vpop.f32.mrf.mxu0
        %v5729 = vadd.f32 %v5184, %v5728
        %v5730 = vpop.f32.mrf.mxu0
        %5731 = vmatprep.mubr.f32.mxu0 %v4105
        %5732 = vmatmul.mubr.f32.gmra.mxu0 %v4104
        %v5733 = vpop.f32.mrf.mxu0
        %v5734 = vadd.f32 %v5189, %v5733
        %v5735 = vpop.f32.mrf.mxu0
        %5736 = vmatprep.mubr.f32.mxu0 %v4113
        %5737 = vmatmul.mubr.f32.gmra.mxu0 %v4112
        %v5738 = vpop.f32.mrf.mxu0
        %v5739 = vadd.f32 %v5194, %v5738
        %v5740 = vpop.f32.mrf.mxu0
        %5741 = vmatprep.mubr.f32.mxu0 %v4121
        %5742 = vmatmul.mubr.f32.gmra.mxu0 %v4120
        %v5743 = vpop.f32.mrf.mxu0
        %v5744 = vadd.f32 %v5199, %v5743
        %v5745 = vpop.f32.mrf.mxu0
        %5746 = vmatprep.mubr.f32.mxu0 %v4129
        %5747 = vmatmul.mubr.f32.gmra.mxu0 %v4128
        %v5748 = vpop.f32.mrf.mxu0
        %v5749 = vadd.f32 %v5204, %v5748
        %v5750 = vpop.f32.mrf.mxu0
        %5751 = vmatprep.mubr.f32.mxu0 %v4137
        %5752 = vmatmul.mubr.f32.gmra.mxu0 %v4136
        %v5753 = vpop.f32.mrf.mxu0
        %v5754 = vadd.f32 %v5209, %v5753
        %v5755 = vpop.f32.mrf.mxu0
        %5756 = vmatprep.mubr.f32.mxu0 %v4145
        %5757 = vmatmul.mubr.f32.gmra.mxu0 %v4144
        %v5758 = vpop.f32.mrf.mxu0
        %v5759 = vadd.f32 %v5214, %v5758
        %v5760 = vpop.f32.mrf.mxu0
        %5761 = vmatprep.mubr.f32.mxu0 %v4153
        %5762 = vmatmul.mubr.f32.gmra.mxu0 %v4152
        %v5763 = vpop.f32.mrf.mxu0
        %v5764 = vadd.f32 %v5219, %v5763
        %v5765 = vpop.f32.mrf.mxu0
        %5766 = vmatprep.mubr.f32.mxu0 %v4161
        %5767 = vmatmul.mubr.f32.gmra.mxu0 %v4160
        %v5768 = vpop.f32.mrf.mxu0
        %v5769 = vadd.f32 %v5224, %v5768
        %v5770 = vpop.f32.mrf.mxu0
        %5771 = vmatprep.mubr.f32.mxu0 %v4169
        %5772 = vmatmul.mubr.f32.gmra.mxu0 %v4168
        %v5773 = vpop.f32.mrf.mxu0
        %v5774 = vadd.f32 %v5229, %v5773
        %v5775 = vpop.f32.mrf.mxu0
        %5776 = vmatprep.mubr.f32.mxu0 %v4177
        %5777 = vmatmul.mubr.f32.gmra.mxu0 %v4176
        %v5778 = vpop.f32.mrf.mxu0
        %v5779 = vadd.f32 %v5234, %v5778
        %v5780 = vpop.f32.mrf.mxu0
        %5781 = vmatprep.mubr.f32.mxu0 %v4185
        %5782 = vmatmul.mubr.f32.gmra.mxu0 %v4184
        %v5783 = vpop.f32.mrf.mxu0
        %v5784 = vadd.f32 %v5239, %v5783
        %v5785 = vpop.f32.mrf.mxu0
        %5786 = vmatprep.mubr.f32.mxu0 %v4193
        %5787 = vmatmul.mubr.f32.gmra.mxu0 %v4192
        %v5788 = vpop.f32.mrf.mxu0
        %v5789 = vadd.f32 %v5244, %v5788
        %v5790 = vpop.f32.mrf.mxu0
        %5791 = vmatprep.mubr.f32.mxu0 %v4201
        %5792 = vmatmul.mubr.f32.gmra.mxu0 %v4200
        %v5793 = vpop.f32.mrf.mxu0
        %v5794 = vadd.f32 %v5249, %v5793
        %v5795 = vpop.f32.mrf.mxu0
        %5796 = vmatprep.mubr.f32.mxu0 %v4209
        %5797 = vmatmul.mubr.f32.gmra.mxu0 %v4208
        %v5798 = vpop.f32.mrf.mxu0
        %v5799 = vadd.f32 %v5254, %v5798
        %v5800 = vpop.f32.mrf.mxu0
        %5801 = vmatprep.mubr.f32.mxu0 %v4217
        %5802 = vmatmul.mubr.f32.gmra.mxu0 %v4216
        %v5803 = vpop.f32.mrf.mxu0
        %v5804 = vadd.f32 %v5259, %v5803
        %v5805 = vpop.f32.mrf.mxu0
        %5806 = vmatprep.mubr.f32.mxu0 %v4225
        %5807 = vmatmul.mubr.f32.gmra.mxu0 %v4224
        %v5808 = vpop.f32.mrf.mxu0
        %v5809 = vadd.f32 %v5264, %v5808
        %v5810 = vpop.f32.mrf.mxu0
        %5811 = vmatprep.mubr.f32.mxu0 %v4233
        %5812 = vmatmul.mubr.f32.gmra.mxu0 %v4232
        %v5813 = vpop.f32.mrf.mxu0
        %v5814 = vadd.f32 %v5269, %v5813
        %v5815 = vpop.f32.mrf.mxu0
        %5816 = vmatprep.mubr.f32.mxu0 %v4241
        %5817 = vmatmul.mubr.f32.gmra.mxu0 %v4240
        %v5818 = vpop.f32.mrf.mxu0
        %v5819 = vadd.f32 %v5274, %v5818
        %v5820 = vpop.f32.mrf.mxu0
        %5821 = vmatprep.mubr.f32.mxu0 %v4249
        %5822 = vmatmul.mubr.f32.gmra.mxu0 %v4248
        %v5823 = vpop.f32.mrf.mxu0
        %v5824 = vadd.f32 %v5279, %v5823
        %v5825 = vpop.f32.mrf.mxu0
        %5826 = vmatprep.mubr.f32.mxu0 %v4257
        %5827 = vmatmul.mubr.f32.gmra.mxu0 %v4256
        %v5828 = vpop.f32.mrf.mxu0
        %v5829 = vadd.f32 %v5284, %v5828
        %v5830 = vpop.f32.mrf.mxu0
        %5831 = vmatprep.mubr.f32.mxu0 %v4265
        %5832 = vmatmul.mubr.f32.gmra.mxu0 %v4264
        %v5833 = vpop.f32.mrf.mxu0
        %v5834 = vadd.f32 %v5289, %v5833
        %v5835 = vpop.f32.mrf.mxu0
        %5836 = vmatprep.mubr.f32.mxu0 %v4273
        %5837 = vmatmul.mubr.f32.gmra.mxu0 %v4272
        %v5838 = vpop.f32.mrf.mxu0
        %v5839 = vadd.f32 %v5294, %v5838
        %v5840 = vpop.f32.mrf.mxu0
        %5841 = vmatprep.mubr.f32.mxu0 %v4281
        %5842 = vmatmul.mubr.f32.gmra.mxu0 %v4280
        %v5843 = vpop.f32.mrf.mxu0
        %v5844 = vadd.f32 %v5299, %v5843
        %v5845 = vpop.f32.mrf.mxu0
        %5846 = vmatprep.mubr.f32.mxu0 %v4289
        %5847 = vmatmul.mubr.f32.gmra.mxu0 %v4288
        %v5848 = vpop.f32.mrf.mxu0
        %v5849 = vadd.f32 %v5304, %v5848
        %v5850 = vpop.f32.mrf.mxu0
        %5851 = vmatprep.mubr.f32.mxu0 %v4297
        %5852 = vmatmul.mubr.f32.gmra.mxu0 %v4296
        %v5853 = vpop.f32.mrf.mxu0
        %v5854 = vadd.f32 %v5309, %v5853
        %v5855 = vpop.f32.mrf.mxu0
        %5856 = vmatprep.mubr.f32.mxu0 %v4305
        %5857 = vmatmul.mubr.f32.gmra.mxu0 %v4304
        %v5858 = vpop.f32.mrf.mxu0
        %v5859 = vadd.f32 %v5314, %v5858
        %v5860 = vpop.f32.mrf.mxu0
        %5861 = vmatprep.mubr.f32.mxu0 %v4313
        %5862 = vmatmul.mubr.f32.gmra.mxu0 %v4312
        %v5863 = vpop.f32.mrf.mxu0
        %v5864 = vadd.f32 %v5319, %v5863
        %v5865 = vpop.f32.mrf.mxu0
        %5866 = vmatprep.mubr.f32.mxu0 %v4321
        %5867 = vmatmul.mubr.f32.gmra.mxu0 %v4320
        %v5868 = vpop.f32.mrf.mxu0
        %v5869 = vadd.f32 %v5324, %v5868
        %v5870 = vpop.f32.mrf.mxu0
        %5871 = vmatprep.mubr.f32.mxu0 %v4329
        %5872 = vmatmul.mubr.f32.gmra.mxu0 %v4328
        %v5873 = vpop.f32.mrf.mxu0
        %v5874 = vadd.f32 %v5329, %v5873
        %v5875 = vpop.f32.mrf.mxu0
        %5876 = vmatprep.mubr.f32.mxu0 %v4337
        %5877 = vmatmul.mubr.f32.gmra.mxu0 %v4336
        %v5878 = vpop.f32.mrf.mxu0
        %v5879 = vadd.f32 %v5334, %v5878
        %v5880 = vpop.f32.mrf.mxu0
        %5881 = vmatprep.mubr.f32.mxu0 %v4345
        %5882 = vmatmul.mubr.f32.gmra.mxu0 %v4344
        %v5883 = vpop.f32.mrf.mxu0
        %v5884 = vadd.f32 %v5339, %v5883
        %v5885 = vpop.f32.mrf.mxu0
        %5886 = vmatprep.mubr.f32.mxu0 %v4353
        %5887 = vmatmul.mubr.f32.gmra.mxu0 %v4352
        %v5888 = vpop.f32.mrf.mxu0
        %v5889 = vadd.f32 %v5344, %v5888
        %v5890 = vpop.f32.mrf.mxu0
        %5891 = vmatprep.mubr.f32.mxu0 %v4361
        %5892 = vmatmul.mubr.f32.gmra.mxu0 %v4360
        %v5893 = vpop.f32.mrf.mxu0
        %v5894 = vadd.f32 %v5349, %v5893
        %v5895 = vpop.f32.mrf.mxu0
        %5896 = vmatprep.mubr.f32.mxu0 %v4369
        %5897 = vmatmul.mubr.f32.gmra.mxu0 %v4368
        %v5898 = vpop.f32.mrf.mxu0
        %v5899 = vadd.f32 %v5354, %v5898
        %v5900 = vpop.f32.mrf.mxu0
        %5901 = vmatprep.mubr.f32.mxu0 %v4377
        %5902 = vmatmul.mubr.f32.gmra.mxu0 %v4376
        %v5903 = vpop.f32.mrf.mxu0
        %v5904 = vadd.f32 %v5359, %v5903
        %v5905 = vpop.f32.mrf.mxu0
        %5906 = vmatprep.mubr.f32.mxu0 %v4385
        %5907 = vmatmul.mubr.f32.gmra.mxu0 %v4384
        %v5908 = vpop.f32.mrf.mxu0
        %v5909 = vadd.f32 %v5364, %v5908
        %v5910 = vpop.f32.mrf.mxu0
        %5911 = vmatprep.mubr.f32.mxu0 %v4393
        %5912 = vmatmul.mubr.f32.gmra.mxu0 %v4392
        %v5913 = vpop.f32.mrf.mxu0
        %v5914 = vadd.f32 %v5369, %v5913
        %v5915 = vpop.f32.mrf.mxu0
        %5916 = vmatprep.mubr.f32.mxu0 %v4401
        %5917 = vmatmul.mubr.f32.gmra.mxu0 %v4400
        %v5918 = vpop.f32.mrf.mxu0
        %v5919 = vadd.f32 %v5374, %v5918
        %v5920 = vpop.f32.mrf.mxu0
        %5921 = vmatprep.mubr.f32.mxu0 %v4409
        %5922 = vmatmul.mubr.f32.gmra.mxu0 %v4408
        %v5923 = vpop.f32.mrf.mxu0
        %v5924 = vadd.f32 %v5379, %v5923
        %v5925 = vpop.f32.mrf.mxu0
        %5926 = vmatprep.mubr.f32.mxu0 %v4417
        %5927 = vmatmul.mubr.f32.gmra.mxu0 %v4416
        %v5928 = vpop.f32.mrf.mxu0
        %v5929 = vadd.f32 %v5384, %v5928
        %v5930 = vpop.f32.mrf.mxu0
        %5931 = vmatprep.mubr.f32.mxu0 %v4425
        %5932 = vmatmul.mubr.f32.gmra.mxu0 %v4424
        %v5933 = vpop.f32.mrf.mxu0
        %v5934 = vadd.f32 %v5389, %v5933
        %v5935 = vpop.f32.mrf.mxu0
        %5936 = vmatprep.mubr.f32.mxu0 %v4433
        %5937 = vmatmul.mubr.f32.gmra.mxu0 %v4432
        %v5938 = vpop.f32.mrf.mxu0
        %v5939 = vadd.f32 %v5394, %v5938
        %v5940 = vpop.f32.mrf.mxu0
        %5941 = vmatprep.mubr.f32.mxu0 %v4441
        %5942 = vmatmul.mubr.f32.gmra.mxu0 %v4440
        %v5943 = vpop.f32.mrf.mxu0
        %v5944 = vadd.f32 %v5399, %v5943
        %v5945 = vpop.f32.mrf.mxu0
        %5946 = vmatprep.mubr.f32.mxu0 %v4449
        %5947 = vmatmul.mubr.f32.gmra.mxu0 %v4448
        %v5948 = vpop.f32.mrf.mxu0
        %v5949 = vadd.f32 %v5404, %v5948
        %v5950 = vpop.f32.mrf.mxu0
        %5951 = vmatprep.mubr.f32.mxu0 %v4457
        %5952 = vmatmul.mubr.f32.gmra.mxu0 %v4456
        %v5953 = vpop.f32.mrf.mxu0
        %v5954 = vadd.f32 %v5409, %v5953
        %v5955 = vpop.f32.mrf.mxu0
        %5956 = vmatprep.mubr.f32.mxu0 %v4465
        %5957 = vmatmul.mubr.f32.gmra.mxu0 %v4464
        %v5958 = vpop.f32.mrf.mxu0
        %v5959 = vadd.f32 %v5414, %v5958
        %v5960 = vpop.f32.mrf.mxu0
        %5961 = vmatprep.mubr.f32.mxu0 %v4473
        %5962 = vmatmul.mubr.f32.gmra.mxu0 %v4472
        %v5963 = vpop.f32.mrf.mxu0
        %v5964 = vadd.f32 %v5419, %v5963
        %v5965 = vpop.f32.mrf.mxu0
        %5966 = vmatprep.mubr.f32.mxu0 %v4481
        %5967 = vmatmul.mubr.f32.gmra.mxu0 %v4480
        %v5968 = vpop.f32.mrf.mxu0
        %v5969 = vadd.f32 %v5424, %v5968
        %v5970 = vpop.f32.mrf.mxu0
        %5971 = vmatprep.mubr.f32.mxu0 %v4489
        %5972 = vmatmul.mubr.f32.gmra.mxu0 %v4488
        %v5973 = vpop.f32.mrf.mxu0
        %v5974 = vadd.f32 %v5429, %v5973
        %v5975 = vpop.f32.mrf.mxu0
        %5976 = vmatprep.mubr.f32.mxu0 %v4497
        %5977 = vmatmul.mubr.f32.gmra.mxu0 %v4496
        %v5978 = vpop.f32.mrf.mxu0
        %v5979 = vadd.f32 %v5434, %v5978
        %v5980 = vpop.f32.mrf.mxu0
        %5981 = vmatprep.mubr.f32.mxu0 %v4505
        %5982 = vmatmul.mubr.f32.gmra.mxu0 %v4504
        %v5983 = vpop.f32.mrf.mxu0
        %v5984 = vadd.f32 %v5439, %v5983
        %v5985 = vpop.f32.mrf.mxu0
        %5986 = vmatprep.mubr.f32.mxu0 %v4513
        %5987 = vmatmul.mubr.f32.gmra.mxu0 %v4512
        %v5988 = vpop.f32.mrf.mxu0
        %v5989 = vadd.f32 %v5444, %v5988
        %v5990 = vpop.f32.mrf.mxu0
        %5991 = vmatprep.mubr.f32.mxu0 %v4521
        %5992 = vmatmul.mubr.f32.gmra.mxu0 %v4520
        %v5993 = vpop.f32.mrf.mxu0
        %v5994 = vadd.f32 %v5449, %v5993
        %v5995 = vpop.f32.mrf.mxu0
        %5996 = vmatprep.mubr.f32.mxu0 %v4529
        %5997 = vmatmul.mubr.f32.gmra.mxu0 %v4528
        %v5998 = vpop.f32.mrf.mxu0
        %v5999 = vadd.f32 %v5454, %v5998
        %v6000 = vpop.f32.mrf.mxu0
        %6001 = vmatprep.mubr.f32.mxu0 %v4537
        %6002 = vmatmul.mubr.f32.gmra.mxu0 %v4536
        %v6003 = vpop.f32.mrf.mxu0
        %v6004 = vadd.f32 %v5459, %v6003
        %v6005 = vpop.f32.mrf.mxu0
        %6006 = vmatprep.mubr.f32.mxu0 %v4545
        %6007 = vmatmul.mubr.f32.gmra.mxu0 %v4544
        %v6008 = vpop.f32.mrf.mxu0
        %v6009 = vadd.f32 %v5464, %v6008
        %v6010 = vpop.f32.mrf.mxu0
        %6011 = vmatprep.mubr.f32.mxu0 %v4553
        %6012 = vmatmul.mubr.f32.gmra.mxu0 %v4552
        %v6013 = vpop.f32.mrf.mxu0
        %v6014 = vadd.f32 %v5469, %v6013
        %v6015 = vpop.f32.mrf.mxu0
        %6016 = vmatprep.mubr.f32.mxu0 %v4561
        %6017 = vmatmul.mubr.f32.gmra.mxu0 %v4560
        %v6018 = vpop.f32.mrf.mxu0
        %v6019 = vadd.f32 %v5474, %v6018
        %v6020 = vpop.f32.mrf.mxu0
        %6021 = vmatprep.mubr.f32.mxu0 %v4569
        %6022 = vmatmul.mubr.f32.gmra.mxu0 %v4568
        %v6023 = vpop.f32.mrf.mxu0
        %v6024 = vadd.f32 %v5479, %v6023
        %v6025 = vpop.f32.mrf.mxu0
        %6026 = vmatprep.mubr.f32.mxu0 %v4577
        %6027 = vmatmul.mubr.f32.gmra.mxu0 %v4576
        %v6028 = vpop.f32.mrf.mxu0
        %v6029 = vadd.f32 %v5484, %v6028
        %v6030 = vpop.f32.mrf.mxu0
        %6031 = vmatprep.mubr.f32.mxu0 %v4585
        %6032 = vmatmul.mubr.f32.gmra.mxu0 %v4584
        %v6033 = vpop.f32.mrf.mxu0
        %v6034 = vadd.f32 %v5489, %v6033
        %v6035 = vpop.f32.mrf.mxu0
        %6036 = vmatprep.mubr.f32.mxu0 %v4593
        %6037 = vmatmul.mubr.f32.gmra.mxu0 %v4592
        %v6038 = vpop.f32.mrf.mxu0
        %v6039 = vadd.f32 %v5494, %v6038
        %v6040 = vpop.f32.mrf.mxu0
        %6041 = vmatprep.mubr.f32.mxu0 %v4601
        %6042 = vmatmul.mubr.f32.gmra.mxu0 %v4600
        %v6043 = vpop.f32.mrf.mxu0
        %v6044 = vadd.f32 %v5499, %v6043
        %v6045 = vpop.f32.mrf.mxu0
        %6046 = vmatprep.mubr.f32.mxu0 %v4609
        %6047 = vmatmul.mubr.f32.gmra.mxu0 %v4608
        %v6048 = vpop.f32.mrf.mxu0
        %v6049 = vadd.f32 %v5504, %v6048
        %v6050 = vpop.f32.mrf.mxu0
        %6051 = vmatprep.mubr.f32.mxu0 %v4617
        %6052 = vmatmul.mubr.f32.gmra.mxu0 %v4616
        %v6053 = vpop.f32.mrf.mxu0
        %v6054 = vadd.f32 %v5509, %v6053
        %v6055 = vpop.f32.mrf.mxu0
        %6056 = vmatprep.mubr.f32.mxu0 %v4625
        %6057 = vmatmul.mubr.f32.gmra.mxu0 %v4624
        %v6058 = vpop.f32.mrf.mxu0
        %v6059 = vadd.f32 %v5514, %v6058
        %v6060 = vpop.f32.mrf.mxu0
        %6061 = vmatprep.mubr.f32.mxu0 %v4633
        %6062 = vmatmul.mubr.f32.gmra.mxu0 %v4632
        %v6063 = vpop.f32.mrf.mxu0
        %v6064 = vadd.f32 %v5519, %v6063
        %v6065 = vpop.f32.mrf.mxu0
        %6066 = vmatprep.mubr.f32.mxu0 %v4641
        %6067 = vmatmul.mubr.f32.gmra.mxu0 %v4640
        %v6068 = vpop.f32.mrf.mxu0
        %v6069 = vadd.f32 %v5524, %v6068
        %v6070 = vpop.f32.mrf.mxu0
        %6071 = vmatprep.mubr.f32.mxu0 %v4649
        %6072 = vmatmul.mubr.f32.gmra.mxu0 %v4648
        %v6073 = vpop.f32.mrf.mxu0
        %v6074 = vadd.f32 %v5529, %v6073
        %v6075 = vpop.f32.mrf.mxu0
        %6076 = vmatprep.mubr.f32.mxu0 %v4657
        %6077 = vmatmul.mubr.f32.gmra.mxu0 %v4656
        %v6078 = vpop.f32.mrf.mxu0
        %v6079 = vadd.f32 %v5534, %v6078
        %v6080 = vpop.f32.mrf.mxu0
        %6081 = vmatprep.mubr.f32.mxu0 %v4665
        %6082 = vmatmul.mubr.f32.gmra.mxu0 %v4664
        %v6083 = vpop.f32.mrf.mxu0
        %v6084 = vadd.f32 %v5539, %v6083
        %v6085 = vpop.f32.mrf.mxu0
        %6086 = vmatprep.mubr.f32.mxu0 %v4673
        %6087 = vmatmul.mubr.f32.gmra.mxu0 %v4672
        %v6088 = vpop.f32.mrf.mxu0
        %v6089 = vadd.f32 %v5544, %v6088
        %v6090 = vpop.f32.mrf.mxu0
        %6091 = vmatprep.mubr.f32.mxu0 %v4681
        %6092 = vmatmul.mubr.f32.gmra.mxu0 %v4680
        %v6093 = vpop.f32.mrf.mxu0
        %v6094 = vadd.f32 %v5549, %v6093
        %v6095 = vpop.f32.mrf.mxu0
        %6096 = vmatprep.mubr.f32.mxu0 %v4689
        %6097 = vmatmul.mubr.f32.gmra.mxu0 %v4688
        %v6098 = vpop.f32.mrf.mxu0
        %v6099 = vadd.f32 %v5554, %v6098
        %v6100 = vpop.f32.mrf.mxu0
        %6101 = vmatprep.mubr.f32.mxu0 %v4697
        %6102 = vmatmul.mubr.f32.gmra.mxu0 %v4696
        %v6103 = vpop.f32.mrf.mxu0
        %v6104 = vadd.f32 %v5559, %v6103
        %v6105 = vpop.f32.mrf.mxu0
        %6106 = vmatprep.mubr.f32.mxu0 %v4705
        %6107 = vmatmul.mubr.f32.gmra.mxu0 %v4704
        %v6108 = vpop.f32.mrf.mxu0
        %v6109 = vadd.f32 %v5564, %v6108
        %v6110 = vpop.f32.mrf.mxu0
        %6111 = vmatprep.mubr.f32.mxu0 %v4713
        %6112 = vmatmul.mubr.f32.gmra.mxu0 %v4712
        %v6113 = vpop.f32.mrf.mxu0
        %v6114 = vadd.f32 %v5569, %v6113
        %v6115 = vpop.f32.mrf.mxu0
        %6116 = vmatprep.mubr.f32.mxu0 %v4721
        %6117 = vmatmul.mubr.f32.gmra.mxu0 %v4720
        %v6118 = vpop.f32.mrf.mxu0
        %v6119 = vadd.f32 %v5574, %v6118
        %v6120 = vpop.f32.mrf.mxu0
        %6121 = vmatprep.mubr.f32.mxu0 %v4729
        %6122 = vmatmul.mubr.f32.gmra.mxu0 %v4728
        %v6123 = vpop.f32.mrf.mxu0
        %v6124 = vadd.f32 %v5579, %v6123
        %v6125 = vpop.f32.mrf.mxu0
        %6126 = vmatprep.mubr.f32.mxu0 %v4737
        %6127 = vmatmul.mubr.f32.gmra.mxu0 %v4736
        %v6128 = vpop.f32.mrf.mxu0
        %v6129 = vadd.f32 %v5584, %v6128
        %v6130 = vpop.f32.mrf.mxu0
        %6131 = vmatprep.mubr.f32.mxu0 %v4745
        %6132 = vmatmul.mubr.f32.gmra.mxu0 %v4744
        %v6133 = vpop.f32.mrf.mxu0
        %v6134 = vadd.f32 %v5589, %v6133
        %v6135 = vpop.f32.mrf.mxu0
        %6136 = vmatprep.mubr.f32.mxu0 %v4753
        %6137 = vmatmul.mubr.f32.gmra.mxu0 %v4752
        %v6138 = vpop.f32.mrf.mxu0
        %v6139 = vadd.f32 %v5594, %v6138
        %v6140 = vpop.f32.mrf.mxu0
        %6141 = vmatprep.mubr.f32.mxu0 %v4761
        %6142 = vmatmul.mubr.f32.gmra.mxu0 %v4760
        %v6143 = vpop.f32.mrf.mxu0
        %v6144 = vadd.f32 %v5599, %v6143
        %v6145 = vpop.f32.mrf.mxu0
        %6146 = vmatprep.mubr.f32.mxu0 %v4769
        %6147 = vmatmul.mubr.f32.gmra.mxu0 %v4768
        %v6148 = vpop.f32.mrf.mxu0
        %v6149 = vadd.f32 %v5604, %v6148
        %v6150 = vpop.f32.mrf.mxu0
        %6151 = vdwg.mxu0
        %6152 = vmatprep.subr.mxu0 0.0
        %6153 = vmatpush1.msra.mxu0 %v473
        %6154 = vmatprep.subr.mxu0 0.0
        %6155 = vmatpush1.msra.mxu0 %v472
        %6156 = vmatprep.subr.mxu0 0.0
        %6157 = vmatpush1.msra.mxu0 %v471
        %6158 = vmatprep.subr.mxu0 0.0
        %6159 = vmatpush1.msra.mxu0 %v470
        %6160 = vmatprep.subr.mxu0 0.0
        %6161 = vmatpush1.msra.mxu0 %v469
        %6162 = vmatprep.subr.mxu0 0.0
        %6163 = vmatpush1.msra.mxu0 %v468
        %6164 = vmatprep.subr.mxu0 0.0
        %6165 = vmatpush1.msra.mxu0 %v467
        %6166 = vmatprep.subr.mxu0 0.0
        %6167 = vmatpush1.msra.mxu0 %v466
        %6168 = vmatprep.subr.mxu0 0.0
        %6169 = vmatpush1.msra.mxu0 %v465
        %6170 = vmatprep.subr.mxu0 0.0
        %6171 = vmatpush1.msra.mxu0 %v464
        %6172 = vmatprep.subr.mxu0 0.0
        %6173 = vmatpush1.msra.mxu0 %v463
        %6174 = vmatprep.subr.mxu0 0.0
        %6175 = vmatpush1.msra.mxu0 %v462
        %6176 = vmatprep.subr.mxu0 0.0
        %6177 = vmatpush1.msra.mxu0 %v461
        %6178 = vmatprep.subr.mxu0 0.0
        %6179 = vmatpush1.msra.mxu0 %v460
        %6180 = vmatprep.subr.mxu0 0.0
        %6181 = vmatpush1.msra.mxu0 %v459
        %6182 = vmatprep.subr.mxu0 0.0
        %6183 = vmatpush1.msra.mxu0 %v458
        %6184 = vmatprep.subr.mxu0 0.0
        %6185 = vmatpush2.msra.mxu0 %v489
        %6186 = vmatprep.subr.mxu0 0.0
        %6187 = vmatpush2.msra.mxu0 %v488
        %6188 = vmatprep.subr.mxu0 0.0
        %6189 = vmatpush2.msra.mxu0 %v487
        %6190 = vmatprep.subr.mxu0 0.0
        %6191 = vmatpush2.msra.mxu0 %v486
        %6192 = vmatprep.subr.mxu0 0.0
        %6193 = vmatpush2.msra.mxu0 %v485
        %6194 = vmatprep.subr.mxu0 0.0
        %6195 = vmatpush2.msra.mxu0 %v484
        %6196 = vmatprep.subr.mxu0 0.0
        %6197 = vmatpush2.msra.mxu0 %v483
        %6198 = vmatprep.subr.mxu0 0.0
        %6199 = vmatpush2.msra.mxu0 %v482
        %6200 = vmatprep.subr.mxu0 0.0
        %6201 = vmatpush2.msra.mxu0 %v481
        %6202 = vmatprep.subr.mxu0 0.0
        %6203 = vmatpush2.msra.mxu0 %v480
        %6204 = vmatprep.subr.mxu0 0.0
        %6205 = vmatpush2.msra.mxu0 %v479
        %6206 = vmatprep.subr.mxu0 0.0
        %6207 = vmatpush2.msra.mxu0 %v478
        %6208 = vmatprep.subr.mxu0 0.0
        %6209 = vmatpush2.msra.mxu0 %v477
        %6210 = vmatprep.subr.mxu0 0.0
        %6211 = vmatpush2.msra.mxu0 %v476
        %6212 = vmatprep.subr.mxu0 0.0
        %6213 = vmatpush2.msra.mxu0 %v475
        %6214 = vmatprep.subr.mxu0 0.0
        %6215 = vmatpush2.msra.mxu0 %v474
        %6216 = vmatprep.mubr.f32.mxu0 %v4011
        %6217 = vmatmul.mubr.f32.gmra.mxu0 %v4010
        %v6218 = vpop.f32.mrf.mxu0
        %v6219 = vadd.f32 %v5674, %v6218
        %v6220 = vpop.f32.mrf.mxu0
        %6221 = vmatprep.mubr.f32.mxu0 %v4019
        %6222 = vmatmul.mubr.f32.gmra.mxu0 %v4018
        %v6223 = vpop.f32.mrf.mxu0
        %v6224 = vadd.f32 %v5679, %v6223
        %v6225 = vpop.f32.mrf.mxu0
        %6226 = vmatprep.mubr.f32.mxu0 %v4027
        %6227 = vmatmul.mubr.f32.gmra.mxu0 %v4026
        %v6228 = vpop.f32.mrf.mxu0
        %v6229 = vadd.f32 %v5684, %v6228
        %v6230 = vpop.f32.mrf.mxu0
        %6231 = vmatprep.mubr.f32.mxu0 %v4035
        %6232 = vmatmul.mubr.f32.gmra.mxu0 %v4034
        %v6233 = vpop.f32.mrf.mxu0
        %v6234 = vadd.f32 %v5689, %v6233
        %v6235 = vpop.f32.mrf.mxu0
        %6236 = vmatprep.mubr.f32.mxu0 %v4043
        %6237 = vmatmul.mubr.f32.gmra.mxu0 %v4042
        %v6238 = vpop.f32.mrf.mxu0
        %v6239 = vadd.f32 %v5694, %v6238
        %v6240 = vpop.f32.mrf.mxu0
        %6241 = vmatprep.mubr.f32.mxu0 %v4051
        %6242 = vmatmul.mubr.f32.gmra.mxu0 %v4050
        %v6243 = vpop.f32.mrf.mxu0
        %v6244 = vadd.f32 %v5699, %v6243
        %v6245 = vpop.f32.mrf.mxu0
        %6246 = vmatprep.mubr.f32.mxu0 %v4059
        %6247 = vmatmul.mubr.f32.gmra.mxu0 %v4058
        %v6248 = vpop.f32.mrf.mxu0
        %v6249 = vadd.f32 %v5704, %v6248
        %v6250 = vpop.f32.mrf.mxu0
        %6251 = vmatprep.mubr.f32.mxu0 %v4067
        %6252 = vmatmul.mubr.f32.gmra.mxu0 %v4066
        %v6253 = vpop.f32.mrf.mxu0
        %v6254 = vadd.f32 %v5709, %v6253
        %v6255 = vpop.f32.mrf.mxu0
        %6256 = vmatprep.mubr.f32.mxu0 %v4075
        %6257 = vmatmul.mubr.f32.gmra.mxu0 %v4074
        %v6258 = vpop.f32.mrf.mxu0
        %v6259 = vadd.f32 %v5714, %v6258
        %v6260 = vpop.f32.mrf.mxu0
        %6261 = vmatprep.mubr.f32.mxu0 %v4083
        %6262 = vmatmul.mubr.f32.gmra.mxu0 %v4082
        %v6263 = vpop.f32.mrf.mxu0
        %v6264 = vadd.f32 %v5719, %v6263
        %v6265 = vpop.f32.mrf.mxu0
        %6266 = vmatprep.mubr.f32.mxu0 %v4091
        %6267 = vmatmul.mubr.f32.gmra.mxu0 %v4090
        %v6268 = vpop.f32.mrf.mxu0
        %v6269 = vadd.f32 %v5724, %v6268
        %v6270 = vpop.f32.mrf.mxu0
        %6271 = vmatprep.mubr.f32.mxu0 %v4099
        %6272 = vmatmul.mubr.f32.gmra.mxu0 %v4098
        %v6273 = vpop.f32.mrf.mxu0
        %v6274 = vadd.f32 %v5729, %v6273
        %v6275 = vpop.f32.mrf.mxu0
        %6276 = vmatprep.mubr.f32.mxu0 %v4107
        %6277 = vmatmul.mubr.f32.gmra.mxu0 %v4106
        %v6278 = vpop.f32.mrf.mxu0
        %v6279 = vadd.f32 %v5734, %v6278
        %v6280 = vpop.f32.mrf.mxu0
        %6281 = vmatprep.mubr.f32.mxu0 %v4115
        %6282 = vmatmul.mubr.f32.gmra.mxu0 %v4114
        %v6283 = vpop.f32.mrf.mxu0
        %v6284 = vadd.f32 %v5739, %v6283
        %v6285 = vpop.f32.mrf.mxu0
        %6286 = vmatprep.mubr.f32.mxu0 %v4123
        %6287 = vmatmul.mubr.f32.gmra.mxu0 %v4122
        %v6288 = vpop.f32.mrf.mxu0
        %v6289 = vadd.f32 %v5744, %v6288
        %v6290 = vpop.f32.mrf.mxu0
        %6291 = vmatprep.mubr.f32.mxu0 %v4131
        %6292 = vmatmul.mubr.f32.gmra.mxu0 %v4130
        %v6293 = vpop.f32.mrf.mxu0
        %v6294 = vadd.f32 %v5749, %v6293
        %v6295 = vpop.f32.mrf.mxu0
        %6296 = vmatprep.mubr.f32.mxu0 %v4139
        %6297 = vmatmul.mubr.f32.gmra.mxu0 %v4138
        %v6298 = vpop.f32.mrf.mxu0
        %v6299 = vadd.f32 %v5754, %v6298
        %v6300 = vpop.f32.mrf.mxu0
        %6301 = vmatprep.mubr.f32.mxu0 %v4147
        %6302 = vmatmul.mubr.f32.gmra.mxu0 %v4146
        %v6303 = vpop.f32.mrf.mxu0
        %v6304 = vadd.f32 %v5759, %v6303
        %v6305 = vpop.f32.mrf.mxu0
        %6306 = vmatprep.mubr.f32.mxu0 %v4155
        %6307 = vmatmul.mubr.f32.gmra.mxu0 %v4154
        %v6308 = vpop.f32.mrf.mxu0
        %v6309 = vadd.f32 %v5764, %v6308
        %v6310 = vpop.f32.mrf.mxu0
        %6311 = vmatprep.mubr.f32.mxu0 %v4163
        %6312 = vmatmul.mubr.f32.gmra.mxu0 %v4162
        %v6313 = vpop.f32.mrf.mxu0
        %v6314 = vadd.f32 %v5769, %v6313
        %v6315 = vpop.f32.mrf.mxu0
        %6316 = vmatprep.mubr.f32.mxu0 %v4171
        %6317 = vmatmul.mubr.f32.gmra.mxu0 %v4170
        %v6318 = vpop.f32.mrf.mxu0
        %v6319 = vadd.f32 %v5774, %v6318
        %v6320 = vpop.f32.mrf.mxu0
        %6321 = vmatprep.mubr.f32.mxu0 %v4179
        %6322 = vmatmul.mubr.f32.gmra.mxu0 %v4178
        %v6323 = vpop.f32.mrf.mxu0
        %v6324 = vadd.f32 %v5779, %v6323
        %v6325 = vpop.f32.mrf.mxu0
        %6326 = vmatprep.mubr.f32.mxu0 %v4187
        %6327 = vmatmul.mubr.f32.gmra.mxu0 %v4186
        %v6328 = vpop.f32.mrf.mxu0
        %v6329 = vadd.f32 %v5784, %v6328
        %v6330 = vpop.f32.mrf.mxu0
        %6331 = vmatprep.mubr.f32.mxu0 %v4195
        %6332 = vmatmul.mubr.f32.gmra.mxu0 %v4194
        %v6333 = vpop.f32.mrf.mxu0
        %v6334 = vadd.f32 %v5789, %v6333
        %v6335 = vpop.f32.mrf.mxu0
        %6336 = vmatprep.mubr.f32.mxu0 %v4203
        %6337 = vmatmul.mubr.f32.gmra.mxu0 %v4202
        %v6338 = vpop.f32.mrf.mxu0
        %v6339 = vadd.f32 %v5794, %v6338
        %v6340 = vpop.f32.mrf.mxu0
        %6341 = vmatprep.mubr.f32.mxu0 %v4211
        %6342 = vmatmul.mubr.f32.gmra.mxu0 %v4210
        %v6343 = vpop.f32.mrf.mxu0
        %v6344 = vadd.f32 %v5799, %v6343
        %v6345 = vpop.f32.mrf.mxu0
        %6346 = vmatprep.mubr.f32.mxu0 %v4219
        %6347 = vmatmul.mubr.f32.gmra.mxu0 %v4218
        %v6348 = vpop.f32.mrf.mxu0
        %v6349 = vadd.f32 %v5804, %v6348
        %v6350 = vpop.f32.mrf.mxu0
        %6351 = vmatprep.mubr.f32.mxu0 %v4227
        %6352 = vmatmul.mubr.f32.gmra.mxu0 %v4226
        %v6353 = vpop.f32.mrf.mxu0
        %v6354 = vadd.f32 %v5809, %v6353
        %v6355 = vpop.f32.mrf.mxu0
        %6356 = vmatprep.mubr.f32.mxu0 %v4235
        %6357 = vmatmul.mubr.f32.gmra.mxu0 %v4234
        %v6358 = vpop.f32.mrf.mxu0
        %v6359 = vadd.f32 %v5814, %v6358
        %v6360 = vpop.f32.mrf.mxu0
        %6361 = vmatprep.mubr.f32.mxu0 %v4243
        %6362 = vmatmul.mubr.f32.gmra.mxu0 %v4242
        %v6363 = vpop.f32.mrf.mxu0
        %v6364 = vadd.f32 %v5819, %v6363
        %v6365 = vpop.f32.mrf.mxu0
        %6366 = vmatprep.mubr.f32.mxu0 %v4251
        %6367 = vmatmul.mubr.f32.gmra.mxu0 %v4250
        %v6368 = vpop.f32.mrf.mxu0
        %v6369 = vadd.f32 %v5824, %v6368
        %v6370 = vpop.f32.mrf.mxu0
        %6371 = vmatprep.mubr.f32.mxu0 %v4259
        %6372 = vmatmul.mubr.f32.gmra.mxu0 %v4258
        %v6373 = vpop.f32.mrf.mxu0
        %v6374 = vadd.f32 %v5829, %v6373
        %v6375 = vpop.f32.mrf.mxu0
        %6376 = vmatprep.mubr.f32.mxu0 %v4267
        %6377 = vmatmul.mubr.f32.gmra.mxu0 %v4266
        %v6378 = vpop.f32.mrf.mxu0
        %v6379 = vadd.f32 %v5834, %v6378
        %v6380 = vpop.f32.mrf.mxu0
        %6381 = vmatprep.mubr.f32.mxu0 %v4275
        %6382 = vmatmul.mubr.f32.gmra.mxu0 %v4274
        %v6383 = vpop.f32.mrf.mxu0
        %v6384 = vadd.f32 %v5839, %v6383
        %v6385 = vpop.f32.mrf.mxu0
        %6386 = vmatprep.mubr.f32.mxu0 %v4283
        %6387 = vmatmul.mubr.f32.gmra.mxu0 %v4282
        %v6388 = vpop.f32.mrf.mxu0
        %v6389 = vadd.f32 %v5844, %v6388
        %v6390 = vpop.f32.mrf.mxu0
        %6391 = vmatprep.mubr.f32.mxu0 %v4291
        %6392 = vmatmul.mubr.f32.gmra.mxu0 %v4290
        %v6393 = vpop.f32.mrf.mxu0
        %v6394 = vadd.f32 %v5849, %v6393
        %v6395 = vpop.f32.mrf.mxu0
        %6396 = vmatprep.mubr.f32.mxu0 %v4299
        %6397 = vmatmul.mubr.f32.gmra.mxu0 %v4298
        %v6398 = vpop.f32.mrf.mxu0
        %v6399 = vadd.f32 %v5854, %v6398
        %v6400 = vpop.f32.mrf.mxu0
        %6401 = vmatprep.mubr.f32.mxu0 %v4307
        %6402 = vmatmul.mubr.f32.gmra.mxu0 %v4306
        %v6403 = vpop.f32.mrf.mxu0
        %v6404 = vadd.f32 %v5859, %v6403
        %v6405 = vpop.f32.mrf.mxu0
        %6406 = vmatprep.mubr.f32.mxu0 %v4315
        %6407 = vmatmul.mubr.f32.gmra.mxu0 %v4314
        %v6408 = vpop.f32.mrf.mxu0
        %v6409 = vadd.f32 %v5864, %v6408
        %v6410 = vpop.f32.mrf.mxu0
        %6411 = vmatprep.mubr.f32.mxu0 %v4323
        %6412 = vmatmul.mubr.f32.gmra.mxu0 %v4322
        %v6413 = vpop.f32.mrf.mxu0
        %v6414 = vadd.f32 %v5869, %v6413
        %v6415 = vpop.f32.mrf.mxu0
        %6416 = vmatprep.mubr.f32.mxu0 %v4331
        %6417 = vmatmul.mubr.f32.gmra.mxu0 %v4330
        %v6418 = vpop.f32.mrf.mxu0
        %v6419 = vadd.f32 %v5874, %v6418
        %v6420 = vpop.f32.mrf.mxu0
        %6421 = vmatprep.mubr.f32.mxu0 %v4339
        %6422 = vmatmul.mubr.f32.gmra.mxu0 %v4338
        %v6423 = vpop.f32.mrf.mxu0
        %v6424 = vadd.f32 %v5879, %v6423
        %v6425 = vpop.f32.mrf.mxu0
        %6426 = vmatprep.mubr.f32.mxu0 %v4347
        %6427 = vmatmul.mubr.f32.gmra.mxu0 %v4346
        %v6428 = vpop.f32.mrf.mxu0
        %v6429 = vadd.f32 %v5884, %v6428
        %v6430 = vpop.f32.mrf.mxu0
        %6431 = vmatprep.mubr.f32.mxu0 %v4355
        %6432 = vmatmul.mubr.f32.gmra.mxu0 %v4354
        %v6433 = vpop.f32.mrf.mxu0
        %v6434 = vadd.f32 %v5889, %v6433
        %v6435 = vpop.f32.mrf.mxu0
        %6436 = vmatprep.mubr.f32.mxu0 %v4363
        %6437 = vmatmul.mubr.f32.gmra.mxu0 %v4362
        %v6438 = vpop.f32.mrf.mxu0
        %v6439 = vadd.f32 %v5894, %v6438
        %v6440 = vpop.f32.mrf.mxu0
        %6441 = vmatprep.mubr.f32.mxu0 %v4371
        %6442 = vmatmul.mubr.f32.gmra.mxu0 %v4370
        %v6443 = vpop.f32.mrf.mxu0
        %v6444 = vadd.f32 %v5899, %v6443
        %v6445 = vpop.f32.mrf.mxu0
        %6446 = vmatprep.mubr.f32.mxu0 %v4379
        %6447 = vmatmul.mubr.f32.gmra.mxu0 %v4378
        %v6448 = vpop.f32.mrf.mxu0
        %v6449 = vadd.f32 %v5904, %v6448
        %v6450 = vpop.f32.mrf.mxu0
        %6451 = vmatprep.mubr.f32.mxu0 %v4387
        %6452 = vmatmul.mubr.f32.gmra.mxu0 %v4386
        %v6453 = vpop.f32.mrf.mxu0
        %v6454 = vadd.f32 %v5909, %v6453
        %v6455 = vpop.f32.mrf.mxu0
        %6456 = vmatprep.mubr.f32.mxu0 %v4395
        %6457 = vmatmul.mubr.f32.gmra.mxu0 %v4394
        %v6458 = vpop.f32.mrf.mxu0
        %v6459 = vadd.f32 %v5914, %v6458
        %v6460 = vpop.f32.mrf.mxu0
        %6461 = vmatprep.mubr.f32.mxu0 %v4403
        %6462 = vmatmul.mubr.f32.gmra.mxu0 %v4402
        %v6463 = vpop.f32.mrf.mxu0
        %v6464 = vadd.f32 %v5919, %v6463
        %v6465 = vpop.f32.mrf.mxu0
        %6466 = vmatprep.mubr.f32.mxu0 %v4411
        %6467 = vmatmul.mubr.f32.gmra.mxu0 %v4410
        %v6468 = vpop.f32.mrf.mxu0
        %v6469 = vadd.f32 %v5924, %v6468
        %v6470 = vpop.f32.mrf.mxu0
        %6471 = vmatprep.mubr.f32.mxu0 %v4419
        %6472 = vmatmul.mubr.f32.gmra.mxu0 %v4418
        %v6473 = vpop.f32.mrf.mxu0
        %v6474 = vadd.f32 %v5929, %v6473
        %v6475 = vpop.f32.mrf.mxu0
        %6476 = vmatprep.mubr.f32.mxu0 %v4427
        %6477 = vmatmul.mubr.f32.gmra.mxu0 %v4426
        %v6478 = vpop.f32.mrf.mxu0
        %v6479 = vadd.f32 %v5934, %v6478
        %v6480 = vpop.f32.mrf.mxu0
        %6481 = vmatprep.mubr.f32.mxu0 %v4435
        %6482 = vmatmul.mubr.f32.gmra.mxu0 %v4434
        %v6483 = vpop.f32.mrf.mxu0
        %v6484 = vadd.f32 %v5939, %v6483
        %v6485 = vpop.f32.mrf.mxu0
        %6486 = vmatprep.mubr.f32.mxu0 %v4443
        %6487 = vmatmul.mubr.f32.gmra.mxu0 %v4442
        %v6488 = vpop.f32.mrf.mxu0
        %v6489 = vadd.f32 %v5944, %v6488
        %v6490 = vpop.f32.mrf.mxu0
        %6491 = vmatprep.mubr.f32.mxu0 %v4451
        %6492 = vmatmul.mubr.f32.gmra.mxu0 %v4450
        %v6493 = vpop.f32.mrf.mxu0
        %v6494 = vadd.f32 %v5949, %v6493
        %v6495 = vpop.f32.mrf.mxu0
        %6496 = vmatprep.mubr.f32.mxu0 %v4459
        %6497 = vmatmul.mubr.f32.gmra.mxu0 %v4458
        %v6498 = vpop.f32.mrf.mxu0
        %v6499 = vadd.f32 %v5954, %v6498
        %v6500 = vpop.f32.mrf.mxu0
        %6501 = vmatprep.mubr.f32.mxu0 %v4467
        %6502 = vmatmul.mubr.f32.gmra.mxu0 %v4466
        %v6503 = vpop.f32.mrf.mxu0
        %v6504 = vadd.f32 %v5959, %v6503
        %v6505 = vpop.f32.mrf.mxu0
        %6506 = vmatprep.mubr.f32.mxu0 %v4475
        %6507 = vmatmul.mubr.f32.gmra.mxu0 %v4474
        %v6508 = vpop.f32.mrf.mxu0
        %v6509 = vadd.f32 %v5964, %v6508
        %v6510 = vpop.f32.mrf.mxu0
        %6511 = vmatprep.mubr.f32.mxu0 %v4483
        %6512 = vmatmul.mubr.f32.gmra.mxu0 %v4482
        %v6513 = vpop.f32.mrf.mxu0
        %v6514 = vadd.f32 %v5969, %v6513
        %v6515 = vpop.f32.mrf.mxu0
        %6516 = vmatprep.mubr.f32.mxu0 %v4491
        %6517 = vmatmul.mubr.f32.gmra.mxu0 %v4490
        %v6518 = vpop.f32.mrf.mxu0
        %v6519 = vadd.f32 %v5974, %v6518
        %v6520 = vpop.f32.mrf.mxu0
        %6521 = vmatprep.mubr.f32.mxu0 %v4499
        %6522 = vmatmul.mubr.f32.gmra.mxu0 %v4498
        %v6523 = vpop.f32.mrf.mxu0
        %v6524 = vadd.f32 %v5979, %v6523
        %v6525 = vpop.f32.mrf.mxu0
        %6526 = vmatprep.mubr.f32.mxu0 %v4507
        %6527 = vmatmul.mubr.f32.gmra.mxu0 %v4506
        %v6528 = vpop.f32.mrf.mxu0
        %v6529 = vadd.f32 %v5984, %v6528
        %v6530 = vpop.f32.mrf.mxu0
        %6531 = vmatprep.mubr.f32.mxu0 %v4515
        %6532 = vmatmul.mubr.f32.gmra.mxu0 %v4514
        %v6533 = vpop.f32.mrf.mxu0
        %v6534 = vadd.f32 %v5989, %v6533
        %v6535 = vpop.f32.mrf.mxu0
        %6536 = vmatprep.mubr.f32.mxu0 %v4523
        %6537 = vmatmul.mubr.f32.gmra.mxu0 %v4522
        %v6538 = vpop.f32.mrf.mxu0
        %v6539 = vadd.f32 %v5994, %v6538
        %v6540 = vpop.f32.mrf.mxu0
        %6541 = vmatprep.mubr.f32.mxu0 %v4531
        %6542 = vmatmul.mubr.f32.gmra.mxu0 %v4530
        %v6543 = vpop.f32.mrf.mxu0
        %v6544 = vadd.f32 %v5999, %v6543
        %v6545 = vpop.f32.mrf.mxu0
        %6546 = vmatprep.mubr.f32.mxu0 %v4539
        %6547 = vmatmul.mubr.f32.gmra.mxu0 %v4538
        %v6548 = vpop.f32.mrf.mxu0
        %v6549 = vadd.f32 %v6004, %v6548
        %v6550 = vpop.f32.mrf.mxu0
        %6551 = vmatprep.mubr.f32.mxu0 %v4547
        %6552 = vmatmul.mubr.f32.gmra.mxu0 %v4546
        %v6553 = vpop.f32.mrf.mxu0
        %v6554 = vadd.f32 %v6009, %v6553
        %v6555 = vpop.f32.mrf.mxu0
        %6556 = vmatprep.mubr.f32.mxu0 %v4555
        %6557 = vmatmul.mubr.f32.gmra.mxu0 %v4554
        %v6558 = vpop.f32.mrf.mxu0
        %v6559 = vadd.f32 %v6014, %v6558
        %v6560 = vpop.f32.mrf.mxu0
        %6561 = vmatprep.mubr.f32.mxu0 %v4563
        %6562 = vmatmul.mubr.f32.gmra.mxu0 %v4562
        %v6563 = vpop.f32.mrf.mxu0
        %v6564 = vadd.f32 %v6019, %v6563
        %v6565 = vpop.f32.mrf.mxu0
        %6566 = vmatprep.mubr.f32.mxu0 %v4571
        %6567 = vmatmul.mubr.f32.gmra.mxu0 %v4570
        %v6568 = vpop.f32.mrf.mxu0
        %v6569 = vadd.f32 %v6024, %v6568
        %v6570 = vpop.f32.mrf.mxu0
        %6571 = vmatprep.mubr.f32.mxu0 %v4579
        %6572 = vmatmul.mubr.f32.gmra.mxu0 %v4578
        %v6573 = vpop.f32.mrf.mxu0
        %v6574 = vadd.f32 %v6029, %v6573
        %v6575 = vpop.f32.mrf.mxu0
        %6576 = vmatprep.mubr.f32.mxu0 %v4587
        %6577 = vmatmul.mubr.f32.gmra.mxu0 %v4586
        %v6578 = vpop.f32.mrf.mxu0
        %v6579 = vadd.f32 %v6034, %v6578
        %v6580 = vpop.f32.mrf.mxu0
        %6581 = vmatprep.mubr.f32.mxu0 %v4595
        %6582 = vmatmul.mubr.f32.gmra.mxu0 %v4594
        %v6583 = vpop.f32.mrf.mxu0
        %v6584 = vadd.f32 %v6039, %v6583
        %v6585 = vpop.f32.mrf.mxu0
        %6586 = vmatprep.mubr.f32.mxu0 %v4603
        %6587 = vmatmul.mubr.f32.gmra.mxu0 %v4602
        %v6588 = vpop.f32.mrf.mxu0
        %v6589 = vadd.f32 %v6044, %v6588
        %v6590 = vpop.f32.mrf.mxu0
        %6591 = vmatprep.mubr.f32.mxu0 %v4611
        %6592 = vmatmul.mubr.f32.gmra.mxu0 %v4610
        %v6593 = vpop.f32.mrf.mxu0
        %v6594 = vadd.f32 %v6049, %v6593
        %v6595 = vpop.f32.mrf.mxu0
        %6596 = vmatprep.mubr.f32.mxu0 %v4619
        %6597 = vmatmul.mubr.f32.gmra.mxu0 %v4618
        %v6598 = vpop.f32.mrf.mxu0
        %v6599 = vadd.f32 %v6054, %v6598
        %v6600 = vpop.f32.mrf.mxu0
        %6601 = vmatprep.mubr.f32.mxu0 %v4627
        %6602 = vmatmul.mubr.f32.gmra.mxu0 %v4626
        %v6603 = vpop.f32.mrf.mxu0
        %v6604 = vadd.f32 %v6059, %v6603
        %v6605 = vpop.f32.mrf.mxu0
        %6606 = vmatprep.mubr.f32.mxu0 %v4635
        %6607 = vmatmul.mubr.f32.gmra.mxu0 %v4634
        %v6608 = vpop.f32.mrf.mxu0
        %v6609 = vadd.f32 %v6064, %v6608
        %v6610 = vpop.f32.mrf.mxu0
        %6611 = vmatprep.mubr.f32.mxu0 %v4643
        %6612 = vmatmul.mubr.f32.gmra.mxu0 %v4642
        %v6613 = vpop.f32.mrf.mxu0
        %v6614 = vadd.f32 %v6069, %v6613
        %v6615 = vpop.f32.mrf.mxu0
        %6616 = vmatprep.mubr.f32.mxu0 %v4651
        %6617 = vmatmul.mubr.f32.gmra.mxu0 %v4650
        %v6618 = vpop.f32.mrf.mxu0
        %v6619 = vadd.f32 %v6074, %v6618
        %v6620 = vpop.f32.mrf.mxu0
        %6621 = vmatprep.mubr.f32.mxu0 %v4659
        %6622 = vmatmul.mubr.f32.gmra.mxu0 %v4658
        %v6623 = vpop.f32.mrf.mxu0
        %v6624 = vadd.f32 %v6079, %v6623
        %v6625 = vpop.f32.mrf.mxu0
        %6626 = vmatprep.mubr.f32.mxu0 %v4667
        %6627 = vmatmul.mubr.f32.gmra.mxu0 %v4666
        %v6628 = vpop.f32.mrf.mxu0
        %v6629 = vadd.f32 %v6084, %v6628
        %v6630 = vpop.f32.mrf.mxu0
        %6631 = vmatprep.mubr.f32.mxu0 %v4675
        %6632 = vmatmul.mubr.f32.gmra.mxu0 %v4674
        %v6633 = vpop.f32.mrf.mxu0
        %v6634 = vadd.f32 %v6089, %v6633
        %v6635 = vpop.f32.mrf.mxu0
        %6636 = vmatprep.mubr.f32.mxu0 %v4683
        %6637 = vmatmul.mubr.f32.gmra.mxu0 %v4682
        %v6638 = vpop.f32.mrf.mxu0
        %v6639 = vadd.f32 %v6094, %v6638
        %v6640 = vpop.f32.mrf.mxu0
        %6641 = vmatprep.mubr.f32.mxu0 %v4691
        %6642 = vmatmul.mubr.f32.gmra.mxu0 %v4690
        %v6643 = vpop.f32.mrf.mxu0
        %v6644 = vadd.f32 %v6099, %v6643
        %v6645 = vpop.f32.mrf.mxu0
        %6646 = vmatprep.mubr.f32.mxu0 %v4699
        %6647 = vmatmul.mubr.f32.gmra.mxu0 %v4698
        %v6648 = vpop.f32.mrf.mxu0
        %v6649 = vadd.f32 %v6104, %v6648
        %v6650 = vpop.f32.mrf.mxu0
        %6651 = vmatprep.mubr.f32.mxu0 %v4707
        %6652 = vmatmul.mubr.f32.gmra.mxu0 %v4706
        %v6653 = vpop.f32.mrf.mxu0
        %v6654 = vadd.f32 %v6109, %v6653
        %v6655 = vpop.f32.mrf.mxu0
        %6656 = vmatprep.mubr.f32.mxu0 %v4715
        %6657 = vmatmul.mubr.f32.gmra.mxu0 %v4714
        %v6658 = vpop.f32.mrf.mxu0
        %v6659 = vadd.f32 %v6114, %v6658
        %v6660 = vpop.f32.mrf.mxu0
        %6661 = vmatprep.mubr.f32.mxu0 %v4723
        %6662 = vmatmul.mubr.f32.gmra.mxu0 %v4722
        %v6663 = vpop.f32.mrf.mxu0
        %v6664 = vadd.f32 %v6119, %v6663
        %v6665 = vpop.f32.mrf.mxu0
        %6666 = vmatprep.mubr.f32.mxu0 %v4731
        %6667 = vmatmul.mubr.f32.gmra.mxu0 %v4730
        %v6668 = vpop.f32.mrf.mxu0
        %v6669 = vadd.f32 %v6124, %v6668
        %v6670 = vpop.f32.mrf.mxu0
        %6671 = vmatprep.mubr.f32.mxu0 %v4739
        %6672 = vmatmul.mubr.f32.gmra.mxu0 %v4738
        %v6673 = vpop.f32.mrf.mxu0
        %v6674 = vadd.f32 %v6129, %v6673
        %v6675 = vpop.f32.mrf.mxu0
        %6676 = vmatprep.mubr.f32.mxu0 %v4747
        %6677 = vmatmul.mubr.f32.gmra.mxu0 %v4746
        %v6678 = vpop.f32.mrf.mxu0
        %v6679 = vadd.f32 %v6134, %v6678
        %v6680 = vpop.f32.mrf.mxu0
        %6681 = vmatprep.mubr.f32.mxu0 %v4755
        %6682 = vmatmul.mubr.f32.gmra.mxu0 %v4754
        %v6683 = vpop.f32.mrf.mxu0
        %v6684 = vadd.f32 %v6139, %v6683
        %v6685 = vpop.f32.mrf.mxu0
        %6686 = vmatprep.mubr.f32.mxu0 %v4763
        %6687 = vmatmul.mubr.f32.gmra.mxu0 %v4762
        %v6688 = vpop.f32.mrf.mxu0
        %v6689 = vadd.f32 %v6144, %v6688
        %v6690 = vpop.f32.mrf.mxu0
        %6691 = vmatprep.mubr.f32.mxu0 %v4771
        %6692 = vmatmul.mubr.f32.gmra.mxu0 %v4770
        %v6693 = vpop.f32.mrf.mxu0
        %v6694 = vadd.f32 %v6149, %v6693
        %v6695 = vpop.f32.mrf.mxu0
        %6696 = vdwg.mxu0
        %6697 = vmatprep.subr.mxu0 0.0
        %6698 = vmatpush1.msra.mxu0 %v505
        %6699 = vmatprep.subr.mxu0 0.0
        %6700 = vmatpush1.msra.mxu0 %v504
        %6701 = vmatprep.subr.mxu0 0.0
        %6702 = vmatpush1.msra.mxu0 %v503
        %6703 = vmatprep.subr.mxu0 0.0
        %6704 = vmatpush1.msra.mxu0 %v502
        %6705 = vmatprep.subr.mxu0 0.0
        %6706 = vmatpush1.msra.mxu0 %v501
        %6707 = vmatprep.subr.mxu0 0.0
        %6708 = vmatpush1.msra.mxu0 %v500
        %6709 = vmatprep.subr.mxu0 0.0
        %6710 = vmatpush1.msra.mxu0 %v499
        %6711 = vmatprep.subr.mxu0 0.0
        %6712 = vmatpush1.msra.mxu0 %v498
        %6713 = vmatprep.subr.mxu0 0.0
        %6714 = vmatpush1.msra.mxu0 %v497
        %6715 = vmatprep.subr.mxu0 0.0
        %6716 = vmatpush1.msra.mxu0 %v496
        %6717 = vmatprep.subr.mxu0 0.0
        %6718 = vmatpush1.msra.mxu0 %v495
        %6719 = vmatprep.subr.mxu0 0.0
        %6720 = vmatpush1.msra.mxu0 %v494
        %6721 = vmatprep.subr.mxu0 0.0
        %6722 = vmatpush1.msra.mxu0 %v493
        %6723 = vmatprep.subr.mxu0 0.0
        %6724 = vmatpush1.msra.mxu0 %v492
        %6725 = vmatprep.subr.mxu0 0.0
        %6726 = vmatpush1.msra.mxu0 %v491
        %6727 = vmatprep.subr.mxu0 0.0
        %6728 = vmatpush1.msra.mxu0 %v490
        %6729 = vmatprep.subr.mxu0 0.0
        %6730 = vmatpush2.msra.mxu0 0.0
        %6731 = vmatprep.subr.mxu0 0.0
        %6732 = vmatpush2.msra.mxu0 0.0
        %6733 = vmatprep.subr.mxu0 0.0
        %6734 = vmatpush2.msra.mxu0 0.0
        %6735 = vmatprep.subr.mxu0 0.0
        %6736 = vmatpush2.msra.mxu0 %v518
        %6737 = vmatprep.subr.mxu0 0.0
        %6738 = vmatpush2.msra.mxu0 %v517
        %6739 = vmatprep.subr.mxu0 0.0
        %6740 = vmatpush2.msra.mxu0 %v516
        %6741 = vmatprep.subr.mxu0 0.0
        %6742 = vmatpush2.msra.mxu0 %v515
        %6743 = vmatprep.subr.mxu0 0.0
        %6744 = vmatpush2.msra.mxu0 %v514
        %6745 = vmatprep.subr.mxu0 0.0
        %6746 = vmatpush2.msra.mxu0 %v513
        %6747 = vmatprep.subr.mxu0 0.0
        %6748 = vmatpush2.msra.mxu0 %v512
        %6749 = vmatprep.subr.mxu0 0.0
        %6750 = vmatpush2.msra.mxu0 %v511
        %6751 = vmatprep.subr.mxu0 0.0
        %6752 = vmatpush2.msra.mxu0 %v510
        %6753 = vmatprep.subr.mxu0 0.0
        %6754 = vmatpush2.msra.mxu0 %v509
        %6755 = vmatprep.subr.mxu0 0.0
        %6756 = vmatpush2.msra.mxu0 %v508
        %6757 = vmatprep.subr.mxu0 0.0
        %6758 = vmatpush2.msra.mxu0 %v507
        %6759 = vmatprep.subr.mxu0 0.0
        %6760 = vmatpush2.msra.mxu0 %v506
        %6761 = vmatprep.mubr.f32.mxu0 %v4775
        %6762 = vmatmul.mubr.f32.gmra.mxu0 %v4012
        %v6763 = vpop.f32.mrf.mxu0
        %v6764 = vadd.f32 %v6219, %v6763
        %v6765 = vpop.f32.mrf.mxu0
        %6766 = vmatprep.mubr.f32.mxu0 %v4778
        %6767 = vmatmul.mubr.f32.gmra.mxu0 %v4020
        %v6768 = vpop.f32.mrf.mxu0
        %v6769 = vadd.f32 %v6224, %v6768
        %v6770 = vpop.f32.mrf.mxu0
        %6771 = vmatprep.mubr.f32.mxu0 %v4781
        %6772 = vmatmul.mubr.f32.gmra.mxu0 %v4028
        %v6773 = vpop.f32.mrf.mxu0
        %v6774 = vadd.f32 %v6229, %v6773
        %v6775 = vpop.f32.mrf.mxu0
        %6776 = vmatprep.mubr.f32.mxu0 %v4784
        %6777 = vmatmul.mubr.f32.gmra.mxu0 %v4036
        %v6778 = vpop.f32.mrf.mxu0
        %v6779 = vadd.f32 %v6234, %v6778
        %v6780 = vpop.f32.mrf.mxu0
        %6781 = vmatprep.mubr.f32.mxu0 %v4787
        %6782 = vmatmul.mubr.f32.gmra.mxu0 %v4044
        %v6783 = vpop.f32.mrf.mxu0
        %v6784 = vadd.f32 %v6239, %v6783
        %v6785 = vpop.f32.mrf.mxu0
        %6786 = vmatprep.mubr.f32.mxu0 %v4790
        %6787 = vmatmul.mubr.f32.gmra.mxu0 %v4052
        %v6788 = vpop.f32.mrf.mxu0
        %v6789 = vadd.f32 %v6244, %v6788
        %v6790 = vpop.f32.mrf.mxu0
        %6791 = vmatprep.mubr.f32.mxu0 %v4793
        %6792 = vmatmul.mubr.f32.gmra.mxu0 %v4060
        %v6793 = vpop.f32.mrf.mxu0
        %v6794 = vadd.f32 %v6249, %v6793
        %v6795 = vpop.f32.mrf.mxu0
        %6796 = vmatprep.mubr.f32.mxu0 %v4796
        %6797 = vmatmul.mubr.f32.gmra.mxu0 %v4068
        %v6798 = vpop.f32.mrf.mxu0
        %v6799 = vadd.f32 %v6254, %v6798
        %v6800 = vpop.f32.mrf.mxu0
        %6801 = vmatprep.mubr.f32.mxu0 %v4799
        %6802 = vmatmul.mubr.f32.gmra.mxu0 %v4076
        %v6803 = vpop.f32.mrf.mxu0
        %v6804 = vadd.f32 %v6259, %v6803
        %v6805 = vpop.f32.mrf.mxu0
        %6806 = vmatprep.mubr.f32.mxu0 %v4802
        %6807 = vmatmul.mubr.f32.gmra.mxu0 %v4084
        %v6808 = vpop.f32.mrf.mxu0
        %v6809 = vadd.f32 %v6264, %v6808
        %v6810 = vpop.f32.mrf.mxu0
        %6811 = vmatprep.mubr.f32.mxu0 %v4805
        %6812 = vmatmul.mubr.f32.gmra.mxu0 %v4092
        %v6813 = vpop.f32.mrf.mxu0
        %v6814 = vadd.f32 %v6269, %v6813
        %v6815 = vpop.f32.mrf.mxu0
        %6816 = vmatprep.mubr.f32.mxu0 %v4808
        %6817 = vmatmul.mubr.f32.gmra.mxu0 %v4100
        %v6818 = vpop.f32.mrf.mxu0
        %v6819 = vadd.f32 %v6274, %v6818
        %v6820 = vpop.f32.mrf.mxu0
        %6821 = vmatprep.mubr.f32.mxu0 %v4811
        %6822 = vmatmul.mubr.f32.gmra.mxu0 %v4108
        %v6823 = vpop.f32.mrf.mxu0
        %v6824 = vadd.f32 %v6279, %v6823
        %v6825 = vpop.f32.mrf.mxu0
        %6826 = vmatprep.mubr.f32.mxu0 %v4814
        %6827 = vmatmul.mubr.f32.gmra.mxu0 %v4116
        %v6828 = vpop.f32.mrf.mxu0
        %v6829 = vadd.f32 %v6284, %v6828
        %v6830 = vpop.f32.mrf.mxu0
        %6831 = vmatprep.mubr.f32.mxu0 %v4817
        %6832 = vmatmul.mubr.f32.gmra.mxu0 %v4124
        %v6833 = vpop.f32.mrf.mxu0
        %v6834 = vadd.f32 %v6289, %v6833
        %v6835 = vpop.f32.mrf.mxu0
        %6836 = vmatprep.mubr.f32.mxu0 %v4820
        %6837 = vmatmul.mubr.f32.gmra.mxu0 %v4132
        %v6838 = vpop.f32.mrf.mxu0
        %v6839 = vadd.f32 %v6294, %v6838
        %v6840 = vpop.f32.mrf.mxu0
        %6841 = vmatprep.mubr.f32.mxu0 %v4823
        %6842 = vmatmul.mubr.f32.gmra.mxu0 %v4140
        %v6843 = vpop.f32.mrf.mxu0
        %v6844 = vadd.f32 %v6299, %v6843
        %v6845 = vpop.f32.mrf.mxu0
        %6846 = vmatprep.mubr.f32.mxu0 %v4826
        %6847 = vmatmul.mubr.f32.gmra.mxu0 %v4148
        %v6848 = vpop.f32.mrf.mxu0
        %v6849 = vadd.f32 %v6304, %v6848
        %v6850 = vpop.f32.mrf.mxu0
        %6851 = vmatprep.mubr.f32.mxu0 %v4829
        %6852 = vmatmul.mubr.f32.gmra.mxu0 %v4156
        %v6853 = vpop.f32.mrf.mxu0
        %v6854 = vadd.f32 %v6309, %v6853
        %v6855 = vpop.f32.mrf.mxu0
        %6856 = vmatprep.mubr.f32.mxu0 %v4832
        %6857 = vmatmul.mubr.f32.gmra.mxu0 %v4164
        %v6858 = vpop.f32.mrf.mxu0
        %v6859 = vadd.f32 %v6314, %v6858
        %v6860 = vpop.f32.mrf.mxu0
        %6861 = vmatprep.mubr.f32.mxu0 %v4835
        %6862 = vmatmul.mubr.f32.gmra.mxu0 %v4172
        %v6863 = vpop.f32.mrf.mxu0
        %v6864 = vadd.f32 %v6319, %v6863
        %v6865 = vpop.f32.mrf.mxu0
        %6866 = vmatprep.mubr.f32.mxu0 %v4838
        %6867 = vmatmul.mubr.f32.gmra.mxu0 %v4180
        %v6868 = vpop.f32.mrf.mxu0
        %v6869 = vadd.f32 %v6324, %v6868
        %v6870 = vpop.f32.mrf.mxu0
        %6871 = vmatprep.mubr.f32.mxu0 %v4841
        %6872 = vmatmul.mubr.f32.gmra.mxu0 %v4188
        %v6873 = vpop.f32.mrf.mxu0
        %v6874 = vadd.f32 %v6329, %v6873
        %v6875 = vpop.f32.mrf.mxu0
        %6876 = vmatprep.mubr.f32.mxu0 %v4844
        %6877 = vmatmul.mubr.f32.gmra.mxu0 %v4196
        %v6878 = vpop.f32.mrf.mxu0
        %v6879 = vadd.f32 %v6334, %v6878
        %v6880 = vpop.f32.mrf.mxu0
        %6881 = vmatprep.mubr.f32.mxu0 %v4847
        %6882 = vmatmul.mubr.f32.gmra.mxu0 %v4204
        %v6883 = vpop.f32.mrf.mxu0
        %v6884 = vadd.f32 %v6339, %v6883
        %v6885 = vpop.f32.mrf.mxu0
        %6886 = vmatprep.mubr.f32.mxu0 %v4850
        %6887 = vmatmul.mubr.f32.gmra.mxu0 %v4212
        %v6888 = vpop.f32.mrf.mxu0
        %v6889 = vadd.f32 %v6344, %v6888
        %v6890 = vpop.f32.mrf.mxu0
        %6891 = vmatprep.mubr.f32.mxu0 %v4853
        %6892 = vmatmul.mubr.f32.gmra.mxu0 %v4220
        %v6893 = vpop.f32.mrf.mxu0
        %v6894 = vadd.f32 %v6349, %v6893
        %v6895 = vpop.f32.mrf.mxu0
        %6896 = vmatprep.mubr.f32.mxu0 %v4856
        %6897 = vmatmul.mubr.f32.gmra.mxu0 %v4228
        %v6898 = vpop.f32.mrf.mxu0
        %v6899 = vadd.f32 %v6354, %v6898
        %v6900 = vpop.f32.mrf.mxu0
        %6901 = vmatprep.mubr.f32.mxu0 %v4859
        %6902 = vmatmul.mubr.f32.gmra.mxu0 %v4236
        %v6903 = vpop.f32.mrf.mxu0
        %v6904 = vadd.f32 %v6359, %v6903
        %v6905 = vpop.f32.mrf.mxu0
        %6906 = vmatprep.mubr.f32.mxu0 %v4862
        %6907 = vmatmul.mubr.f32.gmra.mxu0 %v4244
        %v6908 = vpop.f32.mrf.mxu0
        %v6909 = vadd.f32 %v6364, %v6908
        %v6910 = vpop.f32.mrf.mxu0
        %6911 = vmatprep.mubr.f32.mxu0 %v4865
        %6912 = vmatmul.mubr.f32.gmra.mxu0 %v4252
        %v6913 = vpop.f32.mrf.mxu0
        %v6914 = vadd.f32 %v6369, %v6913
        %v6915 = vpop.f32.mrf.mxu0
        %6916 = vmatprep.mubr.f32.mxu0 %v4868
        %6917 = vmatmul.mubr.f32.gmra.mxu0 %v4260
        %v6918 = vpop.f32.mrf.mxu0
        %v6919 = vadd.f32 %v6374, %v6918
        %v6920 = vpop.f32.mrf.mxu0
        %6921 = vmatprep.mubr.f32.mxu0 %v4871
        %6922 = vmatmul.mubr.f32.gmra.mxu0 %v4268
        %v6923 = vpop.f32.mrf.mxu0
        %v6924 = vadd.f32 %v6379, %v6923
        %v6925 = vpop.f32.mrf.mxu0
        %6926 = vmatprep.mubr.f32.mxu0 %v4874
        %6927 = vmatmul.mubr.f32.gmra.mxu0 %v4276
        %v6928 = vpop.f32.mrf.mxu0
        %v6929 = vadd.f32 %v6384, %v6928
        %v6930 = vpop.f32.mrf.mxu0
        %6931 = vmatprep.mubr.f32.mxu0 %v4877
        %6932 = vmatmul.mubr.f32.gmra.mxu0 %v4284
        %v6933 = vpop.f32.mrf.mxu0
        %v6934 = vadd.f32 %v6389, %v6933
        %v6935 = vpop.f32.mrf.mxu0
        %6936 = vmatprep.mubr.f32.mxu0 %v4880
        %6937 = vmatmul.mubr.f32.gmra.mxu0 %v4292
        %v6938 = vpop.f32.mrf.mxu0
        %v6939 = vadd.f32 %v6394, %v6938
        %v6940 = vpop.f32.mrf.mxu0
        %6941 = vmatprep.mubr.f32.mxu0 %v4883
        %6942 = vmatmul.mubr.f32.gmra.mxu0 %v4300
        %v6943 = vpop.f32.mrf.mxu0
        %v6944 = vadd.f32 %v6399, %v6943
        %v6945 = vpop.f32.mrf.mxu0
        %6946 = vmatprep.mubr.f32.mxu0 %v4886
        %6947 = vmatmul.mubr.f32.gmra.mxu0 %v4308
        %v6948 = vpop.f32.mrf.mxu0
        %v6949 = vadd.f32 %v6404, %v6948
        %v6950 = vpop.f32.mrf.mxu0
        %6951 = vmatprep.mubr.f32.mxu0 %v4889
        %6952 = vmatmul.mubr.f32.gmra.mxu0 %v4316
        %v6953 = vpop.f32.mrf.mxu0
        %v6954 = vadd.f32 %v6409, %v6953
        %v6955 = vpop.f32.mrf.mxu0
        %6956 = vmatprep.mubr.f32.mxu0 %v4892
        %6957 = vmatmul.mubr.f32.gmra.mxu0 %v4324
        %v6958 = vpop.f32.mrf.mxu0
        %v6959 = vadd.f32 %v6414, %v6958
        %v6960 = vpop.f32.mrf.mxu0
        %6961 = vmatprep.mubr.f32.mxu0 %v4895
        %6962 = vmatmul.mubr.f32.gmra.mxu0 %v4332
        %v6963 = vpop.f32.mrf.mxu0
        %v6964 = vadd.f32 %v6419, %v6963
        %v6965 = vpop.f32.mrf.mxu0
        %6966 = vmatprep.mubr.f32.mxu0 %v4898
        %6967 = vmatmul.mubr.f32.gmra.mxu0 %v4340
        %v6968 = vpop.f32.mrf.mxu0
        %v6969 = vadd.f32 %v6424, %v6968
        %v6970 = vpop.f32.mrf.mxu0
        %6971 = vmatprep.mubr.f32.mxu0 %v4901
        %6972 = vmatmul.mubr.f32.gmra.mxu0 %v4348
        %v6973 = vpop.f32.mrf.mxu0
        %v6974 = vadd.f32 %v6429, %v6973
        %v6975 = vpop.f32.mrf.mxu0
        %6976 = vmatprep.mubr.f32.mxu0 %v4904
        %6977 = vmatmul.mubr.f32.gmra.mxu0 %v4356
        %v6978 = vpop.f32.mrf.mxu0
        %v6979 = vadd.f32 %v6434, %v6978
        %v6980 = vpop.f32.mrf.mxu0
        %6981 = vmatprep.mubr.f32.mxu0 %v4907
        %6982 = vmatmul.mubr.f32.gmra.mxu0 %v4364
        %v6983 = vpop.f32.mrf.mxu0
        %v6984 = vadd.f32 %v6439, %v6983
        %v6985 = vpop.f32.mrf.mxu0
        %6986 = vmatprep.mubr.f32.mxu0 %v4910
        %6987 = vmatmul.mubr.f32.gmra.mxu0 %v4372
        %v6988 = vpop.f32.mrf.mxu0
        %v6989 = vadd.f32 %v6444, %v6988
        %v6990 = vpop.f32.mrf.mxu0
        %6991 = vmatprep.mubr.f32.mxu0 %v4913
        %6992 = vmatmul.mubr.f32.gmra.mxu0 %v4380
        %v6993 = vpop.f32.mrf.mxu0
        %v6994 = vadd.f32 %v6449, %v6993
        %v6995 = vpop.f32.mrf.mxu0
        %6996 = vmatprep.mubr.f32.mxu0 %v4916
        %6997 = vmatmul.mubr.f32.gmra.mxu0 %v4388
        %v6998 = vpop.f32.mrf.mxu0
        %v6999 = vadd.f32 %v6454, %v6998
        %v7000 = vpop.f32.mrf.mxu0
        %7001 = vmatprep.mubr.f32.mxu0 %v4919
        %7002 = vmatmul.mubr.f32.gmra.mxu0 %v4396
        %v7003 = vpop.f32.mrf.mxu0
        %v7004 = vadd.f32 %v6459, %v7003
        %v7005 = vpop.f32.mrf.mxu0
        %7006 = vmatprep.mubr.f32.mxu0 %v4922
        %7007 = vmatmul.mubr.f32.gmra.mxu0 %v4404
        %v7008 = vpop.f32.mrf.mxu0
        %v7009 = vadd.f32 %v6464, %v7008
        %v7010 = vpop.f32.mrf.mxu0
        %7011 = vmatprep.mubr.f32.mxu0 %v4925
        %7012 = vmatmul.mubr.f32.gmra.mxu0 %v4412
        %v7013 = vpop.f32.mrf.mxu0
        %v7014 = vadd.f32 %v6469, %v7013
        %v7015 = vpop.f32.mrf.mxu0
        %7016 = vmatprep.mubr.f32.mxu0 %v4928
        %7017 = vmatmul.mubr.f32.gmra.mxu0 %v4420
        %v7018 = vpop.f32.mrf.mxu0
        %v7019 = vadd.f32 %v6474, %v7018
        %v7020 = vpop.f32.mrf.mxu0
        %7021 = vmatprep.mubr.f32.mxu0 %v4931
        %7022 = vmatmul.mubr.f32.gmra.mxu0 %v4428
        %v7023 = vpop.f32.mrf.mxu0
        %v7024 = vadd.f32 %v6479, %v7023
        %v7025 = vpop.f32.mrf.mxu0
        %7026 = vmatprep.mubr.f32.mxu0 %v4934
        %7027 = vmatmul.mubr.f32.gmra.mxu0 %v4436
        %v7028 = vpop.f32.mrf.mxu0
        %v7029 = vadd.f32 %v6484, %v7028
        %v7030 = vpop.f32.mrf.mxu0
        %7031 = vmatprep.mubr.f32.mxu0 %v4937
        %7032 = vmatmul.mubr.f32.gmra.mxu0 %v4444
        %v7033 = vpop.f32.mrf.mxu0
        %v7034 = vadd.f32 %v6489, %v7033
        %v7035 = vpop.f32.mrf.mxu0
        %7036 = vmatprep.mubr.f32.mxu0 %v4940
        %7037 = vmatmul.mubr.f32.gmra.mxu0 %v4452
        %v7038 = vpop.f32.mrf.mxu0
        %v7039 = vadd.f32 %v6494, %v7038
        %v7040 = vpop.f32.mrf.mxu0
        %7041 = vmatprep.mubr.f32.mxu0 %v4943
        %7042 = vmatmul.mubr.f32.gmra.mxu0 %v4460
        %v7043 = vpop.f32.mrf.mxu0
        %v7044 = vadd.f32 %v6499, %v7043
        %v7045 = vpop.f32.mrf.mxu0
        %7046 = vmatprep.mubr.f32.mxu0 %v4946
        %7047 = vmatmul.mubr.f32.gmra.mxu0 %v4468
        %v7048 = vpop.f32.mrf.mxu0
        %v7049 = vadd.f32 %v6504, %v7048
        %v7050 = vpop.f32.mrf.mxu0
        %7051 = vmatprep.mubr.f32.mxu0 %v4949
        %7052 = vmatmul.mubr.f32.gmra.mxu0 %v4476
        %v7053 = vpop.f32.mrf.mxu0
        %v7054 = vadd.f32 %v6509, %v7053
        %v7055 = vpop.f32.mrf.mxu0
        %7056 = vmatprep.mubr.f32.mxu0 %v4952
        %7057 = vmatmul.mubr.f32.gmra.mxu0 %v4484
        %v7058 = vpop.f32.mrf.mxu0
        %v7059 = vadd.f32 %v6514, %v7058
        %v7060 = vpop.f32.mrf.mxu0
        %7061 = vmatprep.mubr.f32.mxu0 %v4955
        %7062 = vmatmul.mubr.f32.gmra.mxu0 %v4492
        %v7063 = vpop.f32.mrf.mxu0
        %v7064 = vadd.f32 %v6519, %v7063
        %v7065 = vpop.f32.mrf.mxu0
        %7066 = vmatprep.mubr.f32.mxu0 %v4958
        %7067 = vmatmul.mubr.f32.gmra.mxu0 %v4500
        %v7068 = vpop.f32.mrf.mxu0
        %v7069 = vadd.f32 %v6524, %v7068
        %v7070 = vpop.f32.mrf.mxu0
        %7071 = vmatprep.mubr.f32.mxu0 %v4961
        %7072 = vmatmul.mubr.f32.gmra.mxu0 %v4508
        %v7073 = vpop.f32.mrf.mxu0
        %v7074 = vadd.f32 %v6529, %v7073
        %v7075 = vpop.f32.mrf.mxu0
        %7076 = vmatprep.mubr.f32.mxu0 %v4964
        %7077 = vmatmul.mubr.f32.gmra.mxu0 %v4516
        %v7078 = vpop.f32.mrf.mxu0
        %v7079 = vadd.f32 %v6534, %v7078
        %v7080 = vpop.f32.mrf.mxu0
        %7081 = vmatprep.mubr.f32.mxu0 %v4967
        %7082 = vmatmul.mubr.f32.gmra.mxu0 %v4524
        %v7083 = vpop.f32.mrf.mxu0
        %v7084 = vadd.f32 %v6539, %v7083
        %v7085 = vpop.f32.mrf.mxu0
        %7086 = vmatprep.mubr.f32.mxu0 %v4970
        %7087 = vmatmul.mubr.f32.gmra.mxu0 %v4532
        %v7088 = vpop.f32.mrf.mxu0
        %v7089 = vadd.f32 %v6544, %v7088
        %v7090 = vpop.f32.mrf.mxu0
        %7091 = vmatprep.mubr.f32.mxu0 %v4973
        %7092 = vmatmul.mubr.f32.gmra.mxu0 %v4540
        %v7093 = vpop.f32.mrf.mxu0
        %v7094 = vadd.f32 %v6549, %v7093
        %v7095 = vpop.f32.mrf.mxu0
        %7096 = vmatprep.mubr.f32.mxu0 %v4976
        %7097 = vmatmul.mubr.f32.gmra.mxu0 %v4548
        %v7098 = vpop.f32.mrf.mxu0
        %v7099 = vadd.f32 %v6554, %v7098
        %v7100 = vpop.f32.mrf.mxu0
        %7101 = vmatprep.mubr.f32.mxu0 %v4979
        %7102 = vmatmul.mubr.f32.gmra.mxu0 %v4556
        %v7103 = vpop.f32.mrf.mxu0
        %v7104 = vadd.f32 %v6559, %v7103
        %v7105 = vpop.f32.mrf.mxu0
        %7106 = vmatprep.mubr.f32.mxu0 %v4982
        %7107 = vmatmul.mubr.f32.gmra.mxu0 %v4564
        %v7108 = vpop.f32.mrf.mxu0
        %v7109 = vadd.f32 %v6564, %v7108
        %v7110 = vpop.f32.mrf.mxu0
        %7111 = vmatprep.mubr.f32.mxu0 %v4985
        %7112 = vmatmul.mubr.f32.gmra.mxu0 %v4572
        %v7113 = vpop.f32.mrf.mxu0
        %v7114 = vadd.f32 %v6569, %v7113
        %v7115 = vpop.f32.mrf.mxu0
        %7116 = vmatprep.mubr.f32.mxu0 %v4988
        %7117 = vmatmul.mubr.f32.gmra.mxu0 %v4580
        %v7118 = vpop.f32.mrf.mxu0
        %v7119 = vadd.f32 %v6574, %v7118
        %v7120 = vpop.f32.mrf.mxu0
        %7121 = vmatprep.mubr.f32.mxu0 %v4991
        %7122 = vmatmul.mubr.f32.gmra.mxu0 %v4588
        %v7123 = vpop.f32.mrf.mxu0
        %v7124 = vadd.f32 %v6579, %v7123
        %v7125 = vpop.f32.mrf.mxu0
        %7126 = vmatprep.mubr.f32.mxu0 %v4994
        %7127 = vmatmul.mubr.f32.gmra.mxu0 %v4596
        %v7128 = vpop.f32.mrf.mxu0
        %v7129 = vadd.f32 %v6584, %v7128
        %v7130 = vpop.f32.mrf.mxu0
        %7131 = vmatprep.mubr.f32.mxu0 %v4997
        %7132 = vmatmul.mubr.f32.gmra.mxu0 %v4604
        %v7133 = vpop.f32.mrf.mxu0
        %v7134 = vadd.f32 %v6589, %v7133
        %v7135 = vpop.f32.mrf.mxu0
        %7136 = vmatprep.mubr.f32.mxu0 %v5000
        %7137 = vmatmul.mubr.f32.gmra.mxu0 %v4612
        %v7138 = vpop.f32.mrf.mxu0
        %v7139 = vadd.f32 %v6594, %v7138
        %v7140 = vpop.f32.mrf.mxu0
        %7141 = vmatprep.mubr.f32.mxu0 %v5003
        %7142 = vmatmul.mubr.f32.gmra.mxu0 %v4620
        %v7143 = vpop.f32.mrf.mxu0
        %v7144 = vadd.f32 %v6599, %v7143
        %v7145 = vpop.f32.mrf.mxu0
        %7146 = vmatprep.mubr.f32.mxu0 %v5006
        %7147 = vmatmul.mubr.f32.gmra.mxu0 %v4628
        %v7148 = vpop.f32.mrf.mxu0
        %v7149 = vadd.f32 %v6604, %v7148
        %v7150 = vpop.f32.mrf.mxu0
        %7151 = vmatprep.mubr.f32.mxu0 %v5009
        %7152 = vmatmul.mubr.f32.gmra.mxu0 %v4636
        %v7153 = vpop.f32.mrf.mxu0
        %v7154 = vadd.f32 %v6609, %v7153
        %v7155 = vpop.f32.mrf.mxu0
        %7156 = vmatprep.mubr.f32.mxu0 %v5012
        %7157 = vmatmul.mubr.f32.gmra.mxu0 %v4644
        %v7158 = vpop.f32.mrf.mxu0
        %v7159 = vadd.f32 %v6614, %v7158
        %v7160 = vpop.f32.mrf.mxu0
        %7161 = vmatprep.mubr.f32.mxu0 %v5015
        %7162 = vmatmul.mubr.f32.gmra.mxu0 %v4652
        %v7163 = vpop.f32.mrf.mxu0
        %v7164 = vadd.f32 %v6619, %v7163
        %v7165 = vpop.f32.mrf.mxu0
        %7166 = vmatprep.mubr.f32.mxu0 %v5018
        %7167 = vmatmul.mubr.f32.gmra.mxu0 %v4660
        %v7168 = vpop.f32.mrf.mxu0
        %v7169 = vadd.f32 %v6624, %v7168
        %v7170 = vpop.f32.mrf.mxu0
        %7171 = vmatprep.mubr.f32.mxu0 %v5021
        %7172 = vmatmul.mubr.f32.gmra.mxu0 %v4668
        %v7173 = vpop.f32.mrf.mxu0
        %v7174 = vadd.f32 %v6629, %v7173
        %v7175 = vpop.f32.mrf.mxu0
        %7176 = vmatprep.mubr.f32.mxu0 %v5024
        %7177 = vmatmul.mubr.f32.gmra.mxu0 %v4676
        %v7178 = vpop.f32.mrf.mxu0
        %v7179 = vadd.f32 %v6634, %v7178
        %v7180 = vpop.f32.mrf.mxu0
        %7181 = vmatprep.mubr.f32.mxu0 %v5027
        %7182 = vmatmul.mubr.f32.gmra.mxu0 %v4684
        %v7183 = vpop.f32.mrf.mxu0
        %v7184 = vadd.f32 %v6639, %v7183
        %v7185 = vpop.f32.mrf.mxu0
        %7186 = vmatprep.mubr.f32.mxu0 %v5030
        %7187 = vmatmul.mubr.f32.gmra.mxu0 %v4692
        %v7188 = vpop.f32.mrf.mxu0
        %v7189 = vadd.f32 %v6644, %v7188
        %v7190 = vpop.f32.mrf.mxu0
        %7191 = vmatprep.mubr.f32.mxu0 %v5033
        %7192 = vmatmul.mubr.f32.gmra.mxu0 %v4700
        %v7193 = vpop.f32.mrf.mxu0
        %v7194 = vadd.f32 %v6649, %v7193
        %v7195 = vpop.f32.mrf.mxu0
        %7196 = vmatprep.mubr.f32.mxu0 %v5036
        %7197 = vmatmul.mubr.f32.gmra.mxu0 %v4708
        %v7198 = vpop.f32.mrf.mxu0
        %v7199 = vadd.f32 %v6654, %v7198
        %v7200 = vpop.f32.mrf.mxu0
        %7201 = vmatprep.mubr.f32.mxu0 %v5039
        %7202 = vmatmul.mubr.f32.gmra.mxu0 %v4716
        %v7203 = vpop.f32.mrf.mxu0
        %v7204 = vadd.f32 %v6659, %v7203
        %v7205 = vpop.f32.mrf.mxu0
        %7206 = vmatprep.mubr.f32.mxu0 %v5042
        %7207 = vmatmul.mubr.f32.gmra.mxu0 %v4724
        %v7208 = vpop.f32.mrf.mxu0
        %v7209 = vadd.f32 %v6664, %v7208
        %v7210 = vpop.f32.mrf.mxu0
        %7211 = vmatprep.mubr.f32.mxu0 %v5045
        %7212 = vmatmul.mubr.f32.gmra.mxu0 %v4732
        %v7213 = vpop.f32.mrf.mxu0
        %v7214 = vadd.f32 %v6669, %v7213
        %v7215 = vpop.f32.mrf.mxu0
        %7216 = vmatprep.mubr.f32.mxu0 %v5048
        %7217 = vmatmul.mubr.f32.gmra.mxu0 %v4740
        %v7218 = vpop.f32.mrf.mxu0
        %v7219 = vadd.f32 %v6674, %v7218
        %v7220 = vpop.f32.mrf.mxu0
        %7221 = vmatprep.mubr.f32.mxu0 %v5051
        %7222 = vmatmul.mubr.f32.gmra.mxu0 %v4748
        %v7223 = vpop.f32.mrf.mxu0
        %v7224 = vadd.f32 %v6679, %v7223
        %v7225 = vpop.f32.mrf.mxu0
        %7226 = vmatprep.mubr.f32.mxu0 %v5054
        %7227 = vmatmul.mubr.f32.gmra.mxu0 %v4756
        %v7228 = vpop.f32.mrf.mxu0
        %v7229 = vadd.f32 %v6684, %v7228
        %v7230 = vpop.f32.mrf.mxu0
        %7231 = vmatprep.mubr.f32.mxu0 %v5057
        %7232 = vmatmul.mubr.f32.gmra.mxu0 %v4764
        %v7233 = vpop.f32.mrf.mxu0
        %v7234 = vadd.f32 %v6689, %v7233
        %v7235 = vpop.f32.mrf.mxu0
        %7236 = vmatprep.mubr.f32.mxu0 %v5060
        %7237 = vmatmul.mubr.f32.gmra.mxu0 %v4772
        %v7238 = vpop.f32.mrf.mxu0
        %v7239 = vadd.f32 %v6694, %v7238
        %v7240 = vpop.f32.mrf.mxu0
        %7241 = vdwg.mxu0
        %v7242 = vmul.f32 %v6764, %v1800
        %v7243 = vmul.f32 %v6769, %v1805
        %v7244 = vmul.f32 %v6774, %v1810
        %v7245 = vmul.f32 %v6779, %v1815
        %v7246 = vmul.f32 %v6784, %v1820
        %v7247 = vmul.f32 %v6789, %v1825
        %v7248 = vmul.f32 %v6794, %v1830
        %v7249 = vmul.f32 %v6799, %v1835
        %v7250 = vmul.f32 %v6804, %v1840
        %v7251 = vmul.f32 %v6809, %v1845
        %v7252 = vmul.f32 %v6814, %v1850
        %v7253 = vmul.f32 %v6819, %v1855
        %v7254 = vmul.f32 %v6824, %v1860
        %v7255 = vmul.f32 %v6829, %v1865
        %v7256 = vmul.f32 %v6834, %v1870
        %v7257 = vmul.f32 %v6839, %v1875
        %v7258 = vmul.f32 %v6844, %v1880
        %v7259 = vmul.f32 %v6849, %v1885
        %v7260 = vmul.f32 %v6854, %v1890
        %v7261 = vmul.f32 %v6859, %v1895
        %v7262 = vmul.f32 %v6864, %v1900
        %v7263 = vmul.f32 %v6869, %v1905
        %v7264 = vmul.f32 %v6874, %v1910
        %v7265 = vmul.f32 %v6879, %v1915
        %v7266 = vmul.f32 %v6884, %v1920
        %v7267 = vmul.f32 %v6889, %v1925
        %v7268 = vmul.f32 %v6894, %v1930
        %v7269 = vmul.f32 %v6899, %v1935
        %v7270 = vmul.f32 %v6904, %v1940
        %v7271 = vmul.f32 %v6909, %v1945
        %v7272 = vmul.f32 %v6914, %v1950
        %v7273 = vmul.f32 %v6919, %v1955
        %v7274 = vmul.f32 %v6924, %v1960
        %v7275 = vmul.f32 %v6929, %v1965
        %v7276 = vmul.f32 %v6934, %v1970
        %v7277 = vmul.f32 %v6939, %v1975
        %v7278 = vmul.f32 %v6944, %v1980
        %v7279 = vmul.f32 %v6949, %v1985
        %v7280 = vmul.f32 %v6954, %v1990
        %v7281 = vmul.f32 %v6959, %v1995
        %v7282 = vmul.f32 %v6964, %v2000
        %v7283 = vmul.f32 %v6969, %v2005
        %v7284 = vmul.f32 %v6974, %v2010
        %v7285 = vmul.f32 %v6979, %v2015
        %v7286 = vmul.f32 %v6984, %v2020
        %v7287 = vmul.f32 %v6989, %v2025
        %v7288 = vmul.f32 %v6994, %v2030
        %v7289 = vmul.f32 %v6999, %v2035
        %v7290 = vmul.f32 %v7004, %v2040
        %v7291 = vmul.f32 %v7009, %v2045
        %v7292 = vmul.f32 %v7014, %v2050
        %v7293 = vmul.f32 %v7019, %v2055
        %v7294 = vmul.f32 %v7024, %v2060
        %v7295 = vmul.f32 %v7029, %v2065
        %v7296 = vmul.f32 %v7034, %v2070
        %v7297 = vmul.f32 %v7039, %v2075
        %v7298 = vmul.f32 %v7044, %v2080
        %v7299 = vmul.f32 %v7049, %v2085
        %v7300 = vmul.f32 %v7054, %v2090
        %v7301 = vmul.f32 %v7059, %v2095
        %v7302 = vmul.f32 %v7064, %v2100
        %v7303 = vmul.f32 %v7069, %v2105
        %v7304 = vmul.f32 %v7074, %v2110
        %v7305 = vmul.f32 %v7079, %v2115
        %v7306 = vmul.f32 %v7084, %v2120
        %v7307 = vmul.f32 %v7089, %v2125
        %v7308 = vmul.f32 %v7094, %v2130
        %v7309 = vmul.f32 %v7099, %v2135
        %v7310 = vmul.f32 %v7104, %v2140
        %v7311 = vmul.f32 %v7109, %v2145
        %v7312 = vmul.f32 %v7114, %v2150
        %v7313 = vmul.f32 %v7119, %v2155
        %v7314 = vmul.f32 %v7124, %v2160
        %v7315 = vmul.f32 %v7129, %v2165
        %v7316 = vmul.f32 %v7134, %v2170
        %v7317 = vmul.f32 %v7139, %v2175
        %v7318 = vmul.f32 %v7144, %v2180
        %v7319 = vmul.f32 %v7149, %v2185
        %v7320 = vmul.f32 %v7154, %v2190
        %v7321 = vmul.f32 %v7159, %v2195
        %v7322 = vmul.f32 %v7164, %v2200
        %v7323 = vmul.f32 %v7169, %v2205
        %v7324 = vmul.f32 %v7174, %v2210
        %v7325 = vmul.f32 %v7179, %v2215
        %v7326 = vmul.f32 %v7184, %v2220
        %v7327 = vmul.f32 %v7189, %v2225
        %v7328 = vmul.f32 %v7194, %v2230
        %v7329 = vmul.f32 %v7199, %v2235
        %v7330 = vmul.f32 %v7204, %v2240
        %v7331 = vmul.f32 %v7209, %v2245
        %v7332 = vmul.f32 %v7214, %v2250
        %v7333 = vmul.f32 %v7219, %v2255
        %v7334 = vmul.f32 %v7224, %v2260
        %v7335 = vmul.f32 %v7229, %v2265
        %v7336 = vmul.f32 %v7234, %v2270
        %v7337 = vmul.f32 %v7239, %v2275
        %v7338 = vsel %vm1444, %v7242, 0.0
        %7339 = vadd.xlane.f32.xlu0 %v7338
        %v7340 = vpop.xlane.xlu0 %7339
        %v7341 = vsel %vm1444, %v7243, 0.0
        %7342 = vadd.xlane.f32.xlu0 %v7341
        %v7343 = vpop.xlane.xlu0 %7342
        %v7344 = vsel %vm1444, %v7244, 0.0
        %7345 = vadd.xlane.f32.xlu0 %v7344
        %v7346 = vpop.xlane.xlu0 %7345
        %v7347 = vsel %vm1444, %v7245, 0.0
        %7348 = vadd.xlane.f32.xlu0 %v7347
        %v7349 = vpop.xlane.xlu0 %7348
        %v7350 = vsel %vm1444, %v7246, 0.0
        %7351 = vadd.xlane.f32.xlu0 %v7350
        %v7352 = vpop.xlane.xlu0 %7351
        %v7353 = vsel %vm1444, %v7247, 0.0
        %7354 = vadd.xlane.f32.xlu0 %v7353
        %v7355 = vpop.xlane.xlu0 %7354
        %v7356 = vsel %vm1444, %v7248, 0.0
        %7357 = vadd.xlane.f32.xlu0 %v7356
        %v7358 = vpop.xlane.xlu0 %7357
        %v7359 = vsel %vm1444, %v7249, 0.0
        %7360 = vadd.xlane.f32.xlu0 %v7359
        %v7361 = vpop.xlane.xlu0 %7360
        %v7362 = vsel %vm1444, %v7250, 0.0
        %7363 = vadd.xlane.f32.xlu0 %v7362
        %v7364 = vpop.xlane.xlu0 %7363
        %v7365 = vsel %vm1444, %v7251, 0.0
        %7366 = vadd.xlane.f32.xlu0 %v7365
        %v7367 = vpop.xlane.xlu0 %7366
        %v7368 = vsel %vm1444, %v7252, 0.0
        %7369 = vadd.xlane.f32.xlu0 %v7368
        %v7370 = vpop.xlane.xlu0 %7369
        %v7371 = vsel %vm1444, %v7253, 0.0
        %7372 = vadd.xlane.f32.xlu0 %v7371
        %v7373 = vpop.xlane.xlu0 %7372
        %v7374 = vsel %vm1444, %v7254, 0.0
        %7375 = vadd.xlane.f32.xlu0 %v7374
        %v7376 = vpop.xlane.xlu0 %7375
        %v7377 = vsel %vm1444, %v7255, 0.0
        %7378 = vadd.xlane.f32.xlu0 %v7377
        %v7379 = vpop.xlane.xlu0 %7378
        %v7380 = vsel %vm1444, %v7256, 0.0
        %7381 = vadd.xlane.f32.xlu0 %v7380
        %v7382 = vpop.xlane.xlu0 %7381
        %v7383 = vsel %vm1444, %v7257, 0.0
        %7384 = vadd.xlane.f32.xlu0 %v7383
        %v7385 = vpop.xlane.xlu0 %7384
        %v7386 = vsel %vm1444, %v7258, 0.0
        %7387 = vadd.xlane.f32.xlu0 %v7386
        %v7388 = vpop.xlane.xlu0 %7387
        %v7389 = vsel %vm1444, %v7259, 0.0
        %7390 = vadd.xlane.f32.xlu0 %v7389
        %v7391 = vpop.xlane.xlu0 %7390
        %v7392 = vsel %vm1444, %v7260, 0.0
        %7393 = vadd.xlane.f32.xlu0 %v7392
        %v7394 = vpop.xlane.xlu0 %7393
        %v7395 = vsel %vm1444, %v7261, 0.0
        %7396 = vadd.xlane.f32.xlu0 %v7395
        %v7397 = vpop.xlane.xlu0 %7396
        %v7398 = vsel %vm1444, %v7262, 0.0
        %7399 = vadd.xlane.f32.xlu0 %v7398
        %v7400 = vpop.xlane.xlu0 %7399
        %v7401 = vsel %vm1444, %v7263, 0.0
        %7402 = vadd.xlane.f32.xlu0 %v7401
        %v7403 = vpop.xlane.xlu0 %7402
        %v7404 = vsel %vm1444, %v7264, 0.0
        %7405 = vadd.xlane.f32.xlu0 %v7404
        %v7406 = vpop.xlane.xlu0 %7405
        %v7407 = vsel %vm1444, %v7265, 0.0
        %7408 = vadd.xlane.f32.xlu0 %v7407
        %v7409 = vpop.xlane.xlu0 %7408
        %v7410 = vsel %vm1444, %v7266, 0.0
        %7411 = vadd.xlane.f32.xlu0 %v7410
        %v7412 = vpop.xlane.xlu0 %7411
        %v7413 = vsel %vm1444, %v7267, 0.0
        %7414 = vadd.xlane.f32.xlu0 %v7413
        %v7415 = vpop.xlane.xlu0 %7414
        %v7416 = vsel %vm1444, %v7268, 0.0
        %7417 = vadd.xlane.f32.xlu0 %v7416
        %v7418 = vpop.xlane.xlu0 %7417
        %v7419 = vsel %vm1444, %v7269, 0.0
        %7420 = vadd.xlane.f32.xlu0 %v7419
        %v7421 = vpop.xlane.xlu0 %7420
        %v7422 = vsel %vm1444, %v7270, 0.0
        %7423 = vadd.xlane.f32.xlu0 %v7422
        %v7424 = vpop.xlane.xlu0 %7423
        %v7425 = vsel %vm1444, %v7271, 0.0
        %7426 = vadd.xlane.f32.xlu0 %v7425
        %v7427 = vpop.xlane.xlu0 %7426
        %v7428 = vsel %vm1444, %v7272, 0.0
        %7429 = vadd.xlane.f32.xlu0 %v7428
        %v7430 = vpop.xlane.xlu0 %7429
        %v7431 = vsel %vm1444, %v7273, 0.0
        %7432 = vadd.xlane.f32.xlu0 %v7431
        %v7433 = vpop.xlane.xlu0 %7432
        %v7434 = vsel %vm1444, %v7274, 0.0
        %7435 = vadd.xlane.f32.xlu0 %v7434
        %v7436 = vpop.xlane.xlu0 %7435
        %v7437 = vsel %vm1444, %v7275, 0.0
        %7438 = vadd.xlane.f32.xlu0 %v7437
        %v7439 = vpop.xlane.xlu0 %7438
        %v7440 = vsel %vm1444, %v7276, 0.0
        %7441 = vadd.xlane.f32.xlu0 %v7440
        %v7442 = vpop.xlane.xlu0 %7441
        %v7443 = vsel %vm1444, %v7277, 0.0
        %7444 = vadd.xlane.f32.xlu0 %v7443
        %v7445 = vpop.xlane.xlu0 %7444
        %v7446 = vsel %vm1444, %v7278, 0.0
        %7447 = vadd.xlane.f32.xlu0 %v7446
        %v7448 = vpop.xlane.xlu0 %7447
        %v7449 = vsel %vm1444, %v7279, 0.0
        %7450 = vadd.xlane.f32.xlu0 %v7449
        %v7451 = vpop.xlane.xlu0 %7450
        %v7452 = vsel %vm1444, %v7280, 0.0
        %7453 = vadd.xlane.f32.xlu0 %v7452
        %v7454 = vpop.xlane.xlu0 %7453
        %v7455 = vsel %vm1444, %v7281, 0.0
        %7456 = vadd.xlane.f32.xlu0 %v7455
        %v7457 = vpop.xlane.xlu0 %7456
        %v7458 = vsel %vm1444, %v7282, 0.0
        %7459 = vadd.xlane.f32.xlu0 %v7458
        %v7460 = vpop.xlane.xlu0 %7459
        %v7461 = vsel %vm1444, %v7283, 0.0
        %7462 = vadd.xlane.f32.xlu0 %v7461
        %v7463 = vpop.xlane.xlu0 %7462
        %v7464 = vsel %vm1444, %v7284, 0.0
        %7465 = vadd.xlane.f32.xlu0 %v7464
        %v7466 = vpop.xlane.xlu0 %7465
        %v7467 = vsel %vm1444, %v7285, 0.0
        %7468 = vadd.xlane.f32.xlu0 %v7467
        %v7469 = vpop.xlane.xlu0 %7468
        %v7470 = vsel %vm1444, %v7286, 0.0
        %7471 = vadd.xlane.f32.xlu0 %v7470
        %v7472 = vpop.xlane.xlu0 %7471
        %v7473 = vsel %vm1444, %v7287, 0.0
        %7474 = vadd.xlane.f32.xlu0 %v7473
        %v7475 = vpop.xlane.xlu0 %7474
        %v7476 = vsel %vm1444, %v7288, 0.0
        %7477 = vadd.xlane.f32.xlu0 %v7476
        %v7478 = vpop.xlane.xlu0 %7477
        %v7479 = vsel %vm1444, %v7289, 0.0
        %7480 = vadd.xlane.f32.xlu0 %v7479
        %v7481 = vpop.xlane.xlu0 %7480
        %v7482 = vsel %vm1444, %v7290, 0.0
        %7483 = vadd.xlane.f32.xlu0 %v7482
        %v7484 = vpop.xlane.xlu0 %7483
        %v7485 = vsel %vm1444, %v7291, 0.0
        %7486 = vadd.xlane.f32.xlu0 %v7485
        %v7487 = vpop.xlane.xlu0 %7486
        %v7488 = vsel %vm1444, %v7292, 0.0
        %7489 = vadd.xlane.f32.xlu0 %v7488
        %v7490 = vpop.xlane.xlu0 %7489
        %v7491 = vsel %vm1444, %v7293, 0.0
        %7492 = vadd.xlane.f32.xlu0 %v7491
        %v7493 = vpop.xlane.xlu0 %7492
        %v7494 = vsel %vm1444, %v7294, 0.0
        %7495 = vadd.xlane.f32.xlu0 %v7494
        %v7496 = vpop.xlane.xlu0 %7495
        %v7497 = vsel %vm1444, %v7295, 0.0
        %7498 = vadd.xlane.f32.xlu0 %v7497
        %v7499 = vpop.xlane.xlu0 %7498
        %v7500 = vsel %vm1444, %v7296, 0.0
        %7501 = vadd.xlane.f32.xlu0 %v7500
        %v7502 = vpop.xlane.xlu0 %7501
        %v7503 = vsel %vm1444, %v7297, 0.0
        %7504 = vadd.xlane.f32.xlu0 %v7503
        %v7505 = vpop.xlane.xlu0 %7504
        %v7506 = vsel %vm1444, %v7298, 0.0
        %7507 = vadd.xlane.f32.xlu0 %v7506
        %v7508 = vpop.xlane.xlu0 %7507
        %v7509 = vsel %vm1444, %v7299, 0.0
        %7510 = vadd.xlane.f32.xlu0 %v7509
        %v7511 = vpop.xlane.xlu0 %7510
        %v7512 = vsel %vm1444, %v7300, 0.0
        %7513 = vadd.xlane.f32.xlu0 %v7512
        %v7514 = vpop.xlane.xlu0 %7513
        %v7515 = vsel %vm1444, %v7301, 0.0
        %7516 = vadd.xlane.f32.xlu0 %v7515
        %v7517 = vpop.xlane.xlu0 %7516
        %v7518 = vsel %vm1444, %v7302, 0.0
        %7519 = vadd.xlane.f32.xlu0 %v7518
        %v7520 = vpop.xlane.xlu0 %7519
        %v7521 = vsel %vm1444, %v7303, 0.0
        %7522 = vadd.xlane.f32.xlu0 %v7521
        %v7523 = vpop.xlane.xlu0 %7522
        %v7524 = vsel %vm1444, %v7304, 0.0
        %7525 = vadd.xlane.f32.xlu0 %v7524
        %v7526 = vpop.xlane.xlu0 %7525
        %v7527 = vsel %vm1444, %v7305, 0.0
        %7528 = vadd.xlane.f32.xlu0 %v7527
        %v7529 = vpop.xlane.xlu0 %7528
        %v7530 = vsel %vm1444, %v7306, 0.0
        %7531 = vadd.xlane.f32.xlu0 %v7530
        %v7532 = vpop.xlane.xlu0 %7531
        %v7533 = vsel %vm1444, %v7307, 0.0
        %7534 = vadd.xlane.f32.xlu0 %v7533
        %v7535 = vpop.xlane.xlu0 %7534
        %v7536 = vsel %vm1444, %v7308, 0.0
        %7537 = vadd.xlane.f32.xlu0 %v7536
        %v7538 = vpop.xlane.xlu0 %7537
        %v7539 = vsel %vm1444, %v7309, 0.0
        %7540 = vadd.xlane.f32.xlu0 %v7539
        %v7541 = vpop.xlane.xlu0 %7540
        %v7542 = vsel %vm1444, %v7310, 0.0
        %7543 = vadd.xlane.f32.xlu0 %v7542
        %v7544 = vpop.xlane.xlu0 %7543
        %v7545 = vsel %vm1444, %v7311, 0.0
        %7546 = vadd.xlane.f32.xlu0 %v7545
        %v7547 = vpop.xlane.xlu0 %7546
        %v7548 = vsel %vm1444, %v7312, 0.0
        %7549 = vadd.xlane.f32.xlu0 %v7548
        %v7550 = vpop.xlane.xlu0 %7549
        %v7551 = vsel %vm1444, %v7313, 0.0
        %7552 = vadd.xlane.f32.xlu0 %v7551
        %v7553 = vpop.xlane.xlu0 %7552
        %v7554 = vsel %vm1444, %v7314, 0.0
        %7555 = vadd.xlane.f32.xlu0 %v7554
        %v7556 = vpop.xlane.xlu0 %7555
        %v7557 = vsel %vm1444, %v7315, 0.0
        %7558 = vadd.xlane.f32.xlu0 %v7557
        %v7559 = vpop.xlane.xlu0 %7558
        %v7560 = vsel %vm1444, %v7316, 0.0
        %7561 = vadd.xlane.f32.xlu0 %v7560
        %v7562 = vpop.xlane.xlu0 %7561
        %v7563 = vsel %vm1444, %v7317, 0.0
        %7564 = vadd.xlane.f32.xlu0 %v7563
        %v7565 = vpop.xlane.xlu0 %7564
        %v7566 = vsel %vm1444, %v7318, 0.0
        %7567 = vadd.xlane.f32.xlu0 %v7566
        %v7568 = vpop.xlane.xlu0 %7567
        %v7569 = vsel %vm1444, %v7319, 0.0
        %7570 = vadd.xlane.f32.xlu0 %v7569
        %v7571 = vpop.xlane.xlu0 %7570
        %v7572 = vsel %vm1444, %v7320, 0.0
        %7573 = vadd.xlane.f32.xlu0 %v7572
        %v7574 = vpop.xlane.xlu0 %7573
        %v7575 = vsel %vm1444, %v7321, 0.0
        %7576 = vadd.xlane.f32.xlu0 %v7575
        %v7577 = vpop.xlane.xlu0 %7576
        %v7578 = vsel %vm1444, %v7322, 0.0
        %7579 = vadd.xlane.f32.xlu0 %v7578
        %v7580 = vpop.xlane.xlu0 %7579
        %v7581 = vsel %vm1444, %v7323, 0.0
        %7582 = vadd.xlane.f32.xlu0 %v7581
        %v7583 = vpop.xlane.xlu0 %7582
        %v7584 = vsel %vm1444, %v7324, 0.0
        %7585 = vadd.xlane.f32.xlu0 %v7584
        %v7586 = vpop.xlane.xlu0 %7585
        %v7587 = vsel %vm1444, %v7325, 0.0
        %7588 = vadd.xlane.f32.xlu0 %v7587
        %v7589 = vpop.xlane.xlu0 %7588
        %v7590 = vsel %vm1444, %v7326, 0.0
        %7591 = vadd.xlane.f32.xlu0 %v7590
        %v7592 = vpop.xlane.xlu0 %7591
        %v7593 = vsel %vm1444, %v7327, 0.0
        %7594 = vadd.xlane.f32.xlu0 %v7593
        %v7595 = vpop.xlane.xlu0 %7594
        %v7596 = vsel %vm1444, %v7328, 0.0
        %7597 = vadd.xlane.f32.xlu0 %v7596
        %v7598 = vpop.xlane.xlu0 %7597
        %v7599 = vsel %vm1444, %v7329, 0.0
        %7600 = vadd.xlane.f32.xlu0 %v7599
        %v7601 = vpop.xlane.xlu0 %7600
        %v7602 = vsel %vm1444, %v7330, 0.0
        %7603 = vadd.xlane.f32.xlu0 %v7602
        %v7604 = vpop.xlane.xlu0 %7603
        %v7605 = vsel %vm1444, %v7331, 0.0
        %7606 = vadd.xlane.f32.xlu0 %v7605
        %v7607 = vpop.xlane.xlu0 %7606
        %v7608 = vsel %vm1444, %v7332, 0.0
        %7609 = vadd.xlane.f32.xlu0 %v7608
        %v7610 = vpop.xlane.xlu0 %7609
        %v7611 = vsel %vm1444, %v7333, 0.0
        %7612 = vadd.xlane.f32.xlu0 %v7611
        %v7613 = vpop.xlane.xlu0 %7612
        %v7614 = vsel %vm1444, %v7334, 0.0
        %7615 = vadd.xlane.f32.xlu0 %v7614
        %v7616 = vpop.xlane.xlu0 %7615
        %v7617 = vsel %vm1444, %v7335, 0.0
        %7618 = vadd.xlane.f32.xlu0 %v7617
        %v7619 = vpop.xlane.xlu0 %7618
        %v7620 = vsel %vm1444, %v7336, 0.0
        %7621 = vadd.xlane.f32.xlu0 %v7620
        %v7622 = vpop.xlane.xlu0 %7621
        %v7623 = vsel %vm1444, %v7337, 0.0
        %7624 = vadd.xlane.f32.xlu0 %v7623
        %v7625 = vpop.xlane.xlu0 %7624
        %v7626 = vmin.f32 %v7340, 0.0
        %v7627 = vmin.f32 %v7343, 0.0
        %v7628 = vmin.f32 %v7346, 0.0
        %v7629 = vmin.f32 %v7349, 0.0
        %v7630 = vmin.f32 %v7352, 0.0
        %v7631 = vmin.f32 %v7355, 0.0
        %v7632 = vmin.f32 %v7358, 0.0
        %v7633 = vmin.f32 %v7361, 0.0
        %v7634 = vmin.f32 %v7364, 0.0
        %v7635 = vmin.f32 %v7367, 0.0
        %v7636 = vmin.f32 %v7370, 0.0
        %v7637 = vmin.f32 %v7373, 0.0
        %v7638 = vmin.f32 %v7376, 0.0
        %v7639 = vmin.f32 %v7379, 0.0
        %v7640 = vmin.f32 %v7382, 0.0
        %v7641 = vmin.f32 %v7385, 0.0
        %v7642 = vmin.f32 %v7388, 0.0
        %v7643 = vmin.f32 %v7391, 0.0
        %v7644 = vmin.f32 %v7394, 0.0
        %v7645 = vmin.f32 %v7397, 0.0
        %v7646 = vmin.f32 %v7400, 0.0
        %v7647 = vmin.f32 %v7403, 0.0
        %v7648 = vmin.f32 %v7406, 0.0
        %v7649 = vmin.f32 %v7409, 0.0
        %v7650 = vmin.f32 %v7412, 0.0
        %v7651 = vmin.f32 %v7415, 0.0
        %v7652 = vmin.f32 %v7418, 0.0
        %v7653 = vmin.f32 %v7421, 0.0
        %v7654 = vmin.f32 %v7424, 0.0
        %v7655 = vmin.f32 %v7427, 0.0
        %v7656 = vmin.f32 %v7430, 0.0
        %v7657 = vmin.f32 %v7433, 0.0
        %v7658 = vmin.f32 %v7436, 0.0
        %v7659 = vmin.f32 %v7439, 0.0
        %v7660 = vmin.f32 %v7442, 0.0
        %v7661 = vmin.f32 %v7445, 0.0
        %v7662 = vmin.f32 %v7448, 0.0
        %v7663 = vmin.f32 %v7451, 0.0
        %v7664 = vmin.f32 %v7454, 0.0
        %v7665 = vmin.f32 %v7457, 0.0
        %v7666 = vmin.f32 %v7460, 0.0
        %v7667 = vmin.f32 %v7463, 0.0
        %v7668 = vmin.f32 %v7466, 0.0
        %v7669 = vmin.f32 %v7469, 0.0
        %v7670 = vmin.f32 %v7472, 0.0
        %v7671 = vmin.f32 %v7475, 0.0
        %v7672 = vmin.f32 %v7478, 0.0
        %v7673 = vmin.f32 %v7481, 0.0
        %v7674 = vmin.f32 %v7484, 0.0
        %v7675 = vmin.f32 %v7487, 0.0
        %v7676 = vmin.f32 %v7490, 0.0
        %v7677 = vmin.f32 %v7493, 0.0
        %v7678 = vmin.f32 %v7496, 0.0
        %v7679 = vmin.f32 %v7499, 0.0
        %v7680 = vmin.f32 %v7502, 0.0
        %v7681 = vmin.f32 %v7505, 0.0
        %v7682 = vmin.f32 %v7508, 0.0
        %v7683 = vmin.f32 %v7511, 0.0
        %v7684 = vmin.f32 %v7514, 0.0
        %v7685 = vmin.f32 %v7517, 0.0
        %v7686 = vmin.f32 %v7520, 0.0
        %v7687 = vmin.f32 %v7523, 0.0
        %v7688 = vmin.f32 %v7526, 0.0
        %v7689 = vmin.f32 %v7529, 0.0
        %v7690 = vmin.f32 %v7532, 0.0
        %v7691 = vmin.f32 %v7535, 0.0
        %v7692 = vmin.f32 %v7538, 0.0
        %v7693 = vmin.f32 %v7541, 0.0
        %v7694 = vmin.f32 %v7544, 0.0
        %v7695 = vmin.f32 %v7547, 0.0
        %v7696 = vmin.f32 %v7550, 0.0
        %v7697 = vmin.f32 %v7553, 0.0
        %v7698 = vmin.f32 %v7556, 0.0
        %v7699 = vmin.f32 %v7559, 0.0
        %v7700 = vmin.f32 %v7562, 0.0
        %v7701 = vmin.f32 %v7565, 0.0
        %v7702 = vmin.f32 %v7568, 0.0
        %v7703 = vmin.f32 %v7571, 0.0
        %v7704 = vmin.f32 %v7574, 0.0
        %v7705 = vmin.f32 %v7577, 0.0
        %v7706 = vmin.f32 %v7580, 0.0
        %v7707 = vmin.f32 %v7583, 0.0
        %v7708 = vmin.f32 %v7586, 0.0
        %v7709 = vmin.f32 %v7589, 0.0
        %v7710 = vmin.f32 %v7592, 0.0
        %v7711 = vmin.f32 %v7595, 0.0
        %v7712 = vmin.f32 %v7598, 0.0
        %v7713 = vmin.f32 %v7601, 0.0
        %v7714 = vmin.f32 %v7604, 0.0
        %v7715 = vmin.f32 %v7607, 0.0
        %v7716 = vmin.f32 %v7610, 0.0
        %v7717 = vmin.f32 %v7613, 0.0
        %v7718 = vmin.f32 %v7616, 0.0
        %v7719 = vmin.f32 %v7619, 0.0
        %v7720 = vmin.f32 %v7622, 0.0
        %v7721 = vmin.f32 %v7625, 0.0
        %v7722 = vand.u32 2147483647, %v7340
        %v7723 = vand.u32 2147483647, %v7343
        %v7724 = vand.u32 2147483647, %v7346
        %v7725 = vand.u32 2147483647, %v7349
        %v7726 = vand.u32 2147483647, %v7352
        %v7727 = vand.u32 2147483647, %v7355
        %v7728 = vand.u32 2147483647, %v7358
        %v7729 = vand.u32 2147483647, %v7361
        %v7730 = vand.u32 2147483647, %v7364
        %v7731 = vand.u32 2147483647, %v7367
        %v7732 = vand.u32 2147483647, %v7370
        %v7733 = vand.u32 2147483647, %v7373
        %v7734 = vand.u32 2147483647, %v7376
        %v7735 = vand.u32 2147483647, %v7379
        %v7736 = vand.u32 2147483647, %v7382
        %v7737 = vand.u32 2147483647, %v7385
        %v7738 = vand.u32 2147483647, %v7388
        %v7739 = vand.u32 2147483647, %v7391
        %v7740 = vand.u32 2147483647, %v7394
        %v7741 = vand.u32 2147483647, %v7397
        %v7742 = vand.u32 2147483647, %v7400
        %v7743 = vand.u32 2147483647, %v7403
        %v7744 = vand.u32 2147483647, %v7406
        %v7745 = vand.u32 2147483647, %v7409
        %v7746 = vand.u32 2147483647, %v7412
        %v7747 = vand.u32 2147483647, %v7415
        %v7748 = vand.u32 2147483647, %v7418
        %v7749 = vand.u32 2147483647, %v7421
        %v7750 = vand.u32 2147483647, %v7424
        %v7751 = vand.u32 2147483647, %v7427
        %v7752 = vand.u32 2147483647, %v7430
        %v7753 = vand.u32 2147483647, %v7433
        %v7754 = vand.u32 2147483647, %v7436
        %v7755 = vand.u32 2147483647, %v7439
        %v7756 = vand.u32 2147483647, %v7442
        %v7757 = vand.u32 2147483647, %v7445
        %v7758 = vand.u32 2147483647, %v7448
        %v7759 = vand.u32 2147483647, %v7451
        %v7760 = vand.u32 2147483647, %v7454
        %v7761 = vand.u32 2147483647, %v7457
        %v7762 = vand.u32 2147483647, %v7460
        %v7763 = vand.u32 2147483647, %v7463
        %v7764 = vand.u32 2147483647, %v7466
        %v7765 = vand.u32 2147483647, %v7469
        %v7766 = vand.u32 2147483647, %v7472
        %v7767 = vand.u32 2147483647, %v7475
        %v7768 = vand.u32 2147483647, %v7478
        %v7769 = vand.u32 2147483647, %v7481
        %v7770 = vand.u32 2147483647, %v7484
        %v7771 = vand.u32 2147483647, %v7487
        %v7772 = vand.u32 2147483647, %v7490
        %v7773 = vand.u32 2147483647, %v7493
        %v7774 = vand.u32 2147483647, %v7496
        %v7775 = vand.u32 2147483647, %v7499
        %v7776 = vand.u32 2147483647, %v7502
        %v7777 = vand.u32 2147483647, %v7505
        %v7778 = vand.u32 2147483647, %v7508
        %v7779 = vand.u32 2147483647, %v7511
        %v7780 = vand.u32 2147483647, %v7514
        %v7781 = vand.u32 2147483647, %v7517
        %v7782 = vand.u32 2147483647, %v7520
        %v7783 = vand.u32 2147483647, %v7523
        %v7784 = vand.u32 2147483647, %v7526
        %v7785 = vand.u32 2147483647, %v7529
        %v7786 = vand.u32 2147483647, %v7532
        %v7787 = vand.u32 2147483647, %v7535
        %v7788 = vand.u32 2147483647, %v7538
        %v7789 = vand.u32 2147483647, %v7541
        %v7790 = vand.u32 2147483647, %v7544
        %v7791 = vand.u32 2147483647, %v7547
        %v7792 = vand.u32 2147483647, %v7550
        %v7793 = vand.u32 2147483647, %v7553
        %v7794 = vand.u32 2147483647, %v7556
        %v7795 = vand.u32 2147483647, %v7559
        %v7796 = vand.u32 2147483647, %v7562
        %v7797 = vand.u32 2147483647, %v7565
        %v7798 = vand.u32 2147483647, %v7568
        %v7799 = vand.u32 2147483647, %v7571
        %v7800 = vand.u32 2147483647, %v7574
        %v7801 = vand.u32 2147483647, %v7577
        %v7802 = vand.u32 2147483647, %v7580
        %v7803 = vand.u32 2147483647, %v7583
        %v7804 = vand.u32 2147483647, %v7586
        %v7805 = vand.u32 2147483647, %v7589
        %v7806 = vand.u32 2147483647, %v7592
        %v7807 = vand.u32 2147483647, %v7595
        %v7808 = vand.u32 2147483647, %v7598
        %v7809 = vand.u32 2147483647, %v7601
        %v7810 = vand.u32 2147483647, %v7604
        %v7811 = vand.u32 2147483647, %v7607
        %v7812 = vand.u32 2147483647, %v7610
        %v7813 = vand.u32 2147483647, %v7613
        %v7814 = vand.u32 2147483647, %v7616
        %v7815 = vand.u32 2147483647, %v7619
        %v7816 = vand.u32 2147483647, %v7622
        %v7817 = vand.u32 2147483647, %v7625
        %v7818 = vsub.f32 0.0, %v7722
        %v7819 = vsub.f32 0.0, %v7723
        %v7820 = vsub.f32 0.0, %v7724
        %v7821 = vsub.f32 0.0, %v7725
        %v7822 = vsub.f32 0.0, %v7726
        %v7823 = vsub.f32 0.0, %v7727
        %v7824 = vsub.f32 0.0, %v7728
        %v7825 = vsub.f32 0.0, %v7729
        %v7826 = vsub.f32 0.0, %v7730
        %v7827 = vsub.f32 0.0, %v7731
        %v7828 = vsub.f32 0.0, %v7732
        %v7829 = vsub.f32 0.0, %v7733
        %v7830 = vsub.f32 0.0, %v7734
        %v7831 = vsub.f32 0.0, %v7735
        %v7832 = vsub.f32 0.0, %v7736
        %v7833 = vsub.f32 0.0, %v7737
        %v7834 = vsub.f32 0.0, %v7738
        %v7835 = vsub.f32 0.0, %v7739
        %v7836 = vsub.f32 0.0, %v7740
        %v7837 = vsub.f32 0.0, %v7741
        %v7838 = vsub.f32 0.0, %v7742
        %v7839 = vsub.f32 0.0, %v7743
        %v7840 = vsub.f32 0.0, %v7744
        %v7841 = vsub.f32 0.0, %v7745
        %v7842 = vsub.f32 0.0, %v7746
        %v7843 = vsub.f32 0.0, %v7747
        %v7844 = vsub.f32 0.0, %v7748
        %v7845 = vsub.f32 0.0, %v7749
        %v7846 = vsub.f32 0.0, %v7750
        %v7847 = vsub.f32 0.0, %v7751
        %v7848 = vsub.f32 0.0, %v7752
        %v7849 = vsub.f32 0.0, %v7753
        %v7850 = vsub.f32 0.0, %v7754
        %v7851 = vsub.f32 0.0, %v7755
        %v7852 = vsub.f32 0.0, %v7756
        %v7853 = vsub.f32 0.0, %v7757
        %v7854 = vsub.f32 0.0, %v7758
        %v7855 = vsub.f32 0.0, %v7759
        %v7856 = vsub.f32 0.0, %v7760
        %v7857 = vsub.f32 0.0, %v7761
        %v7858 = vsub.f32 0.0, %v7762
        %v7859 = vsub.f32 0.0, %v7763
        %v7860 = vsub.f32 0.0, %v7764
        %v7861 = vsub.f32 0.0, %v7765
        %v7862 = vsub.f32 0.0, %v7766
        %v7863 = vsub.f32 0.0, %v7767
        %v7864 = vsub.f32 0.0, %v7768
        %v7865 = vsub.f32 0.0, %v7769
        %v7866 = vsub.f32 0.0, %v7770
        %v7867 = vsub.f32 0.0, %v7771
        %v7868 = vsub.f32 0.0, %v7772
        %v7869 = vsub.f32 0.0, %v7773
        %v7870 = vsub.f32 0.0, %v7774
        %v7871 = vsub.f32 0.0, %v7775
        %v7872 = vsub.f32 0.0, %v7776
        %v7873 = vsub.f32 0.0, %v7777
        %v7874 = vsub.f32 0.0, %v7778
        %v7875 = vsub.f32 0.0, %v7779
        %v7876 = vsub.f32 0.0, %v7780
        %v7877 = vsub.f32 0.0, %v7781
        %v7878 = vsub.f32 0.0, %v7782
        %v7879 = vsub.f32 0.0, %v7783
        %v7880 = vsub.f32 0.0, %v7784
        %v7881 = vsub.f32 0.0, %v7785
        %v7882 = vsub.f32 0.0, %v7786
        %v7883 = vsub.f32 0.0, %v7787
        %v7884 = vsub.f32 0.0, %v7788
        %v7885 = vsub.f32 0.0, %v7789
        %v7886 = vsub.f32 0.0, %v7790
        %v7887 = vsub.f32 0.0, %v7791
        %v7888 = vsub.f32 0.0, %v7792
        %v7889 = vsub.f32 0.0, %v7793
        %v7890 = vsub.f32 0.0, %v7794
        %v7891 = vsub.f32 0.0, %v7795
        %v7892 = vsub.f32 0.0, %v7796
        %v7893 = vsub.f32 0.0, %v7797
        %v7894 = vsub.f32 0.0, %v7798
        %v7895 = vsub.f32 0.0, %v7799
        %v7896 = vsub.f32 0.0, %v7800
        %v7897 = vsub.f32 0.0, %v7801
        %v7898 = vsub.f32 0.0, %v7802
        %v7899 = vsub.f32 0.0, %v7803
        %v7900 = vsub.f32 0.0, %v7804
        %v7901 = vsub.f32 0.0, %v7805
        %v7902 = vsub.f32 0.0, %v7806
        %v7903 = vsub.f32 0.0, %v7807
        %v7904 = vsub.f32 0.0, %v7808
        %v7905 = vsub.f32 0.0, %v7809
        %v7906 = vsub.f32 0.0, %v7810
        %v7907 = vsub.f32 0.0, %v7811
        %v7908 = vsub.f32 0.0, %v7812
        %v7909 = vsub.f32 0.0, %v7813
        %v7910 = vsub.f32 0.0, %v7814
        %v7911 = vsub.f32 0.0, %v7815
        %v7912 = vsub.f32 0.0, %v7816
        %v7913 = vsub.f32 0.0, %v7817
        %v7914 = vmul.f32 %v7818, 1.442695
        %v7915 = vpow.pop %v7914
        %v7916 = vmul.f32 %v7819, 1.442695
        %v7917 = vpow.pop %v7916
        %v7918 = vmul.f32 %v7820, 1.442695
        %v7919 = vpow.pop %v7918
        %v7920 = vmul.f32 %v7821, 1.442695
        %v7921 = vpow.pop %v7920
        %v7922 = vmul.f32 %v7822, 1.442695
        %v7923 = vpow.pop %v7922
        %v7924 = vmul.f32 %v7823, 1.442695
        %v7925 = vpow.pop %v7924
        %v7926 = vmul.f32 %v7824, 1.442695
        %v7927 = vpow.pop %v7926
        %v7928 = vmul.f32 %v7825, 1.442695
        %v7929 = vpow.pop %v7928
        %v7930 = vmul.f32 %v7826, 1.442695
        %v7931 = vpow.pop %v7930
        %v7932 = vmul.f32 %v7827, 1.442695
        %v7933 = vpow.pop %v7932
        %v7934 = vmul.f32 %v7828, 1.442695
        %v7935 = vpow.pop %v7934
        %v7936 = vmul.f32 %v7829, 1.442695
        %v7937 = vpow.pop %v7936
        %v7938 = vmul.f32 %v7830, 1.442695
        %v7939 = vpow.pop %v7938
        %v7940 = vmul.f32 %v7831, 1.442695
        %v7941 = vpow.pop %v7940
        %v7942 = vmul.f32 %v7832, 1.442695
        %v7943 = vpow.pop %v7942
        %v7944 = vmul.f32 %v7833, 1.442695
        %v7945 = vpow.pop %v7944
        %v7946 = vmul.f32 %v7834, 1.442695
        %v7947 = vpow.pop %v7946
        %v7948 = vmul.f32 %v7835, 1.442695
        %v7949 = vpow.pop %v7948
        %v7950 = vmul.f32 %v7836, 1.442695
        %v7951 = vpow.pop %v7950
        %v7952 = vmul.f32 %v7837, 1.442695
        %v7953 = vpow.pop %v7952
        %v7954 = vmul.f32 %v7838, 1.442695
        %v7955 = vpow.pop %v7954
        %v7956 = vmul.f32 %v7839, 1.442695
        %v7957 = vpow.pop %v7956
        %v7958 = vmul.f32 %v7840, 1.442695
        %v7959 = vpow.pop %v7958
        %v7960 = vmul.f32 %v7841, 1.442695
        %v7961 = vpow.pop %v7960
        %v7962 = vmul.f32 %v7842, 1.442695
        %v7963 = vpow.pop %v7962
        %v7964 = vmul.f32 %v7843, 1.442695
        %v7965 = vpow.pop %v7964
        %v7966 = vmul.f32 %v7844, 1.442695
        %v7967 = vpow.pop %v7966
        %v7968 = vmul.f32 %v7845, 1.442695
        %v7969 = vpow.pop %v7968
        %v7970 = vmul.f32 %v7846, 1.442695
        %v7971 = vpow.pop %v7970
        %v7972 = vmul.f32 %v7847, 1.442695
        %v7973 = vpow.pop %v7972
        %v7974 = vmul.f32 %v7848, 1.442695
        %v7975 = vpow.pop %v7974
        %v7976 = vmul.f32 %v7849, 1.442695
        %v7977 = vpow.pop %v7976
        %v7978 = vmul.f32 %v7850, 1.442695
        %v7979 = vpow.pop %v7978
        %v7980 = vmul.f32 %v7851, 1.442695
        %v7981 = vpow.pop %v7980
        %v7982 = vmul.f32 %v7852, 1.442695
        %v7983 = vpow.pop %v7982
        %v7984 = vmul.f32 %v7853, 1.442695
        %v7985 = vpow.pop %v7984
        %v7986 = vmul.f32 %v7854, 1.442695
        %v7987 = vpow.pop %v7986
        %v7988 = vmul.f32 %v7855, 1.442695
        %v7989 = vpow.pop %v7988
        %v7990 = vmul.f32 %v7856, 1.442695
        %v7991 = vpow.pop %v7990
        %v7992 = vmul.f32 %v7857, 1.442695
        %v7993 = vpow.pop %v7992
        %v7994 = vmul.f32 %v7858, 1.442695
        %v7995 = vpow.pop %v7994
        %v7996 = vmul.f32 %v7859, 1.442695
        %v7997 = vpow.pop %v7996
        %v7998 = vmul.f32 %v7860, 1.442695
        %v7999 = vpow.pop %v7998
        %v8000 = vmul.f32 %v7861, 1.442695
        %v8001 = vpow.pop %v8000
        %v8002 = vmul.f32 %v7862, 1.442695
        %v8003 = vpow.pop %v8002
        %v8004 = vmul.f32 %v7863, 1.442695
        %v8005 = vpow.pop %v8004
        %v8006 = vmul.f32 %v7864, 1.442695
        %v8007 = vpow.pop %v8006
        %v8008 = vmul.f32 %v7865, 1.442695
        %v8009 = vpow.pop %v8008
        %v8010 = vmul.f32 %v7866, 1.442695
        %v8011 = vpow.pop %v8010
        %v8012 = vmul.f32 %v7867, 1.442695
        %v8013 = vpow.pop %v8012
        %v8014 = vmul.f32 %v7868, 1.442695
        %v8015 = vpow.pop %v8014
        %v8016 = vmul.f32 %v7869, 1.442695
        %v8017 = vpow.pop %v8016
        %v8018 = vmul.f32 %v7870, 1.442695
        %v8019 = vpow.pop %v8018
        %v8020 = vmul.f32 %v7871, 1.442695
        %v8021 = vpow.pop %v8020
        %v8022 = vmul.f32 %v7872, 1.442695
        %v8023 = vpow.pop %v8022
        %v8024 = vmul.f32 %v7873, 1.442695
        %v8025 = vpow.pop %v8024
        %v8026 = vmul.f32 %v7874, 1.442695
        %v8027 = vpow.pop %v8026
        %v8028 = vmul.f32 %v7875, 1.442695
        %v8029 = vpow.pop %v8028
        %v8030 = vmul.f32 %v7876, 1.442695
        %v8031 = vpow.pop %v8030
        %v8032 = vmul.f32 %v7877, 1.442695
        %v8033 = vpow.pop %v8032
        %v8034 = vmul.f32 %v7878, 1.442695
        %v8035 = vpow.pop %v8034
        %v8036 = vmul.f32 %v7879, 1.442695
        %v8037 = vpow.pop %v8036
        %v8038 = vmul.f32 %v7880, 1.442695
        %v8039 = vpow.pop %v8038
        %v8040 = vmul.f32 %v7881, 1.442695
        %v8041 = vpow.pop %v8040
        %v8042 = vmul.f32 %v7882, 1.442695
        %v8043 = vpow.pop %v8042
        %v8044 = vmul.f32 %v7883, 1.442695
        %v8045 = vpow.pop %v8044
        %v8046 = vmul.f32 %v7884, 1.442695
        %v8047 = vpow.pop %v8046
        %v8048 = vmul.f32 %v7885, 1.442695
        %v8049 = vpow.pop %v8048
        %v8050 = vmul.f32 %v7886, 1.442695
        %v8051 = vpow.pop %v8050
        %v8052 = vmul.f32 %v7887, 1.442695
        %v8053 = vpow.pop %v8052
        %v8054 = vmul.f32 %v7888, 1.442695
        %v8055 = vpow.pop %v8054
        %v8056 = vmul.f32 %v7889, 1.442695
        %v8057 = vpow.pop %v8056
        %v8058 = vmul.f32 %v7890, 1.442695
        %v8059 = vpow.pop %v8058
        %v8060 = vmul.f32 %v7891, 1.442695
        %v8061 = vpow.pop %v8060
        %v8062 = vmul.f32 %v7892, 1.442695
        %v8063 = vpow.pop %v8062
        %v8064 = vmul.f32 %v7893, 1.442695
        %v8065 = vpow.pop %v8064
        %v8066 = vmul.f32 %v7894, 1.442695
        %v8067 = vpow.pop %v8066
        %v8068 = vmul.f32 %v7895, 1.442695
        %v8069 = vpow.pop %v8068
        %v8070 = vmul.f32 %v7896, 1.442695
        %v8071 = vpow.pop %v8070
        %v8072 = vmul.f32 %v7897, 1.442695
        %v8073 = vpow.pop %v8072
        %v8074 = vmul.f32 %v7898, 1.442695
        %v8075 = vpow.pop %v8074
        %v8076 = vmul.f32 %v7899, 1.442695
        %v8077 = vpow.pop %v8076
        %v8078 = vmul.f32 %v7900, 1.442695
        %v8079 = vpow.pop %v8078
        %v8080 = vmul.f32 %v7901, 1.442695
        %v8081 = vpow.pop %v8080
        %v8082 = vmul.f32 %v7902, 1.442695
        %v8083 = vpow.pop %v8082
        %v8084 = vmul.f32 %v7903, 1.442695
        %v8085 = vpow.pop %v8084
        %v8086 = vmul.f32 %v7904, 1.442695
        %v8087 = vpow.pop %v8086
        %v8088 = vmul.f32 %v7905, 1.442695
        %v8089 = vpow.pop %v8088
        %v8090 = vmul.f32 %v7906, 1.442695
        %v8091 = vpow.pop %v8090
        %v8092 = vmul.f32 %v7907, 1.442695
        %v8093 = vpow.pop %v8092
        %v8094 = vmul.f32 %v7908, 1.442695
        %v8095 = vpow.pop %v8094
        %v8096 = vmul.f32 %v7909, 1.442695
        %v8097 = vpow.pop %v8096
        %v8098 = vmul.f32 %v7910, 1.442695
        %v8099 = vpow.pop %v8098
        %v8100 = vmul.f32 %v7911, 1.442695
        %v8101 = vpow.pop %v8100
        %v8102 = vmul.f32 %v7912, 1.442695
        %v8103 = vpow.pop %v8102
        %v8104 = vmul.f32 %v7913, 1.442695
        %v8105 = vpow.pop %v8104
        %v8106 = vadd.f32 %v7915, 1.0
        %v8107 = vadd.f32 %v7917, 1.0
        %v8108 = vadd.f32 %v7919, 1.0
        %v8109 = vadd.f32 %v7921, 1.0
        %v8110 = vadd.f32 %v7923, 1.0
        %v8111 = vadd.f32 %v7925, 1.0
        %v8112 = vadd.f32 %v7927, 1.0
        %v8113 = vadd.f32 %v7929, 1.0
        %v8114 = vadd.f32 %v7931, 1.0
        %v8115 = vadd.f32 %v7933, 1.0
        %v8116 = vadd.f32 %v7935, 1.0
        %v8117 = vadd.f32 %v7937, 1.0
        %v8118 = vadd.f32 %v7939, 1.0
        %v8119 = vadd.f32 %v7941, 1.0
        %v8120 = vadd.f32 %v7943, 1.0
        %v8121 = vadd.f32 %v7945, 1.0
        %v8122 = vadd.f32 %v7947, 1.0
        %v8123 = vadd.f32 %v7949, 1.0
        %v8124 = vadd.f32 %v7951, 1.0
        %v8125 = vadd.f32 %v7953, 1.0
        %v8126 = vadd.f32 %v7955, 1.0
        %v8127 = vadd.f32 %v7957, 1.0
        %v8128 = vadd.f32 %v7959, 1.0
        %v8129 = vadd.f32 %v7961, 1.0
        %v8130 = vadd.f32 %v7963, 1.0
        %v8131 = vadd.f32 %v7965, 1.0
        %v8132 = vadd.f32 %v7967, 1.0
        %v8133 = vadd.f32 %v7969, 1.0
        %v8134 = vadd.f32 %v7971, 1.0
        %v8135 = vadd.f32 %v7973, 1.0
        %v8136 = vadd.f32 %v7975, 1.0
        %v8137 = vadd.f32 %v7977, 1.0
        %v8138 = vadd.f32 %v7979, 1.0
        %v8139 = vadd.f32 %v7981, 1.0
        %v8140 = vadd.f32 %v7983, 1.0
        %v8141 = vadd.f32 %v7985, 1.0
        %v8142 = vadd.f32 %v7987, 1.0
        %v8143 = vadd.f32 %v7989, 1.0
        %v8144 = vadd.f32 %v7991, 1.0
        %v8145 = vadd.f32 %v7993, 1.0
        %v8146 = vadd.f32 %v7995, 1.0
        %v8147 = vadd.f32 %v7997, 1.0
        %v8148 = vadd.f32 %v7999, 1.0
        %v8149 = vadd.f32 %v8001, 1.0
        %v8150 = vadd.f32 %v8003, 1.0
        %v8151 = vadd.f32 %v8005, 1.0
        %v8152 = vadd.f32 %v8007, 1.0
        %v8153 = vadd.f32 %v8009, 1.0
        %v8154 = vadd.f32 %v8011, 1.0
        %v8155 = vadd.f32 %v8013, 1.0
        %v8156 = vadd.f32 %v8015, 1.0
        %v8157 = vadd.f32 %v8017, 1.0
        %v8158 = vadd.f32 %v8019, 1.0
        %v8159 = vadd.f32 %v8021, 1.0
        %v8160 = vadd.f32 %v8023, 1.0
        %v8161 = vadd.f32 %v8025, 1.0
        %v8162 = vadd.f32 %v8027, 1.0
        %v8163 = vadd.f32 %v8029, 1.0
        %v8164 = vadd.f32 %v8031, 1.0
        %v8165 = vadd.f32 %v8033, 1.0
        %v8166 = vadd.f32 %v8035, 1.0
        %v8167 = vadd.f32 %v8037, 1.0
        %v8168 = vadd.f32 %v8039, 1.0
        %v8169 = vadd.f32 %v8041, 1.0
        %v8170 = vadd.f32 %v8043, 1.0
        %v8171 = vadd.f32 %v8045, 1.0
        %v8172 = vadd.f32 %v8047, 1.0
        %v8173 = vadd.f32 %v8049, 1.0
        %v8174 = vadd.f32 %v8051, 1.0
        %v8175 = vadd.f32 %v8053, 1.0
        %v8176 = vadd.f32 %v8055, 1.0
        %v8177 = vadd.f32 %v8057, 1.0
        %v8178 = vadd.f32 %v8059, 1.0
        %v8179 = vadd.f32 %v8061, 1.0
        %v8180 = vadd.f32 %v8063, 1.0
        %v8181 = vadd.f32 %v8065, 1.0
        %v8182 = vadd.f32 %v8067, 1.0
        %v8183 = vadd.f32 %v8069, 1.0
        %v8184 = vadd.f32 %v8071, 1.0
        %v8185 = vadd.f32 %v8073, 1.0
        %v8186 = vadd.f32 %v8075, 1.0
        %v8187 = vadd.f32 %v8077, 1.0
        %v8188 = vadd.f32 %v8079, 1.0
        %v8189 = vadd.f32 %v8081, 1.0
        %v8190 = vadd.f32 %v8083, 1.0
        %v8191 = vadd.f32 %v8085, 1.0
        %v8192 = vadd.f32 %v8087, 1.0
        %v8193 = vadd.f32 %v8089, 1.0
        %v8194 = vadd.f32 %v8091, 1.0
        %v8195 = vadd.f32 %v8093, 1.0
        %v8196 = vadd.f32 %v8095, 1.0
        %v8197 = vadd.f32 %v8097, 1.0
        %v8198 = vadd.f32 %v8099, 1.0
        %v8199 = vadd.f32 %v8101, 1.0
        %v8200 = vadd.f32 %v8103, 1.0
        %v8201 = vadd.f32 %v8105, 1.0
        %v8202 = vlog2.pop %v8106
        %v8203 = vmul.f32 %v8202, 0.6931472
        %v8204 = vlog2.pop %v8107
        %v8205 = vmul.f32 %v8204, 0.6931472
        %v8206 = vlog2.pop %v8108
        %v8207 = vmul.f32 %v8206, 0.6931472
        %v8208 = vlog2.pop %v8109
        %v8209 = vmul.f32 %v8208, 0.6931472
        %v8210 = vlog2.pop %v8110
        %v8211 = vmul.f32 %v8210, 0.6931472
        %v8212 = vlog2.pop %v8111
        %v8213 = vmul.f32 %v8212, 0.6931472
        %v8214 = vlog2.pop %v8112
        %v8215 = vmul.f32 %v8214, 0.6931472
        %v8216 = vlog2.pop %v8113
        %v8217 = vmul.f32 %v8216, 0.6931472
        %v8218 = vlog2.pop %v8114
        %v8219 = vmul.f32 %v8218, 0.6931472
        %v8220 = vlog2.pop %v8115
        %v8221 = vmul.f32 %v8220, 0.6931472
        %v8222 = vlog2.pop %v8116
        %v8223 = vmul.f32 %v8222, 0.6931472
        %v8224 = vlog2.pop %v8117
        %v8225 = vmul.f32 %v8224, 0.6931472
        %v8226 = vlog2.pop %v8118
        %v8227 = vmul.f32 %v8226, 0.6931472
        %v8228 = vlog2.pop %v8119
        %v8229 = vmul.f32 %v8228, 0.6931472
        %v8230 = vlog2.pop %v8120
        %v8231 = vmul.f32 %v8230, 0.6931472
        %v8232 = vlog2.pop %v8121
        %v8233 = vmul.f32 %v8232, 0.6931472
        %v8234 = vlog2.pop %v8122
        %v8235 = vmul.f32 %v8234, 0.6931472
        %v8236 = vlog2.pop %v8123
        %v8237 = vmul.f32 %v8236, 0.6931472
        %v8238 = vlog2.pop %v8124
        %v8239 = vmul.f32 %v8238, 0.6931472
        %v8240 = vlog2.pop %v8125
        %v8241 = vmul.f32 %v8240, 0.6931472
        %v8242 = vlog2.pop %v8126
        %v8243 = vmul.f32 %v8242, 0.6931472
        %v8244 = vlog2.pop %v8127
        %v8245 = vmul.f32 %v8244, 0.6931472
        %v8246 = vlog2.pop %v8128
        %v8247 = vmul.f32 %v8246, 0.6931472
        %v8248 = vlog2.pop %v8129
        %v8249 = vmul.f32 %v8248, 0.6931472
        %v8250 = vlog2.pop %v8130
        %v8251 = vmul.f32 %v8250, 0.6931472
        %v8252 = vlog2.pop %v8131
        %v8253 = vmul.f32 %v8252, 0.6931472
        %v8254 = vlog2.pop %v8132
        %v8255 = vmul.f32 %v8254, 0.6931472
        %v8256 = vlog2.pop %v8133
        %v8257 = vmul.f32 %v8256, 0.6931472
        %v8258 = vlog2.pop %v8134
        %v8259 = vmul.f32 %v8258, 0.6931472
        %v8260 = vlog2.pop %v8135
        %v8261 = vmul.f32 %v8260, 0.6931472
        %v8262 = vlog2.pop %v8136
        %v8263 = vmul.f32 %v8262, 0.6931472
        %v8264 = vlog2.pop %v8137
        %v8265 = vmul.f32 %v8264, 0.6931472
        %v8266 = vlog2.pop %v8138
        %v8267 = vmul.f32 %v8266, 0.6931472
        %v8268 = vlog2.pop %v8139
        %v8269 = vmul.f32 %v8268, 0.6931472
        %v8270 = vlog2.pop %v8140
        %v8271 = vmul.f32 %v8270, 0.6931472
        %v8272 = vlog2.pop %v8141
        %v8273 = vmul.f32 %v8272, 0.6931472
        %v8274 = vlog2.pop %v8142
        %v8275 = vmul.f32 %v8274, 0.6931472
        %v8276 = vlog2.pop %v8143
        %v8277 = vmul.f32 %v8276, 0.6931472
        %v8278 = vlog2.pop %v8144
        %v8279 = vmul.f32 %v8278, 0.6931472
        %v8280 = vlog2.pop %v8145
        %v8281 = vmul.f32 %v8280, 0.6931472
        %v8282 = vlog2.pop %v8146
        %v8283 = vmul.f32 %v8282, 0.6931472
        %v8284 = vlog2.pop %v8147
        %v8285 = vmul.f32 %v8284, 0.6931472
        %v8286 = vlog2.pop %v8148
        %v8287 = vmul.f32 %v8286, 0.6931472
        %v8288 = vlog2.pop %v8149
        %v8289 = vmul.f32 %v8288, 0.6931472
        %v8290 = vlog2.pop %v8150
        %v8291 = vmul.f32 %v8290, 0.6931472
        %v8292 = vlog2.pop %v8151
        %v8293 = vmul.f32 %v8292, 0.6931472
        %v8294 = vlog2.pop %v8152
        %v8295 = vmul.f32 %v8294, 0.6931472
        %v8296 = vlog2.pop %v8153
        %v8297 = vmul.f32 %v8296, 0.6931472
        %v8298 = vlog2.pop %v8154
        %v8299 = vmul.f32 %v8298, 0.6931472
        %v8300 = vlog2.pop %v8155
        %v8301 = vmul.f32 %v8300, 0.6931472
        %v8302 = vlog2.pop %v8156
        %v8303 = vmul.f32 %v8302, 0.6931472
        %v8304 = vlog2.pop %v8157
        %v8305 = vmul.f32 %v8304, 0.6931472
        %v8306 = vlog2.pop %v8158
        %v8307 = vmul.f32 %v8306, 0.6931472
        %v8308 = vlog2.pop %v8159
        %v8309 = vmul.f32 %v8308, 0.6931472
        %v8310 = vlog2.pop %v8160
        %v8311 = vmul.f32 %v8310, 0.6931472
        %v8312 = vlog2.pop %v8161
        %v8313 = vmul.f32 %v8312, 0.6931472
        %v8314 = vlog2.pop %v8162
        %v8315 = vmul.f32 %v8314, 0.6931472
        %v8316 = vlog2.pop %v8163
        %v8317 = vmul.f32 %v8316, 0.6931472
        %v8318 = vlog2.pop %v8164
        %v8319 = vmul.f32 %v8318, 0.6931472
        %v8320 = vlog2.pop %v8165
        %v8321 = vmul.f32 %v8320, 0.6931472
        %v8322 = vlog2.pop %v8166
        %v8323 = vmul.f32 %v8322, 0.6931472
        %v8324 = vlog2.pop %v8167
        %v8325 = vmul.f32 %v8324, 0.6931472
        %v8326 = vlog2.pop %v8168
        %v8327 = vmul.f32 %v8326, 0.6931472
        %v8328 = vlog2.pop %v8169
        %v8329 = vmul.f32 %v8328, 0.6931472
        %v8330 = vlog2.pop %v8170
        %v8331 = vmul.f32 %v8330, 0.6931472
        %v8332 = vlog2.pop %v8171
        %v8333 = vmul.f32 %v8332, 0.6931472
        %v8334 = vlog2.pop %v8172
        %v8335 = vmul.f32 %v8334, 0.6931472
        %v8336 = vlog2.pop %v8173
        %v8337 = vmul.f32 %v8336, 0.6931472
        %v8338 = vlog2.pop %v8174
        %v8339 = vmul.f32 %v8338, 0.6931472
        %v8340 = vlog2.pop %v8175
        %v8341 = vmul.f32 %v8340, 0.6931472
        %v8342 = vlog2.pop %v8176
        %v8343 = vmul.f32 %v8342, 0.6931472
        %v8344 = vlog2.pop %v8177
        %v8345 = vmul.f32 %v8344, 0.6931472
        %v8346 = vlog2.pop %v8178
        %v8347 = vmul.f32 %v8346, 0.6931472
        %v8348 = vlog2.pop %v8179
        %v8349 = vmul.f32 %v8348, 0.6931472
        %v8350 = vlog2.pop %v8180
        %v8351 = vmul.f32 %v8350, 0.6931472
        %v8352 = vlog2.pop %v8181
        %v8353 = vmul.f32 %v8352, 0.6931472
        %v8354 = vlog2.pop %v8182
        %v8355 = vmul.f32 %v8354, 0.6931472
        %v8356 = vlog2.pop %v8183
        %v8357 = vmul.f32 %v8356, 0.6931472
        %v8358 = vlog2.pop %v8184
        %v8359 = vmul.f32 %v8358, 0.6931472
        %v8360 = vlog2.pop %v8185
        %v8361 = vmul.f32 %v8360, 0.6931472
        %v8362 = vlog2.pop %v8186
        %v8363 = vmul.f32 %v8362, 0.6931472
        %v8364 = vlog2.pop %v8187
        %v8365 = vmul.f32 %v8364, 0.6931472
        %v8366 = vlog2.pop %v8188
        %v8367 = vmul.f32 %v8366, 0.6931472
        %v8368 = vlog2.pop %v8189
        %v8369 = vmul.f32 %v8368, 0.6931472
        %v8370 = vlog2.pop %v8190
        %v8371 = vmul.f32 %v8370, 0.6931472
        %v8372 = vlog2.pop %v8191
        %v8373 = vmul.f32 %v8372, 0.6931472
        %v8374 = vlog2.pop %v8192
        %v8375 = vmul.f32 %v8374, 0.6931472
        %v8376 = vlog2.pop %v8193
        %v8377 = vmul.f32 %v8376, 0.6931472
        %v8378 = vlog2.pop %v8194
        %v8379 = vmul.f32 %v8378, 0.6931472
        %v8380 = vlog2.pop %v8195
        %v8381 = vmul.f32 %v8380, 0.6931472
        %v8382 = vlog2.pop %v8196
        %v8383 = vmul.f32 %v8382, 0.6931472
        %v8384 = vlog2.pop %v8197
        %v8385 = vmul.f32 %v8384, 0.6931472
        %v8386 = vlog2.pop %v8198
        %v8387 = vmul.f32 %v8386, 0.6931472
        %v8388 = vlog2.pop %v8199
        %v8389 = vmul.f32 %v8388, 0.6931472
        %v8390 = vlog2.pop %v8200
        %v8391 = vmul.f32 %v8390, 0.6931472
        %v8392 = vlog2.pop %v8201
        %v8393 = vmul.f32 %v8392, 0.6931472
        %v8394 = vsub.f32 %v7626, %v8203
        %v8395 = vsub.f32 %v7627, %v8205
        %v8396 = vsub.f32 %v7628, %v8207
        %v8397 = vsub.f32 %v7629, %v8209
        %v8398 = vsub.f32 %v7630, %v8211
        %v8399 = vsub.f32 %v7631, %v8213
        %v8400 = vsub.f32 %v7632, %v8215
        %v8401 = vsub.f32 %v7633, %v8217
        %v8402 = vsub.f32 %v7634, %v8219
        %v8403 = vsub.f32 %v7635, %v8221
        %v8404 = vsub.f32 %v7636, %v8223
        %v8405 = vsub.f32 %v7637, %v8225
        %v8406 = vsub.f32 %v7638, %v8227
        %v8407 = vsub.f32 %v7639, %v8229
        %v8408 = vsub.f32 %v7640, %v8231
        %v8409 = vsub.f32 %v7641, %v8233
        %v8410 = vsub.f32 %v7642, %v8235
        %v8411 = vsub.f32 %v7643, %v8237
        %v8412 = vsub.f32 %v7644, %v8239
        %v8413 = vsub.f32 %v7645, %v8241
        %v8414 = vsub.f32 %v7646, %v8243
        %v8415 = vsub.f32 %v7647, %v8245
        %v8416 = vsub.f32 %v7648, %v8247
        %v8417 = vsub.f32 %v7649, %v8249
        %v8418 = vsub.f32 %v7650, %v8251
        %v8419 = vsub.f32 %v7651, %v8253
        %v8420 = vsub.f32 %v7652, %v8255
        %v8421 = vsub.f32 %v7653, %v8257
        %v8422 = vsub.f32 %v7654, %v8259
        %v8423 = vsub.f32 %v7655, %v8261
        %v8424 = vsub.f32 %v7656, %v8263
        %v8425 = vsub.f32 %v7657, %v8265
        %v8426 = vsub.f32 %v7658, %v8267
        %v8427 = vsub.f32 %v7659, %v8269
        %v8428 = vsub.f32 %v7660, %v8271
        %v8429 = vsub.f32 %v7661, %v8273
        %v8430 = vsub.f32 %v7662, %v8275
        %v8431 = vsub.f32 %v7663, %v8277
        %v8432 = vsub.f32 %v7664, %v8279
        %v8433 = vsub.f32 %v7665, %v8281
        %v8434 = vsub.f32 %v7666, %v8283
        %v8435 = vsub.f32 %v7667, %v8285
        %v8436 = vsub.f32 %v7668, %v8287
        %v8437 = vsub.f32 %v7669, %v8289
        %v8438 = vsub.f32 %v7670, %v8291
        %v8439 = vsub.f32 %v7671, %v8293
        %v8440 = vsub.f32 %v7672, %v8295
        %v8441 = vsub.f32 %v7673, %v8297
        %v8442 = vsub.f32 %v7674, %v8299
        %v8443 = vsub.f32 %v7675, %v8301
        %v8444 = vsub.f32 %v7676, %v8303
        %v8445 = vsub.f32 %v7677, %v8305
        %v8446 = vsub.f32 %v7678, %v8307
        %v8447 = vsub.f32 %v7679, %v8309
        %v8448 = vsub.f32 %v7680, %v8311
        %v8449 = vsub.f32 %v7681, %v8313
        %v8450 = vsub.f32 %v7682, %v8315
        %v8451 = vsub.f32 %v7683, %v8317
        %v8452 = vsub.f32 %v7684, %v8319
        %v8453 = vsub.f32 %v7685, %v8321
        %v8454 = vsub.f32 %v7686, %v8323
        %v8455 = vsub.f32 %v7687, %v8325
        %v8456 = vsub.f32 %v7688, %v8327
        %v8457 = vsub.f32 %v7689, %v8329
        %v8458 = vsub.f32 %v7690, %v8331
        %v8459 = vsub.f32 %v7691, %v8333
        %v8460 = vsub.f32 %v7692, %v8335
        %v8461 = vsub.f32 %v7693, %v8337
        %v8462 = vsub.f32 %v7694, %v8339
        %v8463 = vsub.f32 %v7695, %v8341
        %v8464 = vsub.f32 %v7696, %v8343
        %v8465 = vsub.f32 %v7697, %v8345
        %v8466 = vsub.f32 %v7698, %v8347
        %v8467 = vsub.f32 %v7699, %v8349
        %v8468 = vsub.f32 %v7700, %v8351
        %v8469 = vsub.f32 %v7701, %v8353
        %v8470 = vsub.f32 %v7702, %v8355
        %v8471 = vsub.f32 %v7703, %v8357
        %v8472 = vsub.f32 %v7704, %v8359
        %v8473 = vsub.f32 %v7705, %v8361
        %v8474 = vsub.f32 %v7706, %v8363
        %v8475 = vsub.f32 %v7707, %v8365
        %v8476 = vsub.f32 %v7708, %v8367
        %v8477 = vsub.f32 %v7709, %v8369
        %v8478 = vsub.f32 %v7710, %v8371
        %v8479 = vsub.f32 %v7711, %v8373
        %v8480 = vsub.f32 %v7712, %v8375
        %v8481 = vsub.f32 %v7713, %v8377
        %v8482 = vsub.f32 %v7714, %v8379
        %v8483 = vsub.f32 %v7715, %v8381
        %v8484 = vsub.f32 %v7716, %v8383
        %v8485 = vsub.f32 %v7717, %v8385
        %v8486 = vsub.f32 %v7718, %v8387
        %v8487 = vsub.f32 %v7719, %v8389
        %v8488 = vsub.f32 %v7720, %v8391
        %v8489 = vsub.f32 %v7721, %v8393
        %vm8490 = vcmask 7168
        %v8491 = vsel %vm8490, %v8394, 0.0
        %v8492 = vsel %vm8490, %v8395, 0.0
        %v8493 = vadd.f32 %v8491, %v8492
        %v8494 = vsel %vm8490, %v8396, 0.0
        %v8495 = vadd.f32 %v8493, %v8494
        %v8496 = vsel %vm8490, %v8397, 0.0
        %v8497 = vadd.f32 %v8495, %v8496
        %v8498 = vsel %vm8490, %v8398, 0.0
        %v8499 = vadd.f32 %v8497, %v8498
        %v8500 = vsel %vm8490, %v8399, 0.0
        %v8501 = vadd.f32 %v8499, %v8500
        %v8502 = vsel %vm8490, %v8400, 0.0
        %v8503 = vadd.f32 %v8501, %v8502
        %v8504 = vsel %vm8490, %v8401, 0.0
        %v8505 = vadd.f32 %v8503, %v8504
        %v8506 = vsel %vm8490, %v8402, 0.0
        %v8507 = vadd.f32 %v8505, %v8506
        %v8508 = vsel %vm8490, %v8403, 0.0
        %v8509 = vadd.f32 %v8507, %v8508
        %v8510 = vsel %vm8490, %v8404, 0.0
        %v8511 = vadd.f32 %v8509, %v8510
        %v8512 = vsel %vm8490, %v8405, 0.0
        %v8513 = vadd.f32 %v8511, %v8512
        %v8514 = vsel %vm8490, %v8406, 0.0
        %v8515 = vadd.f32 %v8513, %v8514
        %v8516 = vsel %vm8490, %v8407, 0.0
        %v8517 = vadd.f32 %v8515, %v8516
        %v8518 = vsel %vm8490, %v8408, 0.0
        %v8519 = vadd.f32 %v8517, %v8518
        %v8520 = vsel %vm8490, %v8409, 0.0
        %v8521 = vadd.f32 %v8519, %v8520
        %v8522 = vsel %vm8490, %v8410, 0.0
        %v8523 = vadd.f32 %v8521, %v8522
        %v8524 = vsel %vm8490, %v8411, 0.0
        %v8525 = vadd.f32 %v8523, %v8524
        %v8526 = vsel %vm8490, %v8412, 0.0
        %v8527 = vadd.f32 %v8525, %v8526
        %v8528 = vsel %vm8490, %v8413, 0.0
        %v8529 = vadd.f32 %v8527, %v8528
        %v8530 = vsel %vm8490, %v8414, 0.0
        %v8531 = vadd.f32 %v8529, %v8530
        %v8532 = vsel %vm8490, %v8415, 0.0
        %v8533 = vadd.f32 %v8531, %v8532
        %v8534 = vsel %vm8490, %v8416, 0.0
        %v8535 = vadd.f32 %v8533, %v8534
        %v8536 = vsel %vm8490, %v8417, 0.0
        %v8537 = vadd.f32 %v8535, %v8536
        %v8538 = vsel %vm8490, %v8418, 0.0
        %v8539 = vadd.f32 %v8537, %v8538
        %v8540 = vsel %vm8490, %v8419, 0.0
        %v8541 = vadd.f32 %v8539, %v8540
        %v8542 = vsel %vm8490, %v8420, 0.0
        %v8543 = vadd.f32 %v8541, %v8542
        %v8544 = vsel %vm8490, %v8421, 0.0
        %v8545 = vadd.f32 %v8543, %v8544
        %v8546 = vsel %vm8490, %v8422, 0.0
        %v8547 = vadd.f32 %v8545, %v8546
        %v8548 = vsel %vm8490, %v8423, 0.0
        %v8549 = vadd.f32 %v8547, %v8548
        %v8550 = vsel %vm8490, %v8424, 0.0
        %v8551 = vadd.f32 %v8549, %v8550
        %v8552 = vsel %vm8490, %v8425, 0.0
        %v8553 = vadd.f32 %v8551, %v8552
        %v8554 = vsel %vm8490, %v8426, 0.0
        %v8555 = vadd.f32 %v8553, %v8554
        %v8556 = vsel %vm8490, %v8427, 0.0
        %v8557 = vadd.f32 %v8555, %v8556
        %v8558 = vsel %vm8490, %v8428, 0.0
        %v8559 = vadd.f32 %v8557, %v8558
        %v8560 = vsel %vm8490, %v8429, 0.0
        %v8561 = vadd.f32 %v8559, %v8560
        %v8562 = vsel %vm8490, %v8430, 0.0
        %v8563 = vadd.f32 %v8561, %v8562
        %v8564 = vsel %vm8490, %v8431, 0.0
        %v8565 = vadd.f32 %v8563, %v8564
        %v8566 = vsel %vm8490, %v8432, 0.0
        %v8567 = vadd.f32 %v8565, %v8566
        %v8568 = vsel %vm8490, %v8433, 0.0
        %v8569 = vadd.f32 %v8567, %v8568
        %v8570 = vsel %vm8490, %v8434, 0.0
        %v8571 = vadd.f32 %v8569, %v8570
        %v8572 = vsel %vm8490, %v8435, 0.0
        %v8573 = vadd.f32 %v8571, %v8572
        %v8574 = vsel %vm8490, %v8436, 0.0
        %v8575 = vadd.f32 %v8573, %v8574
        %v8576 = vsel %vm8490, %v8437, 0.0
        %v8577 = vadd.f32 %v8575, %v8576
        %v8578 = vsel %vm8490, %v8438, 0.0
        %v8579 = vadd.f32 %v8577, %v8578
        %v8580 = vsel %vm8490, %v8439, 0.0
        %v8581 = vadd.f32 %v8579, %v8580
        %v8582 = vsel %vm8490, %v8440, 0.0
        %v8583 = vadd.f32 %v8581, %v8582
        %v8584 = vsel %vm8490, %v8441, 0.0
        %v8585 = vadd.f32 %v8583, %v8584
        %v8586 = vsel %vm8490, %v8442, 0.0
        %v8587 = vadd.f32 %v8585, %v8586
        %v8588 = vsel %vm8490, %v8443, 0.0
        %v8589 = vadd.f32 %v8587, %v8588
        %v8590 = vsel %vm8490, %v8444, 0.0
        %v8591 = vadd.f32 %v8589, %v8590
        %v8592 = vsel %vm8490, %v8445, 0.0
        %v8593 = vadd.f32 %v8591, %v8592
        %v8594 = vsel %vm8490, %v8446, 0.0
        %v8595 = vadd.f32 %v8593, %v8594
        %v8596 = vsel %vm8490, %v8447, 0.0
        %v8597 = vadd.f32 %v8595, %v8596
        %v8598 = vsel %vm8490, %v8448, 0.0
        %v8599 = vadd.f32 %v8597, %v8598
        %v8600 = vsel %vm8490, %v8449, 0.0
        %v8601 = vadd.f32 %v8599, %v8600
        %v8602 = vsel %vm8490, %v8450, 0.0
        %v8603 = vadd.f32 %v8601, %v8602
        %v8604 = vsel %vm8490, %v8451, 0.0
        %v8605 = vadd.f32 %v8603, %v8604
        %v8606 = vsel %vm8490, %v8452, 0.0
        %v8607 = vadd.f32 %v8605, %v8606
        %v8608 = vsel %vm8490, %v8453, 0.0
        %v8609 = vadd.f32 %v8607, %v8608
        %v8610 = vsel %vm8490, %v8454, 0.0
        %v8611 = vadd.f32 %v8609, %v8610
        %v8612 = vsel %vm8490, %v8455, 0.0
        %v8613 = vadd.f32 %v8611, %v8612
        %v8614 = vsel %vm8490, %v8456, 0.0
        %v8615 = vadd.f32 %v8613, %v8614
        %v8616 = vsel %vm8490, %v8457, 0.0
        %v8617 = vadd.f32 %v8615, %v8616
        %v8618 = vsel %vm8490, %v8458, 0.0
        %v8619 = vadd.f32 %v8617, %v8618
        %v8620 = vsel %vm8490, %v8459, 0.0
        %v8621 = vadd.f32 %v8619, %v8620
        %v8622 = vsel %vm8490, %v8460, 0.0
        %v8623 = vadd.f32 %v8621, %v8622
        %v8624 = vsel %vm8490, %v8461, 0.0
        %v8625 = vadd.f32 %v8623, %v8624
        %v8626 = vsel %vm8490, %v8462, 0.0
        %v8627 = vadd.f32 %v8625, %v8626
        %v8628 = vsel %vm8490, %v8463, 0.0
        %v8629 = vadd.f32 %v8627, %v8628
        %v8630 = vsel %vm8490, %v8464, 0.0
        %v8631 = vadd.f32 %v8629, %v8630
        %v8632 = vsel %vm8490, %v8465, 0.0
        %v8633 = vadd.f32 %v8631, %v8632
        %v8634 = vsel %vm8490, %v8466, 0.0
        %v8635 = vadd.f32 %v8633, %v8634
        %v8636 = vsel %vm8490, %v8467, 0.0
        %v8637 = vadd.f32 %v8635, %v8636
        %v8638 = vsel %vm8490, %v8468, 0.0
        %v8639 = vadd.f32 %v8637, %v8638
        %v8640 = vsel %vm8490, %v8469, 0.0
        %v8641 = vadd.f32 %v8639, %v8640
        %v8642 = vsel %vm8490, %v8470, 0.0
        %v8643 = vadd.f32 %v8641, %v8642
        %v8644 = vsel %vm8490, %v8471, 0.0
        %v8645 = vadd.f32 %v8643, %v8644
        %v8646 = vsel %vm8490, %v8472, 0.0
        %v8647 = vadd.f32 %v8645, %v8646
        %v8648 = vsel %vm8490, %v8473, 0.0
        %v8649 = vadd.f32 %v8647, %v8648
        %v8650 = vsel %vm8490, %v8474, 0.0
        %v8651 = vadd.f32 %v8649, %v8650
        %v8652 = vsel %vm8490, %v8475, 0.0
        %v8653 = vadd.f32 %v8651, %v8652
        %v8654 = vsel %vm8490, %v8476, 0.0
        %v8655 = vadd.f32 %v8653, %v8654
        %v8656 = vsel %vm8490, %v8477, 0.0
        %v8657 = vadd.f32 %v8655, %v8656
        %v8658 = vsel %vm8490, %v8478, 0.0
        %v8659 = vadd.f32 %v8657, %v8658
        %v8660 = vsel %vm8490, %v8479, 0.0
        %v8661 = vadd.f32 %v8659, %v8660
        %v8662 = vsel %vm8490, %v8480, 0.0
        %v8663 = vadd.f32 %v8661, %v8662
        %v8664 = vsel %vm8490, %v8481, 0.0
        %v8665 = vadd.f32 %v8663, %v8664
        %v8666 = vsel %vm8490, %v8482, 0.0
        %v8667 = vadd.f32 %v8665, %v8666
        %v8668 = vsel %vm8490, %v8483, 0.0
        %v8669 = vadd.f32 %v8667, %v8668
        %v8670 = vsel %vm8490, %v8484, 0.0
        %v8671 = vadd.f32 %v8669, %v8670
        %v8672 = vsel %vm8490, %v8485, 0.0
        %v8673 = vadd.f32 %v8671, %v8672
        %v8674 = vsel %vm8490, %v8486, 0.0
        %v8675 = vadd.f32 %v8673, %v8674
        %v8676 = vsel %vm8490, %v8487, 0.0
        %v8677 = vadd.f32 %v8675, %v8676
        %v8678 = vsel %vm8490, %v8488, 0.0
        %v8679 = vadd.f32 %v8677, %v8678
        %v8680 = vsel %vm8490, %v8489, 0.0
        %v8681 = vadd.f32 %v8679, %v8680
        %8682 = vadd.xlane.f32.xlu0 %v8681
        %v8683 = vpop.xlane.xlu0 %8682
        %v8684 = vrot.slane %v8683, 4
        %v8685 = vadd.f32 %v8683, %v8684
        %v8686 = vrot.slane %v8685, 2
        %v8687 = vadd.f32 %v8685, %v8686
        %v8688 = vrot.slane %v8687, 1
        %v8689 = vadd.f32 %v8687, %v8688
        %s8690 = vtos %v8689
        %v8691 = vstv %s8690
        %8692 = vst [vmem:[%s250] sm:$0xff] %v8691
        %s8693 = sand.u32 %s147, 1
        %s8694 = scalar_lea.sflag [#allocation3], %s8693
        %s8695 = sand.u32 %s147, 1
        %s8696 = smul.addr %s8695, 8
        %s8697 = scalar_lea.vmem [#allocation2], %s8696
        // Predicated region
        $region41: #{tpu_custom_call.1} parent=39 // pred_check
          %p8698 = pneg %p157
        $region42: #{tpu_custom_call.1} parent=39 // pred_check_branch
          %8700 = sbr.rel (%p8698) target = $region44
        $region43: #{tpu_custom_call.1} parent=39 // pred_region
          %s8702 = ssub.s32 128, 128
          %8703 = vsyncadd %s8694, %s8702
          %s8704 = smul.addr %s19, 128
          %s8705 = scalar_lea.hbm %s5, %s8704
          %s8707 = sshll.u32 %s8697, 4
          %s8708 = int_to_ptr.vmem [resolvable:$true] %s8707
          %8710 = dma.vmem_to_hbm [thread:$0]  %s8708, 128, %s8705, %s8694
        $region44: #{tpu_custom_call.1} parent=39 // pred_fallthru
          _
      $region40: #{tpu_custom_call.1} parent=5 // pred_fallthru
        _
      %p8711 = scmp.le.s32.totalorder 2, %s14
      // Predicated region
      $region45: #{tpu_custom_call.1} parent=5 // pred_check
        %p8712 = pneg %p8711
      $region46: #{tpu_custom_call.1} parent=5 // pred_check_branch
        %8714 = sbr.rel (%p8712) target = $region48
      $region47: #{tpu_custom_call.1} parent=5 // pred_region
        %s8715 = ssub.s32 %s14, 2
        // Predicated region
        $region49: #{tpu_custom_call.1} parent=47 // pred_check
          %p8716 = pneg %p163
        $region50: #{tpu_custom_call.1} parent=47 // pred_check_branch
          %8718 = sbr.rel (%p8716) target = $region52
        $region51: #{tpu_custom_call.1} parent=47 // pred_region
          %s8719 = sand.u32 %s148, 1
          %s8720 = scalar_lea.sflag [#allocation3], %s8719
          %s8721 = sand.u32 %s148, 1
          %s8722 = smul.addr %s8721, 8
          %s8723 = scalar_lea.vmem [#allocation2], %s8722
          %8724 = dma.done %s8720, 128
        $region52: #{tpu_custom_call.1} parent=47 // pred_fallthru
          _
      $region48: #{tpu_custom_call.1} parent=5 // pred_fallthru
        _
    $region6: #{tpu_custom_call.1} parent=1 // loop_footer
      %s18 = sadd.s32 1, %s14
    $region7: #{tpu_custom_call.1} parent=1 // loop_footer_branch
      %13 = sbr.rel target = $region3
    $region8: #{tpu_custom_call.1} parent=1 // loop_exit
      _
    %8725 = vsyncpa [#allocation3], 1
    %s8726 = scalar_lea.sflag [#allocation3], 1
    %8727 = vsyncpa %s8726, 1

</llo_original>
